<compile_context>
chip_gen: v5e
topology: v5e:2x2
jax: 0.10.0
libtpu: 0.0.40
codegen_flags: <defaults>
</compile_context>

<pallas_src>
import functools
import math

import numpy as np

import jax
import jax.numpy as jnp
from jax import lax
from jax.experimental import pallas as pl
from jax.experimental.pallas import tpu as pltpu

CLIP_RES = 224                       # ViT-B/32 input resolution
PATCH = 32                           # ViT-B/32 patch size
N_PATCH = (CLIP_RES // PATCH) ** 2   # 49 tokens
FEAT_DIM = 512
# The module literally computes `sim * math.exp(0.07)` (NOT CLIP's learned
# logit scale), so this matches the spec exactly.
LOGIT_SCALE = math.exp(0.07)


# ------------------------------------------------------------------------
# Constant matrix: Upsample(x7) + AvgPool2d(S//32) + 32x32 patch-grid mean,
# all as one (32, S) matrix R so that per channel  mean_patch = R @ x @ R^T.
# ------------------------------------------------------------------------
@functools.lru_cache(maxsize=None)
def _patch_mean_matrix(stylegan_size: int) -> np.ndarray:
    S = stylegan_size
    k = S // PATCH                       # AvgPool2d kernel_size (= stride)
    O = (7 * S) // k                     # == 224 for S divisible by 32
    assert O == CLIP_RES
    # P[o, i] = (1/k) * |{u in [o*k, (o+1)*k) : u // 7 == i}|   (exact pool)
    p = np.zeros((O, S), dtype=np.float64)
    for o in range(O):
        for u in range(o * k, (o + 1) * k):
            p[o, u // 7] += 1.0 / k
    # Q[ph, u] = 1 iff u % 32 == ph  (sum over the 7x7 grid of 32x32 patches)
    q = np.zeros((PATCH, O), dtype=np.float64)
    for u in range(O):
        q[u % PATCH, u] = 1.0
    r = (q @ p) / 7.0                    # the 1/49 patch mean = (1/7)^2
    return r.astype(np.float32)


# ------------------------------------------------------------------------
# Kernel 1: fused Upsample(x7) + AvgPool2d(S//32) + CLIP 32x32 patch mean.
# Per (b, channel-tile):  out_c = R @ x_c @ R^T  on the MXU (bf16 inputs,
# f32 accumulation), output stored in bf16 for the projection kernel.
# ------------------------------------------------------------------------
def _pool_patchmean_kernel(x_ref, r_ref, o_ref):
    # x_ref: (1, Ct, S, S) f32   r_ref: (32, S) bf16   o_ref: (1, Ct, 32, 32) bf16
    r = r_ref[...]
    ct = o_ref.shape[1]
    for c in range(ct):                                  # static Ct <= 3, unrolled
        x = x_ref[0, c].astype(jnp.bfloat16)             # (S, S)
        tmp = jnp.dot(r, x, preferred_element_type=jnp.float32)        # (32, S)
        out = lax.dot_general(tmp.astype(jnp.bfloat16), r,
                              (((1,), (1,)), ((), ())),
                              preferred_element_type=jnp.float32)      # (32, 32)
        o_ref[0, c] = out.astype(o_ref.dtype)


def pool_patchmean(image):
    """(B, C, S, S) f32 -> (B, C, 32, 32) bf16 per-channel mean of the 49
    CLIP patches of AvgPool2d(S//32)(Upsample(x7)(image)) -- numerically
    identical (up to bf16) to pool -> patchify -> mean, without ever
    materializing the 224x224 image or the (B*49, 3072) token tensor."""
    B, C, S, _ = image.shape
    assert S % PATCH == 0, "stylegan_size must be divisible by 32"
    r = jnp.asarray(_patch_mean_matrix(S), dtype=jnp.bfloat16)
    # Channel tiling: per-channel blocks at large S keep the double-buffered
    # input under v5e's 16 MiB scoped-VMEM default (4 MiB/block at S=1024);
    # at small S all channels ride in one step so the DMA chunk stays >~1 MiB.
    ct = C if 2 * C * S * S * 4 <= 12 * 1024 * 1024 else 1
    grid = (B, C // ct)
    return pl.pallas_call(
        _pool_patchmean_kernel,
        out_shape=jax.ShapeDtypeStruct((B, C, PATCH, PATCH), jnp.bfloat16),
        grid=grid,
        in_specs=[pl.BlockSpec((1, ct, S, S), lambda b, c: (b, c, 0, 0)),
                  pl.BlockSpec((PATCH, S), lambda b, c: (0, 0))],
        out_specs=pl.BlockSpec((1, ct, PATCH, PATCH), lambda b, c: (b, c, 0, 0)),
        compiler_params=pltpu.CompilerParams(
            dimension_semantics=("parallel", "parallel")),   # megacore on v7x
    )(image, r)


# ------------------------------------------------------------------------
# Kernel 2: fused feature projections + L2-normalize + cosine(row 0) + loss.
# Single grid step: the whole bf16 weight set (~4 MiB at these sizes) fits
# VMEM on every generation, so no K tiling / accumulator is needed.
# ------------------------------------------------------------------------
def _proj_loss_kernel(ximg_ref, xaud_ref, cw_ref, cb_ref, aw_ref, ab_ref,
                      loss_ref):
    # CLIP image projection (x_img is already bf16 from kernel 1).
    img_feat = (jnp.dot(ximg_ref[...], cw_ref[...],
                        preferred_element_type=jnp.float32)
                + cb_ref[...])                                   # (1, 512)
    # Audio projection (conv already folded into aw at init time).
    aud_feat = (jnp.dot(xaud_ref[...].astype(jnp.bfloat16), aw_ref[...],
                        preferred_element_type=jnp.float32)
                + ab_ref[...])                                   # (Ba, 512)
    # L2-normalize in f32 (+eps vs. torch.norm so a zero row cannot NaN);
    # rsqrt goes to the EUP slot.
    img_n = img_feat * lax.rsqrt(
        jnp.sum(img_feat * img_feat, axis=-1, keepdims=True) + 1e-12)
    aud_n = aud_feat * lax.rsqrt(
        jnp.sum(aud_feat * aud_feat, axis=-1, keepdims=True) + 1e-12)
    # cos(image row 0, each audio row), lane-major (1, Ba) via A @ B^T.
    sim = lax.dot_general(img_n, aud_n, (((1,), (1,)), ((), ())),
                          preferred_element_type=jnp.float32)    # (1, Ba)
    loss_ref[...] = 1.0 - sim * LOGIT_SCALE


def fused_proj_loss(x_img, x_aud, params):
    Ba, _ = x_aud.shape
    # Whole problem resident in VMEM: x_img + clip_w + x_aud + audio_w + biases.
    resident = (x_img.size * 2 + params["clip_w"].size * 2 + x_aud.size * 4 +
                params["audio_w"].size * 2 + 4 * FEAT_DIM * 4)
    # TODO(synk): if a real spectrogram makes audio_w more than a few MiB,
    #             K-tile/stream audio_w (and clip_w) instead of keeping them
    #             resident -- v7x only has 64 MiB of physical VMEM.
    assert resident < 24 * 1024 * 1024, "stream the projection weights"
    vmem = pl.BlockSpec(memory_space=pltpu.MemorySpace.VMEM)
    out = pl.pallas_call(
        _proj_loss_kernel,
        out_shape=jax.ShapeDtypeStruct((1, Ba), jnp.float32),
        in_specs=[vmem, vmem, vmem, vmem, vmem, vmem],
        out_specs=vmem,
    )(x_img, x_aud, params["clip_w"], params["clip_b"],
      params["audio_w"], params["audio_b"])
    return out.reshape(Ba)


# ------------------------------------------------------------------------
# Deterministic parameter stand-ins + init-time weight folding.
# ------------------------------------------------------------------------
def init_params(key, audio_shape):
    """Raw stand-in parameters (synthetic, deterministic)."""
    _, _, Ha, Wa = audio_shape
    flat_audio = 3 * (Ha - 2) * (Wa - 2)
    flat_patch = 3 * PATCH * PATCH
    k1, k2, k3, k4, k5, k6 = jax.random.split(key, 6)
    return {
        "conv_w": jax.random.normal(k1, (3, 1, 3, 3), jnp.float32) / 3.0,
        "conv_b": jax.random.normal(k6, (3,), jnp.float32) * 0.1,
        # TODO(synk): pretrained CLIP ViT-B/32 image encoder replaced by a
        #             deterministic 32x32 patchify + linear + token-mean stand-in.
        "clip_w": jax.random.normal(k2, (flat_patch, FEAT_DIM), jnp.float32)
                  / math.sqrt(flat_patch),
        "clip_b": jax.random.normal(k3, (FEAT_DIM,), jnp.float32) * 0.01,
        # TODO(synk): pretrained timm resnet18 (num_classes=512) replaced by a
        #             deterministic flatten + linear projection stand-in.
        "audio_w": jax.random.normal(k4, (flat_audio, FEAT_DIM), jnp.float32)
                   / math.sqrt(flat_audio),
        "audio_b": jax.random.normal(k5, (FEAT_DIM,), jnp.float32) * 0.01,
    }


def prepare_params(raw, audio_shape):
    """One-time (init) folding: compose Conv2d(1->3,3x3,valid)+flatten into the
    audio projection (both linear), and cast projection weights to bf16."""
    _, _, Ha, Wa = audio_shape
    Ho, Wo = Ha - 2, Wa - 2
    # Conv as a (Ha*Wa, 3*Ho*Wo) matrix via the identity basis (exact).
    eye = jnp.eye(Ha * Wa, dtype=jnp.float32).reshape(Ha * Wa, 1, Ha, Wa)
    basis = lax.conv_general_dilated(
        eye, raw["conv_w"], window_strides=(1, 1), padding="VALID",
        dimension_numbers=("NCHW", "OIHW", "NCHW"))            # (Ha*Wa, 3, Ho, Wo)
    conv_mat = basis.reshape(Ha * Wa, 3 * Ho * Wo)
    audio_w_comp = jnp.matmul(conv_mat, raw["audio_w"],
                              precision=lax.Precision.HIGHEST)  # (Ha*Wa, 512)
    bias_vec = jnp.repeat(raw["conv_b"], Ho * Wo)               # (3*Ho*Wo,)
    audio_b_comp = raw["audio_b"] + jnp.matmul(
        bias_vec, raw["audio_w"], precision=lax.Precision.HIGHEST)
    return {
        "clip_w": raw["clip_w"].astype(jnp.bfloat16),
        "clip_b": raw["clip_b"].reshape(1, FEAT_DIM).astype(jnp.float32),
        "audio_w": audio_w_comp.astype(jnp.bfloat16),           # conv folded in
        "audio_b": audio_b_comp.reshape(1, FEAT_DIM).astype(jnp.float32),
    }


# ------------------------------------------------------------------------
# SoundCLIPLoss.forward
# ------------------------------------------------------------------------
def soundclip_loss(image, audio, params):
    B, C, S, _ = image.shape
    Ba = audio.shape[0]
    # (1)+(2a) Only image row 0 feeds the loss (sim uses image_features[0]),
    #          so pool/patch-mean is computed for that row only.
    pm = pool_patchmean(image[:1])                       # (1, C, 32, 32) bf16
    x_img = pm.reshape(1, C * PATCH * PATCH)             # (1, 3072) bf16
    # (3a) AudioEncoder conv(1->3, 3x3) folded exactly into the composed audio
    #      projection weights at init time -> only a contiguous flatten here.
    x_aud = audio.reshape(Ba, -1)                        # (Ba, Ha*Wa) f32
    # (2b)+(3b)+(4) projections, normalize, cosine of image row 0, *exp(0.07),
    #               1 - sim -- one fused, single-step kernel.
    return fused_proj_loss(x_img, x_aud, params)         # (Ba,)


# ------------------------------------------------------------------------
# Pure-JAX unfused f32 reference (mirrors the PyTorch pipeline) for sanity.
# ------------------------------------------------------------------------
def _reference_loss(image, audio, raw):
    B, C, S, _ = image.shape
    k = S // PATCH
    up = jnp.repeat(jnp.repeat(image, 7, axis=2), 7, axis=3)
    O = up.shape[-1] // k
    pooled = up.reshape(B, C, O, k, O, k).mean(axis=(3, 5))         # (B,3,224,224)
    patches = (pooled.reshape(B, C, 7, PATCH, 7, PATCH)
                     .transpose(0, 2, 4, 1, 3, 5)
                     .reshape(B * N_PATCH, C * PATCH * PATCH))
    tok = patches @ raw["clip_w"] + raw["clip_b"]
    img_feat = tok.reshape(B, N_PATCH, FEAT_DIM).mean(axis=1)
    conv = lax.conv_general_dilated(
        audio, raw["conv_w"], (1, 1), "VALID",
        dimension_numbers=("NCHW", "OIHW", "NCHW"))
    conv = conv + raw["conv_b"].reshape(1, 3, 1, 1)
    aud_feat = conv.reshape(audio.shape[0], -1) @ raw["audio_w"] + raw["audio_b"]
    img_n = img_feat / jnp.linalg.norm(img_feat, axis=-1, keepdims=True)
    aud_n = aud_feat / jnp.linalg.norm(aud_feat, axis=-1, keepdims=True)
    sim = (img_n @ aud_n.T)[0] * LOGIT_SCALE
    return 1.0 - sim


if __name__ == "__main__":
    key = jax.random.PRNGKey(0)
    k_img, k_aud, k_par = jax.random.split(key, 3)

    stylegan_size = 64                  # opts.stylegan_size (small test size)
    image = jax.random.normal(k_img, (2, 3, stylegan_size, stylegan_size),
                              jnp.float32)
    audio = jax.random.normal(k_aud, (2, 1, 32, 32), jnp.float32)

    raw = init_params(k_par, audio.shape)
    params = prepare_params(raw, audio.shape)       # one-time weight folding

    loss = jax.jit(soundclip_loss)(image, audio, params)
    loss = jax.block_until_ready(loss)

    assert loss.shape == (2,) and loss.dtype == jnp.float32
    assert bool(jnp.all(jnp.isfinite(loss)))

    # Sanity check vs. the unfused f32 reference (bf16 pipeline => loose tol).
    ref = _reference_loss(image, audio, raw)
    assert float(jnp.max(jnp.abs(loss - ref))) < 5e-2, (loss, ref)

    print("KERNEL_OK")
</pallas_src>

<mosaic_0001>
module attributes {stable_mosaic.version = 11 : i64} {
  func.func @_pool_patchmean_kernel(%arg0: i32, %arg1: i32, %arg2: memref<1x3x64x64xf32, #tpu.memory_space<vmem>>, %arg3: memref<32x64xbf16, #tpu.memory_space<vmem>>, %arg4: memref<1x3x32x32xbf16, #tpu.memory_space<vmem>>) attributes {dimension_semantics = [#tpu.dimension_semantics<parallel>, #tpu.dimension_semantics<parallel>], iteration_bounds = array<i64: 1, 1>, scalar_prefetch = 0 : i64, scratch_operands = 0 : i64, tpu.core_type = #tpu.core_type<tc>, window_params = [{transform_indices = @transform_0, window_bounds = array<i64: 1, 3, 64, 64>}, {pipeline_mode = #tpu.pipeline_mode<synchronous>, transform_indices = @transform_1, window_bounds = array<i64: 32, 64>}, {transform_indices = @transform_2, window_bounds = array<i64: 1, 3, 32, 32>}]} {
    %c0 = arith.constant 0 : index
    %c0_0 = arith.constant 0 : index
    %0 = vector.load %arg3[%c0, %c0_0] : memref<32x64xbf16, #tpu.memory_space<vmem>>, vector<32x64xbf16>
    %c0_1 = arith.constant 0 : index
    %c0_2 = arith.constant 0 : index
    %c0_3 = arith.constant 0 : index
    %c0_4 = arith.constant 0 : index
    %1 = vector.load %arg2[%c0_1, %c0_2, %c0_3, %c0_4] : memref<1x3x64x64xf32, #tpu.memory_space<vmem>>, vector<1x1x64x64xf32>
    %2 = vector.shape_cast %1 : vector<1x1x64x64xf32> to vector<64x64xf32>
    %3 = arith.truncf %2 : vector<64x64xf32> to vector<64x64xbf16>
    %cst = arith.constant dense<0.000000e+00> : vector<32x64xf32>
    %4 = tpu.matmul %0, %3, %cst {dimension_numbers = #tpu.dot_dimension_numbers<[1], [0], [0], [1], [0, 0, 1, 1], [], []>} : vector<32x64xbf16>, vector<64x64xbf16>, vector<32x64xf32> -> vector<32x64xf32>
    %5 = arith.truncf %4 : vector<32x64xf32> to vector<32x64xbf16>
    %cst_5 = arith.constant dense<0.000000e+00> : vector<32x32xf32>
    %6 = tpu.matmul %5, %0, %cst_5 {dimension_numbers = #tpu.dot_dimension_numbers<[1], [1], [0], [0], [0, 0, 1, 0], [], []>} : vector<32x64xbf16>, vector<32x64xbf16>, vector<32x32xf32> -> vector<32x32xf32>
    %7 = arith.truncf %6 : vector<32x32xf32> to vector<32x32xbf16>
    %c0_6 = arith.constant 0 : index
    %c0_7 = arith.constant 0 : index
    %c0_8 = arith.constant 0 : index
    %c0_9 = arith.constant 0 : index
    %8 = vector.load %arg4[%c0_6, %c0_7, %c0_8, %c0_9] : memref<1x3x32x32xbf16, #tpu.memory_space<vmem>>, vector<1x1x32x32xbf16>
    %9 = vector.shape_cast %8 : vector<1x1x32x32xbf16> to vector<32x32xbf16>
    %10 = vector.shape_cast %7 : vector<32x32xbf16> to vector<1x1x32x32xbf16>
    tpu.vector_store %arg4[%c0_6, %c0_7, %c0_8, %c0_9], %10 {strides = array<i32>} : memref<1x3x32x32xbf16, #tpu.memory_space<vmem>>, vector<1x1x32x32xbf16>,
    %c0_10 = arith.constant 0 : index
    %c1 = arith.constant 1 : index
    %c0_11 = arith.constant 0 : index
    %c0_12 = arith.constant 0 : index
    %11 = vector.load %arg2[%c0_10, %c1, %c0_11, %c0_12] : memref<1x3x64x64xf32, #tpu.memory_space<vmem>>, vector<1x1x64x64xf32>
    %12 = vector.shape_cast %11 : vector<1x1x64x64xf32> to vector<64x64xf32>
    %13 = arith.truncf %12 : vector<64x64xf32> to vector<64x64xbf16>
    %cst_13 = arith.constant dense<0.000000e+00> : vector<32x64xf32>
    %14 = tpu.matmul %0, %13, %cst_13 {dimension_numbers = #tpu.dot_dimension_numbers<[1], [0], [0], [1], [0, 0, 1, 1], [], []>} : vector<32x64xbf16>, vector<64x64xbf16>, vector<32x64xf32> -> vector<32x64xf32>
    %15 = arith.truncf %14 : vector<32x64xf32> to vector<32x64xbf16>
    %cst_14 = arith.constant dense<0.000000e+00> : vector<32x32xf32>
    %16 = tpu.matmul %15, %0, %cst_14 {dimension_numbers = #tpu.dot_dimension_numbers<[1], [1], [0], [0], [0, 0, 1, 0], [], []>} : vector<32x64xbf16>, vector<32x64xbf16>, vector<32x32xf32> -> vector<32x32xf32>
    %17 = arith.truncf %16 : vector<32x32xf32> to vector<32x32xbf16>
    %c0_15 = arith.constant 0 : index
    %c1_16 = arith.constant 1 : index
    %c0_17 = arith.constant 0 : index
    %c0_18 = arith.constant 0 : index
    %18 = vector.load %arg4[%c0_15, %c1_16, %c0_17, %c0_18] : memref<1x3x32x32xbf16, #tpu.memory_space<vmem>>, vector<1x1x32x32xbf16>
    %19 = vector.shape_cast %18 : vector<1x1x32x32xbf16> to vector<32x32xbf16>
    %20 = vector.shape_cast %17 : vector<32x32xbf16> to vector<1x1x32x32xbf16>
    tpu.vector_store %arg4[%c0_15, %c1_16, %c0_17, %c0_18], %20 {strides = array<i32>} : memref<1x3x32x32xbf16, #tpu.memory_space<vmem>>, vector<1x1x32x32xbf16>,
    %c0_19 = arith.constant 0 : index
    %c2 = arith.constant 2 : index
    %c0_20 = arith.constant 0 : index
    %c0_21 = arith.constant 0 : index
    %21 = vector.load %arg2[%c0_19, %c2, %c0_20, %c0_21] : memref<1x3x64x64xf32, #tpu.memory_space<vmem>>, vector<1x1x64x64xf32>
    %22 = vector.shape_cast %21 : vector<1x1x64x64xf32> to vector<64x64xf32>
    %23 = arith.truncf %22 : vector<64x64xf32> to vector<64x64xbf16>
    %cst_22 = arith.constant dense<0.000000e+00> : vector<32x64xf32>
    %24 = tpu.matmul %0, %23, %cst_22 {dimension_numbers = #tpu.dot_dimension_numbers<[1], [0], [0], [1], [0, 0, 1, 1], [], []>} : vector<32x64xbf16>, vector<64x64xbf16>, vector<32x64xf32> -> vector<32x64xf32>
    %25 = arith.truncf %24 : vector<32x64xf32> to vector<32x64xbf16>
    %cst_23 = arith.constant dense<0.000000e+00> : vector<32x32xf32>
    %26 = tpu.matmul %25, %0, %cst_23 {dimension_numbers = #tpu.dot_dimension_numbers<[1], [1], [0], [0], [0, 0, 1, 0], [], []>} : vector<32x64xbf16>, vector<32x64xbf16>, vector<32x32xf32> -> vector<32x32xf32>
    %27 = arith.truncf %26 : vector<32x32xf32> to vector<32x32xbf16>
    %c0_24 = arith.constant 0 : index
    %c2_25 = arith.constant 2 : index
    %c0_26 = arith.constant 0 : index
    %c0_27 = arith.constant 0 : index
    %28 = vector.load %arg4[%c0_24, %c2_25, %c0_26, %c0_27] : memref<1x3x32x32xbf16, #tpu.memory_space<vmem>>, vector<1x1x32x32xbf16>
    %29 = vector.shape_cast %28 : vector<1x1x32x32xbf16> to vector<32x32xbf16>
    %30 = vector.shape_cast %27 : vector<32x32xbf16> to vector<1x1x32x32xbf16>
    tpu.vector_store %arg4[%c0_24, %c2_25, %c0_26, %c0_27], %30 {strides = array<i32>} : memref<1x3x32x32xbf16, #tpu.memory_space<vmem>>, vector<1x1x32x32xbf16>,
    return
  }
  func.func @transform_0(%arg0: i32, %arg1: i32) -> (i32, i32, i32, i32) {
    %c0_i32 = arith.constant 0 : i32
    %c0_i32_0 = arith.constant 0 : i32
    %c0_i32_1 = arith.constant 0 : i32
    return %arg0, %arg1, %c0_i32, %c0_i32_0 : i32, i32, i32, i32
  }
  func.func @transform_1(%arg0: i32, %arg1: i32) -> (i32, i32) {
    %c0_i32 = arith.constant 0 : i32
    %c0_i32_0 = arith.constant 0 : i32
    %c0_i32_1 = arith.constant 0 : i32
    return %c0_i32, %c0_i32_0 : i32, i32
  }
  func.func @transform_2(%arg0: i32, %arg1: i32) -> (i32, i32, i32, i32) {
    %c0_i32 = arith.constant 0 : i32
    %c0_i32_0 = arith.constant 0 : i32
    %c0_i32_1 = arith.constant 0 : i32
    return %arg0, %arg1, %c0_i32, %c0_i32_0 : i32, i32, i32, i32
  }
}

module attributes {stable_mosaic.version = 11 : i64} {
  func.func @_proj_loss_kernel(%arg0: memref<1x3072xbf16, #tpu.memory_space<vmem>>, %arg1: memref<2x1024xf32, #tpu.memory_space<vmem>>, %arg2: memref<3072x512xbf16, #tpu.memory_space<vmem>>, %arg3: memref<1x512xf32, #tpu.memory_space<vmem>>, %arg4: memref<1024x512xbf16, #tpu.memory_space<vmem>>, %arg5: memref<1x512xf32, #tpu.memory_space<vmem>>, %arg6: memref<1x2xf32, #tpu.memory_space<vmem>>) attributes {dimension_semantics = [], scalar_prefetch = 0 : i64, scratch_operands = 0 : i64, tpu.core_type = #tpu.core_type<tc>} {
    %c0 = arith.constant 0 : index
    %c0_0 = arith.constant 0 : index
    %0 = vector.load %arg0[%c0, %c0_0] : memref<1x3072xbf16, #tpu.memory_space<vmem>>, vector<1x3072xbf16>
    %c0_1 = arith.constant 0 : index
    %c0_2 = arith.constant 0 : index
    %1 = vector.load %arg2[%c0_1, %c0_2] : memref<3072x512xbf16, #tpu.memory_space<vmem>>, vector<3072x512xbf16>
    %cst = arith.constant dense<0.000000e+00> : vector<1x512xf32>
    %2 = tpu.matmul %0, %1, %cst {dimension_numbers = #tpu.dot_dimension_numbers<[1], [0], [0], [1], [0, 0, 1, 1], [], []>} : vector<1x3072xbf16>, vector<3072x512xbf16>, vector<1x512xf32> -> vector<1x512xf32>
    %c0_3 = arith.constant 0 : index
    %c0_4 = arith.constant 0 : index
    %3 = vector.load %arg3[%c0_3, %c0_4] : memref<1x512xf32, #tpu.memory_space<vmem>>, vector<1x512xf32>
    %4 = arith.addf %2, %3 : vector<1x512xf32>
    %c0_5 = arith.constant 0 : index
    %c0_6 = arith.constant 0 : index
    %5 = vector.load %arg1[%c0_5, %c0_6] : memref<2x1024xf32, #tpu.memory_space<vmem>>, vector<2x1024xf32>
    %6 = arith.truncf %5 : vector<2x1024xf32> to vector<2x1024xbf16>
    %c0_7 = arith.constant 0 : index
    %c0_8 = arith.constant 0 : index
    %7 = vector.load %arg4[%c0_7, %c0_8] : memref<1024x512xbf16, #tpu.memory_space<vmem>>, vector<1024x512xbf16>
    %cst_9 = arith.constant dense<0.000000e+00> : vector<2x512xf32>
    %8 = tpu.matmul %6, %7, %cst_9 {dimension_numbers = #tpu.dot_dimension_numbers<[1], [0], [0], [1], [0, 0, 1, 1], [], []>} : vector<2x1024xbf16>, vector<1024x512xbf16>, vector<2x512xf32> -> vector<2x512xf32>
    %c0_10 = arith.constant 0 : index
    %c0_11 = arith.constant 0 : index
    %9 = vector.load %arg5[%c0_10, %c0_11] : memref<1x512xf32, #tpu.memory_space<vmem>>, vector<1x512xf32>
    %10 = vector.broadcast %9 : vector<1x512xf32> to vector<2x512xf32>
    %11 = arith.addf %8, %10 : vector<2x512xf32>
    %12 = arith.mulf %4, %4 : vector<1x512xf32>
    %cst_12 = arith.constant dense<0.000000e+00> : vector<1xf32>
    %13 = vector.multi_reduction <add>, %12, %cst_12 [1] : vector<1x512xf32> to vector<1xf32>
    %14 = vector.shape_cast %13 : vector<1xf32> to vector<1x1xf32>
    %cst_13 = arith.constant 9.99999996E-13 : f32
    %15 = vector.broadcast %cst_13 : f32 to vector<1x1xf32>
    %16 = arith.addf %14, %15 : vector<1x1xf32>
    %17 = math.rsqrt %16 : vector<1x1xf32>
    %18 = vector.broadcast %17 : vector<1x1xf32> to vector<1x512xf32>
    %19 = arith.mulf %4, %18 : vector<1x512xf32>
    %20 = arith.mulf %11, %11 : vector<2x512xf32>
    %cst_14 = arith.constant dense<0.000000e+00> : vector<2xf32>
    %21 = vector.multi_reduction <add>, %20, %cst_14 [1] : vector<2x512xf32> to vector<2xf32>
    %22 = vector.shape_cast %21 : vector<2xf32> to vector<2x1xf32>
    %cst_15 = arith.constant 9.99999996E-13 : f32
    %23 = vector.broadcast %cst_15 : f32 to vector<2x1xf32>
    %24 = arith.addf %22, %23 : vector<2x1xf32>
    %25 = math.rsqrt %24 : vector<2x1xf32>
    %26 = vector.broadcast %25 : vector<2x1xf32> to vector<2x512xf32>
    %27 = arith.mulf %11, %26 : vector<2x512xf32>
    %cst_16 = arith.constant dense<0.000000e+00> : vector<1x2xf32>
    %28 = tpu.matmul %19, %27, %cst_16 {dimension_numbers = #tpu.dot_dimension_numbers<[1], [1], [0], [0], [0, 0, 1, 0], [], []>} : vector<1x512xf32>, vector<2x512xf32>, vector<1x2xf32> -> vector<1x2xf32>
    %cst_17 = arith.constant 1.07250822 : f32
    %29 = vector.broadcast %cst_17 : f32 to vector<1x2xf32>
    %30 = arith.mulf %28, %29 : vector<1x2xf32>
    %cst_18 = arith.constant 1.000000e+00 : f32
    %31 = vector.broadcast %cst_18 : f32 to vector<1x2xf32>
    %32 = arith.subf %31, %30 : vector<1x2xf32>
    %c0_19 = arith.constant 0 : index
    %c0_20 = arith.constant 0 : index
    %33 = vector.load %arg6[%c0_19, %c0_20] : memref<1x2xf32, #tpu.memory_space<vmem>>, vector<1x2xf32>
    tpu.vector_store %arg6[%c0_19, %c0_20], %32 {strides = array<i32>} : memref<1x2xf32, #tpu.memory_space<vmem>>, vector<1x2xf32>,
    return
  }
}

</mosaic_0001>

<llo_original>
// kernel: soundclip_loss.2
$region0: #{soundclip_loss.2}
  #allocation0 [shape = 'u32[]', space=smem, size = 0x4, offset = 0x4, fixed_abs, tag = 'smem constant byte address 0x4 - core index']
  #allocation1 [shape = 'u32[72,128]{1,0:T(1,128)}', space=vmem, size = 0x9000, scoped, tag = 'internal scratch']
  %s0 = inlined_call_operand.vmem [shape: f32[1,3,64,64], index: 0, kind: input, shape index: {}]
  %s1 = inlined_call_operand.hbm [shape: bf16[32,64], index: 1, kind: input, shape index: {}]
  %s2 = inlined_call_operand.vmem [shape: bf16[1,3,32,32], index: 2, kind: output, shape index: {}]
  %s3 = sld [smem:[#allocation0]]
  $region22: #{soundclip_loss.2} parent=0
    _
  %s5 = ssub.s32 1, %s3
  %s6 = scalar_select 0, %s5, %s3
  $region1: #{soundclip_loss.2} parent=0
    #allocation2 [shape = 'u8[8192]{0}', space=vmem, size = 0x2000, scoped, tag = 'input window, operand 1, single buffered']
    #allocation3 [shape = 's32[1]{0}', space=sflag, size = 0x4, scoped, tag = 'scoped memory for soundclip_loss.2']
    %7 = vsyncpa [#allocation3], 0
    // Predicated region
    $region2: #{soundclip_loss.2} parent=1 // pred_check
      _
    $region3: #{soundclip_loss.2} parent=1 // pred_check_branch
      %9 = sbr.rel (0) target = $region5
    $region4: #{soundclip_loss.2} parent=1 // pred_region
      _
    $region5: #{soundclip_loss.2} parent=1 // pred_fallthru
      _
    // Predicated region
    $region6: #{soundclip_loss.2} parent=1 // pred_check
      _
    $region7: #{soundclip_loss.2} parent=1 // pred_check_branch
      %11 = sbr.rel (0) target = $region9
    $region8: #{soundclip_loss.2} parent=1 // pred_region
      %13 = vsyncadd [#allocation3], 0
      %s14 = sshll.u32 %s1, 4
      %s15 = int_to_ptr.hbm [resolvable:$true] %s14
      %s16 = sshll.u32 [#allocation2], 4
      %s17 = int_to_ptr.vmem [resolvable:$true] %s16
      %22 = dma.hbm_to_vmem [thread:$0]  %s15, 256, %s17, [#allocation3], 64, 64, 4
    $region9: #{soundclip_loss.2} parent=1 // pred_fallthru
      _
    // Predicated region
    $region10: #{soundclip_loss.2} parent=1 // pred_check
      _
    $region11: #{soundclip_loss.2} parent=1 // pred_check_branch
      %24 = sbr.rel (0) target = $region13
    $region12: #{soundclip_loss.2} parent=1 // pred_region
      %26 = dma.done [#allocation3], 256
    $region13: #{soundclip_loss.2} parent=1 // pred_fallthru
      _
    %v28 = vld [vmem:[#allocation2] sm:$0xf]
    %v29 = vld [vmem:[#allocation2 + $0x4] sm:$0xf]
    %v30 = vld [vmem:[#allocation2 + $0x8] sm:$0xf]
    %v31 = vld [vmem:[#allocation2 + $0xc] sm:$0xf]
    %v32 = vld [vmem:[%s0] sm:$0xff]
    %v33 = vld [vmem:[%s0 + $0x8] sm:$0xff]
    %v34 = vld [vmem:[%s0 + $0x10] sm:$0xff]
    %v35 = vld [vmem:[%s0 + $0x18] sm:$0xff]
    %v36 = vld [vmem:[%s0 + $0x20] sm:$0xff]
    %v37 = vld [vmem:[%s0 + $0x28] sm:$0xff]
    %v38 = vld [vmem:[%s0 + $0x30] sm:$0xff]
    %v39 = vld [vmem:[%s0 + $0x38] sm:$0xff]
    %v40 = vpack.c.bf16 %v33, %v32
    %v41 = vpack.c.bf16 %v35, %v34
    %v42 = vpack.c.bf16 %v37, %v36
    %v43 = vpack.c.bf16 %v39, %v38
    %v48 = vunpack.c.l.b16 %v28
    %v49 = vunpack.c.l.b16 %v29
    %v50 = vunpack.c.l.b16 %v30
    %v51 = vunpack.c.l.b16 %v31
    %v52 = vpack.c.b16 %v49, %v48
    %v53 = vpack.c.b16 %v51, %v50
    %vm54 = vcmask 523264
    %v56 = vsel %vm54, %v52, 0
    %v59 = vsel %vm54, %v53, 0
    %61 = vmatpush.bf16.msra.mxu0 0
    %62 = vmatpush.bf16.msra.mxu0 0
    %63 = vmatpush.bf16.msra.mxu0 0
    %64 = vmatpush.bf16.msra.mxu0 0
    %65 = vmatpush.bf16.msra.mxu0 %v43
    %66 = vmatpush.bf16.msra.mxu0 %v42
    %67 = vmatpush.bf16.msra.mxu0 %v41
    %68 = vmatpush.bf16.msra.mxu0 %v40
    %69 = vmatmul.bf16.gmra.mxu0 %v56
    %v70 = vpop.f32.mrf.mxu0
    %v71 = vadd.f32 0.0, %v70
    %v72 = vpop.f32.mrf.mxu0
    %v73 = vadd.f32 0.0, %v72
    %74 = vmatmul.bf16.gmra.mxu0 %v59
    %v75 = vpop.f32.mrf.mxu0
    %v76 = vadd.f32 0.0, %v75
    %v77 = vpop.f32.mrf.mxu0
    %v78 = vadd.f32 0.0, %v77
    %79 = vdwg.mxu0
    %v80 = vpack.c.bf16 %v73, %v71
    %v81 = vpack.c.bf16 %v78, %v76
    %v83 = vsel %vm54, %v80, 0
    %v86 = vsel %vm54, %v81, 0
    %88 = vmatpush.bf16.xpose.msra.mxu0 0
    %89 = vmatpush.bf16.xpose.msra.mxu0 0
    %90 = vmatpush.bf16.xpose.msra.mxu0 0
    %91 = vmatpush.bf16.xpose.msra.mxu0 0
    %92 = vmatpush.bf16.xpose.msra.mxu0 0
    %93 = vmatpush.bf16.xpose.msra.mxu0 0
    %94 = vmatpush.bf16.xpose.msra.mxu0 %v59
    %95 = vmatpush.bf16.xpose.msra.mxu0 %v56
    %96 = vmatmul.bf16.gmra.mxu0 %v83
    %v97 = vpop.f32.mrf.mxu0
    %v98 = vadd.f32 0.0, %v97
    %v99 = vpop.f32.mrf.mxu0
    %v100 = vadd.f32 0.0, %v99
    %101 = vmatmul.bf16.gmra.mxu0 %v86
    %v102 = vpop.f32.mrf.mxu0
    %v103 = vadd.f32 0.0, %v102
    %v104 = vpop.f32.mrf.mxu0
    %v105 = vadd.f32 0.0, %v104
    %106 = vdwg.mxu0
    %v107 = vpack.c.bf16 %v98, %v98
    %v108 = vpack.c.bf16 %v100, %v100
    %v109 = vpack.c.bf16 %v103, %v103
    %v110 = vpack.c.bf16 %v105, %v105
    %vm111 = vcmask 257024
    %112 = vst.msk [vmem:[%s2] sm:$0xf] %vm111, %v107
    %113 = vst.msk [vmem:[%s2 + $0x4] sm:$0xf] %vm111, %v108
    %114 = vst.msk [vmem:[%s2 + $0x8] sm:$0xf] %vm111, %v109
    %115 = vst.msk [vmem:[%s2 + $0xc] sm:$0xf] %vm111, %v110
    %s116 = scalar_lea.vmem %s0, 64
    %v117 = vld [vmem:[%s116] sm:$0xff]
    %v118 = vld [vmem:[%s116 + $0x8] sm:$0xff]
    %v119 = vld [vmem:[%s116 + $0x10] sm:$0xff]
    %v120 = vld [vmem:[%s116 + $0x18] sm:$0xff]
    %v121 = vld [vmem:[%s116 + $0x20] sm:$0xff]
    %v122 = vld [vmem:[%s116 + $0x28] sm:$0xff]
    %v123 = vld [vmem:[%s116 + $0x30] sm:$0xff]
    %v124 = vld [vmem:[%s116 + $0x38] sm:$0xff]
    %v125 = vpack.c.bf16 %v118, %v117
    %v126 = vpack.c.bf16 %v120, %v119
    %v127 = vpack.c.bf16 %v122, %v121
    %v128 = vpack.c.bf16 %v124, %v123
    %129 = vmatpush.bf16.msra.mxu0 0
    %130 = vmatpush.bf16.msra.mxu0 0
    %131 = vmatpush.bf16.msra.mxu0 0
    %132 = vmatpush.bf16.msra.mxu0 0
    %133 = vmatpush.bf16.msra.mxu0 %v128
    %134 = vmatpush.bf16.msra.mxu0 %v127
    %135 = vmatpush.bf16.msra.mxu0 %v126
    %136 = vmatpush.bf16.msra.mxu0 %v125
    %137 = vmatmul.bf16.gmra.mxu0 %v56
    %v138 = vpop.f32.mrf.mxu0
    %v139 = vadd.f32 0.0, %v138
    %v140 = vpop.f32.mrf.mxu0
    %v141 = vadd.f32 0.0, %v140
    %142 = vmatmul.bf16.gmra.mxu0 %v59
    %v143 = vpop.f32.mrf.mxu0
    %v144 = vadd.f32 0.0, %v143
    %v145 = vpop.f32.mrf.mxu0
    %v146 = vadd.f32 0.0, %v145
    %147 = vdwg.mxu0
    %v148 = vpack.c.bf16 %v141, %v139
    %v149 = vpack.c.bf16 %v146, %v144
    %v151 = vsel %vm54, %v148, 0
    %v154 = vsel %vm54, %v149, 0
    %156 = vmatpush.bf16.xpose.msra.mxu0 0
    %157 = vmatpush.bf16.xpose.msra.mxu0 0
    %158 = vmatpush.bf16.xpose.msra.mxu0 0
    %159 = vmatpush.bf16.xpose.msra.mxu0 0
    %160 = vmatpush.bf16.xpose.msra.mxu0 0
    %161 = vmatpush.bf16.xpose.msra.mxu0 0
    %162 = vmatpush.bf16.xpose.msra.mxu0 %v59
    %163 = vmatpush.bf16.xpose.msra.mxu0 %v56
    %164 = vmatmul.bf16.gmra.mxu0 %v151
    %v165 = vpop.f32.mrf.mxu0
    %v166 = vadd.f32 0.0, %v165
    %v167 = vpop.f32.mrf.mxu0
    %v168 = vadd.f32 0.0, %v167
    %169 = vmatmul.bf16.gmra.mxu0 %v154
    %v170 = vpop.f32.mrf.mxu0
    %v171 = vadd.f32 0.0, %v170
    %v172 = vpop.f32.mrf.mxu0
    %v173 = vadd.f32 0.0, %v172
    %174 = vdwg.mxu0
    %v175 = vpack.c.bf16 %v166, %v166
    %v176 = vpack.c.bf16 %v168, %v168
    %v177 = vpack.c.bf16 %v171, %v171
    %v178 = vpack.c.bf16 %v173, %v173
    %s179 = scalar_lea.vmem %s2, 16
    %180 = vst.msk [vmem:[%s179] sm:$0xf] %vm111, %v175
    %181 = vst.msk [vmem:[%s179 + $0x4] sm:$0xf] %vm111, %v176
    %182 = vst.msk [vmem:[%s179 + $0x8] sm:$0xf] %vm111, %v177
    %183 = vst.msk [vmem:[%s179 + $0xc] sm:$0xf] %vm111, %v178
    %s184 = scalar_lea.vmem %s0, 128
    %v185 = vld [vmem:[%s184] sm:$0xff]
    %v186 = vld [vmem:[%s184 + $0x8] sm:$0xff]
    %v187 = vld [vmem:[%s184 + $0x10] sm:$0xff]
    %v188 = vld [vmem:[%s184 + $0x18] sm:$0xff]
    %v189 = vld [vmem:[%s184 + $0x20] sm:$0xff]
    %v190 = vld [vmem:[%s184 + $0x28] sm:$0xff]
    %v191 = vld [vmem:[%s184 + $0x30] sm:$0xff]
    %v192 = vld [vmem:[%s184 + $0x38] sm:$0xff]
    %v193 = vpack.c.bf16 %v186, %v185
    %v194 = vpack.c.bf16 %v188, %v187
    %v195 = vpack.c.bf16 %v190, %v189
    %v196 = vpack.c.bf16 %v192, %v191
    %197 = vmatpush.bf16.msra.mxu0 0
    %198 = vmatpush.bf16.msra.mxu0 0
    %199 = vmatpush.bf16.msra.mxu0 0
    %200 = vmatpush.bf16.msra.mxu0 0
    %201 = vmatpush.bf16.msra.mxu0 %v196
    %202 = vmatpush.bf16.msra.mxu0 %v195
    %203 = vmatpush.bf16.msra.mxu0 %v194
    %204 = vmatpush.bf16.msra.mxu0 %v193
    %205 = vmatmul.bf16.gmra.mxu0 %v56
    %v206 = vpop.f32.mrf.mxu0
    %v207 = vadd.f32 0.0, %v206
    %v208 = vpop.f32.mrf.mxu0
    %v209 = vadd.f32 0.0, %v208
    %210 = vmatmul.bf16.gmra.mxu0 %v59
    %v211 = vpop.f32.mrf.mxu0
    %v212 = vadd.f32 0.0, %v211
    %v213 = vpop.f32.mrf.mxu0
    %v214 = vadd.f32 0.0, %v213
    %215 = vdwg.mxu0
    %v216 = vpack.c.bf16 %v209, %v207
    %v217 = vpack.c.bf16 %v214, %v212
    %v219 = vsel %vm54, %v216, 0
    %v222 = vsel %vm54, %v217, 0
    %224 = vmatpush.bf16.xpose.msra.mxu0 0
    %225 = vmatpush.bf16.xpose.msra.mxu0 0
    %226 = vmatpush.bf16.xpose.msra.mxu0 0
    %227 = vmatpush.bf16.xpose.msra.mxu0 0
    %228 = vmatpush.bf16.xpose.msra.mxu0 0
    %229 = vmatpush.bf16.xpose.msra.mxu0 0
    %230 = vmatpush.bf16.xpose.msra.mxu0 %v59
    %231 = vmatpush.bf16.xpose.msra.mxu0 %v56
    %232 = vmatmul.bf16.gmra.mxu0 %v219
    %v233 = vpop.f32.mrf.mxu0
    %v234 = vadd.f32 0.0, %v233
    %v235 = vpop.f32.mrf.mxu0
    %v236 = vadd.f32 0.0, %v235
    %237 = vmatmul.bf16.gmra.mxu0 %v222
    %v238 = vpop.f32.mrf.mxu0
    %v239 = vadd.f32 0.0, %v238
    %v240 = vpop.f32.mrf.mxu0
    %v241 = vadd.f32 0.0, %v240
    %242 = vdwg.mxu0
    %v243 = vpack.c.bf16 %v234, %v234
    %v244 = vpack.c.bf16 %v236, %v236
    %v245 = vpack.c.bf16 %v239, %v239
    %v246 = vpack.c.bf16 %v241, %v241
    %s247 = scalar_lea.vmem %s2, 32
    %248 = vst.msk [vmem:[%s247] sm:$0xf] %vm111, %v243
    %249 = vst.msk [vmem:[%s247 + $0x4] sm:$0xf] %vm111, %v244
    %250 = vst.msk [vmem:[%s247 + $0x8] sm:$0xf] %vm111, %v245
    %251 = vst.msk [vmem:[%s247 + $0xc] sm:$0xf] %vm111, %v246
    // Predicated region
    $region14: #{soundclip_loss.2} parent=1 // pred_check
      _
    $region15: #{soundclip_loss.2} parent=1 // pred_check_branch
      %253 = sbr.rel (0) target = $region17
    $region16: #{soundclip_loss.2} parent=1 // pred_region
      _
    $region17: #{soundclip_loss.2} parent=1 // pred_fallthru
      _
    // Predicated region
    $region18: #{soundclip_loss.2} parent=1 // pred_check
      _
    $region19: #{soundclip_loss.2} parent=1 // pred_check_branch
      %255 = sbr.rel (0) target = $region21
    $region20: #{soundclip_loss.2} parent=1 // pred_region
      _
    $region21: #{soundclip_loss.2} parent=1 // pred_fallthru
      _
    %256 = vsyncpa [#allocation3], 1

// kernel: soundclip_loss.3
$region0: #{soundclip_loss.3}
  #allocation0 [shape = 'u32[]', space=smem, size = 0x4, offset = 0x4, fixed_abs, tag = 'smem constant byte address 0x4 - core index']
  #allocation1 [shape = 'u32[72,128]{1,0:T(1,128)}', space=vmem, size = 0x9000, scoped, tag = 'internal scratch']
  %s0 = inlined_call_operand.vmem [shape: bf16[1,3072], index: 0, kind: input, shape index: {}]
  %s1 = inlined_call_operand.vmem [shape: f32[2,1024], index: 1, kind: input, shape index: {}]
  %s2 = inlined_call_operand.hbm [shape: bf16[3072,512], index: 2, kind: input, shape index: {}]
  %s3 = inlined_call_operand.hbm [shape: f32[1,512], index: 3, kind: input, shape index: {}]
  %s4 = inlined_call_operand.hbm [shape: bf16[1024,512], index: 4, kind: input, shape index: {}]
  %s5 = inlined_call_operand.hbm [shape: f32[1,512], index: 5, kind: input, shape index: {}]
  %s6 = inlined_call_operand.hbm [shape: f32[1,2], index: 6, kind: output, shape index: {}]
  %s7 = sld [smem:[#allocation0]]
  $region50: #{soundclip_loss.3} parent=0
    _
  %s9 = ssub.s32 1, %s7
  %s10 = scalar_select 0, %s9, %s7
  $region1: #{soundclip_loss.3} parent=0
    #allocation2 [shape = 'u8[3145728]{0}', space=vmem, size = 0x300000, scoped, tag = 'input window, operand 2, single buffered']
    #allocation3 [shape = 's32[1]{0}', space=sflag, size = 0x4, scoped, tag = 'scoped memory for soundclip_loss.3']
    #allocation4 [shape = 's32[1]{0}', space=sflag, size = 0x4, scoped, tag = 'scoped memory for soundclip_loss.3']
    #allocation5 [shape = 'u8[2048]{0}', space=vmem, size = 0x800, scoped, tag = 'input window, operand 3, single buffered']
    #allocation6 [shape = 's32[1]{0}', space=sflag, size = 0x4, scoped, tag = 'scoped memory for soundclip_loss.3']
    #allocation7 [shape = 'u8[1048576]{0}', space=vmem, size = 0x100000, scoped, tag = 'input window, operand 4, single buffered']
    #allocation8 [shape = 'u8[2048]{0}', space=vmem, size = 0x800, scoped, tag = 'input window, operand 5, single buffered']
    #allocation9 [shape = 's32[1]{0}', space=sflag, size = 0x4, scoped, tag = 'scoped memory for soundclip_loss.3']
    #allocation10 [shape = 'u8[512]{0}', space=vmem, size = 0x400, scoped, tag = 'output window, operand 0, single buffered']
    %11 = vsyncpa [#allocation3], 0
    %12 = vsyncpa [#allocation6], 0
    %13 = vsyncpa [#allocation9], 0
    %14 = vsyncpa [#allocation4], 0
    // Predicated region
    $region2: #{soundclip_loss.3} parent=1 // pred_check
      _
    $region3: #{soundclip_loss.3} parent=1 // pred_check_branch
      %16 = sbr.rel (0) target = $region5
    $region4: #{soundclip_loss.3} parent=1 // pred_region
      _
    $region5: #{soundclip_loss.3} parent=1 // pred_fallthru
      _
    // Predicated region
    $region6: #{soundclip_loss.3} parent=1 // pred_check
      _
    $region7: #{soundclip_loss.3} parent=1 // pred_check_branch
      %18 = sbr.rel (0) target = $region9
    $region8: #{soundclip_loss.3} parent=1 // pred_region
      _
    $region9: #{soundclip_loss.3} parent=1 // pred_fallthru
      _
    // Predicated region
    $region10: #{soundclip_loss.3} parent=1 // pred_check
      _
    $region11: #{soundclip_loss.3} parent=1 // pred_check_branch
      %20 = sbr.rel (0) target = $region13
    $region12: #{soundclip_loss.3} parent=1 // pred_region
      %22 = vsyncadd [#allocation3], 0
      %s23 = sshll.u32 %s2, 4
      %s24 = int_to_ptr.hbm [resolvable:$true] %s23
      %s25 = sshll.u32 [#allocation2], 4
      %s26 = int_to_ptr.vmem [resolvable:$true] %s25
      %31 = dma.hbm_to_vmem [thread:$0]  %s24, 98304, %s26, [#allocation3], 256, 256, 16
    $region13: #{soundclip_loss.3} parent=1 // pred_fallthru
      _
    // Predicated region
    $region14: #{soundclip_loss.3} parent=1 // pred_check
      _
    $region15: #{soundclip_loss.3} parent=1 // pred_check_branch
      %33 = sbr.rel (0) target = $region17
    $region16: #{soundclip_loss.3} parent=1 // pred_region
      %35 = vsyncadd [#allocation6], 0
      %s37 = sshll.u32 %s3, 4
      %s38 = int_to_ptr.hbm [resolvable:$true] %s37
      %s39 = sshll.u32 [#allocation5], 4
      %s40 = int_to_ptr.vmem [resolvable:$true] %s39
      %42 = dma.hbm_to_vmem [thread:$0]  %s38, 64, %s40, [#allocation6]
    $region17: #{soundclip_loss.3} parent=1 // pred_fallthru
      _
    // Predicated region
    $region18: #{soundclip_loss.3} parent=1 // pred_check
      _
    $region19: #{soundclip_loss.3} parent=1 // pred_check_branch
      %44 = sbr.rel (0) target = $region21
    $region20: #{soundclip_loss.3} parent=1 // pred_region
      %46 = vsyncadd [#allocation6], 0
      %s47 = sshll.u32 %s4, 4
      %s48 = int_to_ptr.hbm [resolvable:$true] %s47
      %s49 = sshll.u32 [#allocation7], 4
      %s50 = int_to_ptr.vmem [resolvable:$true] %s49
      %55 = dma.hbm_to_vmem [thread:$0]  %s48, 32768, %s50, [#allocation6], 256, 256, 16
    $region21: #{soundclip_loss.3} parent=1 // pred_fallthru
      _
    // Predicated region
    $region22: #{soundclip_loss.3} parent=1 // pred_check
      _
    $region23: #{soundclip_loss.3} parent=1 // pred_check_branch
      %57 = sbr.rel (0) target = $region25
    $region24: #{soundclip_loss.3} parent=1 // pred_region
      %59 = vsyncadd [#allocation9], 0
      %s61 = sshll.u32 %s5, 4
      %s62 = int_to_ptr.hbm [resolvable:$true] %s61
      %s63 = sshll.u32 [#allocation8], 4
      %s64 = int_to_ptr.vmem [resolvable:$true] %s63
      %66 = dma.hbm_to_vmem [thread:$0]  %s62, 64, %s64, [#allocation9]
    $region25: #{soundclip_loss.3} parent=1 // pred_fallthru
      _
    // Predicated region
    $region26: #{soundclip_loss.3} parent=1 // pred_check
      _
    $region27: #{soundclip_loss.3} parent=1 // pred_check_branch
      %68 = sbr.rel (0) target = $region29
    $region28: #{soundclip_loss.3} parent=1 // pred_region
      %70 = dma.done [#allocation3], 98304
    $region29: #{soundclip_loss.3} parent=1 // pred_fallthru
      _
    // Predicated region
    $region30: #{soundclip_loss.3} parent=1 // pred_check
      _
    $region31: #{soundclip_loss.3} parent=1 // pred_check_branch
      %72 = sbr.rel (0) target = $region33
    $region32: #{soundclip_loss.3} parent=1 // pred_region
      %74 = dma.done [#allocation6], 64
    $region33: #{soundclip_loss.3} parent=1 // pred_fallthru
      _
    // Predicated region
    $region34: #{soundclip_loss.3} parent=1 // pred_check
      _
    $region35: #{soundclip_loss.3} parent=1 // pred_check_branch
      %76 = sbr.rel (0) target = $region37
    $region36: #{soundclip_loss.3} parent=1 // pred_region
      %78 = dma.done [#allocation6], 32768
    $region37: #{soundclip_loss.3} parent=1 // pred_fallthru
      _
    // Predicated region
    $region38: #{soundclip_loss.3} parent=1 // pred_check
      _
    $region39: #{soundclip_loss.3} parent=1 // pred_check_branch
      %80 = sbr.rel (0) target = $region41
    $region40: #{soundclip_loss.3} parent=1 // pred_region
      %82 = dma.done [#allocation9], 64
    $region41: #{soundclip_loss.3} parent=1 // pred_fallthru
      _
    %v83 = vld [vmem:[%s0] sm:$0xff]
    %v84 = vld [vmem:[%s0 + $0x8] sm:$0xff]
    %v85 = vld [vmem:[%s0 + $0x10] sm:$0xff]
    %v86 = vld [vmem:[#allocation2] sm:$0xff]
    %v87 = vld [vmem:[#allocation2 + $0x8] sm:$0xff]
    %v88 = vld [vmem:[#allocation2 + $0x10] sm:$0xff]
    %v89 = vld [vmem:[#allocation2 + $0x18] sm:$0xff]
    %v90 = vld [vmem:[#allocation2 + $0x20] sm:$0xff]
    %v91 = vld [vmem:[#allocation2 + $0x28] sm:$0xff]
    %v92 = vld [vmem:[#allocation2 + $0x30] sm:$0xff]
    %v93 = vld [vmem:[#allocation2 + $0x38] sm:$0xff]
    %v94 = vld [vmem:[#allocation2 + $0x40] sm:$0xff]
    %v95 = vld [vmem:[#allocation2 + $0x48] sm:$0xff]
    %v96 = vld [vmem:[#allocation2 + $0x50] sm:$0xff]
    %v97 = vld [vmem:[#allocation2 + $0x58] sm:$0xff]
    %v98 = vld [vmem:[#allocation2 + $0x60] sm:$0xff]
    %v99 = vld [vmem:[#allocation2 + $0x68] sm:$0xff]
    %v100 = vld [vmem:[#allocation2 + $0x70] sm:$0xff]
    %v101 = vld [vmem:[#allocation2 + $0x78] sm:$0xff]
    %v102 = vld [vmem:[#allocation2 + $0x80] sm:$0xff]
    %v103 = vld [vmem:[#allocation2 + $0x88] sm:$0xff]
    %v104 = vld [vmem:[#allocation2 + $0x90] sm:$0xff]
    %v105 = vld [vmem:[#allocation2 + $0x98] sm:$0xff]
    %v106 = vld [vmem:[#allocation2 + $0xa0] sm:$0xff]
    %v107 = vld [vmem:[#allocation2 + $0xa8] sm:$0xff]
    %v108 = vld [vmem:[#allocation2 + $0xb0] sm:$0xff]
    %v109 = vld [vmem:[#allocation2 + $0xb8] sm:$0xff]
    %v110 = vld [vmem:[#allocation2 + $0xc0] sm:$0xff]
    %v111 = vld [vmem:[#allocation2 + $0xc8] sm:$0xff]
    %v112 = vld [vmem:[#allocation2 + $0xd0] sm:$0xff]
    %v113 = vld [vmem:[#allocation2 + $0xd8] sm:$0xff]
    %v114 = vld [vmem:[#allocation2 + $0xe0] sm:$0xff]
    %v115 = vld [vmem:[#allocation2 + $0xe8] sm:$0xff]
    %v116 = vld [vmem:[#allocation2 + $0xf0] sm:$0xff]
    %v117 = vld [vmem:[#allocation2 + $0xf8] sm:$0xff]
    %v118 = vld [vmem:[#allocation2 + $0x100] sm:$0xff]
    %v119 = vld [vmem:[#allocation2 + $0x108] sm:$0xff]
    %v120 = vld [vmem:[#allocation2 + $0x110] sm:$0xff]
    %v121 = vld [vmem:[#allocation2 + $0x118] sm:$0xff]
    %v122 = vld [vmem:[#allocation2 + $0x120] sm:$0xff]
    %v123 = vld [vmem:[#allocation2 + $0x128] sm:$0xff]
    %v124 = vld [vmem:[#allocation2 + $0x130] sm:$0xff]
    %v125 = vld [vmem:[#allocation2 + $0x138] sm:$0xff]
    %v126 = vld [vmem:[#allocation2 + $0x140] sm:$0xff]
    %v127 = vld [vmem:[#allocation2 + $0x148] sm:$0xff]
    %v128 = vld [vmem:[#allocation2 + $0x150] sm:$0xff]
    %v129 = vld [vmem:[#allocation2 + $0x158] sm:$0xff]
    %v130 = vld [vmem:[#allocation2 + $0x160] sm:$0xff]
    %v131 = vld [vmem:[#allocation2 + $0x168] sm:$0xff]
    %v132 = vld [vmem:[#allocation2 + $0x170] sm:$0xff]
    %v133 = vld [vmem:[#allocation2 + $0x178] sm:$0xff]
    %v134 = vld [vmem:[#allocation2 + $0x180] sm:$0xff]
    %v135 = vld [vmem:[#allocation2 + $0x188] sm:$0xff]
    %v136 = vld [vmem:[#allocation2 + $0x190] sm:$0xff]
    %v137 = vld [vmem:[#allocation2 + $0x198] sm:$0xff]
    %v138 = vld [vmem:[#allocation2 + $0x1a0] sm:$0xff]
    %v139 = vld [vmem:[#allocation2 + $0x1a8] sm:$0xff]
    %v140 = vld [vmem:[#allocation2 + $0x1b0] sm:$0xff]
    %v141 = vld [vmem:[#allocation2 + $0x1b8] sm:$0xff]
    %v142 = vld [vmem:[#allocation2 + $0x1c0] sm:$0xff]
    %v143 = vld [vmem:[#allocation2 + $0x1c8] sm:$0xff]
    %v144 = vld [vmem:[#allocation2 + $0x1d0] sm:$0xff]
    %v145 = vld [vmem:[#allocation2 + $0x1d8] sm:$0xff]
    %v146 = vld [vmem:[#allocation2 + $0x1e0] sm:$0xff]
    %v147 = vld [vmem:[#allocation2 + $0x1e8] sm:$0xff]
    %v148 = vld [vmem:[#allocation2 + $0x1f0] sm:$0xff]
    %v149 = vld [vmem:[#allocation2 + $0x1f8] sm:$0xff]
    %v150 = vld [vmem:[#allocation2 + $0x200] sm:$0xff]
    %v151 = vld [vmem:[#allocation2 + $0x208] sm:$0xff]
    %v152 = vld [vmem:[#allocation2 + $0x210] sm:$0xff]
    %v153 = vld [vmem:[#allocation2 + $0x218] sm:$0xff]
    %v154 = vld [vmem:[#allocation2 + $0x220] sm:$0xff]
    %v155 = vld [vmem:[#allocation2 + $0x228] sm:$0xff]
    %v156 = vld [vmem:[#allocation2 + $0x230] sm:$0xff]
    %v157 = vld [vmem:[#allocation2 + $0x238] sm:$0xff]
    %v158 = vld [vmem:[#allocation2 + $0x240] sm:$0xff]
    %v159 = vld [vmem:[#allocation2 + $0x248] sm:$0xff]
    %v160 = vld [vmem:[#allocation2 + $0x250] sm:$0xff]
    %v161 = vld [vmem:[#allocation2 + $0x258] sm:$0xff]
    %v162 = vld [vmem:[#allocation2 + $0x260] sm:$0xff]
    %v163 = vld [vmem:[#allocation2 + $0x268] sm:$0xff]
    %v164 = vld [vmem:[#allocation2 + $0x270] sm:$0xff]
    %v165 = vld [vmem:[#allocation2 + $0x278] sm:$0xff]
    %v166 = vld [vmem:[#allocation2 + $0x280] sm:$0xff]
    %v167 = vld [vmem:[#allocation2 + $0x288] sm:$0xff]
    %v168 = vld [vmem:[#allocation2 + $0x290] sm:$0xff]
    %v169 = vld [vmem:[#allocation2 + $0x298] sm:$0xff]
    %v170 = vld [vmem:[#allocation2 + $0x2a0] sm:$0xff]
    %v171 = vld [vmem:[#allocation2 + $0x2a8] sm:$0xff]
    %v172 = vld [vmem:[#allocation2 + $0x2b0] sm:$0xff]
    %v173 = vld [vmem:[#allocation2 + $0x2b8] sm:$0xff]
    %v174 = vld [vmem:[#allocation2 + $0x2c0] sm:$0xff]
    %v175 = vld [vmem:[#allocation2 + $0x2c8] sm:$0xff]
    %v176 = vld [vmem:[#allocation2 + $0x2d0] sm:$0xff]
    %v177 = vld [vmem:[#allocation2 + $0x2d8] sm:$0xff]
    %v178 = vld [vmem:[#allocation2 + $0x2e0] sm:$0xff]
    %v179 = vld [vmem:[#allocation2 + $0x2e8] sm:$0xff]
    %v180 = vld [vmem:[#allocation2 + $0x2f0] sm:$0xff]
    %v181 = vld [vmem:[#allocation2 + $0x2f8] sm:$0xff]
    %v182 = vld [vmem:[#allocation2 + $0x300] sm:$0xff]
    %v183 = vld [vmem:[#allocation2 + $0x308] sm:$0xff]
    %v184 = vld [vmem:[#allocation2 + $0x310] sm:$0xff]
    %v185 = vld [vmem:[#allocation2 + $0x318] sm:$0xff]
    %v186 = vld [vmem:[#allocation2 + $0x320] sm:$0xff]
    %v187 = vld [vmem:[#allocation2 + $0x328] sm:$0xff]
    %v188 = vld [vmem:[#allocation2 + $0x330] sm:$0xff]
    %v189 = vld [vmem:[#allocation2 + $0x338] sm:$0xff]
    %v190 = vld [vmem:[#allocation2 + $0x340] sm:$0xff]
    %v191 = vld [vmem:[#allocation2 + $0x348] sm:$0xff]
    %v192 = vld [vmem:[#allocation2 + $0x350] sm:$0xff]
    %v193 = vld [vmem:[#allocation2 + $0x358] sm:$0xff]
    %v194 = vld [vmem:[#allocation2 + $0x360] sm:$0xff]
    %v195 = vld [vmem:[#allocation2 + $0x368] sm:$0xff]
    %v196 = vld [vmem:[#allocation2 + $0x370] sm:$0xff]
    %v197 = vld [vmem:[#allocation2 + $0x378] sm:$0xff]
    %v198 = vld [vmem:[#allocation2 + $0x380] sm:$0xff]
    %v199 = vld [vmem:[#allocation2 + $0x388] sm:$0xff]
    %v200 = vld [vmem:[#allocation2 + $0x390] sm:$0xff]
    %v201 = vld [vmem:[#allocation2 + $0x398] sm:$0xff]
    %v202 = vld [vmem:[#allocation2 + $0x3a0] sm:$0xff]
    %v203 = vld [vmem:[#allocation2 + $0x3a8] sm:$0xff]
    %v204 = vld [vmem:[#allocation2 + $0x3b0] sm:$0xff]
    %v205 = vld [vmem:[#allocation2 + $0x3b8] sm:$0xff]
    %v206 = vld [vmem:[#allocation2 + $0x3c0] sm:$0xff]
    %v207 = vld [vmem:[#allocation2 + $0x3c8] sm:$0xff]
    %v208 = vld [vmem:[#allocation2 + $0x3d0] sm:$0xff]
    %v209 = vld [vmem:[#allocation2 + $0x3d8] sm:$0xff]
    %v210 = vld [vmem:[#allocation2 + $0x3e0] sm:$0xff]
    %v211 = vld [vmem:[#allocation2 + $0x3e8] sm:$0xff]
    %v212 = vld [vmem:[#allocation2 + $0x3f0] sm:$0xff]
    %v213 = vld [vmem:[#allocation2 + $0x3f8] sm:$0xff]
    %v214 = vld [vmem:[#allocation2 + $0x400] sm:$0xff]
    %v215 = vld [vmem:[#allocation2 + $0x408] sm:$0xff]
    %v216 = vld [vmem:[#allocation2 + $0x410] sm:$0xff]
    %v217 = vld [vmem:[#allocation2 + $0x418] sm:$0xff]
    %v218 = vld [vmem:[#allocation2 + $0x420] sm:$0xff]
    %v219 = vld [vmem:[#allocation2 + $0x428] sm:$0xff]
    %v220 = vld [vmem:[#allocation2 + $0x430] sm:$0xff]
    %v221 = vld [vmem:[#allocation2 + $0x438] sm:$0xff]
    %v222 = vld [vmem:[#allocation2 + $0x440] sm:$0xff]
    %v223 = vld [vmem:[#allocation2 + $0x448] sm:$0xff]
    %v224 = vld [vmem:[#allocation2 + $0x450] sm:$0xff]
    %v225 = vld [vmem:[#allocation2 + $0x458] sm:$0xff]
    %v226 = vld [vmem:[#allocation2 + $0x460] sm:$0xff]
    %v227 = vld [vmem:[#allocation2 + $0x468] sm:$0xff]
    %v228 = vld [vmem:[#allocation2 + $0x470] sm:$0xff]
    %v229 = vld [vmem:[#allocation2 + $0x478] sm:$0xff]
    %v230 = vld [vmem:[#allocation2 + $0x480] sm:$0xff]
    %v231 = vld [vmem:[#allocation2 + $0x488] sm:$0xff]
    %v232 = vld [vmem:[#allocation2 + $0x490] sm:$0xff]
    %v233 = vld [vmem:[#allocation2 + $0x498] sm:$0xff]
    %v234 = vld [vmem:[#allocation2 + $0x4a0] sm:$0xff]
    %v235 = vld [vmem:[#allocation2 + $0x4a8] sm:$0xff]
    %v236 = vld [vmem:[#allocation2 + $0x4b0] sm:$0xff]
    %v237 = vld [vmem:[#allocation2 + $0x4b8] sm:$0xff]
    %v238 = vld [vmem:[#allocation2 + $0x4c0] sm:$0xff]
    %v239 = vld [vmem:[#allocation2 + $0x4c8] sm:$0xff]
    %v240 = vld [vmem:[#allocation2 + $0x4d0] sm:$0xff]
    %v241 = vld [vmem:[#allocation2 + $0x4d8] sm:$0xff]
    %v242 = vld [vmem:[#allocation2 + $0x4e0] sm:$0xff]
    %v243 = vld [vmem:[#allocation2 + $0x4e8] sm:$0xff]
    %v244 = vld [vmem:[#allocation2 + $0x4f0] sm:$0xff]
    %v245 = vld [vmem:[#allocation2 + $0x4f8] sm:$0xff]
    %v246 = vld [vmem:[#allocation2 + $0x500] sm:$0xff]
    %v247 = vld [vmem:[#allocation2 + $0x508] sm:$0xff]
    %v248 = vld [vmem:[#allocation2 + $0x510] sm:$0xff]
    %v249 = vld [vmem:[#allocation2 + $0x518] sm:$0xff]
    %v250 = vld [vmem:[#allocation2 + $0x520] sm:$0xff]
    %v251 = vld [vmem:[#allocation2 + $0x528] sm:$0xff]
    %v252 = vld [vmem:[#allocation2 + $0x530] sm:$0xff]
    %v253 = vld [vmem:[#allocation2 + $0x538] sm:$0xff]
    %v254 = vld [vmem:[#allocation2 + $0x540] sm:$0xff]
    %v255 = vld [vmem:[#allocation2 + $0x548] sm:$0xff]
    %v256 = vld [vmem:[#allocation2 + $0x550] sm:$0xff]
    %v257 = vld [vmem:[#allocation2 + $0x558] sm:$0xff]
    %v258 = vld [vmem:[#allocation2 + $0x560] sm:$0xff]
    %v259 = vld [vmem:[#allocation2 + $0x568] sm:$0xff]
    %v260 = vld [vmem:[#allocation2 + $0x570] sm:$0xff]
    %v261 = vld [vmem:[#allocation2 + $0x578] sm:$0xff]
    %v262 = vld [vmem:[#allocation2 + $0x580] sm:$0xff]
    %v263 = vld [vmem:[#allocation2 + $0x588] sm:$0xff]
    %v264 = vld [vmem:[#allocation2 + $0x590] sm:$0xff]
    %v265 = vld [vmem:[#allocation2 + $0x598] sm:$0xff]
    %v266 = vld [vmem:[#allocation2 + $0x5a0] sm:$0xff]
    %v267 = vld [vmem:[#allocation2 + $0x5a8] sm:$0xff]
    %v268 = vld [vmem:[#allocation2 + $0x5b0] sm:$0xff]
    %v269 = vld [vmem:[#allocation2 + $0x5b8] sm:$0xff]
    %v270 = vld [vmem:[#allocation2 + $0x5c0] sm:$0xff]
    %v271 = vld [vmem:[#allocation2 + $0x5c8] sm:$0xff]
    %v272 = vld [vmem:[#allocation2 + $0x5d0] sm:$0xff]
    %v273 = vld [vmem:[#allocation2 + $0x5d8] sm:$0xff]
    %v274 = vld [vmem:[#allocation2 + $0x5e0] sm:$0xff]
    %v275 = vld [vmem:[#allocation2 + $0x5e8] sm:$0xff]
    %v276 = vld [vmem:[#allocation2 + $0x5f0] sm:$0xff]
    %v277 = vld [vmem:[#allocation2 + $0x5f8] sm:$0xff]
    %v278 = vld [vmem:[#allocation2 + $0x600] sm:$0xff]
    %v279 = vld [vmem:[#allocation2 + $0x608] sm:$0xff]
    %v280 = vld [vmem:[#allocation2 + $0x610] sm:$0xff]
    %v281 = vld [vmem:[#allocation2 + $0x618] sm:$0xff]
    %v282 = vld [vmem:[#allocation2 + $0x620] sm:$0xff]
    %v283 = vld [vmem:[#allocation2 + $0x628] sm:$0xff]
    %v284 = vld [vmem:[#allocation2 + $0x630] sm:$0xff]
    %v285 = vld [vmem:[#allocation2 + $0x638] sm:$0xff]
    %v286 = vld [vmem:[#allocation2 + $0x640] sm:$0xff]
    %v287 = vld [vmem:[#allocation2 + $0x648] sm:$0xff]
    %v288 = vld [vmem:[#allocation2 + $0x650] sm:$0xff]
    %v289 = vld [vmem:[#allocation2 + $0x658] sm:$0xff]
    %v290 = vld [vmem:[#allocation2 + $0x660] sm:$0xff]
    %v291 = vld [vmem:[#allocation2 + $0x668] sm:$0xff]
    %v292 = vld [vmem:[#allocation2 + $0x670] sm:$0xff]
    %v293 = vld [vmem:[#allocation2 + $0x678] sm:$0xff]
    %v294 = vld [vmem:[#allocation2 + $0x680] sm:$0xff]
    %v295 = vld [vmem:[#allocation2 + $0x688] sm:$0xff]
    %v296 = vld [vmem:[#allocation2 + $0x690] sm:$0xff]
    %v297 = vld [vmem:[#allocation2 + $0x698] sm:$0xff]
    %v298 = vld [vmem:[#allocation2 + $0x6a0] sm:$0xff]
    %v299 = vld [vmem:[#allocation2 + $0x6a8] sm:$0xff]
    %v300 = vld [vmem:[#allocation2 + $0x6b0] sm:$0xff]
    %v301 = vld [vmem:[#allocation2 + $0x6b8] sm:$0xff]
    %v302 = vld [vmem:[#allocation2 + $0x6c0] sm:$0xff]
    %v303 = vld [vmem:[#allocation2 + $0x6c8] sm:$0xff]
    %v304 = vld [vmem:[#allocation2 + $0x6d0] sm:$0xff]
    %v305 = vld [vmem:[#allocation2 + $0x6d8] sm:$0xff]
    %v306 = vld [vmem:[#allocation2 + $0x6e0] sm:$0xff]
    %v307 = vld [vmem:[#allocation2 + $0x6e8] sm:$0xff]
    %v308 = vld [vmem:[#allocation2 + $0x6f0] sm:$0xff]
    %v309 = vld [vmem:[#allocation2 + $0x6f8] sm:$0xff]
    %v310 = vld [vmem:[#allocation2 + $0x700] sm:$0xff]
    %v311 = vld [vmem:[#allocation2 + $0x708] sm:$0xff]
    %v312 = vld [vmem:[#allocation2 + $0x710] sm:$0xff]
    %v313 = vld [vmem:[#allocation2 + $0x718] sm:$0xff]
    %v314 = vld [vmem:[#allocation2 + $0x720] sm:$0xff]
    %v315 = vld [vmem:[#allocation2 + $0x728] sm:$0xff]
    %v316 = vld [vmem:[#allocation2 + $0x730] sm:$0xff]
    %v317 = vld [vmem:[#allocation2 + $0x738] sm:$0xff]
    %v318 = vld [vmem:[#allocation2 + $0x740] sm:$0xff]
    %v319 = vld [vmem:[#allocation2 + $0x748] sm:$0xff]
    %v320 = vld [vmem:[#allocation2 + $0x750] sm:$0xff]
    %v321 = vld [vmem:[#allocation2 + $0x758] sm:$0xff]
    %v322 = vld [vmem:[#allocation2 + $0x760] sm:$0xff]
    %v323 = vld [vmem:[#allocation2 + $0x768] sm:$0xff]
    %v324 = vld [vmem:[#allocation2 + $0x770] sm:$0xff]
    %v325 = vld [vmem:[#allocation2 + $0x778] sm:$0xff]
    %v326 = vld [vmem:[#allocation2 + $0x780] sm:$0xff]
    %v327 = vld [vmem:[#allocation2 + $0x788] sm:$0xff]
    %v328 = vld [vmem:[#allocation2 + $0x790] sm:$0xff]
    %v329 = vld [vmem:[#allocation2 + $0x798] sm:$0xff]
    %v330 = vld [vmem:[#allocation2 + $0x7a0] sm:$0xff]
    %v331 = vld [vmem:[#allocation2 + $0x7a8] sm:$0xff]
    %v332 = vld [vmem:[#allocation2 + $0x7b0] sm:$0xff]
    %v333 = vld [vmem:[#allocation2 + $0x7b8] sm:$0xff]
    %v334 = vld [vmem:[#allocation2 + $0x7c0] sm:$0xff]
    %v335 = vld [vmem:[#allocation2 + $0x7c8] sm:$0xff]
    %v336 = vld [vmem:[#allocation2 + $0x7d0] sm:$0xff]
    %v337 = vld [vmem:[#allocation2 + $0x7d8] sm:$0xff]
    %v338 = vld [vmem:[#allocation2 + $0x7e0] sm:$0xff]
    %v339 = vld [vmem:[#allocation2 + $0x7e8] sm:$0xff]
    %v340 = vld [vmem:[#allocation2 + $0x7f0] sm:$0xff]
    %v341 = vld [vmem:[#allocation2 + $0x7f8] sm:$0xff]
    %v342 = vld [vmem:[#allocation2 + $0x800] sm:$0xff]
    %v343 = vld [vmem:[#allocation2 + $0x808] sm:$0xff]
    %v344 = vld [vmem:[#allocation2 + $0x810] sm:$0xff]
    %v345 = vld [vmem:[#allocation2 + $0x818] sm:$0xff]
    %v346 = vld [vmem:[#allocation2 + $0x820] sm:$0xff]
    %v347 = vld [vmem:[#allocation2 + $0x828] sm:$0xff]
    %v348 = vld [vmem:[#allocation2 + $0x830] sm:$0xff]
    %v349 = vld [vmem:[#allocation2 + $0x838] sm:$0xff]
    %v350 = vld [vmem:[#allocation2 + $0x840] sm:$0xff]
    %v351 = vld [vmem:[#allocation2 + $0x848] sm:$0xff]
    %v352 = vld [vmem:[#allocation2 + $0x850] sm:$0xff]
    %v353 = vld [vmem:[#allocation2 + $0x858] sm:$0xff]
    %v354 = vld [vmem:[#allocation2 + $0x860] sm:$0xff]
    %v355 = vld [vmem:[#allocation2 + $0x868] sm:$0xff]
    %v356 = vld [vmem:[#allocation2 + $0x870] sm:$0xff]
    %v357 = vld [vmem:[#allocation2 + $0x878] sm:$0xff]
    %v358 = vld [vmem:[#allocation2 + $0x880] sm:$0xff]
    %v359 = vld [vmem:[#allocation2 + $0x888] sm:$0xff]
    %v360 = vld [vmem:[#allocation2 + $0x890] sm:$0xff]
    %v361 = vld [vmem:[#allocation2 + $0x898] sm:$0xff]
    %v362 = vld [vmem:[#allocation2 + $0x8a0] sm:$0xff]
    %v363 = vld [vmem:[#allocation2 + $0x8a8] sm:$0xff]
    %v364 = vld [vmem:[#allocation2 + $0x8b0] sm:$0xff]
    %v365 = vld [vmem:[#allocation2 + $0x8b8] sm:$0xff]
    %v366 = vld [vmem:[#allocation2 + $0x8c0] sm:$0xff]
    %v367 = vld [vmem:[#allocation2 + $0x8c8] sm:$0xff]
    %v368 = vld [vmem:[#allocation2 + $0x8d0] sm:$0xff]
    %v369 = vld [vmem:[#allocation2 + $0x8d8] sm:$0xff]
    %v370 = vld [vmem:[#allocation2 + $0x8e0] sm:$0xff]
    %v371 = vld [vmem:[#allocation2 + $0x8e8] sm:$0xff]
    %v372 = vld [vmem:[#allocation2 + $0x8f0] sm:$0xff]
    %v373 = vld [vmem:[#allocation2 + $0x8f8] sm:$0xff]
    %v374 = vld [vmem:[#allocation2 + $0x900] sm:$0xff]
    %v375 = vld [vmem:[#allocation2 + $0x908] sm:$0xff]
    %v376 = vld [vmem:[#allocation2 + $0x910] sm:$0xff]
    %v377 = vld [vmem:[#allocation2 + $0x918] sm:$0xff]
    %v378 = vld [vmem:[#allocation2 + $0x920] sm:$0xff]
    %v379 = vld [vmem:[#allocation2 + $0x928] sm:$0xff]
    %v380 = vld [vmem:[#allocation2 + $0x930] sm:$0xff]
    %v381 = vld [vmem:[#allocation2 + $0x938] sm:$0xff]
    %v382 = vld [vmem:[#allocation2 + $0x940] sm:$0xff]
    %v383 = vld [vmem:[#allocation2 + $0x948] sm:$0xff]
    %v384 = vld [vmem:[#allocation2 + $0x950] sm:$0xff]
    %v385 = vld [vmem:[#allocation2 + $0x958] sm:$0xff]
    %v386 = vld [vmem:[#allocation2 + $0x960] sm:$0xff]
    %v387 = vld [vmem:[#allocation2 + $0x968] sm:$0xff]
    %v388 = vld [vmem:[#allocation2 + $0x970] sm:$0xff]
    %v389 = vld [vmem:[#allocation2 + $0x978] sm:$0xff]
    %v390 = vld [vmem:[#allocation2 + $0x980] sm:$0xff]
    %v391 = vld [vmem:[#allocation2 + $0x988] sm:$0xff]
    %v392 = vld [vmem:[#allocation2 + $0x990] sm:$0xff]
    %v393 = vld [vmem:[#allocation2 + $0x998] sm:$0xff]
    %v394 = vld [vmem:[#allocation2 + $0x9a0] sm:$0xff]
    %v395 = vld [vmem:[#allocation2 + $0x9a8] sm:$0xff]
    %v396 = vld [vmem:[#allocation2 + $0x9b0] sm:$0xff]
    %v397 = vld [vmem:[#allocation2 + $0x9b8] sm:$0xff]
    %v398 = vld [vmem:[#allocation2 + $0x9c0] sm:$0xff]
    %v399 = vld [vmem:[#allocation2 + $0x9c8] sm:$0xff]
    %v400 = vld [vmem:[#allocation2 + $0x9d0] sm:$0xff]
    %v401 = vld [vmem:[#allocation2 + $0x9d8] sm:$0xff]
    %v402 = vld [vmem:[#allocation2 + $0x9e0] sm:$0xff]
    %v403 = vld [vmem:[#allocation2 + $0x9e8] sm:$0xff]
    %v404 = vld [vmem:[#allocation2 + $0x9f0] sm:$0xff]
    %v405 = vld [vmem:[#allocation2 + $0x9f8] sm:$0xff]
    %v406 = vld [vmem:[#allocation2 + $0xa00] sm:$0xff]
    %v407 = vld [vmem:[#allocation2 + $0xa08] sm:$0xff]
    %v408 = vld [vmem:[#allocation2 + $0xa10] sm:$0xff]
    %v409 = vld [vmem:[#allocation2 + $0xa18] sm:$0xff]
    %v410 = vld [vmem:[#allocation2 + $0xa20] sm:$0xff]
    %v411 = vld [vmem:[#allocation2 + $0xa28] sm:$0xff]
    %v412 = vld [vmem:[#allocation2 + $0xa30] sm:$0xff]
    %v413 = vld [vmem:[#allocation2 + $0xa38] sm:$0xff]
    %v414 = vld [vmem:[#allocation2 + $0xa40] sm:$0xff]
    %v415 = vld [vmem:[#allocation2 + $0xa48] sm:$0xff]
    %v416 = vld [vmem:[#allocation2 + $0xa50] sm:$0xff]
    %v417 = vld [vmem:[#allocation2 + $0xa58] sm:$0xff]
    %v418 = vld [vmem:[#allocation2 + $0xa60] sm:$0xff]
    %v419 = vld [vmem:[#allocation2 + $0xa68] sm:$0xff]
    %v420 = vld [vmem:[#allocation2 + $0xa70] sm:$0xff]
    %v421 = vld [vmem:[#allocation2 + $0xa78] sm:$0xff]
    %v422 = vld [vmem:[#allocation2 + $0xa80] sm:$0xff]
    %v423 = vld [vmem:[#allocation2 + $0xa88] sm:$0xff]
    %v424 = vld [vmem:[#allocation2 + $0xa90] sm:$0xff]
    %v425 = vld [vmem:[#allocation2 + $0xa98] sm:$0xff]
    %v426 = vld [vmem:[#allocation2 + $0xaa0] sm:$0xff]
    %v427 = vld [vmem:[#allocation2 + $0xaa8] sm:$0xff]
    %v428 = vld [vmem:[#allocation2 + $0xab0] sm:$0xff]
    %v429 = vld [vmem:[#allocation2 + $0xab8] sm:$0xff]
    %v430 = vld [vmem:[#allocation2 + $0xac0] sm:$0xff]
    %v431 = vld [vmem:[#allocation2 + $0xac8] sm:$0xff]
    %v432 = vld [vmem:[#allocation2 + $0xad0] sm:$0xff]
    %v433 = vld [vmem:[#allocation2 + $0xad8] sm:$0xff]
    %v434 = vld [vmem:[#allocation2 + $0xae0] sm:$0xff]
    %v435 = vld [vmem:[#allocation2 + $0xae8] sm:$0xff]
    %v436 = vld [vmem:[#allocation2 + $0xaf0] sm:$0xff]
    %v437 = vld [vmem:[#allocation2 + $0xaf8] sm:$0xff]
    %v438 = vld [vmem:[#allocation2 + $0xb00] sm:$0xff]
    %v439 = vld [vmem:[#allocation2 + $0xb08] sm:$0xff]
    %v440 = vld [vmem:[#allocation2 + $0xb10] sm:$0xff]
    %v441 = vld [vmem:[#allocation2 + $0xb18] sm:$0xff]
    %v442 = vld [vmem:[#allocation2 + $0xb20] sm:$0xff]
    %v443 = vld [vmem:[#allocation2 + $0xb28] sm:$0xff]
    %v444 = vld [vmem:[#allocation2 + $0xb30] sm:$0xff]
    %v445 = vld [vmem:[#allocation2 + $0xb38] sm:$0xff]
    %v446 = vld [vmem:[#allocation2 + $0xb40] sm:$0xff]
    %v447 = vld [vmem:[#allocation2 + $0xb48] sm:$0xff]
    %v448 = vld [vmem:[#allocation2 + $0xb50] sm:$0xff]
    %v449 = vld [vmem:[#allocation2 + $0xb58] sm:$0xff]
    %v450 = vld [vmem:[#allocation2 + $0xb60] sm:$0xff]
    %v451 = vld [vmem:[#allocation2 + $0xb68] sm:$0xff]
    %v452 = vld [vmem:[#allocation2 + $0xb70] sm:$0xff]
    %v453 = vld [vmem:[#allocation2 + $0xb78] sm:$0xff]
    %v454 = vld [vmem:[#allocation2 + $0xb80] sm:$0xff]
    %v455 = vld [vmem:[#allocation2 + $0xb88] sm:$0xff]
    %v456 = vld [vmem:[#allocation2 + $0xb90] sm:$0xff]
    %v457 = vld [vmem:[#allocation2 + $0xb98] sm:$0xff]
    %v458 = vld [vmem:[#allocation2 + $0xba0] sm:$0xff]
    %v459 = vld [vmem:[#allocation2 + $0xba8] sm:$0xff]
    %v460 = vld [vmem:[#allocation2 + $0xbb0] sm:$0xff]
    %v461 = vld [vmem:[#allocation2 + $0xbb8] sm:$0xff]
    %v462 = vld [vmem:[#allocation2 + $0xbc0] sm:$0xff]
    %v463 = vld [vmem:[#allocation2 + $0xbc8] sm:$0xff]
    %v464 = vld [vmem:[#allocation2 + $0xbd0] sm:$0xff]
    %v465 = vld [vmem:[#allocation2 + $0xbd8] sm:$0xff]
    %v466 = vld [vmem:[#allocation2 + $0xbe0] sm:$0xff]
    %v467 = vld [vmem:[#allocation2 + $0xbe8] sm:$0xff]
    %v468 = vld [vmem:[#allocation2 + $0xbf0] sm:$0xff]
    %v469 = vld [vmem:[#allocation2 + $0xbf8] sm:$0xff]
    %v470 = vld [vmem:[#allocation2 + $0xc00] sm:$0xff]
    %v471 = vld [vmem:[#allocation2 + $0xc08] sm:$0xff]
    %v472 = vld [vmem:[#allocation2 + $0xc10] sm:$0xff]
    %v473 = vld [vmem:[#allocation2 + $0xc18] sm:$0xff]
    %v474 = vld [vmem:[#allocation2 + $0xc20] sm:$0xff]
    %v475 = vld [vmem:[#allocation2 + $0xc28] sm:$0xff]
    %v476 = vld [vmem:[#allocation2 + $0xc30] sm:$0xff]
    %v477 = vld [vmem:[#allocation2 + $0xc38] sm:$0xff]
    %v478 = vld [vmem:[#allocation2 + $0xc40] sm:$0xff]
    %v479 = vld [vmem:[#allocation2 + $0xc48] sm:$0xff]
    %v480 = vld [vmem:[#allocation2 + $0xc50] sm:$0xff]
    %v481 = vld [vmem:[#allocation2 + $0xc58] sm:$0xff]
    %v482 = vld [vmem:[#allocation2 + $0xc60] sm:$0xff]
    %v483 = vld [vmem:[#allocation2 + $0xc68] sm:$0xff]
    %v484 = vld [vmem:[#allocation2 + $0xc70] sm:$0xff]
    %v485 = vld [vmem:[#allocation2 + $0xc78] sm:$0xff]
    %v486 = vld [vmem:[#allocation2 + $0xc80] sm:$0xff]
    %v487 = vld [vmem:[#allocation2 + $0xc88] sm:$0xff]
    %v488 = vld [vmem:[#allocation2 + $0xc90] sm:$0xff]
    %v489 = vld [vmem:[#allocation2 + $0xc98] sm:$0xff]
    %v490 = vld [vmem:[#allocation2 + $0xca0] sm:$0xff]
    %v491 = vld [vmem:[#allocation2 + $0xca8] sm:$0xff]
    %v492 = vld [vmem:[#allocation2 + $0xcb0] sm:$0xff]
    %v493 = vld [vmem:[#allocation2 + $0xcb8] sm:$0xff]
    %v494 = vld [vmem:[#allocation2 + $0xcc0] sm:$0xff]
    %v495 = vld [vmem:[#allocation2 + $0xcc8] sm:$0xff]
    %v496 = vld [vmem:[#allocation2 + $0xcd0] sm:$0xff]
    %v497 = vld [vmem:[#allocation2 + $0xcd8] sm:$0xff]
    %v498 = vld [vmem:[#allocation2 + $0xce0] sm:$0xff]
    %v499 = vld [vmem:[#allocation2 + $0xce8] sm:$0xff]
    %v500 = vld [vmem:[#allocation2 + $0xcf0] sm:$0xff]
    %v501 = vld [vmem:[#allocation2 + $0xcf8] sm:$0xff]
    %v502 = vld [vmem:[#allocation2 + $0xd00] sm:$0xff]
    %v503 = vld [vmem:[#allocation2 + $0xd08] sm:$0xff]
    %v504 = vld [vmem:[#allocation2 + $0xd10] sm:$0xff]
    %v505 = vld [vmem:[#allocation2 + $0xd18] sm:$0xff]
    %v506 = vld [vmem:[#allocation2 + $0xd20] sm:$0xff]
    %v507 = vld [vmem:[#allocation2 + $0xd28] sm:$0xff]
    %v508 = vld [vmem:[#allocation2 + $0xd30] sm:$0xff]
    %v509 = vld [vmem:[#allocation2 + $0xd38] sm:$0xff]
    %v510 = vld [vmem:[#allocation2 + $0xd40] sm:$0xff]
    %v511 = vld [vmem:[#allocation2 + $0xd48] sm:$0xff]
    %v512 = vld [vmem:[#allocation2 + $0xd50] sm:$0xff]
    %v513 = vld [vmem:[#allocation2 + $0xd58] sm:$0xff]
    %v514 = vld [vmem:[#allocation2 + $0xd60] sm:$0xff]
    %v515 = vld [vmem:[#allocation2 + $0xd68] sm:$0xff]
    %v516 = vld [vmem:[#allocation2 + $0xd70] sm:$0xff]
    %v517 = vld [vmem:[#allocation2 + $0xd78] sm:$0xff]
    %v518 = vld [vmem:[#allocation2 + $0xd80] sm:$0xff]
    %v519 = vld [vmem:[#allocation2 + $0xd88] sm:$0xff]
    %v520 = vld [vmem:[#allocation2 + $0xd90] sm:$0xff]
    %v521 = vld [vmem:[#allocation2 + $0xd98] sm:$0xff]
    %v522 = vld [vmem:[#allocation2 + $0xda0] sm:$0xff]
    %v523 = vld [vmem:[#allocation2 + $0xda8] sm:$0xff]
    %v524 = vld [vmem:[#allocation2 + $0xdb0] sm:$0xff]
    %v525 = vld [vmem:[#allocation2 + $0xdb8] sm:$0xff]
    %v526 = vld [vmem:[#allocation2 + $0xdc0] sm:$0xff]
    %v527 = vld [vmem:[#allocation2 + $0xdc8] sm:$0xff]
    %v528 = vld [vmem:[#allocation2 + $0xdd0] sm:$0xff]
    %v529 = vld [vmem:[#allocation2 + $0xdd8] sm:$0xff]
    %v530 = vld [vmem:[#allocation2 + $0xde0] sm:$0xff]
    %v531 = vld [vmem:[#allocation2 + $0xde8] sm:$0xff]
    %v532 = vld [vmem:[#allocation2 + $0xdf0] sm:$0xff]
    %v533 = vld [vmem:[#allocation2 + $0xdf8] sm:$0xff]
    %v534 = vld [vmem:[#allocation2 + $0xe00] sm:$0xff]
    %v535 = vld [vmem:[#allocation2 + $0xe08] sm:$0xff]
    %v536 = vld [vmem:[#allocation2 + $0xe10] sm:$0xff]
    %v537 = vld [vmem:[#allocation2 + $0xe18] sm:$0xff]
    %v538 = vld [vmem:[#allocation2 + $0xe20] sm:$0xff]
    %v539 = vld [vmem:[#allocation2 + $0xe28] sm:$0xff]
    %v540 = vld [vmem:[#allocation2 + $0xe30] sm:$0xff]
    %v541 = vld [vmem:[#allocation2 + $0xe38] sm:$0xff]
    %v542 = vld [vmem:[#allocation2 + $0xe40] sm:$0xff]
    %v543 = vld [vmem:[#allocation2 + $0xe48] sm:$0xff]
    %v544 = vld [vmem:[#allocation2 + $0xe50] sm:$0xff]
    %v545 = vld [vmem:[#allocation2 + $0xe58] sm:$0xff]
    %v546 = vld [vmem:[#allocation2 + $0xe60] sm:$0xff]
    %v547 = vld [vmem:[#allocation2 + $0xe68] sm:$0xff]
    %v548 = vld [vmem:[#allocation2 + $0xe70] sm:$0xff]
    %v549 = vld [vmem:[#allocation2 + $0xe78] sm:$0xff]
    %v550 = vld [vmem:[#allocation2 + $0xe80] sm:$0xff]
    %v551 = vld [vmem:[#allocation2 + $0xe88] sm:$0xff]
    %v552 = vld [vmem:[#allocation2 + $0xe90] sm:$0xff]
    %v553 = vld [vmem:[#allocation2 + $0xe98] sm:$0xff]
    %v554 = vld [vmem:[#allocation2 + $0xea0] sm:$0xff]
    %v555 = vld [vmem:[#allocation2 + $0xea8] sm:$0xff]
    %v556 = vld [vmem:[#allocation2 + $0xeb0] sm:$0xff]
    %v557 = vld [vmem:[#allocation2 + $0xeb8] sm:$0xff]
    %v558 = vld [vmem:[#allocation2 + $0xec0] sm:$0xff]
    %v559 = vld [vmem:[#allocation2 + $0xec8] sm:$0xff]
    %v560 = vld [vmem:[#allocation2 + $0xed0] sm:$0xff]
    %v561 = vld [vmem:[#allocation2 + $0xed8] sm:$0xff]
    %v562 = vld [vmem:[#allocation2 + $0xee0] sm:$0xff]
    %v563 = vld [vmem:[#allocation2 + $0xee8] sm:$0xff]
    %v564 = vld [vmem:[#allocation2 + $0xef0] sm:$0xff]
    %v565 = vld [vmem:[#allocation2 + $0xef8] sm:$0xff]
    %v566 = vld [vmem:[#allocation2 + $0xf00] sm:$0xff]
    %v567 = vld [vmem:[#allocation2 + $0xf08] sm:$0xff]
    %v568 = vld [vmem:[#allocation2 + $0xf10] sm:$0xff]
    %v569 = vld [vmem:[#allocation2 + $0xf18] sm:$0xff]
    %v570 = vld [vmem:[#allocation2 + $0xf20] sm:$0xff]
    %v571 = vld [vmem:[#allocation2 + $0xf28] sm:$0xff]
    %v572 = vld [vmem:[#allocation2 + $0xf30] sm:$0xff]
    %v573 = vld [vmem:[#allocation2 + $0xf38] sm:$0xff]
    %v574 = vld [vmem:[#allocation2 + $0xf40] sm:$0xff]
    %v575 = vld [vmem:[#allocation2 + $0xf48] sm:$0xff]
    %v576 = vld [vmem:[#allocation2 + $0xf50] sm:$0xff]
    %v577 = vld [vmem:[#allocation2 + $0xf58] sm:$0xff]
    %v578 = vld [vmem:[#allocation2 + $0xf60] sm:$0xff]
    %v579 = vld [vmem:[#allocation2 + $0xf68] sm:$0xff]
    %v580 = vld [vmem:[#allocation2 + $0xf70] sm:$0xff]
    %v581 = vld [vmem:[#allocation2 + $0xf78] sm:$0xff]
    %v582 = vld [vmem:[#allocation2 + $0xf80] sm:$0xff]
    %v583 = vld [vmem:[#allocation2 + $0xf88] sm:$0xff]
    %v584 = vld [vmem:[#allocation2 + $0xf90] sm:$0xff]
    %v585 = vld [vmem:[#allocation2 + $0xf98] sm:$0xff]
    %v586 = vld [vmem:[#allocation2 + $0xfa0] sm:$0xff]
    %v587 = vld [vmem:[#allocation2 + $0xfa8] sm:$0xff]
    %v588 = vld [vmem:[#allocation2 + $0xfb0] sm:$0xff]
    %v589 = vld [vmem:[#allocation2 + $0xfb8] sm:$0xff]
    %v590 = vld [vmem:[#allocation2 + $0xfc0] sm:$0xff]
    %v591 = vld [vmem:[#allocation2 + $0xfc8] sm:$0xff]
    %v592 = vld [vmem:[#allocation2 + $0xfd0] sm:$0xff]
    %v593 = vld [vmem:[#allocation2 + $0xfd8] sm:$0xff]
    %v594 = vld [vmem:[#allocation2 + $0xfe0] sm:$0xff]
    %v595 = vld [vmem:[#allocation2 + $0xfe8] sm:$0xff]
    %v596 = vld [vmem:[#allocation2 + $0xff0] sm:$0xff]
    %v597 = vld [vmem:[#allocation2 + $0xff8] sm:$0xff]
    %v598 = vld [vmem:[#allocation2 + $0x1000] sm:$0xff]
    %v599 = vld [vmem:[#allocation2 + $0x1008] sm:$0xff]
    %v600 = vld [vmem:[#allocation2 + $0x1010] sm:$0xff]
    %v601 = vld [vmem:[#allocation2 + $0x1018] sm:$0xff]
    %v602 = vld [vmem:[#allocation2 + $0x1020] sm:$0xff]
    %v603 = vld [vmem:[#allocation2 + $0x1028] sm:$0xff]
    %v604 = vld [vmem:[#allocation2 + $0x1030] sm:$0xff]
    %v605 = vld [vmem:[#allocation2 + $0x1038] sm:$0xff]
    %v606 = vld [vmem:[#allocation2 + $0x1040] sm:$0xff]
    %v607 = vld [vmem:[#allocation2 + $0x1048] sm:$0xff]
    %v608 = vld [vmem:[#allocation2 + $0x1050] sm:$0xff]
    %v609 = vld [vmem:[#allocation2 + $0x1058] sm:$0xff]
    %v610 = vld [vmem:[#allocation2 + $0x1060] sm:$0xff]
    %v611 = vld [vmem:[#allocation2 + $0x1068] sm:$0xff]
    %v612 = vld [vmem:[#allocation2 + $0x1070] sm:$0xff]
    %v613 = vld [vmem:[#allocation2 + $0x1078] sm:$0xff]
    %v614 = vld [vmem:[#allocation2 + $0x1080] sm:$0xff]
    %v615 = vld [vmem:[#allocation2 + $0x1088] sm:$0xff]
    %v616 = vld [vmem:[#allocation2 + $0x1090] sm:$0xff]
    %v617 = vld [vmem:[#allocation2 + $0x1098] sm:$0xff]
    %v618 = vld [vmem:[#allocation2 + $0x10a0] sm:$0xff]
    %v619 = vld [vmem:[#allocation2 + $0x10a8] sm:$0xff]
    %v620 = vld [vmem:[#allocation2 + $0x10b0] sm:$0xff]
    %v621 = vld [vmem:[#allocation2 + $0x10b8] sm:$0xff]
    %v622 = vld [vmem:[#allocation2 + $0x10c0] sm:$0xff]
    %v623 = vld [vmem:[#allocation2 + $0x10c8] sm:$0xff]
    %v624 = vld [vmem:[#allocation2 + $0x10d0] sm:$0xff]
    %v625 = vld [vmem:[#allocation2 + $0x10d8] sm:$0xff]
    %v626 = vld [vmem:[#allocation2 + $0x10e0] sm:$0xff]
    %v627 = vld [vmem:[#allocation2 + $0x10e8] sm:$0xff]
    %v628 = vld [vmem:[#allocation2 + $0x10f0] sm:$0xff]
    %v629 = vld [vmem:[#allocation2 + $0x10f8] sm:$0xff]
    %v630 = vld [vmem:[#allocation2 + $0x1100] sm:$0xff]
    %v631 = vld [vmem:[#allocation2 + $0x1108] sm:$0xff]
    %v632 = vld [vmem:[#allocation2 + $0x1110] sm:$0xff]
    %v633 = vld [vmem:[#allocation2 + $0x1118] sm:$0xff]
    %v634 = vld [vmem:[#allocation2 + $0x1120] sm:$0xff]
    %v635 = vld [vmem:[#allocation2 + $0x1128] sm:$0xff]
    %v636 = vld [vmem:[#allocation2 + $0x1130] sm:$0xff]
    %v637 = vld [vmem:[#allocation2 + $0x1138] sm:$0xff]
    %v638 = vld [vmem:[#allocation2 + $0x1140] sm:$0xff]
    %v639 = vld [vmem:[#allocation2 + $0x1148] sm:$0xff]
    %v640 = vld [vmem:[#allocation2 + $0x1150] sm:$0xff]
    %v641 = vld [vmem:[#allocation2 + $0x1158] sm:$0xff]
    %v642 = vld [vmem:[#allocation2 + $0x1160] sm:$0xff]
    %v643 = vld [vmem:[#allocation2 + $0x1168] sm:$0xff]
    %v644 = vld [vmem:[#allocation2 + $0x1170] sm:$0xff]
    %v645 = vld [vmem:[#allocation2 + $0x1178] sm:$0xff]
    %v646 = vld [vmem:[#allocation2 + $0x1180] sm:$0xff]
    %v647 = vld [vmem:[#allocation2 + $0x1188] sm:$0xff]
    %v648 = vld [vmem:[#allocation2 + $0x1190] sm:$0xff]
    %v649 = vld [vmem:[#allocation2 + $0x1198] sm:$0xff]
    %v650 = vld [vmem:[#allocation2 + $0x11a0] sm:$0xff]
    %v651 = vld [vmem:[#allocation2 + $0x11a8] sm:$0xff]
    %v652 = vld [vmem:[#allocation2 + $0x11b0] sm:$0xff]
    %v653 = vld [vmem:[#allocation2 + $0x11b8] sm:$0xff]
    %v654 = vld [vmem:[#allocation2 + $0x11c0] sm:$0xff]
    %v655 = vld [vmem:[#allocation2 + $0x11c8] sm:$0xff]
    %v656 = vld [vmem:[#allocation2 + $0x11d0] sm:$0xff]
    %v657 = vld [vmem:[#allocation2 + $0x11d8] sm:$0xff]
    %v658 = vld [vmem:[#allocation2 + $0x11e0] sm:$0xff]
    %v659 = vld [vmem:[#allocation2 + $0x11e8] sm:$0xff]
    %v660 = vld [vmem:[#allocation2 + $0x11f0] sm:$0xff]
    %v661 = vld [vmem:[#allocation2 + $0x11f8] sm:$0xff]
    %v662 = vld [vmem:[#allocation2 + $0x1200] sm:$0xff]
    %v663 = vld [vmem:[#allocation2 + $0x1208] sm:$0xff]
    %v664 = vld [vmem:[#allocation2 + $0x1210] sm:$0xff]
    %v665 = vld [vmem:[#allocation2 + $0x1218] sm:$0xff]
    %v666 = vld [vmem:[#allocation2 + $0x1220] sm:$0xff]
    %v667 = vld [vmem:[#allocation2 + $0x1228] sm:$0xff]
    %v668 = vld [vmem:[#allocation2 + $0x1230] sm:$0xff]
    %v669 = vld [vmem:[#allocation2 + $0x1238] sm:$0xff]
    %v670 = vld [vmem:[#allocation2 + $0x1240] sm:$0xff]
    %v671 = vld [vmem:[#allocation2 + $0x1248] sm:$0xff]
    %v672 = vld [vmem:[#allocation2 + $0x1250] sm:$0xff]
    %v673 = vld [vmem:[#allocation2 + $0x1258] sm:$0xff]
    %v674 = vld [vmem:[#allocation2 + $0x1260] sm:$0xff]
    %v675 = vld [vmem:[#allocation2 + $0x1268] sm:$0xff]
    %v676 = vld [vmem:[#allocation2 + $0x1270] sm:$0xff]
    %v677 = vld [vmem:[#allocation2 + $0x1278] sm:$0xff]
    %v678 = vld [vmem:[#allocation2 + $0x1280] sm:$0xff]
    %v679 = vld [vmem:[#allocation2 + $0x1288] sm:$0xff]
    %v680 = vld [vmem:[#allocation2 + $0x1290] sm:$0xff]
    %v681 = vld [vmem:[#allocation2 + $0x1298] sm:$0xff]
    %v682 = vld [vmem:[#allocation2 + $0x12a0] sm:$0xff]
    %v683 = vld [vmem:[#allocation2 + $0x12a8] sm:$0xff]
    %v684 = vld [vmem:[#allocation2 + $0x12b0] sm:$0xff]
    %v685 = vld [vmem:[#allocation2 + $0x12b8] sm:$0xff]
    %v686 = vld [vmem:[#allocation2 + $0x12c0] sm:$0xff]
    %v687 = vld [vmem:[#allocation2 + $0x12c8] sm:$0xff]
    %v688 = vld [vmem:[#allocation2 + $0x12d0] sm:$0xff]
    %v689 = vld [vmem:[#allocation2 + $0x12d8] sm:$0xff]
    %v690 = vld [vmem:[#allocation2 + $0x12e0] sm:$0xff]
    %v691 = vld [vmem:[#allocation2 + $0x12e8] sm:$0xff]
    %v692 = vld [vmem:[#allocation2 + $0x12f0] sm:$0xff]
    %v693 = vld [vmem:[#allocation2 + $0x12f8] sm:$0xff]
    %v694 = vld [vmem:[#allocation2 + $0x1300] sm:$0xff]
    %v695 = vld [vmem:[#allocation2 + $0x1308] sm:$0xff]
    %v696 = vld [vmem:[#allocation2 + $0x1310] sm:$0xff]
    %v697 = vld [vmem:[#allocation2 + $0x1318] sm:$0xff]
    %v698 = vld [vmem:[#allocation2 + $0x1320] sm:$0xff]
    %v699 = vld [vmem:[#allocation2 + $0x1328] sm:$0xff]
    %v700 = vld [vmem:[#allocation2 + $0x1330] sm:$0xff]
    %v701 = vld [vmem:[#allocation2 + $0x1338] sm:$0xff]
    %v702 = vld [vmem:[#allocation2 + $0x1340] sm:$0xff]
    %v703 = vld [vmem:[#allocation2 + $0x1348] sm:$0xff]
    %v704 = vld [vmem:[#allocation2 + $0x1350] sm:$0xff]
    %v705 = vld [vmem:[#allocation2 + $0x1358] sm:$0xff]
    %v706 = vld [vmem:[#allocation2 + $0x1360] sm:$0xff]
    %v707 = vld [vmem:[#allocation2 + $0x1368] sm:$0xff]
    %v708 = vld [vmem:[#allocation2 + $0x1370] sm:$0xff]
    %v709 = vld [vmem:[#allocation2 + $0x1378] sm:$0xff]
    %v710 = vld [vmem:[#allocation2 + $0x1380] sm:$0xff]
    %v711 = vld [vmem:[#allocation2 + $0x1388] sm:$0xff]
    %v712 = vld [vmem:[#allocation2 + $0x1390] sm:$0xff]
    %v713 = vld [vmem:[#allocation2 + $0x1398] sm:$0xff]
    %v714 = vld [vmem:[#allocation2 + $0x13a0] sm:$0xff]
    %v715 = vld [vmem:[#allocation2 + $0x13a8] sm:$0xff]
    %v716 = vld [vmem:[#allocation2 + $0x13b0] sm:$0xff]
    %v717 = vld [vmem:[#allocation2 + $0x13b8] sm:$0xff]
    %v718 = vld [vmem:[#allocation2 + $0x13c0] sm:$0xff]
    %v719 = vld [vmem:[#allocation2 + $0x13c8] sm:$0xff]
    %v720 = vld [vmem:[#allocation2 + $0x13d0] sm:$0xff]
    %v721 = vld [vmem:[#allocation2 + $0x13d8] sm:$0xff]
    %v722 = vld [vmem:[#allocation2 + $0x13e0] sm:$0xff]
    %v723 = vld [vmem:[#allocation2 + $0x13e8] sm:$0xff]
    %v724 = vld [vmem:[#allocation2 + $0x13f0] sm:$0xff]
    %v725 = vld [vmem:[#allocation2 + $0x13f8] sm:$0xff]
    %v726 = vld [vmem:[#allocation2 + $0x1400] sm:$0xff]
    %v727 = vld [vmem:[#allocation2 + $0x1408] sm:$0xff]
    %v728 = vld [vmem:[#allocation2 + $0x1410] sm:$0xff]
    %v729 = vld [vmem:[#allocation2 + $0x1418] sm:$0xff]
    %v730 = vld [vmem:[#allocation2 + $0x1420] sm:$0xff]
    %v731 = vld [vmem:[#allocation2 + $0x1428] sm:$0xff]
    %v732 = vld [vmem:[#allocation2 + $0x1430] sm:$0xff]
    %v733 = vld [vmem:[#allocation2 + $0x1438] sm:$0xff]
    %v734 = vld [vmem:[#allocation2 + $0x1440] sm:$0xff]
    %v735 = vld [vmem:[#allocation2 + $0x1448] sm:$0xff]
    %v736 = vld [vmem:[#allocation2 + $0x1450] sm:$0xff]
    %v737 = vld [vmem:[#allocation2 + $0x1458] sm:$0xff]
    %v738 = vld [vmem:[#allocation2 + $0x1460] sm:$0xff]
    %v739 = vld [vmem:[#allocation2 + $0x1468] sm:$0xff]
    %v740 = vld [vmem:[#allocation2 + $0x1470] sm:$0xff]
    %v741 = vld [vmem:[#allocation2 + $0x1478] sm:$0xff]
    %v742 = vld [vmem:[#allocation2 + $0x1480] sm:$0xff]
    %v743 = vld [vmem:[#allocation2 + $0x1488] sm:$0xff]
    %v744 = vld [vmem:[#allocation2 + $0x1490] sm:$0xff]
    %v745 = vld [vmem:[#allocation2 + $0x1498] sm:$0xff]
    %v746 = vld [vmem:[#allocation2 + $0x14a0] sm:$0xff]
    %v747 = vld [vmem:[#allocation2 + $0x14a8] sm:$0xff]
    %v748 = vld [vmem:[#allocation2 + $0x14b0] sm:$0xff]
    %v749 = vld [vmem:[#allocation2 + $0x14b8] sm:$0xff]
    %v750 = vld [vmem:[#allocation2 + $0x14c0] sm:$0xff]
    %v751 = vld [vmem:[#allocation2 + $0x14c8] sm:$0xff]
    %v752 = vld [vmem:[#allocation2 + $0x14d0] sm:$0xff]
    %v753 = vld [vmem:[#allocation2 + $0x14d8] sm:$0xff]
    %v754 = vld [vmem:[#allocation2 + $0x14e0] sm:$0xff]
    %v755 = vld [vmem:[#allocation2 + $0x14e8] sm:$0xff]
    %v756 = vld [vmem:[#allocation2 + $0x14f0] sm:$0xff]
    %v757 = vld [vmem:[#allocation2 + $0x14f8] sm:$0xff]
    %v758 = vld [vmem:[#allocation2 + $0x1500] sm:$0xff]
    %v759 = vld [vmem:[#allocation2 + $0x1508] sm:$0xff]
    %v760 = vld [vmem:[#allocation2 + $0x1510] sm:$0xff]
    %v761 = vld [vmem:[#allocation2 + $0x1518] sm:$0xff]
    %v762 = vld [vmem:[#allocation2 + $0x1520] sm:$0xff]
    %v763 = vld [vmem:[#allocation2 + $0x1528] sm:$0xff]
    %v764 = vld [vmem:[#allocation2 + $0x1530] sm:$0xff]
    %v765 = vld [vmem:[#allocation2 + $0x1538] sm:$0xff]
    %v766 = vld [vmem:[#allocation2 + $0x1540] sm:$0xff]
    %v767 = vld [vmem:[#allocation2 + $0x1548] sm:$0xff]
    %v768 = vld [vmem:[#allocation2 + $0x1550] sm:$0xff]
    %v769 = vld [vmem:[#allocation2 + $0x1558] sm:$0xff]
    %v770 = vld [vmem:[#allocation2 + $0x1560] sm:$0xff]
    %v771 = vld [vmem:[#allocation2 + $0x1568] sm:$0xff]
    %v772 = vld [vmem:[#allocation2 + $0x1570] sm:$0xff]
    %v773 = vld [vmem:[#allocation2 + $0x1578] sm:$0xff]
    %v774 = vld [vmem:[#allocation2 + $0x1580] sm:$0xff]
    %v775 = vld [vmem:[#allocation2 + $0x1588] sm:$0xff]
    %v776 = vld [vmem:[#allocation2 + $0x1590] sm:$0xff]
    %v777 = vld [vmem:[#allocation2 + $0x1598] sm:$0xff]
    %v778 = vld [vmem:[#allocation2 + $0x15a0] sm:$0xff]
    %v779 = vld [vmem:[#allocation2 + $0x15a8] sm:$0xff]
    %v780 = vld [vmem:[#allocation2 + $0x15b0] sm:$0xff]
    %v781 = vld [vmem:[#allocation2 + $0x15b8] sm:$0xff]
    %v782 = vld [vmem:[#allocation2 + $0x15c0] sm:$0xff]
    %v783 = vld [vmem:[#allocation2 + $0x15c8] sm:$0xff]
    %v784 = vld [vmem:[#allocation2 + $0x15d0] sm:$0xff]
    %v785 = vld [vmem:[#allocation2 + $0x15d8] sm:$0xff]
    %v786 = vld [vmem:[#allocation2 + $0x15e0] sm:$0xff]
    %v787 = vld [vmem:[#allocation2 + $0x15e8] sm:$0xff]
    %v788 = vld [vmem:[#allocation2 + $0x15f0] sm:$0xff]
    %v789 = vld [vmem:[#allocation2 + $0x15f8] sm:$0xff]
    %v790 = vld [vmem:[#allocation2 + $0x1600] sm:$0xff]
    %v791 = vld [vmem:[#allocation2 + $0x1608] sm:$0xff]
    %v792 = vld [vmem:[#allocation2 + $0x1610] sm:$0xff]
    %v793 = vld [vmem:[#allocation2 + $0x1618] sm:$0xff]
    %v794 = vld [vmem:[#allocation2 + $0x1620] sm:$0xff]
    %v795 = vld [vmem:[#allocation2 + $0x1628] sm:$0xff]
    %v796 = vld [vmem:[#allocation2 + $0x1630] sm:$0xff]
    %v797 = vld [vmem:[#allocation2 + $0x1638] sm:$0xff]
    %v798 = vld [vmem:[#allocation2 + $0x1640] sm:$0xff]
    %v799 = vld [vmem:[#allocation2 + $0x1648] sm:$0xff]
    %v800 = vld [vmem:[#allocation2 + $0x1650] sm:$0xff]
    %v801 = vld [vmem:[#allocation2 + $0x1658] sm:$0xff]
    %v802 = vld [vmem:[#allocation2 + $0x1660] sm:$0xff]
    %v803 = vld [vmem:[#allocation2 + $0x1668] sm:$0xff]
    %v804 = vld [vmem:[#allocation2 + $0x1670] sm:$0xff]
    %v805 = vld [vmem:[#allocation2 + $0x1678] sm:$0xff]
    %v806 = vld [vmem:[#allocation2 + $0x1680] sm:$0xff]
    %v807 = vld [vmem:[#allocation2 + $0x1688] sm:$0xff]
    %v808 = vld [vmem:[#allocation2 + $0x1690] sm:$0xff]
    %v809 = vld [vmem:[#allocation2 + $0x1698] sm:$0xff]
    %v810 = vld [vmem:[#allocation2 + $0x16a0] sm:$0xff]
    %v811 = vld [vmem:[#allocation2 + $0x16a8] sm:$0xff]
    %v812 = vld [vmem:[#allocation2 + $0x16b0] sm:$0xff]
    %v813 = vld [vmem:[#allocation2 + $0x16b8] sm:$0xff]
    %v814 = vld [vmem:[#allocation2 + $0x16c0] sm:$0xff]
    %v815 = vld [vmem:[#allocation2 + $0x16c8] sm:$0xff]
    %v816 = vld [vmem:[#allocation2 + $0x16d0] sm:$0xff]
    %v817 = vld [vmem:[#allocation2 + $0x16d8] sm:$0xff]
    %v818 = vld [vmem:[#allocation2 + $0x16e0] sm:$0xff]
    %v819 = vld [vmem:[#allocation2 + $0x16e8] sm:$0xff]
    %v820 = vld [vmem:[#allocation2 + $0x16f0] sm:$0xff]
    %v821 = vld [vmem:[#allocation2 + $0x16f8] sm:$0xff]
    %v822 = vld [vmem:[#allocation2 + $0x1700] sm:$0xff]
    %v823 = vld [vmem:[#allocation2 + $0x1708] sm:$0xff]
    %v824 = vld [vmem:[#allocation2 + $0x1710] sm:$0xff]
    %v825 = vld [vmem:[#allocation2 + $0x1718] sm:$0xff]
    %v826 = vld [vmem:[#allocation2 + $0x1720] sm:$0xff]
    %v827 = vld [vmem:[#allocation2 + $0x1728] sm:$0xff]
    %v828 = vld [vmem:[#allocation2 + $0x1730] sm:$0xff]
    %v829 = vld [vmem:[#allocation2 + $0x1738] sm:$0xff]
    %v830 = vld [vmem:[#allocation2 + $0x1740] sm:$0xff]
    %v831 = vld [vmem:[#allocation2 + $0x1748] sm:$0xff]
    %v832 = vld [vmem:[#allocation2 + $0x1750] sm:$0xff]
    %v833 = vld [vmem:[#allocation2 + $0x1758] sm:$0xff]
    %v834 = vld [vmem:[#allocation2 + $0x1760] sm:$0xff]
    %v835 = vld [vmem:[#allocation2 + $0x1768] sm:$0xff]
    %v836 = vld [vmem:[#allocation2 + $0x1770] sm:$0xff]
    %v837 = vld [vmem:[#allocation2 + $0x1778] sm:$0xff]
    %v838 = vld [vmem:[#allocation2 + $0x1780] sm:$0xff]
    %v839 = vld [vmem:[#allocation2 + $0x1788] sm:$0xff]
    %v840 = vld [vmem:[#allocation2 + $0x1790] sm:$0xff]
    %v841 = vld [vmem:[#allocation2 + $0x1798] sm:$0xff]
    %v842 = vld [vmem:[#allocation2 + $0x17a0] sm:$0xff]
    %v843 = vld [vmem:[#allocation2 + $0x17a8] sm:$0xff]
    %v844 = vld [vmem:[#allocation2 + $0x17b0] sm:$0xff]
    %v845 = vld [vmem:[#allocation2 + $0x17b8] sm:$0xff]
    %v846 = vld [vmem:[#allocation2 + $0x17c0] sm:$0xff]
    %v847 = vld [vmem:[#allocation2 + $0x17c8] sm:$0xff]
    %v848 = vld [vmem:[#allocation2 + $0x17d0] sm:$0xff]
    %v849 = vld [vmem:[#allocation2 + $0x17d8] sm:$0xff]
    %v850 = vld [vmem:[#allocation2 + $0x17e0] sm:$0xff]
    %v851 = vld [vmem:[#allocation2 + $0x17e8] sm:$0xff]
    %v852 = vld [vmem:[#allocation2 + $0x17f0] sm:$0xff]
    %v853 = vld [vmem:[#allocation2 + $0x17f8] sm:$0xff]
    %v854 = vld [vmem:[#allocation5] sm:$0xf]
    %856 = vst [vmem:[#allocation1] ss:$9 sm:$0xff] %v83
    %v857 = vld [vmem:[#allocation1] sm:$0xff]
    %v858 = vld [vmem:[#allocation1 + $0x9] sm:$0xff]
    %v859 = vld [vmem:[#allocation1 + $0x12] sm:$0xff]
    %v860 = vld [vmem:[#allocation1 + $0x1b] sm:$0xff]
    %v861 = vld [vmem:[#allocation1 + $0x24] sm:$0xff]
    %v862 = vld [vmem:[#allocation1 + $0x2d] sm:$0xff]
    %v863 = vld [vmem:[#allocation1 + $0x36] sm:$0xff]
    %v864 = vld [vmem:[#allocation1 + $0x3f] sm:$0xff]
    %866 = vst [vmem:[#allocation1] ss:$9 sm:$0xff] %v84
    %v867 = vld [vmem:[#allocation1] sm:$0xff]
    %v868 = vld [vmem:[#allocation1 + $0x9] sm:$0xff]
    %v869 = vld [vmem:[#allocation1 + $0x12] sm:$0xff]
    %v870 = vld [vmem:[#allocation1 + $0x1b] sm:$0xff]
    %v871 = vld [vmem:[#allocation1 + $0x24] sm:$0xff]
    %v872 = vld [vmem:[#allocation1 + $0x2d] sm:$0xff]
    %v873 = vld [vmem:[#allocation1 + $0x36] sm:$0xff]
    %v874 = vld [vmem:[#allocation1 + $0x3f] sm:$0xff]
    %876 = vst [vmem:[#allocation1] ss:$9 sm:$0xff] %v85
    %v877 = vld [vmem:[#allocation1] sm:$0xff]
    %v878 = vld [vmem:[#allocation1 + $0x9] sm:$0xff]
    %v879 = vld [vmem:[#allocation1 + $0x12] sm:$0xff]
    %v880 = vld [vmem:[#allocation1 + $0x1b] sm:$0xff]
    %v881 = vld [vmem:[#allocation1 + $0x24] sm:$0xff]
    %v882 = vld [vmem:[#allocation1 + $0x2d] sm:$0xff]
    %v883 = vld [vmem:[#allocation1 + $0x36] sm:$0xff]
    %v884 = vld [vmem:[#allocation1 + $0x3f] sm:$0xff]
    %v1677 = vunpack.c.l.b16 %v86
    %v1678 = vunpack.c.h.b16 %v86
    %v1679 = vunpack.c.l.b16 %v87
    %v1680 = vunpack.c.h.b16 %v87
    %v1681 = vunpack.c.l.b16 %v88
    %v1682 = vunpack.c.h.b16 %v88
    %v1683 = vunpack.c.l.b16 %v89
    %v1684 = vunpack.c.h.b16 %v89
    %v1685 = vunpack.c.l.b16 %v90
    %v1686 = vunpack.c.h.b16 %v90
    %v1687 = vunpack.c.l.b16 %v91
    %v1688 = vunpack.c.h.b16 %v91
    %v1689 = vunpack.c.l.b16 %v92
    %v1690 = vunpack.c.h.b16 %v92
    %v1691 = vunpack.c.l.b16 %v93
    %v1692 = vunpack.c.h.b16 %v93
    %v1693 = vunpack.c.l.b16 %v94
    %v1694 = vunpack.c.h.b16 %v94
    %v1695 = vunpack.c.l.b16 %v95
    %v1696 = vunpack.c.h.b16 %v95
    %v1697 = vunpack.c.l.b16 %v96
    %v1698 = vunpack.c.h.b16 %v96
    %v1699 = vunpack.c.l.b16 %v97
    %v1700 = vunpack.c.h.b16 %v97
    %v1701 = vunpack.c.l.b16 %v98
    %v1702 = vunpack.c.h.b16 %v98
    %v1703 = vunpack.c.l.b16 %v99
    %v1704 = vunpack.c.h.b16 %v99
    %v1705 = vunpack.c.l.b16 %v100
    %v1706 = vunpack.c.h.b16 %v100
    %v1707 = vunpack.c.l.b16 %v101
    %v1708 = vunpack.c.h.b16 %v101
    %v1709 = vunpack.c.l.b16 %v102
    %v1710 = vunpack.c.h.b16 %v102
    %v1711 = vunpack.c.l.b16 %v103
    %v1712 = vunpack.c.h.b16 %v103
    %v1713 = vunpack.c.l.b16 %v104
    %v1714 = vunpack.c.h.b16 %v104
    %v1715 = vunpack.c.l.b16 %v105
    %v1716 = vunpack.c.h.b16 %v105
    %v1717 = vunpack.c.l.b16 %v106
    %v1718 = vunpack.c.h.b16 %v106
    %v1719 = vunpack.c.l.b16 %v107
    %v1720 = vunpack.c.h.b16 %v107
    %v1721 = vunpack.c.l.b16 %v108
    %v1722 = vunpack.c.h.b16 %v108
    %v1723 = vunpack.c.l.b16 %v109
    %v1724 = vunpack.c.h.b16 %v109
    %v1725 = vunpack.c.l.b16 %v110
    %v1726 = vunpack.c.h.b16 %v110
    %v1727 = vunpack.c.l.b16 %v111
    %v1728 = vunpack.c.h.b16 %v111
    %v1729 = vunpack.c.l.b16 %v112
    %v1730 = vunpack.c.h.b16 %v112
    %v1731 = vunpack.c.l.b16 %v113
    %v1732 = vunpack.c.h.b16 %v113
    %v1733 = vunpack.c.l.b16 %v114
    %v1734 = vunpack.c.h.b16 %v114
    %v1735 = vunpack.c.l.b16 %v115
    %v1736 = vunpack.c.h.b16 %v115
    %v1737 = vunpack.c.l.b16 %v116
    %v1738 = vunpack.c.h.b16 %v116
    %v1739 = vunpack.c.l.b16 %v117
    %v1740 = vunpack.c.h.b16 %v117
    %v1741 = vunpack.c.l.b16 %v118
    %v1742 = vunpack.c.h.b16 %v118
    %v1743 = vunpack.c.l.b16 %v119
    %v1744 = vunpack.c.h.b16 %v119
    %v1745 = vunpack.c.l.b16 %v120
    %v1746 = vunpack.c.h.b16 %v120
    %v1747 = vunpack.c.l.b16 %v121
    %v1748 = vunpack.c.h.b16 %v121
    %v1749 = vunpack.c.l.b16 %v122
    %v1750 = vunpack.c.h.b16 %v122
    %v1751 = vunpack.c.l.b16 %v123
    %v1752 = vunpack.c.h.b16 %v123
    %v1753 = vunpack.c.l.b16 %v124
    %v1754 = vunpack.c.h.b16 %v124
    %v1755 = vunpack.c.l.b16 %v125
    %v1756 = vunpack.c.h.b16 %v125
    %v1757 = vunpack.c.l.b16 %v126
    %v1758 = vunpack.c.h.b16 %v126
    %v1759 = vunpack.c.l.b16 %v127
    %v1760 = vunpack.c.h.b16 %v127
    %v1761 = vunpack.c.l.b16 %v128
    %v1762 = vunpack.c.h.b16 %v128
    %v1763 = vunpack.c.l.b16 %v129
    %v1764 = vunpack.c.h.b16 %v129
    %v1765 = vunpack.c.l.b16 %v130
    %v1766 = vunpack.c.h.b16 %v130
    %v1767 = vunpack.c.l.b16 %v131
    %v1768 = vunpack.c.h.b16 %v131
    %v1769 = vunpack.c.l.b16 %v132
    %v1770 = vunpack.c.h.b16 %v132
    %v1771 = vunpack.c.l.b16 %v133
    %v1772 = vunpack.c.h.b16 %v133
    %v1773 = vunpack.c.l.b16 %v134
    %v1774 = vunpack.c.h.b16 %v134
    %v1775 = vunpack.c.l.b16 %v135
    %v1776 = vunpack.c.h.b16 %v135
    %v1777 = vunpack.c.l.b16 %v136
    %v1778 = vunpack.c.h.b16 %v136
    %v1779 = vunpack.c.l.b16 %v137
    %v1780 = vunpack.c.h.b16 %v137
    %v1781 = vunpack.c.l.b16 %v138
    %v1782 = vunpack.c.h.b16 %v138
    %v1783 = vunpack.c.l.b16 %v139
    %v1784 = vunpack.c.h.b16 %v139
    %v1785 = vunpack.c.l.b16 %v140
    %v1786 = vunpack.c.h.b16 %v140
    %v1787 = vunpack.c.l.b16 %v141
    %v1788 = vunpack.c.h.b16 %v141
    %v1789 = vunpack.c.l.b16 %v142
    %v1790 = vunpack.c.h.b16 %v142
    %v1791 = vunpack.c.l.b16 %v143
    %v1792 = vunpack.c.h.b16 %v143
    %v1793 = vunpack.c.l.b16 %v144
    %v1794 = vunpack.c.h.b16 %v144
    %v1795 = vunpack.c.l.b16 %v145
    %v1796 = vunpack.c.h.b16 %v145
    %v1797 = vunpack.c.l.b16 %v146
    %v1798 = vunpack.c.h.b16 %v146
    %v1799 = vunpack.c.l.b16 %v147
    %v1800 = vunpack.c.h.b16 %v147
    %v1801 = vunpack.c.l.b16 %v148
    %v1802 = vunpack.c.h.b16 %v148
    %v1803 = vunpack.c.l.b16 %v149
    %v1804 = vunpack.c.h.b16 %v149
    %v1805 = vunpack.c.l.b16 %v150
    %v1806 = vunpack.c.h.b16 %v150
    %v1807 = vunpack.c.l.b16 %v151
    %v1808 = vunpack.c.h.b16 %v151
    %v1809 = vunpack.c.l.b16 %v152
    %v1810 = vunpack.c.h.b16 %v152
    %v1811 = vunpack.c.l.b16 %v153
    %v1812 = vunpack.c.h.b16 %v153
    %v1813 = vunpack.c.l.b16 %v154
    %v1814 = vunpack.c.h.b16 %v154
    %v1815 = vunpack.c.l.b16 %v155
    %v1816 = vunpack.c.h.b16 %v155
    %v1817 = vunpack.c.l.b16 %v156
    %v1818 = vunpack.c.h.b16 %v156
    %v1819 = vunpack.c.l.b16 %v157
    %v1820 = vunpack.c.h.b16 %v157
    %v1821 = vunpack.c.l.b16 %v158
    %v1822 = vunpack.c.h.b16 %v158
    %v1823 = vunpack.c.l.b16 %v159
    %v1824 = vunpack.c.h.b16 %v159
    %v1825 = vunpack.c.l.b16 %v160
    %v1826 = vunpack.c.h.b16 %v160
    %v1827 = vunpack.c.l.b16 %v161
    %v1828 = vunpack.c.h.b16 %v161
    %v1829 = vunpack.c.l.b16 %v162
    %v1830 = vunpack.c.h.b16 %v162
    %v1831 = vunpack.c.l.b16 %v163
    %v1832 = vunpack.c.h.b16 %v163
    %v1833 = vunpack.c.l.b16 %v164
    %v1834 = vunpack.c.h.b16 %v164
    %v1835 = vunpack.c.l.b16 %v165
    %v1836 = vunpack.c.h.b16 %v165
    %v1837 = vunpack.c.l.b16 %v166
    %v1838 = vunpack.c.h.b16 %v166
    %v1839 = vunpack.c.l.b16 %v167
    %v1840 = vunpack.c.h.b16 %v167
    %v1841 = vunpack.c.l.b16 %v168
    %v1842 = vunpack.c.h.b16 %v168
    %v1843 = vunpack.c.l.b16 %v169
    %v1844 = vunpack.c.h.b16 %v169
    %v1845 = vunpack.c.l.b16 %v170
    %v1846 = vunpack.c.h.b16 %v170
    %v1847 = vunpack.c.l.b16 %v171
    %v1848 = vunpack.c.h.b16 %v171
    %v1849 = vunpack.c.l.b16 %v172
    %v1850 = vunpack.c.h.b16 %v172
    %v1851 = vunpack.c.l.b16 %v173
    %v1852 = vunpack.c.h.b16 %v173
    %v1853 = vunpack.c.l.b16 %v174
    %v1854 = vunpack.c.h.b16 %v174
    %v1855 = vunpack.c.l.b16 %v175
    %v1856 = vunpack.c.h.b16 %v175
    %v1857 = vunpack.c.l.b16 %v176
    %v1858 = vunpack.c.h.b16 %v176
    %v1859 = vunpack.c.l.b16 %v177
    %v1860 = vunpack.c.h.b16 %v177
    %v1861 = vunpack.c.l.b16 %v178
    %v1862 = vunpack.c.h.b16 %v178
    %v1863 = vunpack.c.l.b16 %v179
    %v1864 = vunpack.c.h.b16 %v179
    %v1865 = vunpack.c.l.b16 %v180
    %v1866 = vunpack.c.h.b16 %v180
    %v1867 = vunpack.c.l.b16 %v181
    %v1868 = vunpack.c.h.b16 %v181
    %v1869 = vunpack.c.l.b16 %v182
    %v1870 = vunpack.c.h.b16 %v182
    %v1871 = vunpack.c.l.b16 %v183
    %v1872 = vunpack.c.h.b16 %v183
    %v1873 = vunpack.c.l.b16 %v184
    %v1874 = vunpack.c.h.b16 %v184
    %v1875 = vunpack.c.l.b16 %v185
    %v1876 = vunpack.c.h.b16 %v185
    %v1877 = vunpack.c.l.b16 %v186
    %v1878 = vunpack.c.h.b16 %v186
    %v1879 = vunpack.c.l.b16 %v187
    %v1880 = vunpack.c.h.b16 %v187
    %v1881 = vunpack.c.l.b16 %v188
    %v1882 = vunpack.c.h.b16 %v188
    %v1883 = vunpack.c.l.b16 %v189
    %v1884 = vunpack.c.h.b16 %v189
    %v1885 = vunpack.c.l.b16 %v190
    %v1886 = vunpack.c.h.b16 %v190
    %v1887 = vunpack.c.l.b16 %v191
    %v1888 = vunpack.c.h.b16 %v191
    %v1889 = vunpack.c.l.b16 %v192
    %v1890 = vunpack.c.h.b16 %v192
    %v1891 = vunpack.c.l.b16 %v193
    %v1892 = vunpack.c.h.b16 %v193
    %v1893 = vunpack.c.l.b16 %v194
    %v1894 = vunpack.c.h.b16 %v194
    %v1895 = vunpack.c.l.b16 %v195
    %v1896 = vunpack.c.h.b16 %v195
    %v1897 = vunpack.c.l.b16 %v196
    %v1898 = vunpack.c.h.b16 %v196
    %v1899 = vunpack.c.l.b16 %v197
    %v1900 = vunpack.c.h.b16 %v197
    %v1901 = vunpack.c.l.b16 %v198
    %v1902 = vunpack.c.h.b16 %v198
    %v1903 = vunpack.c.l.b16 %v199
    %v1904 = vunpack.c.h.b16 %v199
    %v1905 = vunpack.c.l.b16 %v200
    %v1906 = vunpack.c.h.b16 %v200
    %v1907 = vunpack.c.l.b16 %v201
    %v1908 = vunpack.c.h.b16 %v201
    %v1909 = vunpack.c.l.b16 %v202
    %v1910 = vunpack.c.h.b16 %v202
    %v1911 = vunpack.c.l.b16 %v203
    %v1912 = vunpack.c.h.b16 %v203
    %v1913 = vunpack.c.l.b16 %v204
    %v1914 = vunpack.c.h.b16 %v204
    %v1915 = vunpack.c.l.b16 %v205
    %v1916 = vunpack.c.h.b16 %v205
    %v1917 = vunpack.c.l.b16 %v206
    %v1918 = vunpack.c.h.b16 %v206
    %v1919 = vunpack.c.l.b16 %v207
    %v1920 = vunpack.c.h.b16 %v207
    %v1921 = vunpack.c.l.b16 %v208
    %v1922 = vunpack.c.h.b16 %v208
    %v1923 = vunpack.c.l.b16 %v209
    %v1924 = vunpack.c.h.b16 %v209
    %v1925 = vunpack.c.l.b16 %v210
    %v1926 = vunpack.c.h.b16 %v210
    %v1927 = vunpack.c.l.b16 %v211
    %v1928 = vunpack.c.h.b16 %v211
    %v1929 = vunpack.c.l.b16 %v212
    %v1930 = vunpack.c.h.b16 %v212
    %v1931 = vunpack.c.l.b16 %v213
    %v1932 = vunpack.c.h.b16 %v213
    %v1933 = vunpack.c.l.b16 %v214
    %v1934 = vunpack.c.h.b16 %v214
    %v1935 = vunpack.c.l.b16 %v215
    %v1936 = vunpack.c.h.b16 %v215
    %v1937 = vunpack.c.l.b16 %v216
    %v1938 = vunpack.c.h.b16 %v216
    %v1939 = vunpack.c.l.b16 %v217
    %v1940 = vunpack.c.h.b16 %v217
    %v1941 = vunpack.c.l.b16 %v218
    %v1942 = vunpack.c.h.b16 %v218
    %v1943 = vunpack.c.l.b16 %v219
    %v1944 = vunpack.c.h.b16 %v219
    %v1945 = vunpack.c.l.b16 %v220
    %v1946 = vunpack.c.h.b16 %v220
    %v1947 = vunpack.c.l.b16 %v221
    %v1948 = vunpack.c.h.b16 %v221
    %v1949 = vunpack.c.l.b16 %v222
    %v1950 = vunpack.c.h.b16 %v222
    %v1951 = vunpack.c.l.b16 %v223
    %v1952 = vunpack.c.h.b16 %v223
    %v1953 = vunpack.c.l.b16 %v224
    %v1954 = vunpack.c.h.b16 %v224
    %v1955 = vunpack.c.l.b16 %v225
    %v1956 = vunpack.c.h.b16 %v225
    %v1957 = vunpack.c.l.b16 %v226
    %v1958 = vunpack.c.h.b16 %v226
    %v1959 = vunpack.c.l.b16 %v227
    %v1960 = vunpack.c.h.b16 %v227
    %v1961 = vunpack.c.l.b16 %v228
    %v1962 = vunpack.c.h.b16 %v228
    %v1963 = vunpack.c.l.b16 %v229
    %v1964 = vunpack.c.h.b16 %v229
    %v1965 = vunpack.c.l.b16 %v230
    %v1966 = vunpack.c.h.b16 %v230
    %v1967 = vunpack.c.l.b16 %v231
    %v1968 = vunpack.c.h.b16 %v231
    %v1969 = vunpack.c.l.b16 %v232
    %v1970 = vunpack.c.h.b16 %v232
    %v1971 = vunpack.c.l.b16 %v233
    %v1972 = vunpack.c.h.b16 %v233
    %v1973 = vunpack.c.l.b16 %v234
    %v1974 = vunpack.c.h.b16 %v234
    %v1975 = vunpack.c.l.b16 %v235
    %v1976 = vunpack.c.h.b16 %v235
    %v1977 = vunpack.c.l.b16 %v236
    %v1978 = vunpack.c.h.b16 %v236
    %v1979 = vunpack.c.l.b16 %v237
    %v1980 = vunpack.c.h.b16 %v237
    %v1981 = vunpack.c.l.b16 %v238
    %v1982 = vunpack.c.h.b16 %v238
    %v1983 = vunpack.c.l.b16 %v239
    %v1984 = vunpack.c.h.b16 %v239
    %v1985 = vunpack.c.l.b16 %v240
    %v1986 = vunpack.c.h.b16 %v240
    %v1987 = vunpack.c.l.b16 %v241
    %v1988 = vunpack.c.h.b16 %v241
    %v1989 = vunpack.c.l.b16 %v242
    %v1990 = vunpack.c.h.b16 %v242
    %v1991 = vunpack.c.l.b16 %v243
    %v1992 = vunpack.c.h.b16 %v243
    %v1993 = vunpack.c.l.b16 %v244
    %v1994 = vunpack.c.h.b16 %v244
    %v1995 = vunpack.c.l.b16 %v245
    %v1996 = vunpack.c.h.b16 %v245
    %v1997 = vunpack.c.l.b16 %v246
    %v1998 = vunpack.c.h.b16 %v246
    %v1999 = vunpack.c.l.b16 %v247
    %v2000 = vunpack.c.h.b16 %v247
    %v2001 = vunpack.c.l.b16 %v248
    %v2002 = vunpack.c.h.b16 %v248
    %v2003 = vunpack.c.l.b16 %v249
    %v2004 = vunpack.c.h.b16 %v249
    %v2005 = vunpack.c.l.b16 %v250
    %v2006 = vunpack.c.h.b16 %v250
    %v2007 = vunpack.c.l.b16 %v251
    %v2008 = vunpack.c.h.b16 %v251
    %v2009 = vunpack.c.l.b16 %v252
    %v2010 = vunpack.c.h.b16 %v252
    %v2011 = vunpack.c.l.b16 %v253
    %v2012 = vunpack.c.h.b16 %v253
    %v2013 = vunpack.c.l.b16 %v254
    %v2014 = vunpack.c.h.b16 %v254
    %v2015 = vunpack.c.l.b16 %v255
    %v2016 = vunpack.c.h.b16 %v255
    %v2017 = vunpack.c.l.b16 %v256
    %v2018 = vunpack.c.h.b16 %v256
    %v2019 = vunpack.c.l.b16 %v257
    %v2020 = vunpack.c.h.b16 %v257
    %v2021 = vunpack.c.l.b16 %v258
    %v2022 = vunpack.c.h.b16 %v258
    %v2023 = vunpack.c.l.b16 %v259
    %v2024 = vunpack.c.h.b16 %v259
    %v2025 = vunpack.c.l.b16 %v260
    %v2026 = vunpack.c.h.b16 %v260
    %v2027 = vunpack.c.l.b16 %v261
    %v2028 = vunpack.c.h.b16 %v261
    %v2029 = vunpack.c.l.b16 %v262
    %v2030 = vunpack.c.h.b16 %v262
    %v2031 = vunpack.c.l.b16 %v263
    %v2032 = vunpack.c.h.b16 %v263
    %v2033 = vunpack.c.l.b16 %v264
    %v2034 = vunpack.c.h.b16 %v264
    %v2035 = vunpack.c.l.b16 %v265
    %v2036 = vunpack.c.h.b16 %v265
    %v2037 = vunpack.c.l.b16 %v266
    %v2038 = vunpack.c.h.b16 %v266
    %v2039 = vunpack.c.l.b16 %v267
    %v2040 = vunpack.c.h.b16 %v267
    %v2041 = vunpack.c.l.b16 %v268
    %v2042 = vunpack.c.h.b16 %v268
    %v2043 = vunpack.c.l.b16 %v269
    %v2044 = vunpack.c.h.b16 %v269
    %v2045 = vunpack.c.l.b16 %v270
    %v2046 = vunpack.c.h.b16 %v270
    %v2047 = vunpack.c.l.b16 %v271
    %v2048 = vunpack.c.h.b16 %v271
    %v2049 = vunpack.c.l.b16 %v272
    %v2050 = vunpack.c.h.b16 %v272
    %v2051 = vunpack.c.l.b16 %v273
    %v2052 = vunpack.c.h.b16 %v273
    %v2053 = vunpack.c.l.b16 %v274
    %v2054 = vunpack.c.h.b16 %v274
    %v2055 = vunpack.c.l.b16 %v275
    %v2056 = vunpack.c.h.b16 %v275
    %v2057 = vunpack.c.l.b16 %v276
    %v2058 = vunpack.c.h.b16 %v276
    %v2059 = vunpack.c.l.b16 %v277
    %v2060 = vunpack.c.h.b16 %v277
    %v2061 = vunpack.c.l.b16 %v278
    %v2062 = vunpack.c.h.b16 %v278
    %v2063 = vunpack.c.l.b16 %v279
    %v2064 = vunpack.c.h.b16 %v279
    %v2065 = vunpack.c.l.b16 %v280
    %v2066 = vunpack.c.h.b16 %v280
    %v2067 = vunpack.c.l.b16 %v281
    %v2068 = vunpack.c.h.b16 %v281
    %v2069 = vunpack.c.l.b16 %v282
    %v2070 = vunpack.c.h.b16 %v282
    %v2071 = vunpack.c.l.b16 %v283
    %v2072 = vunpack.c.h.b16 %v283
    %v2073 = vunpack.c.l.b16 %v284
    %v2074 = vunpack.c.h.b16 %v284
    %v2075 = vunpack.c.l.b16 %v285
    %v2076 = vunpack.c.h.b16 %v285
    %v2077 = vunpack.c.l.b16 %v286
    %v2078 = vunpack.c.h.b16 %v286
    %v2079 = vunpack.c.l.b16 %v287
    %v2080 = vunpack.c.h.b16 %v287
    %v2081 = vunpack.c.l.b16 %v288
    %v2082 = vunpack.c.h.b16 %v288
    %v2083 = vunpack.c.l.b16 %v289
    %v2084 = vunpack.c.h.b16 %v289
    %v2085 = vunpack.c.l.b16 %v290
    %v2086 = vunpack.c.h.b16 %v290
    %v2087 = vunpack.c.l.b16 %v291
    %v2088 = vunpack.c.h.b16 %v291
    %v2089 = vunpack.c.l.b16 %v292
    %v2090 = vunpack.c.h.b16 %v292
    %v2091 = vunpack.c.l.b16 %v293
    %v2092 = vunpack.c.h.b16 %v293
    %v2093 = vunpack.c.l.b16 %v294
    %v2094 = vunpack.c.h.b16 %v294
    %v2095 = vunpack.c.l.b16 %v295
    %v2096 = vunpack.c.h.b16 %v295
    %v2097 = vunpack.c.l.b16 %v296
    %v2098 = vunpack.c.h.b16 %v296
    %v2099 = vunpack.c.l.b16 %v297
    %v2100 = vunpack.c.h.b16 %v297
    %v2101 = vunpack.c.l.b16 %v298
    %v2102 = vunpack.c.h.b16 %v298
    %v2103 = vunpack.c.l.b16 %v299
    %v2104 = vunpack.c.h.b16 %v299
    %v2105 = vunpack.c.l.b16 %v300
    %v2106 = vunpack.c.h.b16 %v300
    %v2107 = vunpack.c.l.b16 %v301
    %v2108 = vunpack.c.h.b16 %v301
    %v2109 = vunpack.c.l.b16 %v302
    %v2110 = vunpack.c.h.b16 %v302
    %v2111 = vunpack.c.l.b16 %v303
    %v2112 = vunpack.c.h.b16 %v303
    %v2113 = vunpack.c.l.b16 %v304
    %v2114 = vunpack.c.h.b16 %v304
    %v2115 = vunpack.c.l.b16 %v305
    %v2116 = vunpack.c.h.b16 %v305
    %v2117 = vunpack.c.l.b16 %v306
    %v2118 = vunpack.c.h.b16 %v306
    %v2119 = vunpack.c.l.b16 %v307
    %v2120 = vunpack.c.h.b16 %v307
    %v2121 = vunpack.c.l.b16 %v308
    %v2122 = vunpack.c.h.b16 %v308
    %v2123 = vunpack.c.l.b16 %v309
    %v2124 = vunpack.c.h.b16 %v309
    %v2125 = vunpack.c.l.b16 %v310
    %v2126 = vunpack.c.h.b16 %v310
    %v2127 = vunpack.c.l.b16 %v311
    %v2128 = vunpack.c.h.b16 %v311
    %v2129 = vunpack.c.l.b16 %v312
    %v2130 = vunpack.c.h.b16 %v312
    %v2131 = vunpack.c.l.b16 %v313
    %v2132 = vunpack.c.h.b16 %v313
    %v2133 = vunpack.c.l.b16 %v314
    %v2134 = vunpack.c.h.b16 %v314
    %v2135 = vunpack.c.l.b16 %v315
    %v2136 = vunpack.c.h.b16 %v315
    %v2137 = vunpack.c.l.b16 %v316
    %v2138 = vunpack.c.h.b16 %v316
    %v2139 = vunpack.c.l.b16 %v317
    %v2140 = vunpack.c.h.b16 %v317
    %v2141 = vunpack.c.l.b16 %v318
    %v2142 = vunpack.c.h.b16 %v318
    %v2143 = vunpack.c.l.b16 %v319
    %v2144 = vunpack.c.h.b16 %v319
    %v2145 = vunpack.c.l.b16 %v320
    %v2146 = vunpack.c.h.b16 %v320
    %v2147 = vunpack.c.l.b16 %v321
    %v2148 = vunpack.c.h.b16 %v321
    %v2149 = vunpack.c.l.b16 %v322
    %v2150 = vunpack.c.h.b16 %v322
    %v2151 = vunpack.c.l.b16 %v323
    %v2152 = vunpack.c.h.b16 %v323
    %v2153 = vunpack.c.l.b16 %v324
    %v2154 = vunpack.c.h.b16 %v324
    %v2155 = vunpack.c.l.b16 %v325
    %v2156 = vunpack.c.h.b16 %v325
    %v2157 = vunpack.c.l.b16 %v326
    %v2158 = vunpack.c.h.b16 %v326
    %v2159 = vunpack.c.l.b16 %v327
    %v2160 = vunpack.c.h.b16 %v327
    %v2161 = vunpack.c.l.b16 %v328
    %v2162 = vunpack.c.h.b16 %v328
    %v2163 = vunpack.c.l.b16 %v329
    %v2164 = vunpack.c.h.b16 %v329
    %v2165 = vunpack.c.l.b16 %v330
    %v2166 = vunpack.c.h.b16 %v330
    %v2167 = vunpack.c.l.b16 %v331
    %v2168 = vunpack.c.h.b16 %v331
    %v2169 = vunpack.c.l.b16 %v332
    %v2170 = vunpack.c.h.b16 %v332
    %v2171 = vunpack.c.l.b16 %v333
    %v2172 = vunpack.c.h.b16 %v333
    %v2173 = vunpack.c.l.b16 %v334
    %v2174 = vunpack.c.h.b16 %v334
    %v2175 = vunpack.c.l.b16 %v335
    %v2176 = vunpack.c.h.b16 %v335
    %v2177 = vunpack.c.l.b16 %v336
    %v2178 = vunpack.c.h.b16 %v336
    %v2179 = vunpack.c.l.b16 %v337
    %v2180 = vunpack.c.h.b16 %v337
    %v2181 = vunpack.c.l.b16 %v338
    %v2182 = vunpack.c.h.b16 %v338
    %v2183 = vunpack.c.l.b16 %v339
    %v2184 = vunpack.c.h.b16 %v339
    %v2185 = vunpack.c.l.b16 %v340
    %v2186 = vunpack.c.h.b16 %v340
    %v2187 = vunpack.c.l.b16 %v341
    %v2188 = vunpack.c.h.b16 %v341
    %v2189 = vunpack.c.l.b16 %v342
    %v2190 = vunpack.c.h.b16 %v342
    %v2191 = vunpack.c.l.b16 %v343
    %v2192 = vunpack.c.h.b16 %v343
    %v2193 = vunpack.c.l.b16 %v344
    %v2194 = vunpack.c.h.b16 %v344
    %v2195 = vunpack.c.l.b16 %v345
    %v2196 = vunpack.c.h.b16 %v345
    %v2197 = vunpack.c.l.b16 %v346
    %v2198 = vunpack.c.h.b16 %v346
    %v2199 = vunpack.c.l.b16 %v347
    %v2200 = vunpack.c.h.b16 %v347
    %v2201 = vunpack.c.l.b16 %v348
    %v2202 = vunpack.c.h.b16 %v348
    %v2203 = vunpack.c.l.b16 %v349
    %v2204 = vunpack.c.h.b16 %v349
    %v2205 = vunpack.c.l.b16 %v350
    %v2206 = vunpack.c.h.b16 %v350
    %v2207 = vunpack.c.l.b16 %v351
    %v2208 = vunpack.c.h.b16 %v351
    %v2209 = vunpack.c.l.b16 %v352
    %v2210 = vunpack.c.h.b16 %v352
    %v2211 = vunpack.c.l.b16 %v353
    %v2212 = vunpack.c.h.b16 %v353
    %v2213 = vunpack.c.l.b16 %v354
    %v2214 = vunpack.c.h.b16 %v354
    %v2215 = vunpack.c.l.b16 %v355
    %v2216 = vunpack.c.h.b16 %v355
    %v2217 = vunpack.c.l.b16 %v356
    %v2218 = vunpack.c.h.b16 %v356
    %v2219 = vunpack.c.l.b16 %v357
    %v2220 = vunpack.c.h.b16 %v357
    %v2221 = vunpack.c.l.b16 %v358
    %v2222 = vunpack.c.h.b16 %v358
    %v2223 = vunpack.c.l.b16 %v359
    %v2224 = vunpack.c.h.b16 %v359
    %v2225 = vunpack.c.l.b16 %v360
    %v2226 = vunpack.c.h.b16 %v360
    %v2227 = vunpack.c.l.b16 %v361
    %v2228 = vunpack.c.h.b16 %v361
    %v2229 = vunpack.c.l.b16 %v362
    %v2230 = vunpack.c.h.b16 %v362
    %v2231 = vunpack.c.l.b16 %v363
    %v2232 = vunpack.c.h.b16 %v363
    %v2233 = vunpack.c.l.b16 %v364
    %v2234 = vunpack.c.h.b16 %v364
    %v2235 = vunpack.c.l.b16 %v365
    %v2236 = vunpack.c.h.b16 %v365
    %v2237 = vunpack.c.l.b16 %v366
    %v2238 = vunpack.c.h.b16 %v366
    %v2239 = vunpack.c.l.b16 %v367
    %v2240 = vunpack.c.h.b16 %v367
    %v2241 = vunpack.c.l.b16 %v368
    %v2242 = vunpack.c.h.b16 %v368
    %v2243 = vunpack.c.l.b16 %v369
    %v2244 = vunpack.c.h.b16 %v369
    %v2245 = vunpack.c.l.b16 %v370
    %v2246 = vunpack.c.h.b16 %v370
    %v2247 = vunpack.c.l.b16 %v371
    %v2248 = vunpack.c.h.b16 %v371
    %v2249 = vunpack.c.l.b16 %v372
    %v2250 = vunpack.c.h.b16 %v372
    %v2251 = vunpack.c.l.b16 %v373
    %v2252 = vunpack.c.h.b16 %v373
    %v2253 = vunpack.c.l.b16 %v374
    %v2254 = vunpack.c.h.b16 %v374
    %v2255 = vunpack.c.l.b16 %v375
    %v2256 = vunpack.c.h.b16 %v375
    %v2257 = vunpack.c.l.b16 %v376
    %v2258 = vunpack.c.h.b16 %v376
    %v2259 = vunpack.c.l.b16 %v377
    %v2260 = vunpack.c.h.b16 %v377
    %v2261 = vunpack.c.l.b16 %v378
    %v2262 = vunpack.c.h.b16 %v378
    %v2263 = vunpack.c.l.b16 %v379
    %v2264 = vunpack.c.h.b16 %v379
    %v2265 = vunpack.c.l.b16 %v380
    %v2266 = vunpack.c.h.b16 %v380
    %v2267 = vunpack.c.l.b16 %v381
    %v2268 = vunpack.c.h.b16 %v381
    %v2269 = vunpack.c.l.b16 %v382
    %v2270 = vunpack.c.h.b16 %v382
    %v2271 = vunpack.c.l.b16 %v383
    %v2272 = vunpack.c.h.b16 %v383
    %v2273 = vunpack.c.l.b16 %v384
    %v2274 = vunpack.c.h.b16 %v384
    %v2275 = vunpack.c.l.b16 %v385
    %v2276 = vunpack.c.h.b16 %v385
    %v2277 = vunpack.c.l.b16 %v386
    %v2278 = vunpack.c.h.b16 %v386
    %v2279 = vunpack.c.l.b16 %v387
    %v2280 = vunpack.c.h.b16 %v387
    %v2281 = vunpack.c.l.b16 %v388
    %v2282 = vunpack.c.h.b16 %v388
    %v2283 = vunpack.c.l.b16 %v389
    %v2284 = vunpack.c.h.b16 %v389
    %v2285 = vunpack.c.l.b16 %v390
    %v2286 = vunpack.c.h.b16 %v390
    %v2287 = vunpack.c.l.b16 %v391
    %v2288 = vunpack.c.h.b16 %v391
    %v2289 = vunpack.c.l.b16 %v392
    %v2290 = vunpack.c.h.b16 %v392
    %v2291 = vunpack.c.l.b16 %v393
    %v2292 = vunpack.c.h.b16 %v393
    %v2293 = vunpack.c.l.b16 %v394
    %v2294 = vunpack.c.h.b16 %v394
    %v2295 = vunpack.c.l.b16 %v395
    %v2296 = vunpack.c.h.b16 %v395
    %v2297 = vunpack.c.l.b16 %v396
    %v2298 = vunpack.c.h.b16 %v396
    %v2299 = vunpack.c.l.b16 %v397
    %v2300 = vunpack.c.h.b16 %v397
    %v2301 = vunpack.c.l.b16 %v398
    %v2302 = vunpack.c.h.b16 %v398
    %v2303 = vunpack.c.l.b16 %v399
    %v2304 = vunpack.c.h.b16 %v399
    %v2305 = vunpack.c.l.b16 %v400
    %v2306 = vunpack.c.h.b16 %v400
    %v2307 = vunpack.c.l.b16 %v401
    %v2308 = vunpack.c.h.b16 %v401
    %v2309 = vunpack.c.l.b16 %v402
    %v2310 = vunpack.c.h.b16 %v402
    %v2311 = vunpack.c.l.b16 %v403
    %v2312 = vunpack.c.h.b16 %v403
    %v2313 = vunpack.c.l.b16 %v404
    %v2314 = vunpack.c.h.b16 %v404
    %v2315 = vunpack.c.l.b16 %v405
    %v2316 = vunpack.c.h.b16 %v405
    %v2317 = vunpack.c.l.b16 %v406
    %v2318 = vunpack.c.h.b16 %v406
    %v2319 = vunpack.c.l.b16 %v407
    %v2320 = vunpack.c.h.b16 %v407
    %v2321 = vunpack.c.l.b16 %v408
    %v2322 = vunpack.c.h.b16 %v408
    %v2323 = vunpack.c.l.b16 %v409
    %v2324 = vunpack.c.h.b16 %v409
    %v2325 = vunpack.c.l.b16 %v410
    %v2326 = vunpack.c.h.b16 %v410
    %v2327 = vunpack.c.l.b16 %v411
    %v2328 = vunpack.c.h.b16 %v411
    %v2329 = vunpack.c.l.b16 %v412
    %v2330 = vunpack.c.h.b16 %v412
    %v2331 = vunpack.c.l.b16 %v413
    %v2332 = vunpack.c.h.b16 %v413
    %v2333 = vunpack.c.l.b16 %v414
    %v2334 = vunpack.c.h.b16 %v414
    %v2335 = vunpack.c.l.b16 %v415
    %v2336 = vunpack.c.h.b16 %v415
    %v2337 = vunpack.c.l.b16 %v416
    %v2338 = vunpack.c.h.b16 %v416
    %v2339 = vunpack.c.l.b16 %v417
    %v2340 = vunpack.c.h.b16 %v417
    %v2341 = vunpack.c.l.b16 %v418
    %v2342 = vunpack.c.h.b16 %v418
    %v2343 = vunpack.c.l.b16 %v419
    %v2344 = vunpack.c.h.b16 %v419
    %v2345 = vunpack.c.l.b16 %v420
    %v2346 = vunpack.c.h.b16 %v420
    %v2347 = vunpack.c.l.b16 %v421
    %v2348 = vunpack.c.h.b16 %v421
    %v2349 = vunpack.c.l.b16 %v422
    %v2350 = vunpack.c.h.b16 %v422
    %v2351 = vunpack.c.l.b16 %v423
    %v2352 = vunpack.c.h.b16 %v423
    %v2353 = vunpack.c.l.b16 %v424
    %v2354 = vunpack.c.h.b16 %v424
    %v2355 = vunpack.c.l.b16 %v425
    %v2356 = vunpack.c.h.b16 %v425
    %v2357 = vunpack.c.l.b16 %v426
    %v2358 = vunpack.c.h.b16 %v426
    %v2359 = vunpack.c.l.b16 %v427
    %v2360 = vunpack.c.h.b16 %v427
    %v2361 = vunpack.c.l.b16 %v428
    %v2362 = vunpack.c.h.b16 %v428
    %v2363 = vunpack.c.l.b16 %v429
    %v2364 = vunpack.c.h.b16 %v429
    %v2365 = vunpack.c.l.b16 %v430
    %v2366 = vunpack.c.h.b16 %v430
    %v2367 = vunpack.c.l.b16 %v431
    %v2368 = vunpack.c.h.b16 %v431
    %v2369 = vunpack.c.l.b16 %v432
    %v2370 = vunpack.c.h.b16 %v432
    %v2371 = vunpack.c.l.b16 %v433
    %v2372 = vunpack.c.h.b16 %v433
    %v2373 = vunpack.c.l.b16 %v434
    %v2374 = vunpack.c.h.b16 %v434
    %v2375 = vunpack.c.l.b16 %v435
    %v2376 = vunpack.c.h.b16 %v435
    %v2377 = vunpack.c.l.b16 %v436
    %v2378 = vunpack.c.h.b16 %v436
    %v2379 = vunpack.c.l.b16 %v437
    %v2380 = vunpack.c.h.b16 %v437
    %v2381 = vunpack.c.l.b16 %v438
    %v2382 = vunpack.c.h.b16 %v438
    %v2383 = vunpack.c.l.b16 %v439
    %v2384 = vunpack.c.h.b16 %v439
    %v2385 = vunpack.c.l.b16 %v440
    %v2386 = vunpack.c.h.b16 %v440
    %v2387 = vunpack.c.l.b16 %v441
    %v2388 = vunpack.c.h.b16 %v441
    %v2389 = vunpack.c.l.b16 %v442
    %v2390 = vunpack.c.h.b16 %v442
    %v2391 = vunpack.c.l.b16 %v443
    %v2392 = vunpack.c.h.b16 %v443
    %v2393 = vunpack.c.l.b16 %v444
    %v2394 = vunpack.c.h.b16 %v444
    %v2395 = vunpack.c.l.b16 %v445
    %v2396 = vunpack.c.h.b16 %v445
    %v2397 = vunpack.c.l.b16 %v446
    %v2398 = vunpack.c.h.b16 %v446
    %v2399 = vunpack.c.l.b16 %v447
    %v2400 = vunpack.c.h.b16 %v447
    %v2401 = vunpack.c.l.b16 %v448
    %v2402 = vunpack.c.h.b16 %v448
    %v2403 = vunpack.c.l.b16 %v449
    %v2404 = vunpack.c.h.b16 %v449
    %v2405 = vunpack.c.l.b16 %v450
    %v2406 = vunpack.c.h.b16 %v450
    %v2407 = vunpack.c.l.b16 %v451
    %v2408 = vunpack.c.h.b16 %v451
    %v2409 = vunpack.c.l.b16 %v452
    %v2410 = vunpack.c.h.b16 %v452
    %v2411 = vunpack.c.l.b16 %v453
    %v2412 = vunpack.c.h.b16 %v453
    %v2413 = vunpack.c.l.b16 %v454
    %v2414 = vunpack.c.h.b16 %v454
    %v2415 = vunpack.c.l.b16 %v455
    %v2416 = vunpack.c.h.b16 %v455
    %v2417 = vunpack.c.l.b16 %v456
    %v2418 = vunpack.c.h.b16 %v456
    %v2419 = vunpack.c.l.b16 %v457
    %v2420 = vunpack.c.h.b16 %v457
    %v2421 = vunpack.c.l.b16 %v458
    %v2422 = vunpack.c.h.b16 %v458
    %v2423 = vunpack.c.l.b16 %v459
    %v2424 = vunpack.c.h.b16 %v459
    %v2425 = vunpack.c.l.b16 %v460
    %v2426 = vunpack.c.h.b16 %v460
    %v2427 = vunpack.c.l.b16 %v461
    %v2428 = vunpack.c.h.b16 %v461
    %v2429 = vunpack.c.l.b16 %v462
    %v2430 = vunpack.c.h.b16 %v462
    %v2431 = vunpack.c.l.b16 %v463
    %v2432 = vunpack.c.h.b16 %v463
    %v2433 = vunpack.c.l.b16 %v464
    %v2434 = vunpack.c.h.b16 %v464
    %v2435 = vunpack.c.l.b16 %v465
    %v2436 = vunpack.c.h.b16 %v465
    %v2437 = vunpack.c.l.b16 %v466
    %v2438 = vunpack.c.h.b16 %v466
    %v2439 = vunpack.c.l.b16 %v467
    %v2440 = vunpack.c.h.b16 %v467
    %v2441 = vunpack.c.l.b16 %v468
    %v2442 = vunpack.c.h.b16 %v468
    %v2443 = vunpack.c.l.b16 %v469
    %v2444 = vunpack.c.h.b16 %v469
    %v2445 = vunpack.c.l.b16 %v470
    %v2446 = vunpack.c.h.b16 %v470
    %v2447 = vunpack.c.l.b16 %v471
    %v2448 = vunpack.c.h.b16 %v471
    %v2449 = vunpack.c.l.b16 %v472
    %v2450 = vunpack.c.h.b16 %v472
    %v2451 = vunpack.c.l.b16 %v473
    %v2452 = vunpack.c.h.b16 %v473
    %v2453 = vunpack.c.l.b16 %v474
    %v2454 = vunpack.c.h.b16 %v474
    %v2455 = vunpack.c.l.b16 %v475
    %v2456 = vunpack.c.h.b16 %v475
    %v2457 = vunpack.c.l.b16 %v476
    %v2458 = vunpack.c.h.b16 %v476
    %v2459 = vunpack.c.l.b16 %v477
    %v2460 = vunpack.c.h.b16 %v477
    %v2461 = vunpack.c.l.b16 %v478
    %v2462 = vunpack.c.h.b16 %v478
    %v2463 = vunpack.c.l.b16 %v479
    %v2464 = vunpack.c.h.b16 %v479
    %v2465 = vunpack.c.l.b16 %v480
    %v2466 = vunpack.c.h.b16 %v480
    %v2467 = vunpack.c.l.b16 %v481
    %v2468 = vunpack.c.h.b16 %v481
    %v2469 = vunpack.c.l.b16 %v482
    %v2470 = vunpack.c.h.b16 %v482
    %v2471 = vunpack.c.l.b16 %v483
    %v2472 = vunpack.c.h.b16 %v483
    %v2473 = vunpack.c.l.b16 %v484
    %v2474 = vunpack.c.h.b16 %v484
    %v2475 = vunpack.c.l.b16 %v485
    %v2476 = vunpack.c.h.b16 %v485
    %v2477 = vunpack.c.l.b16 %v486
    %v2478 = vunpack.c.h.b16 %v486
    %v2479 = vunpack.c.l.b16 %v487
    %v2480 = vunpack.c.h.b16 %v487
    %v2481 = vunpack.c.l.b16 %v488
    %v2482 = vunpack.c.h.b16 %v488
    %v2483 = vunpack.c.l.b16 %v489
    %v2484 = vunpack.c.h.b16 %v489
    %v2485 = vunpack.c.l.b16 %v490
    %v2486 = vunpack.c.h.b16 %v490
    %v2487 = vunpack.c.l.b16 %v491
    %v2488 = vunpack.c.h.b16 %v491
    %v2489 = vunpack.c.l.b16 %v492
    %v2490 = vunpack.c.h.b16 %v492
    %v2491 = vunpack.c.l.b16 %v493
    %v2492 = vunpack.c.h.b16 %v493
    %v2493 = vunpack.c.l.b16 %v494
    %v2494 = vunpack.c.h.b16 %v494
    %v2495 = vunpack.c.l.b16 %v495
    %v2496 = vunpack.c.h.b16 %v495
    %v2497 = vunpack.c.l.b16 %v496
    %v2498 = vunpack.c.h.b16 %v496
    %v2499 = vunpack.c.l.b16 %v497
    %v2500 = vunpack.c.h.b16 %v497
    %v2501 = vunpack.c.l.b16 %v498
    %v2502 = vunpack.c.h.b16 %v498
    %v2503 = vunpack.c.l.b16 %v499
    %v2504 = vunpack.c.h.b16 %v499
    %v2505 = vunpack.c.l.b16 %v500
    %v2506 = vunpack.c.h.b16 %v500
    %v2507 = vunpack.c.l.b16 %v501
    %v2508 = vunpack.c.h.b16 %v501
    %v2509 = vunpack.c.l.b16 %v502
    %v2510 = vunpack.c.h.b16 %v502
    %v2511 = vunpack.c.l.b16 %v503
    %v2512 = vunpack.c.h.b16 %v503
    %v2513 = vunpack.c.l.b16 %v504
    %v2514 = vunpack.c.h.b16 %v504
    %v2515 = vunpack.c.l.b16 %v505
    %v2516 = vunpack.c.h.b16 %v505
    %v2517 = vunpack.c.l.b16 %v506
    %v2518 = vunpack.c.h.b16 %v506
    %v2519 = vunpack.c.l.b16 %v507
    %v2520 = vunpack.c.h.b16 %v507
    %v2521 = vunpack.c.l.b16 %v508
    %v2522 = vunpack.c.h.b16 %v508
    %v2523 = vunpack.c.l.b16 %v509
    %v2524 = vunpack.c.h.b16 %v509
    %v2525 = vunpack.c.l.b16 %v510
    %v2526 = vunpack.c.h.b16 %v510
    %v2527 = vunpack.c.l.b16 %v511
    %v2528 = vunpack.c.h.b16 %v511
    %v2529 = vunpack.c.l.b16 %v512
    %v2530 = vunpack.c.h.b16 %v512
    %v2531 = vunpack.c.l.b16 %v513
    %v2532 = vunpack.c.h.b16 %v513
    %v2533 = vunpack.c.l.b16 %v514
    %v2534 = vunpack.c.h.b16 %v514
    %v2535 = vunpack.c.l.b16 %v515
    %v2536 = vunpack.c.h.b16 %v515
    %v2537 = vunpack.c.l.b16 %v516
    %v2538 = vunpack.c.h.b16 %v516
    %v2539 = vunpack.c.l.b16 %v517
    %v2540 = vunpack.c.h.b16 %v517
    %v2541 = vunpack.c.l.b16 %v518
    %v2542 = vunpack.c.h.b16 %v518
    %v2543 = vunpack.c.l.b16 %v519
    %v2544 = vunpack.c.h.b16 %v519
    %v2545 = vunpack.c.l.b16 %v520
    %v2546 = vunpack.c.h.b16 %v520
    %v2547 = vunpack.c.l.b16 %v521
    %v2548 = vunpack.c.h.b16 %v521
    %v2549 = vunpack.c.l.b16 %v522
    %v2550 = vunpack.c.h.b16 %v522
    %v2551 = vunpack.c.l.b16 %v523
    %v2552 = vunpack.c.h.b16 %v523
    %v2553 = vunpack.c.l.b16 %v524
    %v2554 = vunpack.c.h.b16 %v524
    %v2555 = vunpack.c.l.b16 %v525
    %v2556 = vunpack.c.h.b16 %v525
    %v2557 = vunpack.c.l.b16 %v526
    %v2558 = vunpack.c.h.b16 %v526
    %v2559 = vunpack.c.l.b16 %v527
    %v2560 = vunpack.c.h.b16 %v527
    %v2561 = vunpack.c.l.b16 %v528
    %v2562 = vunpack.c.h.b16 %v528
    %v2563 = vunpack.c.l.b16 %v529
    %v2564 = vunpack.c.h.b16 %v529
    %v2565 = vunpack.c.l.b16 %v530
    %v2566 = vunpack.c.h.b16 %v530
    %v2567 = vunpack.c.l.b16 %v531
    %v2568 = vunpack.c.h.b16 %v531
    %v2569 = vunpack.c.l.b16 %v532
    %v2570 = vunpack.c.h.b16 %v532
    %v2571 = vunpack.c.l.b16 %v533
    %v2572 = vunpack.c.h.b16 %v533
    %v2573 = vunpack.c.l.b16 %v534
    %v2574 = vunpack.c.h.b16 %v534
    %v2575 = vunpack.c.l.b16 %v535
    %v2576 = vunpack.c.h.b16 %v535
    %v2577 = vunpack.c.l.b16 %v536
    %v2578 = vunpack.c.h.b16 %v536
    %v2579 = vunpack.c.l.b16 %v537
    %v2580 = vunpack.c.h.b16 %v537
    %v2581 = vunpack.c.l.b16 %v538
    %v2582 = vunpack.c.h.b16 %v538
    %v2583 = vunpack.c.l.b16 %v539
    %v2584 = vunpack.c.h.b16 %v539
    %v2585 = vunpack.c.l.b16 %v540
    %v2586 = vunpack.c.h.b16 %v540
    %v2587 = vunpack.c.l.b16 %v541
    %v2588 = vunpack.c.h.b16 %v541
    %v2589 = vunpack.c.l.b16 %v542
    %v2590 = vunpack.c.h.b16 %v542
    %v2591 = vunpack.c.l.b16 %v543
    %v2592 = vunpack.c.h.b16 %v543
    %v2593 = vunpack.c.l.b16 %v544
    %v2594 = vunpack.c.h.b16 %v544
    %v2595 = vunpack.c.l.b16 %v545
    %v2596 = vunpack.c.h.b16 %v545
    %v2597 = vunpack.c.l.b16 %v546
    %v2598 = vunpack.c.h.b16 %v546
    %v2599 = vunpack.c.l.b16 %v547
    %v2600 = vunpack.c.h.b16 %v547
    %v2601 = vunpack.c.l.b16 %v548
    %v2602 = vunpack.c.h.b16 %v548
    %v2603 = vunpack.c.l.b16 %v549
    %v2604 = vunpack.c.h.b16 %v549
    %v2605 = vunpack.c.l.b16 %v550
    %v2606 = vunpack.c.h.b16 %v550
    %v2607 = vunpack.c.l.b16 %v551
    %v2608 = vunpack.c.h.b16 %v551
    %v2609 = vunpack.c.l.b16 %v552
    %v2610 = vunpack.c.h.b16 %v552
    %v2611 = vunpack.c.l.b16 %v553
    %v2612 = vunpack.c.h.b16 %v553
    %v2613 = vunpack.c.l.b16 %v554
    %v2614 = vunpack.c.h.b16 %v554
    %v2615 = vunpack.c.l.b16 %v555
    %v2616 = vunpack.c.h.b16 %v555
    %v2617 = vunpack.c.l.b16 %v556
    %v2618 = vunpack.c.h.b16 %v556
    %v2619 = vunpack.c.l.b16 %v557
    %v2620 = vunpack.c.h.b16 %v557
    %v2621 = vunpack.c.l.b16 %v558
    %v2622 = vunpack.c.h.b16 %v558
    %v2623 = vunpack.c.l.b16 %v559
    %v2624 = vunpack.c.h.b16 %v559
    %v2625 = vunpack.c.l.b16 %v560
    %v2626 = vunpack.c.h.b16 %v560
    %v2627 = vunpack.c.l.b16 %v561
    %v2628 = vunpack.c.h.b16 %v561
    %v2629 = vunpack.c.l.b16 %v562
    %v2630 = vunpack.c.h.b16 %v562
    %v2631 = vunpack.c.l.b16 %v563
    %v2632 = vunpack.c.h.b16 %v563
    %v2633 = vunpack.c.l.b16 %v564
    %v2634 = vunpack.c.h.b16 %v564
    %v2635 = vunpack.c.l.b16 %v565
    %v2636 = vunpack.c.h.b16 %v565
    %v2637 = vunpack.c.l.b16 %v566
    %v2638 = vunpack.c.h.b16 %v566
    %v2639 = vunpack.c.l.b16 %v567
    %v2640 = vunpack.c.h.b16 %v567
    %v2641 = vunpack.c.l.b16 %v568
    %v2642 = vunpack.c.h.b16 %v568
    %v2643 = vunpack.c.l.b16 %v569
    %v2644 = vunpack.c.h.b16 %v569
    %v2645 = vunpack.c.l.b16 %v570
    %v2646 = vunpack.c.h.b16 %v570
    %v2647 = vunpack.c.l.b16 %v571
    %v2648 = vunpack.c.h.b16 %v571
    %v2649 = vunpack.c.l.b16 %v572
    %v2650 = vunpack.c.h.b16 %v572
    %v2651 = vunpack.c.l.b16 %v573
    %v2652 = vunpack.c.h.b16 %v573
    %v2653 = vunpack.c.l.b16 %v574
    %v2654 = vunpack.c.h.b16 %v574
    %v2655 = vunpack.c.l.b16 %v575
    %v2656 = vunpack.c.h.b16 %v575
    %v2657 = vunpack.c.l.b16 %v576
    %v2658 = vunpack.c.h.b16 %v576
    %v2659 = vunpack.c.l.b16 %v577
    %v2660 = vunpack.c.h.b16 %v577
    %v2661 = vunpack.c.l.b16 %v578
    %v2662 = vunpack.c.h.b16 %v578
    %v2663 = vunpack.c.l.b16 %v579
    %v2664 = vunpack.c.h.b16 %v579
    %v2665 = vunpack.c.l.b16 %v580
    %v2666 = vunpack.c.h.b16 %v580
    %v2667 = vunpack.c.l.b16 %v581
    %v2668 = vunpack.c.h.b16 %v581
    %v2669 = vunpack.c.l.b16 %v582
    %v2670 = vunpack.c.h.b16 %v582
    %v2671 = vunpack.c.l.b16 %v583
    %v2672 = vunpack.c.h.b16 %v583
    %v2673 = vunpack.c.l.b16 %v584
    %v2674 = vunpack.c.h.b16 %v584
    %v2675 = vunpack.c.l.b16 %v585
    %v2676 = vunpack.c.h.b16 %v585
    %v2677 = vunpack.c.l.b16 %v586
    %v2678 = vunpack.c.h.b16 %v586
    %v2679 = vunpack.c.l.b16 %v587
    %v2680 = vunpack.c.h.b16 %v587
    %v2681 = vunpack.c.l.b16 %v588
    %v2682 = vunpack.c.h.b16 %v588
    %v2683 = vunpack.c.l.b16 %v589
    %v2684 = vunpack.c.h.b16 %v589
    %v2685 = vunpack.c.l.b16 %v590
    %v2686 = vunpack.c.h.b16 %v590
    %v2687 = vunpack.c.l.b16 %v591
    %v2688 = vunpack.c.h.b16 %v591
    %v2689 = vunpack.c.l.b16 %v592
    %v2690 = vunpack.c.h.b16 %v592
    %v2691 = vunpack.c.l.b16 %v593
    %v2692 = vunpack.c.h.b16 %v593
    %v2693 = vunpack.c.l.b16 %v594
    %v2694 = vunpack.c.h.b16 %v594
    %v2695 = vunpack.c.l.b16 %v595
    %v2696 = vunpack.c.h.b16 %v595
    %v2697 = vunpack.c.l.b16 %v596
    %v2698 = vunpack.c.h.b16 %v596
    %v2699 = vunpack.c.l.b16 %v597
    %v2700 = vunpack.c.h.b16 %v597
    %v2701 = vunpack.c.l.b16 %v598
    %v2702 = vunpack.c.h.b16 %v598
    %v2703 = vunpack.c.l.b16 %v599
    %v2704 = vunpack.c.h.b16 %v599
    %v2705 = vunpack.c.l.b16 %v600
    %v2706 = vunpack.c.h.b16 %v600
    %v2707 = vunpack.c.l.b16 %v601
    %v2708 = vunpack.c.h.b16 %v601
    %v2709 = vunpack.c.l.b16 %v602
    %v2710 = vunpack.c.h.b16 %v602
    %v2711 = vunpack.c.l.b16 %v603
    %v2712 = vunpack.c.h.b16 %v603
    %v2713 = vunpack.c.l.b16 %v604
    %v2714 = vunpack.c.h.b16 %v604
    %v2715 = vunpack.c.l.b16 %v605
    %v2716 = vunpack.c.h.b16 %v605
    %v2717 = vunpack.c.l.b16 %v606
    %v2718 = vunpack.c.h.b16 %v606
    %v2719 = vunpack.c.l.b16 %v607
    %v2720 = vunpack.c.h.b16 %v607
    %v2721 = vunpack.c.l.b16 %v608
    %v2722 = vunpack.c.h.b16 %v608
    %v2723 = vunpack.c.l.b16 %v609
    %v2724 = vunpack.c.h.b16 %v609
    %v2725 = vunpack.c.l.b16 %v610
    %v2726 = vunpack.c.h.b16 %v610
    %v2727 = vunpack.c.l.b16 %v611
    %v2728 = vunpack.c.h.b16 %v611
    %v2729 = vunpack.c.l.b16 %v612
    %v2730 = vunpack.c.h.b16 %v612
    %v2731 = vunpack.c.l.b16 %v613
    %v2732 = vunpack.c.h.b16 %v613
    %v2733 = vunpack.c.l.b16 %v614
    %v2734 = vunpack.c.h.b16 %v614
    %v2735 = vunpack.c.l.b16 %v615
    %v2736 = vunpack.c.h.b16 %v615
    %v2737 = vunpack.c.l.b16 %v616
    %v2738 = vunpack.c.h.b16 %v616
    %v2739 = vunpack.c.l.b16 %v617
    %v2740 = vunpack.c.h.b16 %v617
    %v2741 = vunpack.c.l.b16 %v618
    %v2742 = vunpack.c.h.b16 %v618
    %v2743 = vunpack.c.l.b16 %v619
    %v2744 = vunpack.c.h.b16 %v619
    %v2745 = vunpack.c.l.b16 %v620
    %v2746 = vunpack.c.h.b16 %v620
    %v2747 = vunpack.c.l.b16 %v621
    %v2748 = vunpack.c.h.b16 %v621
    %v2749 = vunpack.c.l.b16 %v622
    %v2750 = vunpack.c.h.b16 %v622
    %v2751 = vunpack.c.l.b16 %v623
    %v2752 = vunpack.c.h.b16 %v623
    %v2753 = vunpack.c.l.b16 %v624
    %v2754 = vunpack.c.h.b16 %v624
    %v2755 = vunpack.c.l.b16 %v625
    %v2756 = vunpack.c.h.b16 %v625
    %v2757 = vunpack.c.l.b16 %v626
    %v2758 = vunpack.c.h.b16 %v626
    %v2759 = vunpack.c.l.b16 %v627
    %v2760 = vunpack.c.h.b16 %v627
    %v2761 = vunpack.c.l.b16 %v628
    %v2762 = vunpack.c.h.b16 %v628
    %v2763 = vunpack.c.l.b16 %v629
    %v2764 = vunpack.c.h.b16 %v629
    %v2765 = vunpack.c.l.b16 %v630
    %v2766 = vunpack.c.h.b16 %v630
    %v2767 = vunpack.c.l.b16 %v631
    %v2768 = vunpack.c.h.b16 %v631
    %v2769 = vunpack.c.l.b16 %v632
    %v2770 = vunpack.c.h.b16 %v632
    %v2771 = vunpack.c.l.b16 %v633
    %v2772 = vunpack.c.h.b16 %v633
    %v2773 = vunpack.c.l.b16 %v634
    %v2774 = vunpack.c.h.b16 %v634
    %v2775 = vunpack.c.l.b16 %v635
    %v2776 = vunpack.c.h.b16 %v635
    %v2777 = vunpack.c.l.b16 %v636
    %v2778 = vunpack.c.h.b16 %v636
    %v2779 = vunpack.c.l.b16 %v637
    %v2780 = vunpack.c.h.b16 %v637
    %v2781 = vunpack.c.l.b16 %v638
    %v2782 = vunpack.c.h.b16 %v638
    %v2783 = vunpack.c.l.b16 %v639
    %v2784 = vunpack.c.h.b16 %v639
    %v2785 = vunpack.c.l.b16 %v640
    %v2786 = vunpack.c.h.b16 %v640
    %v2787 = vunpack.c.l.b16 %v641
    %v2788 = vunpack.c.h.b16 %v641
    %v2789 = vunpack.c.l.b16 %v642
    %v2790 = vunpack.c.h.b16 %v642
    %v2791 = vunpack.c.l.b16 %v643
    %v2792 = vunpack.c.h.b16 %v643
    %v2793 = vunpack.c.l.b16 %v644
    %v2794 = vunpack.c.h.b16 %v644
    %v2795 = vunpack.c.l.b16 %v645
    %v2796 = vunpack.c.h.b16 %v645
    %v2797 = vunpack.c.l.b16 %v646
    %v2798 = vunpack.c.h.b16 %v646
    %v2799 = vunpack.c.l.b16 %v647
    %v2800 = vunpack.c.h.b16 %v647
    %v2801 = vunpack.c.l.b16 %v648
    %v2802 = vunpack.c.h.b16 %v648
    %v2803 = vunpack.c.l.b16 %v649
    %v2804 = vunpack.c.h.b16 %v649
    %v2805 = vunpack.c.l.b16 %v650
    %v2806 = vunpack.c.h.b16 %v650
    %v2807 = vunpack.c.l.b16 %v651
    %v2808 = vunpack.c.h.b16 %v651
    %v2809 = vunpack.c.l.b16 %v652
    %v2810 = vunpack.c.h.b16 %v652
    %v2811 = vunpack.c.l.b16 %v653
    %v2812 = vunpack.c.h.b16 %v653
    %v2813 = vunpack.c.l.b16 %v654
    %v2814 = vunpack.c.h.b16 %v654
    %v2815 = vunpack.c.l.b16 %v655
    %v2816 = vunpack.c.h.b16 %v655
    %v2817 = vunpack.c.l.b16 %v656
    %v2818 = vunpack.c.h.b16 %v656
    %v2819 = vunpack.c.l.b16 %v657
    %v2820 = vunpack.c.h.b16 %v657
    %v2821 = vunpack.c.l.b16 %v658
    %v2822 = vunpack.c.h.b16 %v658
    %v2823 = vunpack.c.l.b16 %v659
    %v2824 = vunpack.c.h.b16 %v659
    %v2825 = vunpack.c.l.b16 %v660
    %v2826 = vunpack.c.h.b16 %v660
    %v2827 = vunpack.c.l.b16 %v661
    %v2828 = vunpack.c.h.b16 %v661
    %v2829 = vunpack.c.l.b16 %v662
    %v2830 = vunpack.c.h.b16 %v662
    %v2831 = vunpack.c.l.b16 %v663
    %v2832 = vunpack.c.h.b16 %v663
    %v2833 = vunpack.c.l.b16 %v664
    %v2834 = vunpack.c.h.b16 %v664
    %v2835 = vunpack.c.l.b16 %v665
    %v2836 = vunpack.c.h.b16 %v665
    %v2837 = vunpack.c.l.b16 %v666
    %v2838 = vunpack.c.h.b16 %v666
    %v2839 = vunpack.c.l.b16 %v667
    %v2840 = vunpack.c.h.b16 %v667
    %v2841 = vunpack.c.l.b16 %v668
    %v2842 = vunpack.c.h.b16 %v668
    %v2843 = vunpack.c.l.b16 %v669
    %v2844 = vunpack.c.h.b16 %v669
    %v2845 = vunpack.c.l.b16 %v670
    %v2846 = vunpack.c.h.b16 %v670
    %v2847 = vunpack.c.l.b16 %v671
    %v2848 = vunpack.c.h.b16 %v671
    %v2849 = vunpack.c.l.b16 %v672
    %v2850 = vunpack.c.h.b16 %v672
    %v2851 = vunpack.c.l.b16 %v673
    %v2852 = vunpack.c.h.b16 %v673
    %v2853 = vunpack.c.l.b16 %v674
    %v2854 = vunpack.c.h.b16 %v674
    %v2855 = vunpack.c.l.b16 %v675
    %v2856 = vunpack.c.h.b16 %v675
    %v2857 = vunpack.c.l.b16 %v676
    %v2858 = vunpack.c.h.b16 %v676
    %v2859 = vunpack.c.l.b16 %v677
    %v2860 = vunpack.c.h.b16 %v677
    %v2861 = vunpack.c.l.b16 %v678
    %v2862 = vunpack.c.h.b16 %v678
    %v2863 = vunpack.c.l.b16 %v679
    %v2864 = vunpack.c.h.b16 %v679
    %v2865 = vunpack.c.l.b16 %v680
    %v2866 = vunpack.c.h.b16 %v680
    %v2867 = vunpack.c.l.b16 %v681
    %v2868 = vunpack.c.h.b16 %v681
    %v2869 = vunpack.c.l.b16 %v682
    %v2870 = vunpack.c.h.b16 %v682
    %v2871 = vunpack.c.l.b16 %v683
    %v2872 = vunpack.c.h.b16 %v683
    %v2873 = vunpack.c.l.b16 %v684
    %v2874 = vunpack.c.h.b16 %v684
    %v2875 = vunpack.c.l.b16 %v685
    %v2876 = vunpack.c.h.b16 %v685
    %v2877 = vunpack.c.l.b16 %v686
    %v2878 = vunpack.c.h.b16 %v686
    %v2879 = vunpack.c.l.b16 %v687
    %v2880 = vunpack.c.h.b16 %v687
    %v2881 = vunpack.c.l.b16 %v688
    %v2882 = vunpack.c.h.b16 %v688
    %v2883 = vunpack.c.l.b16 %v689
    %v2884 = vunpack.c.h.b16 %v689
    %v2885 = vunpack.c.l.b16 %v690
    %v2886 = vunpack.c.h.b16 %v690
    %v2887 = vunpack.c.l.b16 %v691
    %v2888 = vunpack.c.h.b16 %v691
    %v2889 = vunpack.c.l.b16 %v692
    %v2890 = vunpack.c.h.b16 %v692
    %v2891 = vunpack.c.l.b16 %v693
    %v2892 = vunpack.c.h.b16 %v693
    %v2893 = vunpack.c.l.b16 %v694
    %v2894 = vunpack.c.h.b16 %v694
    %v2895 = vunpack.c.l.b16 %v695
    %v2896 = vunpack.c.h.b16 %v695
    %v2897 = vunpack.c.l.b16 %v696
    %v2898 = vunpack.c.h.b16 %v696
    %v2899 = vunpack.c.l.b16 %v697
    %v2900 = vunpack.c.h.b16 %v697
    %v2901 = vunpack.c.l.b16 %v698
    %v2902 = vunpack.c.h.b16 %v698
    %v2903 = vunpack.c.l.b16 %v699
    %v2904 = vunpack.c.h.b16 %v699
    %v2905 = vunpack.c.l.b16 %v700
    %v2906 = vunpack.c.h.b16 %v700
    %v2907 = vunpack.c.l.b16 %v701
    %v2908 = vunpack.c.h.b16 %v701
    %v2909 = vunpack.c.l.b16 %v702
    %v2910 = vunpack.c.h.b16 %v702
    %v2911 = vunpack.c.l.b16 %v703
    %v2912 = vunpack.c.h.b16 %v703
    %v2913 = vunpack.c.l.b16 %v704
    %v2914 = vunpack.c.h.b16 %v704
    %v2915 = vunpack.c.l.b16 %v705
    %v2916 = vunpack.c.h.b16 %v705
    %v2917 = vunpack.c.l.b16 %v706
    %v2918 = vunpack.c.h.b16 %v706
    %v2919 = vunpack.c.l.b16 %v707
    %v2920 = vunpack.c.h.b16 %v707
    %v2921 = vunpack.c.l.b16 %v708
    %v2922 = vunpack.c.h.b16 %v708
    %v2923 = vunpack.c.l.b16 %v709
    %v2924 = vunpack.c.h.b16 %v709
    %v2925 = vunpack.c.l.b16 %v710
    %v2926 = vunpack.c.h.b16 %v710
    %v2927 = vunpack.c.l.b16 %v711
    %v2928 = vunpack.c.h.b16 %v711
    %v2929 = vunpack.c.l.b16 %v712
    %v2930 = vunpack.c.h.b16 %v712
    %v2931 = vunpack.c.l.b16 %v713
    %v2932 = vunpack.c.h.b16 %v713
    %v2933 = vunpack.c.l.b16 %v714
    %v2934 = vunpack.c.h.b16 %v714
    %v2935 = vunpack.c.l.b16 %v715
    %v2936 = vunpack.c.h.b16 %v715
    %v2937 = vunpack.c.l.b16 %v716
    %v2938 = vunpack.c.h.b16 %v716
    %v2939 = vunpack.c.l.b16 %v717
    %v2940 = vunpack.c.h.b16 %v717
    %v2941 = vunpack.c.l.b16 %v718
    %v2942 = vunpack.c.h.b16 %v718
    %v2943 = vunpack.c.l.b16 %v719
    %v2944 = vunpack.c.h.b16 %v719
    %v2945 = vunpack.c.l.b16 %v720
    %v2946 = vunpack.c.h.b16 %v720
    %v2947 = vunpack.c.l.b16 %v721
    %v2948 = vunpack.c.h.b16 %v721
    %v2949 = vunpack.c.l.b16 %v722
    %v2950 = vunpack.c.h.b16 %v722
    %v2951 = vunpack.c.l.b16 %v723
    %v2952 = vunpack.c.h.b16 %v723
    %v2953 = vunpack.c.l.b16 %v724
    %v2954 = vunpack.c.h.b16 %v724
    %v2955 = vunpack.c.l.b16 %v725
    %v2956 = vunpack.c.h.b16 %v725
    %v2957 = vunpack.c.l.b16 %v726
    %v2958 = vunpack.c.h.b16 %v726
    %v2959 = vunpack.c.l.b16 %v727
    %v2960 = vunpack.c.h.b16 %v727
    %v2961 = vunpack.c.l.b16 %v728
    %v2962 = vunpack.c.h.b16 %v728
    %v2963 = vunpack.c.l.b16 %v729
    %v2964 = vunpack.c.h.b16 %v729
    %v2965 = vunpack.c.l.b16 %v730
    %v2966 = vunpack.c.h.b16 %v730
    %v2967 = vunpack.c.l.b16 %v731
    %v2968 = vunpack.c.h.b16 %v731
    %v2969 = vunpack.c.l.b16 %v732
    %v2970 = vunpack.c.h.b16 %v732
    %v2971 = vunpack.c.l.b16 %v733
    %v2972 = vunpack.c.h.b16 %v733
    %v2973 = vunpack.c.l.b16 %v734
    %v2974 = vunpack.c.h.b16 %v734
    %v2975 = vunpack.c.l.b16 %v735
    %v2976 = vunpack.c.h.b16 %v735
    %v2977 = vunpack.c.l.b16 %v736
    %v2978 = vunpack.c.h.b16 %v736
    %v2979 = vunpack.c.l.b16 %v737
    %v2980 = vunpack.c.h.b16 %v737
    %v2981 = vunpack.c.l.b16 %v738
    %v2982 = vunpack.c.h.b16 %v738
    %v2983 = vunpack.c.l.b16 %v739
    %v2984 = vunpack.c.h.b16 %v739
    %v2985 = vunpack.c.l.b16 %v740
    %v2986 = vunpack.c.h.b16 %v740
    %v2987 = vunpack.c.l.b16 %v741
    %v2988 = vunpack.c.h.b16 %v741
    %v2989 = vunpack.c.l.b16 %v742
    %v2990 = vunpack.c.h.b16 %v742
    %v2991 = vunpack.c.l.b16 %v743
    %v2992 = vunpack.c.h.b16 %v743
    %v2993 = vunpack.c.l.b16 %v744
    %v2994 = vunpack.c.h.b16 %v744
    %v2995 = vunpack.c.l.b16 %v745
    %v2996 = vunpack.c.h.b16 %v745
    %v2997 = vunpack.c.l.b16 %v746
    %v2998 = vunpack.c.h.b16 %v746
    %v2999 = vunpack.c.l.b16 %v747
    %v3000 = vunpack.c.h.b16 %v747
    %v3001 = vunpack.c.l.b16 %v748
    %v3002 = vunpack.c.h.b16 %v748
    %v3003 = vunpack.c.l.b16 %v749
    %v3004 = vunpack.c.h.b16 %v749
    %v3005 = vunpack.c.l.b16 %v750
    %v3006 = vunpack.c.h.b16 %v750
    %v3007 = vunpack.c.l.b16 %v751
    %v3008 = vunpack.c.h.b16 %v751
    %v3009 = vunpack.c.l.b16 %v752
    %v3010 = vunpack.c.h.b16 %v752
    %v3011 = vunpack.c.l.b16 %v753
    %v3012 = vunpack.c.h.b16 %v753
    %v3013 = vunpack.c.l.b16 %v754
    %v3014 = vunpack.c.h.b16 %v754
    %v3015 = vunpack.c.l.b16 %v755
    %v3016 = vunpack.c.h.b16 %v755
    %v3017 = vunpack.c.l.b16 %v756
    %v3018 = vunpack.c.h.b16 %v756
    %v3019 = vunpack.c.l.b16 %v757
    %v3020 = vunpack.c.h.b16 %v757
    %v3021 = vunpack.c.l.b16 %v758
    %v3022 = vunpack.c.h.b16 %v758
    %v3023 = vunpack.c.l.b16 %v759
    %v3024 = vunpack.c.h.b16 %v759
    %v3025 = vunpack.c.l.b16 %v760
    %v3026 = vunpack.c.h.b16 %v760
    %v3027 = vunpack.c.l.b16 %v761
    %v3028 = vunpack.c.h.b16 %v761
    %v3029 = vunpack.c.l.b16 %v762
    %v3030 = vunpack.c.h.b16 %v762
    %v3031 = vunpack.c.l.b16 %v763
    %v3032 = vunpack.c.h.b16 %v763
    %v3033 = vunpack.c.l.b16 %v764
    %v3034 = vunpack.c.h.b16 %v764
    %v3035 = vunpack.c.l.b16 %v765
    %v3036 = vunpack.c.h.b16 %v765
    %v3037 = vunpack.c.l.b16 %v766
    %v3038 = vunpack.c.h.b16 %v766
    %v3039 = vunpack.c.l.b16 %v767
    %v3040 = vunpack.c.h.b16 %v767
    %v3041 = vunpack.c.l.b16 %v768
    %v3042 = vunpack.c.h.b16 %v768
    %v3043 = vunpack.c.l.b16 %v769
    %v3044 = vunpack.c.h.b16 %v769
    %v3045 = vunpack.c.l.b16 %v770
    %v3046 = vunpack.c.h.b16 %v770
    %v3047 = vunpack.c.l.b16 %v771
    %v3048 = vunpack.c.h.b16 %v771
    %v3049 = vunpack.c.l.b16 %v772
    %v3050 = vunpack.c.h.b16 %v772
    %v3051 = vunpack.c.l.b16 %v773
    %v3052 = vunpack.c.h.b16 %v773
    %v3053 = vunpack.c.l.b16 %v774
    %v3054 = vunpack.c.h.b16 %v774
    %v3055 = vunpack.c.l.b16 %v775
    %v3056 = vunpack.c.h.b16 %v775
    %v3057 = vunpack.c.l.b16 %v776
    %v3058 = vunpack.c.h.b16 %v776
    %v3059 = vunpack.c.l.b16 %v777
    %v3060 = vunpack.c.h.b16 %v777
    %v3061 = vunpack.c.l.b16 %v778
    %v3062 = vunpack.c.h.b16 %v778
    %v3063 = vunpack.c.l.b16 %v779
    %v3064 = vunpack.c.h.b16 %v779
    %v3065 = vunpack.c.l.b16 %v780
    %v3066 = vunpack.c.h.b16 %v780
    %v3067 = vunpack.c.l.b16 %v781
    %v3068 = vunpack.c.h.b16 %v781
    %v3069 = vunpack.c.l.b16 %v782
    %v3070 = vunpack.c.h.b16 %v782
    %v3071 = vunpack.c.l.b16 %v783
    %v3072 = vunpack.c.h.b16 %v783
    %v3073 = vunpack.c.l.b16 %v784
    %v3074 = vunpack.c.h.b16 %v784
    %v3075 = vunpack.c.l.b16 %v785
    %v3076 = vunpack.c.h.b16 %v785
    %v3077 = vunpack.c.l.b16 %v786
    %v3078 = vunpack.c.h.b16 %v786
    %v3079 = vunpack.c.l.b16 %v787
    %v3080 = vunpack.c.h.b16 %v787
    %v3081 = vunpack.c.l.b16 %v788
    %v3082 = vunpack.c.h.b16 %v788
    %v3083 = vunpack.c.l.b16 %v789
    %v3084 = vunpack.c.h.b16 %v789
    %v3085 = vunpack.c.l.b16 %v790
    %v3086 = vunpack.c.h.b16 %v790
    %v3087 = vunpack.c.l.b16 %v791
    %v3088 = vunpack.c.h.b16 %v791
    %v3089 = vunpack.c.l.b16 %v792
    %v3090 = vunpack.c.h.b16 %v792
    %v3091 = vunpack.c.l.b16 %v793
    %v3092 = vunpack.c.h.b16 %v793
    %v3093 = vunpack.c.l.b16 %v794
    %v3094 = vunpack.c.h.b16 %v794
    %v3095 = vunpack.c.l.b16 %v795
    %v3096 = vunpack.c.h.b16 %v795
    %v3097 = vunpack.c.l.b16 %v796
    %v3098 = vunpack.c.h.b16 %v796
    %v3099 = vunpack.c.l.b16 %v797
    %v3100 = vunpack.c.h.b16 %v797
    %v3101 = vunpack.c.l.b16 %v798
    %v3102 = vunpack.c.h.b16 %v798
    %v3103 = vunpack.c.l.b16 %v799
    %v3104 = vunpack.c.h.b16 %v799
    %v3105 = vunpack.c.l.b16 %v800
    %v3106 = vunpack.c.h.b16 %v800
    %v3107 = vunpack.c.l.b16 %v801
    %v3108 = vunpack.c.h.b16 %v801
    %v3109 = vunpack.c.l.b16 %v802
    %v3110 = vunpack.c.h.b16 %v802
    %v3111 = vunpack.c.l.b16 %v803
    %v3112 = vunpack.c.h.b16 %v803
    %v3113 = vunpack.c.l.b16 %v804
    %v3114 = vunpack.c.h.b16 %v804
    %v3115 = vunpack.c.l.b16 %v805
    %v3116 = vunpack.c.h.b16 %v805
    %v3117 = vunpack.c.l.b16 %v806
    %v3118 = vunpack.c.h.b16 %v806
    %v3119 = vunpack.c.l.b16 %v807
    %v3120 = vunpack.c.h.b16 %v807
    %v3121 = vunpack.c.l.b16 %v808
    %v3122 = vunpack.c.h.b16 %v808
    %v3123 = vunpack.c.l.b16 %v809
    %v3124 = vunpack.c.h.b16 %v809
    %v3125 = vunpack.c.l.b16 %v810
    %v3126 = vunpack.c.h.b16 %v810
    %v3127 = vunpack.c.l.b16 %v811
    %v3128 = vunpack.c.h.b16 %v811
    %v3129 = vunpack.c.l.b16 %v812
    %v3130 = vunpack.c.h.b16 %v812
    %v3131 = vunpack.c.l.b16 %v813
    %v3132 = vunpack.c.h.b16 %v813
    %v3133 = vunpack.c.l.b16 %v814
    %v3134 = vunpack.c.h.b16 %v814
    %v3135 = vunpack.c.l.b16 %v815
    %v3136 = vunpack.c.h.b16 %v815
    %v3137 = vunpack.c.l.b16 %v816
    %v3138 = vunpack.c.h.b16 %v816
    %v3139 = vunpack.c.l.b16 %v817
    %v3140 = vunpack.c.h.b16 %v817
    %v3141 = vunpack.c.l.b16 %v818
    %v3142 = vunpack.c.h.b16 %v818
    %v3143 = vunpack.c.l.b16 %v819
    %v3144 = vunpack.c.h.b16 %v819
    %v3145 = vunpack.c.l.b16 %v820
    %v3146 = vunpack.c.h.b16 %v820
    %v3147 = vunpack.c.l.b16 %v821
    %v3148 = vunpack.c.h.b16 %v821
    %v3149 = vunpack.c.l.b16 %v822
    %v3150 = vunpack.c.h.b16 %v822
    %v3151 = vunpack.c.l.b16 %v823
    %v3152 = vunpack.c.h.b16 %v823
    %v3153 = vunpack.c.l.b16 %v824
    %v3154 = vunpack.c.h.b16 %v824
    %v3155 = vunpack.c.l.b16 %v825
    %v3156 = vunpack.c.h.b16 %v825
    %v3157 = vunpack.c.l.b16 %v826
    %v3158 = vunpack.c.h.b16 %v826
    %v3159 = vunpack.c.l.b16 %v827
    %v3160 = vunpack.c.h.b16 %v827
    %v3161 = vunpack.c.l.b16 %v828
    %v3162 = vunpack.c.h.b16 %v828
    %v3163 = vunpack.c.l.b16 %v829
    %v3164 = vunpack.c.h.b16 %v829
    %v3165 = vunpack.c.l.b16 %v830
    %v3166 = vunpack.c.h.b16 %v830
    %v3167 = vunpack.c.l.b16 %v831
    %v3168 = vunpack.c.h.b16 %v831
    %v3169 = vunpack.c.l.b16 %v832
    %v3170 = vunpack.c.h.b16 %v832
    %v3171 = vunpack.c.l.b16 %v833
    %v3172 = vunpack.c.h.b16 %v833
    %v3173 = vunpack.c.l.b16 %v834
    %v3174 = vunpack.c.h.b16 %v834
    %v3175 = vunpack.c.l.b16 %v835
    %v3176 = vunpack.c.h.b16 %v835
    %v3177 = vunpack.c.l.b16 %v836
    %v3178 = vunpack.c.h.b16 %v836
    %v3179 = vunpack.c.l.b16 %v837
    %v3180 = vunpack.c.h.b16 %v837
    %v3181 = vunpack.c.l.b16 %v838
    %v3182 = vunpack.c.h.b16 %v838
    %v3183 = vunpack.c.l.b16 %v839
    %v3184 = vunpack.c.h.b16 %v839
    %v3185 = vunpack.c.l.b16 %v840
    %v3186 = vunpack.c.h.b16 %v840
    %v3187 = vunpack.c.l.b16 %v841
    %v3188 = vunpack.c.h.b16 %v841
    %v3189 = vunpack.c.l.b16 %v842
    %v3190 = vunpack.c.h.b16 %v842
    %v3191 = vunpack.c.l.b16 %v843
    %v3192 = vunpack.c.h.b16 %v843
    %v3193 = vunpack.c.l.b16 %v844
    %v3194 = vunpack.c.h.b16 %v844
    %v3195 = vunpack.c.l.b16 %v845
    %v3196 = vunpack.c.h.b16 %v845
    %v3197 = vunpack.c.l.b16 %v846
    %v3198 = vunpack.c.h.b16 %v846
    %v3199 = vunpack.c.l.b16 %v847
    %v3200 = vunpack.c.h.b16 %v847
    %v3201 = vunpack.c.l.b16 %v848
    %v3202 = vunpack.c.h.b16 %v848
    %v3203 = vunpack.c.l.b16 %v849
    %v3204 = vunpack.c.h.b16 %v849
    %v3205 = vunpack.c.l.b16 %v850
    %v3206 = vunpack.c.h.b16 %v850
    %v3207 = vunpack.c.l.b16 %v851
    %v3208 = vunpack.c.h.b16 %v851
    %v3209 = vunpack.c.l.b16 %v852
    %v3210 = vunpack.c.h.b16 %v852
    %v3211 = vunpack.c.l.b16 %v853
    %v3212 = vunpack.c.h.b16 %v853
    %v3213 = vpack.c.b16 %v1681, %v1677
    %v3214 = vpack.c.b16 %v1682, %v1678
    %v3215 = vpack.c.b16 %v1683, %v1679
    %v3216 = vpack.c.b16 %v1684, %v1680
    %v3217 = vpack.c.b16 %v1689, %v1685
    %v3218 = vpack.c.b16 %v1690, %v1686
    %v3219 = vpack.c.b16 %v1691, %v1687
    %v3220 = vpack.c.b16 %v1692, %v1688
    %v3221 = vpack.c.b16 %v1697, %v1693
    %v3222 = vpack.c.b16 %v1698, %v1694
    %v3223 = vpack.c.b16 %v1699, %v1695
    %v3224 = vpack.c.b16 %v1700, %v1696
    %v3225 = vpack.c.b16 %v1705, %v1701
    %v3226 = vpack.c.b16 %v1706, %v1702
    %v3227 = vpack.c.b16 %v1707, %v1703
    %v3228 = vpack.c.b16 %v1708, %v1704
    %v3229 = vpack.c.b16 %v1713, %v1709
    %v3230 = vpack.c.b16 %v1714, %v1710
    %v3231 = vpack.c.b16 %v1715, %v1711
    %v3232 = vpack.c.b16 %v1716, %v1712
    %v3233 = vpack.c.b16 %v1721, %v1717
    %v3234 = vpack.c.b16 %v1722, %v1718
    %v3235 = vpack.c.b16 %v1723, %v1719
    %v3236 = vpack.c.b16 %v1724, %v1720
    %v3237 = vpack.c.b16 %v1729, %v1725
    %v3238 = vpack.c.b16 %v1730, %v1726
    %v3239 = vpack.c.b16 %v1731, %v1727
    %v3240 = vpack.c.b16 %v1732, %v1728
    %v3241 = vpack.c.b16 %v1737, %v1733
    %v3242 = vpack.c.b16 %v1738, %v1734
    %v3243 = vpack.c.b16 %v1739, %v1735
    %v3244 = vpack.c.b16 %v1740, %v1736
    %v3245 = vpack.c.b16 %v1745, %v1741
    %v3246 = vpack.c.b16 %v1746, %v1742
    %v3247 = vpack.c.b16 %v1747, %v1743
    %v3248 = vpack.c.b16 %v1748, %v1744
    %v3249 = vpack.c.b16 %v1753, %v1749
    %v3250 = vpack.c.b16 %v1754, %v1750
    %v3251 = vpack.c.b16 %v1755, %v1751
    %v3252 = vpack.c.b16 %v1756, %v1752
    %v3253 = vpack.c.b16 %v1761, %v1757
    %v3254 = vpack.c.b16 %v1762, %v1758
    %v3255 = vpack.c.b16 %v1763, %v1759
    %v3256 = vpack.c.b16 %v1764, %v1760
    %v3257 = vpack.c.b16 %v1769, %v1765
    %v3258 = vpack.c.b16 %v1770, %v1766
    %v3259 = vpack.c.b16 %v1771, %v1767
    %v3260 = vpack.c.b16 %v1772, %v1768
    %v3261 = vpack.c.b16 %v1777, %v1773
    %v3262 = vpack.c.b16 %v1778, %v1774
    %v3263 = vpack.c.b16 %v1779, %v1775
    %v3264 = vpack.c.b16 %v1780, %v1776
    %v3265 = vpack.c.b16 %v1785, %v1781
    %v3266 = vpack.c.b16 %v1786, %v1782
    %v3267 = vpack.c.b16 %v1787, %v1783
    %v3268 = vpack.c.b16 %v1788, %v1784
    %v3269 = vpack.c.b16 %v1793, %v1789
    %v3270 = vpack.c.b16 %v1794, %v1790
    %v3271 = vpack.c.b16 %v1795, %v1791
    %v3272 = vpack.c.b16 %v1796, %v1792
    %v3273 = vpack.c.b16 %v1801, %v1797
    %v3274 = vpack.c.b16 %v1802, %v1798
    %v3275 = vpack.c.b16 %v1803, %v1799
    %v3276 = vpack.c.b16 %v1804, %v1800
    %v3277 = vpack.c.b16 %v1809, %v1805
    %v3278 = vpack.c.b16 %v1810, %v1806
    %v3279 = vpack.c.b16 %v1811, %v1807
    %v3280 = vpack.c.b16 %v1812, %v1808
    %v3281 = vpack.c.b16 %v1817, %v1813
    %v3282 = vpack.c.b16 %v1818, %v1814
    %v3283 = vpack.c.b16 %v1819, %v1815
    %v3284 = vpack.c.b16 %v1820, %v1816
    %v3285 = vpack.c.b16 %v1825, %v1821
    %v3286 = vpack.c.b16 %v1826, %v1822
    %v3287 = vpack.c.b16 %v1827, %v1823
    %v3288 = vpack.c.b16 %v1828, %v1824
    %v3289 = vpack.c.b16 %v1833, %v1829
    %v3290 = vpack.c.b16 %v1834, %v1830
    %v3291 = vpack.c.b16 %v1835, %v1831
    %v3292 = vpack.c.b16 %v1836, %v1832
    %v3293 = vpack.c.b16 %v1841, %v1837
    %v3294 = vpack.c.b16 %v1842, %v1838
    %v3295 = vpack.c.b16 %v1843, %v1839
    %v3296 = vpack.c.b16 %v1844, %v1840
    %v3297 = vpack.c.b16 %v1849, %v1845
    %v3298 = vpack.c.b16 %v1850, %v1846
    %v3299 = vpack.c.b16 %v1851, %v1847
    %v3300 = vpack.c.b16 %v1852, %v1848
    %v3301 = vpack.c.b16 %v1857, %v1853
    %v3302 = vpack.c.b16 %v1858, %v1854
    %v3303 = vpack.c.b16 %v1859, %v1855
    %v3304 = vpack.c.b16 %v1860, %v1856
    %v3305 = vpack.c.b16 %v1865, %v1861
    %v3306 = vpack.c.b16 %v1866, %v1862
    %v3307 = vpack.c.b16 %v1867, %v1863
    %v3308 = vpack.c.b16 %v1868, %v1864
    %v3309 = vpack.c.b16 %v1873, %v1869
    %v3310 = vpack.c.b16 %v1874, %v1870
    %v3311 = vpack.c.b16 %v1875, %v1871
    %v3312 = vpack.c.b16 %v1876, %v1872
    %v3313 = vpack.c.b16 %v1881, %v1877
    %v3314 = vpack.c.b16 %v1882, %v1878
    %v3315 = vpack.c.b16 %v1883, %v1879
    %v3316 = vpack.c.b16 %v1884, %v1880
    %v3317 = vpack.c.b16 %v1889, %v1885
    %v3318 = vpack.c.b16 %v1890, %v1886
    %v3319 = vpack.c.b16 %v1891, %v1887
    %v3320 = vpack.c.b16 %v1892, %v1888
    %v3321 = vpack.c.b16 %v1897, %v1893
    %v3322 = vpack.c.b16 %v1898, %v1894
    %v3323 = vpack.c.b16 %v1899, %v1895
    %v3324 = vpack.c.b16 %v1900, %v1896
    %v3325 = vpack.c.b16 %v1905, %v1901
    %v3326 = vpack.c.b16 %v1906, %v1902
    %v3327 = vpack.c.b16 %v1907, %v1903
    %v3328 = vpack.c.b16 %v1908, %v1904
    %v3329 = vpack.c.b16 %v1913, %v1909
    %v3330 = vpack.c.b16 %v1914, %v1910
    %v3331 = vpack.c.b16 %v1915, %v1911
    %v3332 = vpack.c.b16 %v1916, %v1912
    %v3333 = vpack.c.b16 %v1921, %v1917
    %v3334 = vpack.c.b16 %v1922, %v1918
    %v3335 = vpack.c.b16 %v1923, %v1919
    %v3336 = vpack.c.b16 %v1924, %v1920
    %v3337 = vpack.c.b16 %v1929, %v1925
    %v3338 = vpack.c.b16 %v1930, %v1926
    %v3339 = vpack.c.b16 %v1931, %v1927
    %v3340 = vpack.c.b16 %v1932, %v1928
    %v3341 = vpack.c.b16 %v1937, %v1933
    %v3342 = vpack.c.b16 %v1938, %v1934
    %v3343 = vpack.c.b16 %v1939, %v1935
    %v3344 = vpack.c.b16 %v1940, %v1936
    %v3345 = vpack.c.b16 %v1945, %v1941
    %v3346 = vpack.c.b16 %v1946, %v1942
    %v3347 = vpack.c.b16 %v1947, %v1943
    %v3348 = vpack.c.b16 %v1948, %v1944
    %v3349 = vpack.c.b16 %v1953, %v1949
    %v3350 = vpack.c.b16 %v1954, %v1950
    %v3351 = vpack.c.b16 %v1955, %v1951
    %v3352 = vpack.c.b16 %v1956, %v1952
    %v3353 = vpack.c.b16 %v1961, %v1957
    %v3354 = vpack.c.b16 %v1962, %v1958
    %v3355 = vpack.c.b16 %v1963, %v1959
    %v3356 = vpack.c.b16 %v1964, %v1960
    %v3357 = vpack.c.b16 %v1969, %v1965
    %v3358 = vpack.c.b16 %v1970, %v1966
    %v3359 = vpack.c.b16 %v1971, %v1967
    %v3360 = vpack.c.b16 %v1972, %v1968
    %v3361 = vpack.c.b16 %v1977, %v1973
    %v3362 = vpack.c.b16 %v1978, %v1974
    %v3363 = vpack.c.b16 %v1979, %v1975
    %v3364 = vpack.c.b16 %v1980, %v1976
    %v3365 = vpack.c.b16 %v1985, %v1981
    %v3366 = vpack.c.b16 %v1986, %v1982
    %v3367 = vpack.c.b16 %v1987, %v1983
    %v3368 = vpack.c.b16 %v1988, %v1984
    %v3369 = vpack.c.b16 %v1993, %v1989
    %v3370 = vpack.c.b16 %v1994, %v1990
    %v3371 = vpack.c.b16 %v1995, %v1991
    %v3372 = vpack.c.b16 %v1996, %v1992
    %v3373 = vpack.c.b16 %v2001, %v1997
    %v3374 = vpack.c.b16 %v2002, %v1998
    %v3375 = vpack.c.b16 %v2003, %v1999
    %v3376 = vpack.c.b16 %v2004, %v2000
    %v3377 = vpack.c.b16 %v2009, %v2005
    %v3378 = vpack.c.b16 %v2010, %v2006
    %v3379 = vpack.c.b16 %v2011, %v2007
    %v3380 = vpack.c.b16 %v2012, %v2008
    %v3381 = vpack.c.b16 %v2017, %v2013
    %v3382 = vpack.c.b16 %v2018, %v2014
    %v3383 = vpack.c.b16 %v2019, %v2015
    %v3384 = vpack.c.b16 %v2020, %v2016
    %v3385 = vpack.c.b16 %v2025, %v2021
    %v3386 = vpack.c.b16 %v2026, %v2022
    %v3387 = vpack.c.b16 %v2027, %v2023
    %v3388 = vpack.c.b16 %v2028, %v2024
    %v3389 = vpack.c.b16 %v2033, %v2029
    %v3390 = vpack.c.b16 %v2034, %v2030
    %v3391 = vpack.c.b16 %v2035, %v2031
    %v3392 = vpack.c.b16 %v2036, %v2032
    %v3393 = vpack.c.b16 %v2041, %v2037
    %v3394 = vpack.c.b16 %v2042, %v2038
    %v3395 = vpack.c.b16 %v2043, %v2039
    %v3396 = vpack.c.b16 %v2044, %v2040
    %v3397 = vpack.c.b16 %v2049, %v2045
    %v3398 = vpack.c.b16 %v2050, %v2046
    %v3399 = vpack.c.b16 %v2051, %v2047
    %v3400 = vpack.c.b16 %v2052, %v2048
    %v3401 = vpack.c.b16 %v2057, %v2053
    %v3402 = vpack.c.b16 %v2058, %v2054
    %v3403 = vpack.c.b16 %v2059, %v2055
    %v3404 = vpack.c.b16 %v2060, %v2056
    %v3405 = vpack.c.b16 %v2065, %v2061
    %v3406 = vpack.c.b16 %v2066, %v2062
    %v3407 = vpack.c.b16 %v2067, %v2063
    %v3408 = vpack.c.b16 %v2068, %v2064
    %v3409 = vpack.c.b16 %v2073, %v2069
    %v3410 = vpack.c.b16 %v2074, %v2070
    %v3411 = vpack.c.b16 %v2075, %v2071
    %v3412 = vpack.c.b16 %v2076, %v2072
    %v3413 = vpack.c.b16 %v2081, %v2077
    %v3414 = vpack.c.b16 %v2082, %v2078
    %v3415 = vpack.c.b16 %v2083, %v2079
    %v3416 = vpack.c.b16 %v2084, %v2080
    %v3417 = vpack.c.b16 %v2089, %v2085
    %v3418 = vpack.c.b16 %v2090, %v2086
    %v3419 = vpack.c.b16 %v2091, %v2087
    %v3420 = vpack.c.b16 %v2092, %v2088
    %v3421 = vpack.c.b16 %v2097, %v2093
    %v3422 = vpack.c.b16 %v2098, %v2094
    %v3423 = vpack.c.b16 %v2099, %v2095
    %v3424 = vpack.c.b16 %v2100, %v2096
    %v3425 = vpack.c.b16 %v2105, %v2101
    %v3426 = vpack.c.b16 %v2106, %v2102
    %v3427 = vpack.c.b16 %v2107, %v2103
    %v3428 = vpack.c.b16 %v2108, %v2104
    %v3429 = vpack.c.b16 %v2113, %v2109
    %v3430 = vpack.c.b16 %v2114, %v2110
    %v3431 = vpack.c.b16 %v2115, %v2111
    %v3432 = vpack.c.b16 %v2116, %v2112
    %v3433 = vpack.c.b16 %v2121, %v2117
    %v3434 = vpack.c.b16 %v2122, %v2118
    %v3435 = vpack.c.b16 %v2123, %v2119
    %v3436 = vpack.c.b16 %v2124, %v2120
    %v3437 = vpack.c.b16 %v2129, %v2125
    %v3438 = vpack.c.b16 %v2130, %v2126
    %v3439 = vpack.c.b16 %v2131, %v2127
    %v3440 = vpack.c.b16 %v2132, %v2128
    %v3441 = vpack.c.b16 %v2137, %v2133
    %v3442 = vpack.c.b16 %v2138, %v2134
    %v3443 = vpack.c.b16 %v2139, %v2135
    %v3444 = vpack.c.b16 %v2140, %v2136
    %v3445 = vpack.c.b16 %v2145, %v2141
    %v3446 = vpack.c.b16 %v2146, %v2142
    %v3447 = vpack.c.b16 %v2147, %v2143
    %v3448 = vpack.c.b16 %v2148, %v2144
    %v3449 = vpack.c.b16 %v2153, %v2149
    %v3450 = vpack.c.b16 %v2154, %v2150
    %v3451 = vpack.c.b16 %v2155, %v2151
    %v3452 = vpack.c.b16 %v2156, %v2152
    %v3453 = vpack.c.b16 %v2161, %v2157
    %v3454 = vpack.c.b16 %v2162, %v2158
    %v3455 = vpack.c.b16 %v2163, %v2159
    %v3456 = vpack.c.b16 %v2164, %v2160
    %v3457 = vpack.c.b16 %v2169, %v2165
    %v3458 = vpack.c.b16 %v2170, %v2166
    %v3459 = vpack.c.b16 %v2171, %v2167
    %v3460 = vpack.c.b16 %v2172, %v2168
    %v3461 = vpack.c.b16 %v2177, %v2173
    %v3462 = vpack.c.b16 %v2178, %v2174
    %v3463 = vpack.c.b16 %v2179, %v2175
    %v3464 = vpack.c.b16 %v2180, %v2176
    %v3465 = vpack.c.b16 %v2185, %v2181
    %v3466 = vpack.c.b16 %v2186, %v2182
    %v3467 = vpack.c.b16 %v2187, %v2183
    %v3468 = vpack.c.b16 %v2188, %v2184
    %v3469 = vpack.c.b16 %v2193, %v2189
    %v3470 = vpack.c.b16 %v2194, %v2190
    %v3471 = vpack.c.b16 %v2195, %v2191
    %v3472 = vpack.c.b16 %v2196, %v2192
    %v3473 = vpack.c.b16 %v2201, %v2197
    %v3474 = vpack.c.b16 %v2202, %v2198
    %v3475 = vpack.c.b16 %v2203, %v2199
    %v3476 = vpack.c.b16 %v2204, %v2200
    %v3477 = vpack.c.b16 %v2209, %v2205
    %v3478 = vpack.c.b16 %v2210, %v2206
    %v3479 = vpack.c.b16 %v2211, %v2207
    %v3480 = vpack.c.b16 %v2212, %v2208
    %v3481 = vpack.c.b16 %v2217, %v2213
    %v3482 = vpack.c.b16 %v2218, %v2214
    %v3483 = vpack.c.b16 %v2219, %v2215
    %v3484 = vpack.c.b16 %v2220, %v2216
    %v3485 = vpack.c.b16 %v2225, %v2221
    %v3486 = vpack.c.b16 %v2226, %v2222
    %v3487 = vpack.c.b16 %v2227, %v2223
    %v3488 = vpack.c.b16 %v2228, %v2224
    %v3489 = vpack.c.b16 %v2233, %v2229
    %v3490 = vpack.c.b16 %v2234, %v2230
    %v3491 = vpack.c.b16 %v2235, %v2231
    %v3492 = vpack.c.b16 %v2236, %v2232
    %v3493 = vpack.c.b16 %v2241, %v2237
    %v3494 = vpack.c.b16 %v2242, %v2238
    %v3495 = vpack.c.b16 %v2243, %v2239
    %v3496 = vpack.c.b16 %v2244, %v2240
    %v3497 = vpack.c.b16 %v2249, %v2245
    %v3498 = vpack.c.b16 %v2250, %v2246
    %v3499 = vpack.c.b16 %v2251, %v2247
    %v3500 = vpack.c.b16 %v2252, %v2248
    %v3501 = vpack.c.b16 %v2257, %v2253
    %v3502 = vpack.c.b16 %v2258, %v2254
    %v3503 = vpack.c.b16 %v2259, %v2255
    %v3504 = vpack.c.b16 %v2260, %v2256
    %v3505 = vpack.c.b16 %v2265, %v2261
    %v3506 = vpack.c.b16 %v2266, %v2262
    %v3507 = vpack.c.b16 %v2267, %v2263
    %v3508 = vpack.c.b16 %v2268, %v2264
    %v3509 = vpack.c.b16 %v2273, %v2269
    %v3510 = vpack.c.b16 %v2274, %v2270
    %v3511 = vpack.c.b16 %v2275, %v2271
    %v3512 = vpack.c.b16 %v2276, %v2272
    %v3513 = vpack.c.b16 %v2281, %v2277
    %v3514 = vpack.c.b16 %v2282, %v2278
    %v3515 = vpack.c.b16 %v2283, %v2279
    %v3516 = vpack.c.b16 %v2284, %v2280
    %v3517 = vpack.c.b16 %v2289, %v2285
    %v3518 = vpack.c.b16 %v2290, %v2286
    %v3519 = vpack.c.b16 %v2291, %v2287
    %v3520 = vpack.c.b16 %v2292, %v2288
    %v3521 = vpack.c.b16 %v2297, %v2293
    %v3522 = vpack.c.b16 %v2298, %v2294
    %v3523 = vpack.c.b16 %v2299, %v2295
    %v3524 = vpack.c.b16 %v2300, %v2296
    %v3525 = vpack.c.b16 %v2305, %v2301
    %v3526 = vpack.c.b16 %v2306, %v2302
    %v3527 = vpack.c.b16 %v2307, %v2303
    %v3528 = vpack.c.b16 %v2308, %v2304
    %v3529 = vpack.c.b16 %v2313, %v2309
    %v3530 = vpack.c.b16 %v2314, %v2310
    %v3531 = vpack.c.b16 %v2315, %v2311
    %v3532 = vpack.c.b16 %v2316, %v2312
    %v3533 = vpack.c.b16 %v2321, %v2317
    %v3534 = vpack.c.b16 %v2322, %v2318
    %v3535 = vpack.c.b16 %v2323, %v2319
    %v3536 = vpack.c.b16 %v2324, %v2320
    %v3537 = vpack.c.b16 %v2329, %v2325
    %v3538 = vpack.c.b16 %v2330, %v2326
    %v3539 = vpack.c.b16 %v2331, %v2327
    %v3540 = vpack.c.b16 %v2332, %v2328
    %v3541 = vpack.c.b16 %v2337, %v2333
    %v3542 = vpack.c.b16 %v2338, %v2334
    %v3543 = vpack.c.b16 %v2339, %v2335
    %v3544 = vpack.c.b16 %v2340, %v2336
    %v3545 = vpack.c.b16 %v2345, %v2341
    %v3546 = vpack.c.b16 %v2346, %v2342
    %v3547 = vpack.c.b16 %v2347, %v2343
    %v3548 = vpack.c.b16 %v2348, %v2344
    %v3549 = vpack.c.b16 %v2353, %v2349
    %v3550 = vpack.c.b16 %v2354, %v2350
    %v3551 = vpack.c.b16 %v2355, %v2351
    %v3552 = vpack.c.b16 %v2356, %v2352
    %v3553 = vpack.c.b16 %v2361, %v2357
    %v3554 = vpack.c.b16 %v2362, %v2358
    %v3555 = vpack.c.b16 %v2363, %v2359
    %v3556 = vpack.c.b16 %v2364, %v2360
    %v3557 = vpack.c.b16 %v2369, %v2365
    %v3558 = vpack.c.b16 %v2370, %v2366
    %v3559 = vpack.c.b16 %v2371, %v2367
    %v3560 = vpack.c.b16 %v2372, %v2368
    %v3561 = vpack.c.b16 %v2377, %v2373
    %v3562 = vpack.c.b16 %v2378, %v2374
    %v3563 = vpack.c.b16 %v2379, %v2375
    %v3564 = vpack.c.b16 %v2380, %v2376
    %v3565 = vpack.c.b16 %v2385, %v2381
    %v3566 = vpack.c.b16 %v2386, %v2382
    %v3567 = vpack.c.b16 %v2387, %v2383
    %v3568 = vpack.c.b16 %v2388, %v2384
    %v3569 = vpack.c.b16 %v2393, %v2389
    %v3570 = vpack.c.b16 %v2394, %v2390
    %v3571 = vpack.c.b16 %v2395, %v2391
    %v3572 = vpack.c.b16 %v2396, %v2392
    %v3573 = vpack.c.b16 %v2401, %v2397
    %v3574 = vpack.c.b16 %v2402, %v2398
    %v3575 = vpack.c.b16 %v2403, %v2399
    %v3576 = vpack.c.b16 %v2404, %v2400
    %v3577 = vpack.c.b16 %v2409, %v2405
    %v3578 = vpack.c.b16 %v2410, %v2406
    %v3579 = vpack.c.b16 %v2411, %v2407
    %v3580 = vpack.c.b16 %v2412, %v2408
    %v3581 = vpack.c.b16 %v2417, %v2413
    %v3582 = vpack.c.b16 %v2418, %v2414
    %v3583 = vpack.c.b16 %v2419, %v2415
    %v3584 = vpack.c.b16 %v2420, %v2416
    %v3585 = vpack.c.b16 %v2425, %v2421
    %v3586 = vpack.c.b16 %v2426, %v2422
    %v3587 = vpack.c.b16 %v2427, %v2423
    %v3588 = vpack.c.b16 %v2428, %v2424
    %v3589 = vpack.c.b16 %v2433, %v2429
    %v3590 = vpack.c.b16 %v2434, %v2430
    %v3591 = vpack.c.b16 %v2435, %v2431
    %v3592 = vpack.c.b16 %v2436, %v2432
    %v3593 = vpack.c.b16 %v2441, %v2437
    %v3594 = vpack.c.b16 %v2442, %v2438
    %v3595 = vpack.c.b16 %v2443, %v2439
    %v3596 = vpack.c.b16 %v2444, %v2440
    %v3597 = vpack.c.b16 %v2449, %v2445
    %v3598 = vpack.c.b16 %v2450, %v2446
    %v3599 = vpack.c.b16 %v2451, %v2447
    %v3600 = vpack.c.b16 %v2452, %v2448
    %v3601 = vpack.c.b16 %v2457, %v2453
    %v3602 = vpack.c.b16 %v2458, %v2454
    %v3603 = vpack.c.b16 %v2459, %v2455
    %v3604 = vpack.c.b16 %v2460, %v2456
    %v3605 = vpack.c.b16 %v2465, %v2461
    %v3606 = vpack.c.b16 %v2466, %v2462
    %v3607 = vpack.c.b16 %v2467, %v2463
    %v3608 = vpack.c.b16 %v2468, %v2464
    %v3609 = vpack.c.b16 %v2473, %v2469
    %v3610 = vpack.c.b16 %v2474, %v2470
    %v3611 = vpack.c.b16 %v2475, %v2471
    %v3612 = vpack.c.b16 %v2476, %v2472
    %v3613 = vpack.c.b16 %v2481, %v2477
    %v3614 = vpack.c.b16 %v2482, %v2478
    %v3615 = vpack.c.b16 %v2483, %v2479
    %v3616 = vpack.c.b16 %v2484, %v2480
    %v3617 = vpack.c.b16 %v2489, %v2485
    %v3618 = vpack.c.b16 %v2490, %v2486
    %v3619 = vpack.c.b16 %v2491, %v2487
    %v3620 = vpack.c.b16 %v2492, %v2488
    %v3621 = vpack.c.b16 %v2497, %v2493
    %v3622 = vpack.c.b16 %v2498, %v2494
    %v3623 = vpack.c.b16 %v2499, %v2495
    %v3624 = vpack.c.b16 %v2500, %v2496
    %v3625 = vpack.c.b16 %v2505, %v2501
    %v3626 = vpack.c.b16 %v2506, %v2502
    %v3627 = vpack.c.b16 %v2507, %v2503
    %v3628 = vpack.c.b16 %v2508, %v2504
    %v3629 = vpack.c.b16 %v2513, %v2509
    %v3630 = vpack.c.b16 %v2514, %v2510
    %v3631 = vpack.c.b16 %v2515, %v2511
    %v3632 = vpack.c.b16 %v2516, %v2512
    %v3633 = vpack.c.b16 %v2521, %v2517
    %v3634 = vpack.c.b16 %v2522, %v2518
    %v3635 = vpack.c.b16 %v2523, %v2519
    %v3636 = vpack.c.b16 %v2524, %v2520
    %v3637 = vpack.c.b16 %v2529, %v2525
    %v3638 = vpack.c.b16 %v2530, %v2526
    %v3639 = vpack.c.b16 %v2531, %v2527
    %v3640 = vpack.c.b16 %v2532, %v2528
    %v3641 = vpack.c.b16 %v2537, %v2533
    %v3642 = vpack.c.b16 %v2538, %v2534
    %v3643 = vpack.c.b16 %v2539, %v2535
    %v3644 = vpack.c.b16 %v2540, %v2536
    %v3645 = vpack.c.b16 %v2545, %v2541
    %v3646 = vpack.c.b16 %v2546, %v2542
    %v3647 = vpack.c.b16 %v2547, %v2543
    %v3648 = vpack.c.b16 %v2548, %v2544
    %v3649 = vpack.c.b16 %v2553, %v2549
    %v3650 = vpack.c.b16 %v2554, %v2550
    %v3651 = vpack.c.b16 %v2555, %v2551
    %v3652 = vpack.c.b16 %v2556, %v2552
    %v3653 = vpack.c.b16 %v2561, %v2557
    %v3654 = vpack.c.b16 %v2562, %v2558
    %v3655 = vpack.c.b16 %v2563, %v2559
    %v3656 = vpack.c.b16 %v2564, %v2560
    %v3657 = vpack.c.b16 %v2569, %v2565
    %v3658 = vpack.c.b16 %v2570, %v2566
    %v3659 = vpack.c.b16 %v2571, %v2567
    %v3660 = vpack.c.b16 %v2572, %v2568
    %v3661 = vpack.c.b16 %v2577, %v2573
    %v3662 = vpack.c.b16 %v2578, %v2574
    %v3663 = vpack.c.b16 %v2579, %v2575
    %v3664 = vpack.c.b16 %v2580, %v2576
    %v3665 = vpack.c.b16 %v2585, %v2581
    %v3666 = vpack.c.b16 %v2586, %v2582
    %v3667 = vpack.c.b16 %v2587, %v2583
    %v3668 = vpack.c.b16 %v2588, %v2584
    %v3669 = vpack.c.b16 %v2593, %v2589
    %v3670 = vpack.c.b16 %v2594, %v2590
    %v3671 = vpack.c.b16 %v2595, %v2591
    %v3672 = vpack.c.b16 %v2596, %v2592
    %v3673 = vpack.c.b16 %v2601, %v2597
    %v3674 = vpack.c.b16 %v2602, %v2598
    %v3675 = vpack.c.b16 %v2603, %v2599
    %v3676 = vpack.c.b16 %v2604, %v2600
    %v3677 = vpack.c.b16 %v2609, %v2605
    %v3678 = vpack.c.b16 %v2610, %v2606
    %v3679 = vpack.c.b16 %v2611, %v2607
    %v3680 = vpack.c.b16 %v2612, %v2608
    %v3681 = vpack.c.b16 %v2617, %v2613
    %v3682 = vpack.c.b16 %v2618, %v2614
    %v3683 = vpack.c.b16 %v2619, %v2615
    %v3684 = vpack.c.b16 %v2620, %v2616
    %v3685 = vpack.c.b16 %v2625, %v2621
    %v3686 = vpack.c.b16 %v2626, %v2622
    %v3687 = vpack.c.b16 %v2627, %v2623
    %v3688 = vpack.c.b16 %v2628, %v2624
    %v3689 = vpack.c.b16 %v2633, %v2629
    %v3690 = vpack.c.b16 %v2634, %v2630
    %v3691 = vpack.c.b16 %v2635, %v2631
    %v3692 = vpack.c.b16 %v2636, %v2632
    %v3693 = vpack.c.b16 %v2641, %v2637
    %v3694 = vpack.c.b16 %v2642, %v2638
    %v3695 = vpack.c.b16 %v2643, %v2639
    %v3696 = vpack.c.b16 %v2644, %v2640
    %v3697 = vpack.c.b16 %v2649, %v2645
    %v3698 = vpack.c.b16 %v2650, %v2646
    %v3699 = vpack.c.b16 %v2651, %v2647
    %v3700 = vpack.c.b16 %v2652, %v2648
    %v3701 = vpack.c.b16 %v2657, %v2653
    %v3702 = vpack.c.b16 %v2658, %v2654
    %v3703 = vpack.c.b16 %v2659, %v2655
    %v3704 = vpack.c.b16 %v2660, %v2656
    %v3705 = vpack.c.b16 %v2665, %v2661
    %v3706 = vpack.c.b16 %v2666, %v2662
    %v3707 = vpack.c.b16 %v2667, %v2663
    %v3708 = vpack.c.b16 %v2668, %v2664
    %v3709 = vpack.c.b16 %v2673, %v2669
    %v3710 = vpack.c.b16 %v2674, %v2670
    %v3711 = vpack.c.b16 %v2675, %v2671
    %v3712 = vpack.c.b16 %v2676, %v2672
    %v3713 = vpack.c.b16 %v2681, %v2677
    %v3714 = vpack.c.b16 %v2682, %v2678
    %v3715 = vpack.c.b16 %v2683, %v2679
    %v3716 = vpack.c.b16 %v2684, %v2680
    %v3717 = vpack.c.b16 %v2689, %v2685
    %v3718 = vpack.c.b16 %v2690, %v2686
    %v3719 = vpack.c.b16 %v2691, %v2687
    %v3720 = vpack.c.b16 %v2692, %v2688
    %v3721 = vpack.c.b16 %v2697, %v2693
    %v3722 = vpack.c.b16 %v2698, %v2694
    %v3723 = vpack.c.b16 %v2699, %v2695
    %v3724 = vpack.c.b16 %v2700, %v2696
    %v3725 = vpack.c.b16 %v2705, %v2701
    %v3726 = vpack.c.b16 %v2706, %v2702
    %v3727 = vpack.c.b16 %v2707, %v2703
    %v3728 = vpack.c.b16 %v2708, %v2704
    %v3729 = vpack.c.b16 %v2713, %v2709
    %v3730 = vpack.c.b16 %v2714, %v2710
    %v3731 = vpack.c.b16 %v2715, %v2711
    %v3732 = vpack.c.b16 %v2716, %v2712
    %v3733 = vpack.c.b16 %v2721, %v2717
    %v3734 = vpack.c.b16 %v2722, %v2718
    %v3735 = vpack.c.b16 %v2723, %v2719
    %v3736 = vpack.c.b16 %v2724, %v2720
    %v3737 = vpack.c.b16 %v2729, %v2725
    %v3738 = vpack.c.b16 %v2730, %v2726
    %v3739 = vpack.c.b16 %v2731, %v2727
    %v3740 = vpack.c.b16 %v2732, %v2728
    %v3741 = vpack.c.b16 %v2737, %v2733
    %v3742 = vpack.c.b16 %v2738, %v2734
    %v3743 = vpack.c.b16 %v2739, %v2735
    %v3744 = vpack.c.b16 %v2740, %v2736
    %v3745 = vpack.c.b16 %v2745, %v2741
    %v3746 = vpack.c.b16 %v2746, %v2742
    %v3747 = vpack.c.b16 %v2747, %v2743
    %v3748 = vpack.c.b16 %v2748, %v2744
    %v3749 = vpack.c.b16 %v2753, %v2749
    %v3750 = vpack.c.b16 %v2754, %v2750
    %v3751 = vpack.c.b16 %v2755, %v2751
    %v3752 = vpack.c.b16 %v2756, %v2752
    %v3753 = vpack.c.b16 %v2761, %v2757
    %v3754 = vpack.c.b16 %v2762, %v2758
    %v3755 = vpack.c.b16 %v2763, %v2759
    %v3756 = vpack.c.b16 %v2764, %v2760
    %v3757 = vpack.c.b16 %v2769, %v2765
    %v3758 = vpack.c.b16 %v2770, %v2766
    %v3759 = vpack.c.b16 %v2771, %v2767
    %v3760 = vpack.c.b16 %v2772, %v2768
    %v3761 = vpack.c.b16 %v2777, %v2773
    %v3762 = vpack.c.b16 %v2778, %v2774
    %v3763 = vpack.c.b16 %v2779, %v2775
    %v3764 = vpack.c.b16 %v2780, %v2776
    %v3765 = vpack.c.b16 %v2785, %v2781
    %v3766 = vpack.c.b16 %v2786, %v2782
    %v3767 = vpack.c.b16 %v2787, %v2783
    %v3768 = vpack.c.b16 %v2788, %v2784
    %v3769 = vpack.c.b16 %v2793, %v2789
    %v3770 = vpack.c.b16 %v2794, %v2790
    %v3771 = vpack.c.b16 %v2795, %v2791
    %v3772 = vpack.c.b16 %v2796, %v2792
    %v3773 = vpack.c.b16 %v2801, %v2797
    %v3774 = vpack.c.b16 %v2802, %v2798
    %v3775 = vpack.c.b16 %v2803, %v2799
    %v3776 = vpack.c.b16 %v2804, %v2800
    %v3777 = vpack.c.b16 %v2809, %v2805
    %v3778 = vpack.c.b16 %v2810, %v2806
    %v3779 = vpack.c.b16 %v2811, %v2807
    %v3780 = vpack.c.b16 %v2812, %v2808
    %v3781 = vpack.c.b16 %v2817, %v2813
    %v3782 = vpack.c.b16 %v2818, %v2814
    %v3783 = vpack.c.b16 %v2819, %v2815
    %v3784 = vpack.c.b16 %v2820, %v2816
    %v3785 = vpack.c.b16 %v2825, %v2821
    %v3786 = vpack.c.b16 %v2826, %v2822
    %v3787 = vpack.c.b16 %v2827, %v2823
    %v3788 = vpack.c.b16 %v2828, %v2824
    %v3789 = vpack.c.b16 %v2833, %v2829
    %v3790 = vpack.c.b16 %v2834, %v2830
    %v3791 = vpack.c.b16 %v2835, %v2831
    %v3792 = vpack.c.b16 %v2836, %v2832
    %v3793 = vpack.c.b16 %v2841, %v2837
    %v3794 = vpack.c.b16 %v2842, %v2838
    %v3795 = vpack.c.b16 %v2843, %v2839
    %v3796 = vpack.c.b16 %v2844, %v2840
    %v3797 = vpack.c.b16 %v2849, %v2845
    %v3798 = vpack.c.b16 %v2850, %v2846
    %v3799 = vpack.c.b16 %v2851, %v2847
    %v3800 = vpack.c.b16 %v2852, %v2848
    %v3801 = vpack.c.b16 %v2857, %v2853
    %v3802 = vpack.c.b16 %v2858, %v2854
    %v3803 = vpack.c.b16 %v2859, %v2855
    %v3804 = vpack.c.b16 %v2860, %v2856
    %v3805 = vpack.c.b16 %v2865, %v2861
    %v3806 = vpack.c.b16 %v2866, %v2862
    %v3807 = vpack.c.b16 %v2867, %v2863
    %v3808 = vpack.c.b16 %v2868, %v2864
    %v3809 = vpack.c.b16 %v2873, %v2869
    %v3810 = vpack.c.b16 %v2874, %v2870
    %v3811 = vpack.c.b16 %v2875, %v2871
    %v3812 = vpack.c.b16 %v2876, %v2872
    %v3813 = vpack.c.b16 %v2881, %v2877
    %v3814 = vpack.c.b16 %v2882, %v2878
    %v3815 = vpack.c.b16 %v2883, %v2879
    %v3816 = vpack.c.b16 %v2884, %v2880
    %v3817 = vpack.c.b16 %v2889, %v2885
    %v3818 = vpack.c.b16 %v2890, %v2886
    %v3819 = vpack.c.b16 %v2891, %v2887
    %v3820 = vpack.c.b16 %v2892, %v2888
    %v3821 = vpack.c.b16 %v2897, %v2893
    %v3822 = vpack.c.b16 %v2898, %v2894
    %v3823 = vpack.c.b16 %v2899, %v2895
    %v3824 = vpack.c.b16 %v2900, %v2896
    %v3825 = vpack.c.b16 %v2905, %v2901
    %v3826 = vpack.c.b16 %v2906, %v2902
    %v3827 = vpack.c.b16 %v2907, %v2903
    %v3828 = vpack.c.b16 %v2908, %v2904
    %v3829 = vpack.c.b16 %v2913, %v2909
    %v3830 = vpack.c.b16 %v2914, %v2910
    %v3831 = vpack.c.b16 %v2915, %v2911
    %v3832 = vpack.c.b16 %v2916, %v2912
    %v3833 = vpack.c.b16 %v2921, %v2917
    %v3834 = vpack.c.b16 %v2922, %v2918
    %v3835 = vpack.c.b16 %v2923, %v2919
    %v3836 = vpack.c.b16 %v2924, %v2920
    %v3837 = vpack.c.b16 %v2929, %v2925
    %v3838 = vpack.c.b16 %v2930, %v2926
    %v3839 = vpack.c.b16 %v2931, %v2927
    %v3840 = vpack.c.b16 %v2932, %v2928
    %v3841 = vpack.c.b16 %v2937, %v2933
    %v3842 = vpack.c.b16 %v2938, %v2934
    %v3843 = vpack.c.b16 %v2939, %v2935
    %v3844 = vpack.c.b16 %v2940, %v2936
    %v3845 = vpack.c.b16 %v2945, %v2941
    %v3846 = vpack.c.b16 %v2946, %v2942
    %v3847 = vpack.c.b16 %v2947, %v2943
    %v3848 = vpack.c.b16 %v2948, %v2944
    %v3849 = vpack.c.b16 %v2953, %v2949
    %v3850 = vpack.c.b16 %v2954, %v2950
    %v3851 = vpack.c.b16 %v2955, %v2951
    %v3852 = vpack.c.b16 %v2956, %v2952
    %v3853 = vpack.c.b16 %v2961, %v2957
    %v3854 = vpack.c.b16 %v2962, %v2958
    %v3855 = vpack.c.b16 %v2963, %v2959
    %v3856 = vpack.c.b16 %v2964, %v2960
    %v3857 = vpack.c.b16 %v2969, %v2965
    %v3858 = vpack.c.b16 %v2970, %v2966
    %v3859 = vpack.c.b16 %v2971, %v2967
    %v3860 = vpack.c.b16 %v2972, %v2968
    %v3861 = vpack.c.b16 %v2977, %v2973
    %v3862 = vpack.c.b16 %v2978, %v2974
    %v3863 = vpack.c.b16 %v2979, %v2975
    %v3864 = vpack.c.b16 %v2980, %v2976
    %v3865 = vpack.c.b16 %v2985, %v2981
    %v3866 = vpack.c.b16 %v2986, %v2982
    %v3867 = vpack.c.b16 %v2987, %v2983
    %v3868 = vpack.c.b16 %v2988, %v2984
    %v3869 = vpack.c.b16 %v2993, %v2989
    %v3870 = vpack.c.b16 %v2994, %v2990
    %v3871 = vpack.c.b16 %v2995, %v2991
    %v3872 = vpack.c.b16 %v2996, %v2992
    %v3873 = vpack.c.b16 %v3001, %v2997
    %v3874 = vpack.c.b16 %v3002, %v2998
    %v3875 = vpack.c.b16 %v3003, %v2999
    %v3876 = vpack.c.b16 %v3004, %v3000
    %v3877 = vpack.c.b16 %v3009, %v3005
    %v3878 = vpack.c.b16 %v3010, %v3006
    %v3879 = vpack.c.b16 %v3011, %v3007
    %v3880 = vpack.c.b16 %v3012, %v3008
    %v3881 = vpack.c.b16 %v3017, %v3013
    %v3882 = vpack.c.b16 %v3018, %v3014
    %v3883 = vpack.c.b16 %v3019, %v3015
    %v3884 = vpack.c.b16 %v3020, %v3016
    %v3885 = vpack.c.b16 %v3025, %v3021
    %v3886 = vpack.c.b16 %v3026, %v3022
    %v3887 = vpack.c.b16 %v3027, %v3023
    %v3888 = vpack.c.b16 %v3028, %v3024
    %v3889 = vpack.c.b16 %v3033, %v3029
    %v3890 = vpack.c.b16 %v3034, %v3030
    %v3891 = vpack.c.b16 %v3035, %v3031
    %v3892 = vpack.c.b16 %v3036, %v3032
    %v3893 = vpack.c.b16 %v3041, %v3037
    %v3894 = vpack.c.b16 %v3042, %v3038
    %v3895 = vpack.c.b16 %v3043, %v3039
    %v3896 = vpack.c.b16 %v3044, %v3040
    %v3897 = vpack.c.b16 %v3049, %v3045
    %v3898 = vpack.c.b16 %v3050, %v3046
    %v3899 = vpack.c.b16 %v3051, %v3047
    %v3900 = vpack.c.b16 %v3052, %v3048
    %v3901 = vpack.c.b16 %v3057, %v3053
    %v3902 = vpack.c.b16 %v3058, %v3054
    %v3903 = vpack.c.b16 %v3059, %v3055
    %v3904 = vpack.c.b16 %v3060, %v3056
    %v3905 = vpack.c.b16 %v3065, %v3061
    %v3906 = vpack.c.b16 %v3066, %v3062
    %v3907 = vpack.c.b16 %v3067, %v3063
    %v3908 = vpack.c.b16 %v3068, %v3064
    %v3909 = vpack.c.b16 %v3073, %v3069
    %v3910 = vpack.c.b16 %v3074, %v3070
    %v3911 = vpack.c.b16 %v3075, %v3071
    %v3912 = vpack.c.b16 %v3076, %v3072
    %v3913 = vpack.c.b16 %v3081, %v3077
    %v3914 = vpack.c.b16 %v3082, %v3078
    %v3915 = vpack.c.b16 %v3083, %v3079
    %v3916 = vpack.c.b16 %v3084, %v3080
    %v3917 = vpack.c.b16 %v3089, %v3085
    %v3918 = vpack.c.b16 %v3090, %v3086
    %v3919 = vpack.c.b16 %v3091, %v3087
    %v3920 = vpack.c.b16 %v3092, %v3088
    %v3921 = vpack.c.b16 %v3097, %v3093
    %v3922 = vpack.c.b16 %v3098, %v3094
    %v3923 = vpack.c.b16 %v3099, %v3095
    %v3924 = vpack.c.b16 %v3100, %v3096
    %v3925 = vpack.c.b16 %v3105, %v3101
    %v3926 = vpack.c.b16 %v3106, %v3102
    %v3927 = vpack.c.b16 %v3107, %v3103
    %v3928 = vpack.c.b16 %v3108, %v3104
    %v3929 = vpack.c.b16 %v3113, %v3109
    %v3930 = vpack.c.b16 %v3114, %v3110
    %v3931 = vpack.c.b16 %v3115, %v3111
    %v3932 = vpack.c.b16 %v3116, %v3112
    %v3933 = vpack.c.b16 %v3121, %v3117
    %v3934 = vpack.c.b16 %v3122, %v3118
    %v3935 = vpack.c.b16 %v3123, %v3119
    %v3936 = vpack.c.b16 %v3124, %v3120
    %v3937 = vpack.c.b16 %v3129, %v3125
    %v3938 = vpack.c.b16 %v3130, %v3126
    %v3939 = vpack.c.b16 %v3131, %v3127
    %v3940 = vpack.c.b16 %v3132, %v3128
    %v3941 = vpack.c.b16 %v3137, %v3133
    %v3942 = vpack.c.b16 %v3138, %v3134
    %v3943 = vpack.c.b16 %v3139, %v3135
    %v3944 = vpack.c.b16 %v3140, %v3136
    %v3945 = vpack.c.b16 %v3145, %v3141
    %v3946 = vpack.c.b16 %v3146, %v3142
    %v3947 = vpack.c.b16 %v3147, %v3143
    %v3948 = vpack.c.b16 %v3148, %v3144
    %v3949 = vpack.c.b16 %v3153, %v3149
    %v3950 = vpack.c.b16 %v3154, %v3150
    %v3951 = vpack.c.b16 %v3155, %v3151
    %v3952 = vpack.c.b16 %v3156, %v3152
    %v3953 = vpack.c.b16 %v3161, %v3157
    %v3954 = vpack.c.b16 %v3162, %v3158
    %v3955 = vpack.c.b16 %v3163, %v3159
    %v3956 = vpack.c.b16 %v3164, %v3160
    %v3957 = vpack.c.b16 %v3169, %v3165
    %v3958 = vpack.c.b16 %v3170, %v3166
    %v3959 = vpack.c.b16 %v3171, %v3167
    %v3960 = vpack.c.b16 %v3172, %v3168
    %v3961 = vpack.c.b16 %v3177, %v3173
    %v3962 = vpack.c.b16 %v3178, %v3174
    %v3963 = vpack.c.b16 %v3179, %v3175
    %v3964 = vpack.c.b16 %v3180, %v3176
    %v3965 = vpack.c.b16 %v3185, %v3181
    %v3966 = vpack.c.b16 %v3186, %v3182
    %v3967 = vpack.c.b16 %v3187, %v3183
    %v3968 = vpack.c.b16 %v3188, %v3184
    %v3969 = vpack.c.b16 %v3193, %v3189
    %v3970 = vpack.c.b16 %v3194, %v3190
    %v3971 = vpack.c.b16 %v3195, %v3191
    %v3972 = vpack.c.b16 %v3196, %v3192
    %v3973 = vpack.c.b16 %v3201, %v3197
    %v3974 = vpack.c.b16 %v3202, %v3198
    %v3975 = vpack.c.b16 %v3203, %v3199
    %v3976 = vpack.c.b16 %v3204, %v3200
    %v3977 = vpack.c.b16 %v3209, %v3205
    %v3978 = vpack.c.b16 %v3210, %v3206
    %v3979 = vpack.c.b16 %v3211, %v3207
    %v3980 = vpack.c.b16 %v3212, %v3208
    %v4750 = vperm.slane %v854, 0
    %v4751 = vperm.slane %v854, 1
    %v4752 = vperm.slane %v854, 2
    %v4753 = vperm.slane %v854, 3
    %4758 = vmatpush.bf16.msra.mxu0 %v3241
    %4759 = vmatpush.bf16.msra.mxu0 %v3237
    %4760 = vmatpush.bf16.msra.mxu0 %v3233
    %4761 = vmatpush.bf16.msra.mxu0 %v3229
    %4762 = vmatpush.bf16.msra.mxu0 %v3225
    %4763 = vmatpush.bf16.msra.mxu0 %v3221
    %4764 = vmatpush.bf16.msra.mxu0 %v3217
    %4765 = vmatpush.bf16.msra.mxu0 %v3213
    %4766 = vmatmul.bf16.gmra.mxu0 %v857
    %v4767 = vpop.f32.mrf.mxu0
    %v4768 = vadd.f32 %v4750, %v4767
    %v4769 = vpop.f32.mrf.mxu0
    %4770 = vdwg.mxu0
    %4771 = vmatpush.bf16.msra.mxu0 %v3273
    %4772 = vmatpush.bf16.msra.mxu0 %v3269
    %4773 = vmatpush.bf16.msra.mxu0 %v3265
    %4774 = vmatpush.bf16.msra.mxu0 %v3261
    %4775 = vmatpush.bf16.msra.mxu0 %v3257
    %4776 = vmatpush.bf16.msra.mxu0 %v3253
    %4777 = vmatpush.bf16.msra.mxu0 %v3249
    %4778 = vmatpush.bf16.msra.mxu0 %v3245
    %4779 = vmatmul.bf16.gmra.mxu0 %v858
    %v4780 = vpop.f32.mrf.mxu0
    %v4781 = vadd.f32 %v4768, %v4780
    %v4782 = vpop.f32.mrf.mxu0
    %4783 = vdwg.mxu0
    %4784 = vmatpush.bf16.msra.mxu0 %v3305
    %4785 = vmatpush.bf16.msra.mxu0 %v3301
    %4786 = vmatpush.bf16.msra.mxu0 %v3297
    %4787 = vmatpush.bf16.msra.mxu0 %v3293
    %4788 = vmatpush.bf16.msra.mxu0 %v3289
    %4789 = vmatpush.bf16.msra.mxu0 %v3285
    %4790 = vmatpush.bf16.msra.mxu0 %v3281
    %4791 = vmatpush.bf16.msra.mxu0 %v3277
    %4792 = vmatmul.bf16.gmra.mxu0 %v859
    %v4793 = vpop.f32.mrf.mxu0
    %v4794 = vadd.f32 %v4781, %v4793
    %v4795 = vpop.f32.mrf.mxu0
    %4796 = vdwg.mxu0
    %4797 = vmatpush.bf16.msra.mxu0 %v3337
    %4798 = vmatpush.bf16.msra.mxu0 %v3333
    %4799 = vmatpush.bf16.msra.mxu0 %v3329
    %4800 = vmatpush.bf16.msra.mxu0 %v3325
    %4801 = vmatpush.bf16.msra.mxu0 %v3321
    %4802 = vmatpush.bf16.msra.mxu0 %v3317
    %4803 = vmatpush.bf16.msra.mxu0 %v3313
    %4804 = vmatpush.bf16.msra.mxu0 %v3309
    %4805 = vmatmul.bf16.gmra.mxu0 %v860
    %v4806 = vpop.f32.mrf.mxu0
    %v4807 = vadd.f32 %v4794, %v4806
    %v4808 = vpop.f32.mrf.mxu0
    %4809 = vdwg.mxu0
    %4810 = vmatpush.bf16.msra.mxu0 %v3369
    %4811 = vmatpush.bf16.msra.mxu0 %v3365
    %4812 = vmatpush.bf16.msra.mxu0 %v3361
    %4813 = vmatpush.bf16.msra.mxu0 %v3357
    %4814 = vmatpush.bf16.msra.mxu0 %v3353
    %4815 = vmatpush.bf16.msra.mxu0 %v3349
    %4816 = vmatpush.bf16.msra.mxu0 %v3345
    %4817 = vmatpush.bf16.msra.mxu0 %v3341
    %4818 = vmatmul.bf16.gmra.mxu0 %v861
    %v4819 = vpop.f32.mrf.mxu0
    %v4820 = vadd.f32 %v4807, %v4819
    %v4821 = vpop.f32.mrf.mxu0
    %4822 = vdwg.mxu0
    %4823 = vmatpush.bf16.msra.mxu0 %v3401
    %4824 = vmatpush.bf16.msra.mxu0 %v3397
    %4825 = vmatpush.bf16.msra.mxu0 %v3393
    %4826 = vmatpush.bf16.msra.mxu0 %v3389
    %4827 = vmatpush.bf16.msra.mxu0 %v3385
    %4828 = vmatpush.bf16.msra.mxu0 %v3381
    %4829 = vmatpush.bf16.msra.mxu0 %v3377
    %4830 = vmatpush.bf16.msra.mxu0 %v3373
    %4831 = vmatmul.bf16.gmra.mxu0 %v862
    %v4832 = vpop.f32.mrf.mxu0
    %v4833 = vadd.f32 %v4820, %v4832
    %v4834 = vpop.f32.mrf.mxu0
    %4835 = vdwg.mxu0
    %4836 = vmatpush.bf16.msra.mxu0 %v3433
    %4837 = vmatpush.bf16.msra.mxu0 %v3429
    %4838 = vmatpush.bf16.msra.mxu0 %v3425
    %4839 = vmatpush.bf16.msra.mxu0 %v3421
    %4840 = vmatpush.bf16.msra.mxu0 %v3417
    %4841 = vmatpush.bf16.msra.mxu0 %v3413
    %4842 = vmatpush.bf16.msra.mxu0 %v3409
    %4843 = vmatpush.bf16.msra.mxu0 %v3405
    %4844 = vmatmul.bf16.gmra.mxu0 %v863
    %v4845 = vpop.f32.mrf.mxu0
    %v4846 = vadd.f32 %v4833, %v4845
    %v4847 = vpop.f32.mrf.mxu0
    %4848 = vdwg.mxu0
    %4849 = vmatpush.bf16.msra.mxu0 %v3465
    %4850 = vmatpush.bf16.msra.mxu0 %v3461
    %4851 = vmatpush.bf16.msra.mxu0 %v3457
    %4852 = vmatpush.bf16.msra.mxu0 %v3453
    %4853 = vmatpush.bf16.msra.mxu0 %v3449
    %4854 = vmatpush.bf16.msra.mxu0 %v3445
    %4855 = vmatpush.bf16.msra.mxu0 %v3441
    %4856 = vmatpush.bf16.msra.mxu0 %v3437
    %4857 = vmatmul.bf16.gmra.mxu0 %v864
    %v4858 = vpop.f32.mrf.mxu0
    %v4859 = vadd.f32 %v4846, %v4858
    %v4860 = vpop.f32.mrf.mxu0
    %4861 = vdwg.mxu0
    %4862 = vmatpush.bf16.msra.mxu0 %v3497
    %4863 = vmatpush.bf16.msra.mxu0 %v3493
    %4864 = vmatpush.bf16.msra.mxu0 %v3489
    %4865 = vmatpush.bf16.msra.mxu0 %v3485
    %4866 = vmatpush.bf16.msra.mxu0 %v3481
    %4867 = vmatpush.bf16.msra.mxu0 %v3477
    %4868 = vmatpush.bf16.msra.mxu0 %v3473
    %4869 = vmatpush.bf16.msra.mxu0 %v3469
    %4870 = vmatmul.bf16.gmra.mxu0 %v867
    %v4871 = vpop.f32.mrf.mxu0
    %v4872 = vadd.f32 %v4859, %v4871
    %v4873 = vpop.f32.mrf.mxu0
    %4874 = vdwg.mxu0
    %4875 = vmatpush.bf16.msra.mxu0 %v3529
    %4876 = vmatpush.bf16.msra.mxu0 %v3525
    %4877 = vmatpush.bf16.msra.mxu0 %v3521
    %4878 = vmatpush.bf16.msra.mxu0 %v3517
    %4879 = vmatpush.bf16.msra.mxu0 %v3513
    %4880 = vmatpush.bf16.msra.mxu0 %v3509
    %4881 = vmatpush.bf16.msra.mxu0 %v3505
    %4882 = vmatpush.bf16.msra.mxu0 %v3501
    %4883 = vmatmul.bf16.gmra.mxu0 %v868
    %v4884 = vpop.f32.mrf.mxu0
    %v4885 = vadd.f32 %v4872, %v4884
    %v4886 = vpop.f32.mrf.mxu0
    %4887 = vdwg.mxu0
    %4888 = vmatpush.bf16.msra.mxu0 %v3561
    %4889 = vmatpush.bf16.msra.mxu0 %v3557
    %4890 = vmatpush.bf16.msra.mxu0 %v3553
    %4891 = vmatpush.bf16.msra.mxu0 %v3549
    %4892 = vmatpush.bf16.msra.mxu0 %v3545
    %4893 = vmatpush.bf16.msra.mxu0 %v3541
    %4894 = vmatpush.bf16.msra.mxu0 %v3537
    %4895 = vmatpush.bf16.msra.mxu0 %v3533
    %4896 = vmatmul.bf16.gmra.mxu0 %v869
    %v4897 = vpop.f32.mrf.mxu0
    %v4898 = vadd.f32 %v4885, %v4897
    %v4899 = vpop.f32.mrf.mxu0
    %4900 = vdwg.mxu0
    %4901 = vmatpush.bf16.msra.mxu0 %v3593
    %4902 = vmatpush.bf16.msra.mxu0 %v3589
    %4903 = vmatpush.bf16.msra.mxu0 %v3585
    %4904 = vmatpush.bf16.msra.mxu0 %v3581
    %4905 = vmatpush.bf16.msra.mxu0 %v3577
    %4906 = vmatpush.bf16.msra.mxu0 %v3573
    %4907 = vmatpush.bf16.msra.mxu0 %v3569
    %4908 = vmatpush.bf16.msra.mxu0 %v3565
    %4909 = vmatmul.bf16.gmra.mxu0 %v870
    %v4910 = vpop.f32.mrf.mxu0
    %v4911 = vadd.f32 %v4898, %v4910
    %v4912 = vpop.f32.mrf.mxu0
    %4913 = vdwg.mxu0
    %4914 = vmatpush.bf16.msra.mxu0 %v3625
    %4915 = vmatpush.bf16.msra.mxu0 %v3621
    %4916 = vmatpush.bf16.msra.mxu0 %v3617
    %4917 = vmatpush.bf16.msra.mxu0 %v3613
    %4918 = vmatpush.bf16.msra.mxu0 %v3609
    %4919 = vmatpush.bf16.msra.mxu0 %v3605
    %4920 = vmatpush.bf16.msra.mxu0 %v3601
    %4921 = vmatpush.bf16.msra.mxu0 %v3597
    %4922 = vmatmul.bf16.gmra.mxu0 %v871
    %v4923 = vpop.f32.mrf.mxu0
    %v4924 = vadd.f32 %v4911, %v4923
    %v4925 = vpop.f32.mrf.mxu0
    %4926 = vdwg.mxu0
    %4927 = vmatpush.bf16.msra.mxu0 %v3657
    %4928 = vmatpush.bf16.msra.mxu0 %v3653
    %4929 = vmatpush.bf16.msra.mxu0 %v3649
    %4930 = vmatpush.bf16.msra.mxu0 %v3645
    %4931 = vmatpush.bf16.msra.mxu0 %v3641
    %4932 = vmatpush.bf16.msra.mxu0 %v3637
    %4933 = vmatpush.bf16.msra.mxu0 %v3633
    %4934 = vmatpush.bf16.msra.mxu0 %v3629
    %4935 = vmatmul.bf16.gmra.mxu0 %v872
    %v4936 = vpop.f32.mrf.mxu0
    %v4937 = vadd.f32 %v4924, %v4936
    %v4938 = vpop.f32.mrf.mxu0
    %4939 = vdwg.mxu0
    %4940 = vmatpush.bf16.msra.mxu0 %v3689
    %4941 = vmatpush.bf16.msra.mxu0 %v3685
    %4942 = vmatpush.bf16.msra.mxu0 %v3681
    %4943 = vmatpush.bf16.msra.mxu0 %v3677
    %4944 = vmatpush.bf16.msra.mxu0 %v3673
    %4945 = vmatpush.bf16.msra.mxu0 %v3669
    %4946 = vmatpush.bf16.msra.mxu0 %v3665
    %4947 = vmatpush.bf16.msra.mxu0 %v3661
    %4948 = vmatmul.bf16.gmra.mxu0 %v873
    %v4949 = vpop.f32.mrf.mxu0
    %v4950 = vadd.f32 %v4937, %v4949
    %v4951 = vpop.f32.mrf.mxu0
    %4952 = vdwg.mxu0
    %4953 = vmatpush.bf16.msra.mxu0 %v3721
    %4954 = vmatpush.bf16.msra.mxu0 %v3717
    %4955 = vmatpush.bf16.msra.mxu0 %v3713
    %4956 = vmatpush.bf16.msra.mxu0 %v3709
    %4957 = vmatpush.bf16.msra.mxu0 %v3705
    %4958 = vmatpush.bf16.msra.mxu0 %v3701
    %4959 = vmatpush.bf16.msra.mxu0 %v3697
    %4960 = vmatpush.bf16.msra.mxu0 %v3693
    %4961 = vmatmul.bf16.gmra.mxu0 %v874
    %v4962 = vpop.f32.mrf.mxu0
    %v4963 = vadd.f32 %v4950, %v4962
    %v4964 = vpop.f32.mrf.mxu0
    %4965 = vdwg.mxu0
    %4966 = vmatpush.bf16.msra.mxu0 %v3753
    %4967 = vmatpush.bf16.msra.mxu0 %v3749
    %4968 = vmatpush.bf16.msra.mxu0 %v3745
    %4969 = vmatpush.bf16.msra.mxu0 %v3741
    %4970 = vmatpush.bf16.msra.mxu0 %v3737
    %4971 = vmatpush.bf16.msra.mxu0 %v3733
    %4972 = vmatpush.bf16.msra.mxu0 %v3729
    %4973 = vmatpush.bf16.msra.mxu0 %v3725
    %4974 = vmatmul.bf16.gmra.mxu0 %v877
    %v4975 = vpop.f32.mrf.mxu0
    %v4976 = vadd.f32 %v4963, %v4975
    %v4977 = vpop.f32.mrf.mxu0
    %4978 = vdwg.mxu0
    %4979 = vmatpush.bf16.msra.mxu0 %v3785
    %4980 = vmatpush.bf16.msra.mxu0 %v3781
    %4981 = vmatpush.bf16.msra.mxu0 %v3777
    %4982 = vmatpush.bf16.msra.mxu0 %v3773
    %4983 = vmatpush.bf16.msra.mxu0 %v3769
    %4984 = vmatpush.bf16.msra.mxu0 %v3765
    %4985 = vmatpush.bf16.msra.mxu0 %v3761
    %4986 = vmatpush.bf16.msra.mxu0 %v3757
    %4987 = vmatmul.bf16.gmra.mxu0 %v878
    %v4988 = vpop.f32.mrf.mxu0
    %v4989 = vadd.f32 %v4976, %v4988
    %v4990 = vpop.f32.mrf.mxu0
    %4991 = vdwg.mxu0
    %4992 = vmatpush.bf16.msra.mxu0 %v3817
    %4993 = vmatpush.bf16.msra.mxu0 %v3813
    %4994 = vmatpush.bf16.msra.mxu0 %v3809
    %4995 = vmatpush.bf16.msra.mxu0 %v3805
    %4996 = vmatpush.bf16.msra.mxu0 %v3801
    %4997 = vmatpush.bf16.msra.mxu0 %v3797
    %4998 = vmatpush.bf16.msra.mxu0 %v3793
    %4999 = vmatpush.bf16.msra.mxu0 %v3789
    %5000 = vmatmul.bf16.gmra.mxu0 %v879
    %v5001 = vpop.f32.mrf.mxu0
    %v5002 = vadd.f32 %v4989, %v5001
    %v5003 = vpop.f32.mrf.mxu0
    %5004 = vdwg.mxu0
    %5005 = vmatpush.bf16.msra.mxu0 %v3849
    %5006 = vmatpush.bf16.msra.mxu0 %v3845
    %5007 = vmatpush.bf16.msra.mxu0 %v3841
    %5008 = vmatpush.bf16.msra.mxu0 %v3837
    %5009 = vmatpush.bf16.msra.mxu0 %v3833
    %5010 = vmatpush.bf16.msra.mxu0 %v3829
    %5011 = vmatpush.bf16.msra.mxu0 %v3825
    %5012 = vmatpush.bf16.msra.mxu0 %v3821
    %5013 = vmatmul.bf16.gmra.mxu0 %v880
    %v5014 = vpop.f32.mrf.mxu0
    %v5015 = vadd.f32 %v5002, %v5014
    %v5016 = vpop.f32.mrf.mxu0
    %5017 = vdwg.mxu0
    %5018 = vmatpush.bf16.msra.mxu0 %v3881
    %5019 = vmatpush.bf16.msra.mxu0 %v3877
    %5020 = vmatpush.bf16.msra.mxu0 %v3873
    %5021 = vmatpush.bf16.msra.mxu0 %v3869
    %5022 = vmatpush.bf16.msra.mxu0 %v3865
    %5023 = vmatpush.bf16.msra.mxu0 %v3861
    %5024 = vmatpush.bf16.msra.mxu0 %v3857
    %5025 = vmatpush.bf16.msra.mxu0 %v3853
    %5026 = vmatmul.bf16.gmra.mxu0 %v881
    %v5027 = vpop.f32.mrf.mxu0
    %v5028 = vadd.f32 %v5015, %v5027
    %v5029 = vpop.f32.mrf.mxu0
    %5030 = vdwg.mxu0
    %5031 = vmatpush.bf16.msra.mxu0 %v3913
    %5032 = vmatpush.bf16.msra.mxu0 %v3909
    %5033 = vmatpush.bf16.msra.mxu0 %v3905
    %5034 = vmatpush.bf16.msra.mxu0 %v3901
    %5035 = vmatpush.bf16.msra.mxu0 %v3897
    %5036 = vmatpush.bf16.msra.mxu0 %v3893
    %5037 = vmatpush.bf16.msra.mxu0 %v3889
    %5038 = vmatpush.bf16.msra.mxu0 %v3885
    %5039 = vmatmul.bf16.gmra.mxu0 %v882
    %v5040 = vpop.f32.mrf.mxu0
    %v5041 = vadd.f32 %v5028, %v5040
    %v5042 = vpop.f32.mrf.mxu0
    %5043 = vdwg.mxu0
    %5044 = vmatpush.bf16.msra.mxu0 %v3945
    %5045 = vmatpush.bf16.msra.mxu0 %v3941
    %5046 = vmatpush.bf16.msra.mxu0 %v3937
    %5047 = vmatpush.bf16.msra.mxu0 %v3933
    %5048 = vmatpush.bf16.msra.mxu0 %v3929
    %5049 = vmatpush.bf16.msra.mxu0 %v3925
    %5050 = vmatpush.bf16.msra.mxu0 %v3921
    %5051 = vmatpush.bf16.msra.mxu0 %v3917
    %5052 = vmatmul.bf16.gmra.mxu0 %v883
    %v5053 = vpop.f32.mrf.mxu0
    %v5054 = vadd.f32 %v5041, %v5053
    %v5055 = vpop.f32.mrf.mxu0
    %5056 = vdwg.mxu0
    %5057 = vmatpush.bf16.msra.mxu0 %v3977
    %5058 = vmatpush.bf16.msra.mxu0 %v3973
    %5059 = vmatpush.bf16.msra.mxu0 %v3969
    %5060 = vmatpush.bf16.msra.mxu0 %v3965
    %5061 = vmatpush.bf16.msra.mxu0 %v3961
    %5062 = vmatpush.bf16.msra.mxu0 %v3957
    %5063 = vmatpush.bf16.msra.mxu0 %v3953
    %5064 = vmatpush.bf16.msra.mxu0 %v3949
    %5065 = vmatmul.bf16.gmra.mxu0 %v884
    %v5066 = vpop.f32.mrf.mxu0
    %v5067 = vadd.f32 %v5054, %v5066
    %v5068 = vpop.f32.mrf.mxu0
    %5069 = vdwg.mxu0
    %5070 = vmatpush.bf16.msra.mxu0 %v3242
    %5071 = vmatpush.bf16.msra.mxu0 %v3238
    %5072 = vmatpush.bf16.msra.mxu0 %v3234
    %5073 = vmatpush.bf16.msra.mxu0 %v3230
    %5074 = vmatpush.bf16.msra.mxu0 %v3226
    %5075 = vmatpush.bf16.msra.mxu0 %v3222
    %5076 = vmatpush.bf16.msra.mxu0 %v3218
    %5077 = vmatpush.bf16.msra.mxu0 %v3214
    %5078 = vmatmul.bf16.gmra.mxu0 %v857
    %v5079 = vpop.f32.mrf.mxu0
    %v5080 = vadd.f32 %v4751, %v5079
    %v5081 = vpop.f32.mrf.mxu0
    %5082 = vdwg.mxu0
    %5083 = vmatpush.bf16.msra.mxu0 %v3274
    %5084 = vmatpush.bf16.msra.mxu0 %v3270
    %5085 = vmatpush.bf16.msra.mxu0 %v3266
    %5086 = vmatpush.bf16.msra.mxu0 %v3262
    %5087 = vmatpush.bf16.msra.mxu0 %v3258
    %5088 = vmatpush.bf16.msra.mxu0 %v3254
    %5089 = vmatpush.bf16.msra.mxu0 %v3250
    %5090 = vmatpush.bf16.msra.mxu0 %v3246
    %5091 = vmatmul.bf16.gmra.mxu0 %v858
    %v5092 = vpop.f32.mrf.mxu0
    %v5093 = vadd.f32 %v5080, %v5092
    %v5094 = vpop.f32.mrf.mxu0
    %5095 = vdwg.mxu0
    %5096 = vmatpush.bf16.msra.mxu0 %v3306
    %5097 = vmatpush.bf16.msra.mxu0 %v3302
    %5098 = vmatpush.bf16.msra.mxu0 %v3298
    %5099 = vmatpush.bf16.msra.mxu0 %v3294
    %5100 = vmatpush.bf16.msra.mxu0 %v3290
    %5101 = vmatpush.bf16.msra.mxu0 %v3286
    %5102 = vmatpush.bf16.msra.mxu0 %v3282
    %5103 = vmatpush.bf16.msra.mxu0 %v3278
    %5104 = vmatmul.bf16.gmra.mxu0 %v859
    %v5105 = vpop.f32.mrf.mxu0
    %v5106 = vadd.f32 %v5093, %v5105
    %v5107 = vpop.f32.mrf.mxu0
    %5108 = vdwg.mxu0
    %5109 = vmatpush.bf16.msra.mxu0 %v3338
    %5110 = vmatpush.bf16.msra.mxu0 %v3334
    %5111 = vmatpush.bf16.msra.mxu0 %v3330
    %5112 = vmatpush.bf16.msra.mxu0 %v3326
    %5113 = vmatpush.bf16.msra.mxu0 %v3322
    %5114 = vmatpush.bf16.msra.mxu0 %v3318
    %5115 = vmatpush.bf16.msra.mxu0 %v3314
    %5116 = vmatpush.bf16.msra.mxu0 %v3310
    %5117 = vmatmul.bf16.gmra.mxu0 %v860
    %v5118 = vpop.f32.mrf.mxu0
    %v5119 = vadd.f32 %v5106, %v5118
    %v5120 = vpop.f32.mrf.mxu0
    %5121 = vdwg.mxu0
    %5122 = vmatpush.bf16.msra.mxu0 %v3370
    %5123 = vmatpush.bf16.msra.mxu0 %v3366
    %5124 = vmatpush.bf16.msra.mxu0 %v3362
    %5125 = vmatpush.bf16.msra.mxu0 %v3358
    %5126 = vmatpush.bf16.msra.mxu0 %v3354
    %5127 = vmatpush.bf16.msra.mxu0 %v3350
    %5128 = vmatpush.bf16.msra.mxu0 %v3346
    %5129 = vmatpush.bf16.msra.mxu0 %v3342
    %5130 = vmatmul.bf16.gmra.mxu0 %v861
    %v5131 = vpop.f32.mrf.mxu0
    %v5132 = vadd.f32 %v5119, %v5131
    %v5133 = vpop.f32.mrf.mxu0
    %5134 = vdwg.mxu0
    %5135 = vmatpush.bf16.msra.mxu0 %v3402
    %5136 = vmatpush.bf16.msra.mxu0 %v3398
    %5137 = vmatpush.bf16.msra.mxu0 %v3394
    %5138 = vmatpush.bf16.msra.mxu0 %v3390
    %5139 = vmatpush.bf16.msra.mxu0 %v3386
    %5140 = vmatpush.bf16.msra.mxu0 %v3382
    %5141 = vmatpush.bf16.msra.mxu0 %v3378
    %5142 = vmatpush.bf16.msra.mxu0 %v3374
    %5143 = vmatmul.bf16.gmra.mxu0 %v862
    %v5144 = vpop.f32.mrf.mxu0
    %v5145 = vadd.f32 %v5132, %v5144
    %v5146 = vpop.f32.mrf.mxu0
    %5147 = vdwg.mxu0
    %5148 = vmatpush.bf16.msra.mxu0 %v3434
    %5149 = vmatpush.bf16.msra.mxu0 %v3430
    %5150 = vmatpush.bf16.msra.mxu0 %v3426
    %5151 = vmatpush.bf16.msra.mxu0 %v3422
    %5152 = vmatpush.bf16.msra.mxu0 %v3418
    %5153 = vmatpush.bf16.msra.mxu0 %v3414
    %5154 = vmatpush.bf16.msra.mxu0 %v3410
    %5155 = vmatpush.bf16.msra.mxu0 %v3406
    %5156 = vmatmul.bf16.gmra.mxu0 %v863
    %v5157 = vpop.f32.mrf.mxu0
    %v5158 = vadd.f32 %v5145, %v5157
    %v5159 = vpop.f32.mrf.mxu0
    %5160 = vdwg.mxu0
    %5161 = vmatpush.bf16.msra.mxu0 %v3466
    %5162 = vmatpush.bf16.msra.mxu0 %v3462
    %5163 = vmatpush.bf16.msra.mxu0 %v3458
    %5164 = vmatpush.bf16.msra.mxu0 %v3454
    %5165 = vmatpush.bf16.msra.mxu0 %v3450
    %5166 = vmatpush.bf16.msra.mxu0 %v3446
    %5167 = vmatpush.bf16.msra.mxu0 %v3442
    %5168 = vmatpush.bf16.msra.mxu0 %v3438
    %5169 = vmatmul.bf16.gmra.mxu0 %v864
    %v5170 = vpop.f32.mrf.mxu0
    %v5171 = vadd.f32 %v5158, %v5170
    %v5172 = vpop.f32.mrf.mxu0
    %5173 = vdwg.mxu0
    %5174 = vmatpush.bf16.msra.mxu0 %v3498
    %5175 = vmatpush.bf16.msra.mxu0 %v3494
    %5176 = vmatpush.bf16.msra.mxu0 %v3490
    %5177 = vmatpush.bf16.msra.mxu0 %v3486
    %5178 = vmatpush.bf16.msra.mxu0 %v3482
    %5179 = vmatpush.bf16.msra.mxu0 %v3478
    %5180 = vmatpush.bf16.msra.mxu0 %v3474
    %5181 = vmatpush.bf16.msra.mxu0 %v3470
    %5182 = vmatmul.bf16.gmra.mxu0 %v867
    %v5183 = vpop.f32.mrf.mxu0
    %v5184 = vadd.f32 %v5171, %v5183
    %v5185 = vpop.f32.mrf.mxu0
    %5186 = vdwg.mxu0
    %5187 = vmatpush.bf16.msra.mxu0 %v3530
    %5188 = vmatpush.bf16.msra.mxu0 %v3526
    %5189 = vmatpush.bf16.msra.mxu0 %v3522
    %5190 = vmatpush.bf16.msra.mxu0 %v3518
    %5191 = vmatpush.bf16.msra.mxu0 %v3514
    %5192 = vmatpush.bf16.msra.mxu0 %v3510
    %5193 = vmatpush.bf16.msra.mxu0 %v3506
    %5194 = vmatpush.bf16.msra.mxu0 %v3502
    %5195 = vmatmul.bf16.gmra.mxu0 %v868
    %v5196 = vpop.f32.mrf.mxu0
    %v5197 = vadd.f32 %v5184, %v5196
    %v5198 = vpop.f32.mrf.mxu0
    %5199 = vdwg.mxu0
    %5200 = vmatpush.bf16.msra.mxu0 %v3562
    %5201 = vmatpush.bf16.msra.mxu0 %v3558
    %5202 = vmatpush.bf16.msra.mxu0 %v3554
    %5203 = vmatpush.bf16.msra.mxu0 %v3550
    %5204 = vmatpush.bf16.msra.mxu0 %v3546
    %5205 = vmatpush.bf16.msra.mxu0 %v3542
    %5206 = vmatpush.bf16.msra.mxu0 %v3538
    %5207 = vmatpush.bf16.msra.mxu0 %v3534
    %5208 = vmatmul.bf16.gmra.mxu0 %v869
    %v5209 = vpop.f32.mrf.mxu0
    %v5210 = vadd.f32 %v5197, %v5209
    %v5211 = vpop.f32.mrf.mxu0
    %5212 = vdwg.mxu0
    %5213 = vmatpush.bf16.msra.mxu0 %v3594
    %5214 = vmatpush.bf16.msra.mxu0 %v3590
    %5215 = vmatpush.bf16.msra.mxu0 %v3586
    %5216 = vmatpush.bf16.msra.mxu0 %v3582
    %5217 = vmatpush.bf16.msra.mxu0 %v3578
    %5218 = vmatpush.bf16.msra.mxu0 %v3574
    %5219 = vmatpush.bf16.msra.mxu0 %v3570
    %5220 = vmatpush.bf16.msra.mxu0 %v3566
    %5221 = vmatmul.bf16.gmra.mxu0 %v870
    %v5222 = vpop.f32.mrf.mxu0
    %v5223 = vadd.f32 %v5210, %v5222
    %v5224 = vpop.f32.mrf.mxu0
    %5225 = vdwg.mxu0
    %5226 = vmatpush.bf16.msra.mxu0 %v3626
    %5227 = vmatpush.bf16.msra.mxu0 %v3622
    %5228 = vmatpush.bf16.msra.mxu0 %v3618
    %5229 = vmatpush.bf16.msra.mxu0 %v3614
    %5230 = vmatpush.bf16.msra.mxu0 %v3610
    %5231 = vmatpush.bf16.msra.mxu0 %v3606
    %5232 = vmatpush.bf16.msra.mxu0 %v3602
    %5233 = vmatpush.bf16.msra.mxu0 %v3598
    %5234 = vmatmul.bf16.gmra.mxu0 %v871
    %v5235 = vpop.f32.mrf.mxu0
    %v5236 = vadd.f32 %v5223, %v5235
    %v5237 = vpop.f32.mrf.mxu0
    %5238 = vdwg.mxu0
    %5239 = vmatpush.bf16.msra.mxu0 %v3658
    %5240 = vmatpush.bf16.msra.mxu0 %v3654
    %5241 = vmatpush.bf16.msra.mxu0 %v3650
    %5242 = vmatpush.bf16.msra.mxu0 %v3646
    %5243 = vmatpush.bf16.msra.mxu0 %v3642
    %5244 = vmatpush.bf16.msra.mxu0 %v3638
    %5245 = vmatpush.bf16.msra.mxu0 %v3634
    %5246 = vmatpush.bf16.msra.mxu0 %v3630
    %5247 = vmatmul.bf16.gmra.mxu0 %v872
    %v5248 = vpop.f32.mrf.mxu0
    %v5249 = vadd.f32 %v5236, %v5248
    %v5250 = vpop.f32.mrf.mxu0
    %5251 = vdwg.mxu0
    %5252 = vmatpush.bf16.msra.mxu0 %v3690
    %5253 = vmatpush.bf16.msra.mxu0 %v3686
    %5254 = vmatpush.bf16.msra.mxu0 %v3682
    %5255 = vmatpush.bf16.msra.mxu0 %v3678
    %5256 = vmatpush.bf16.msra.mxu0 %v3674
    %5257 = vmatpush.bf16.msra.mxu0 %v3670
    %5258 = vmatpush.bf16.msra.mxu0 %v3666
    %5259 = vmatpush.bf16.msra.mxu0 %v3662
    %5260 = vmatmul.bf16.gmra.mxu0 %v873
    %v5261 = vpop.f32.mrf.mxu0
    %v5262 = vadd.f32 %v5249, %v5261
    %v5263 = vpop.f32.mrf.mxu0
    %5264 = vdwg.mxu0
    %5265 = vmatpush.bf16.msra.mxu0 %v3722
    %5266 = vmatpush.bf16.msra.mxu0 %v3718
    %5267 = vmatpush.bf16.msra.mxu0 %v3714
    %5268 = vmatpush.bf16.msra.mxu0 %v3710
    %5269 = vmatpush.bf16.msra.mxu0 %v3706
    %5270 = vmatpush.bf16.msra.mxu0 %v3702
    %5271 = vmatpush.bf16.msra.mxu0 %v3698
    %5272 = vmatpush.bf16.msra.mxu0 %v3694
    %5273 = vmatmul.bf16.gmra.mxu0 %v874
    %v5274 = vpop.f32.mrf.mxu0
    %v5275 = vadd.f32 %v5262, %v5274
    %v5276 = vpop.f32.mrf.mxu0
    %5277 = vdwg.mxu0
    %5278 = vmatpush.bf16.msra.mxu0 %v3754
    %5279 = vmatpush.bf16.msra.mxu0 %v3750
    %5280 = vmatpush.bf16.msra.mxu0 %v3746
    %5281 = vmatpush.bf16.msra.mxu0 %v3742
    %5282 = vmatpush.bf16.msra.mxu0 %v3738
    %5283 = vmatpush.bf16.msra.mxu0 %v3734
    %5284 = vmatpush.bf16.msra.mxu0 %v3730
    %5285 = vmatpush.bf16.msra.mxu0 %v3726
    %5286 = vmatmul.bf16.gmra.mxu0 %v877
    %v5287 = vpop.f32.mrf.mxu0
    %v5288 = vadd.f32 %v5275, %v5287
    %v5289 = vpop.f32.mrf.mxu0
    %5290 = vdwg.mxu0
    %5291 = vmatpush.bf16.msra.mxu0 %v3786
    %5292 = vmatpush.bf16.msra.mxu0 %v3782
    %5293 = vmatpush.bf16.msra.mxu0 %v3778
    %5294 = vmatpush.bf16.msra.mxu0 %v3774
    %5295 = vmatpush.bf16.msra.mxu0 %v3770
    %5296 = vmatpush.bf16.msra.mxu0 %v3766
    %5297 = vmatpush.bf16.msra.mxu0 %v3762
    %5298 = vmatpush.bf16.msra.mxu0 %v3758
    %5299 = vmatmul.bf16.gmra.mxu0 %v878
    %v5300 = vpop.f32.mrf.mxu0
    %v5301 = vadd.f32 %v5288, %v5300
    %v5302 = vpop.f32.mrf.mxu0
    %5303 = vdwg.mxu0
    %5304 = vmatpush.bf16.msra.mxu0 %v3818
    %5305 = vmatpush.bf16.msra.mxu0 %v3814
    %5306 = vmatpush.bf16.msra.mxu0 %v3810
    %5307 = vmatpush.bf16.msra.mxu0 %v3806
    %5308 = vmatpush.bf16.msra.mxu0 %v3802
    %5309 = vmatpush.bf16.msra.mxu0 %v3798
    %5310 = vmatpush.bf16.msra.mxu0 %v3794
    %5311 = vmatpush.bf16.msra.mxu0 %v3790
    %5312 = vmatmul.bf16.gmra.mxu0 %v879
    %v5313 = vpop.f32.mrf.mxu0
    %v5314 = vadd.f32 %v5301, %v5313
    %v5315 = vpop.f32.mrf.mxu0
    %5316 = vdwg.mxu0
    %5317 = vmatpush.bf16.msra.mxu0 %v3850
    %5318 = vmatpush.bf16.msra.mxu0 %v3846
    %5319 = vmatpush.bf16.msra.mxu0 %v3842
    %5320 = vmatpush.bf16.msra.mxu0 %v3838
    %5321 = vmatpush.bf16.msra.mxu0 %v3834
    %5322 = vmatpush.bf16.msra.mxu0 %v3830
    %5323 = vmatpush.bf16.msra.mxu0 %v3826
    %5324 = vmatpush.bf16.msra.mxu0 %v3822
    %5325 = vmatmul.bf16.gmra.mxu0 %v880
    %v5326 = vpop.f32.mrf.mxu0
    %v5327 = vadd.f32 %v5314, %v5326
    %v5328 = vpop.f32.mrf.mxu0
    %5329 = vdwg.mxu0
    %5330 = vmatpush.bf16.msra.mxu0 %v3882
    %5331 = vmatpush.bf16.msra.mxu0 %v3878
    %5332 = vmatpush.bf16.msra.mxu0 %v3874
    %5333 = vmatpush.bf16.msra.mxu0 %v3870
    %5334 = vmatpush.bf16.msra.mxu0 %v3866
    %5335 = vmatpush.bf16.msra.mxu0 %v3862
    %5336 = vmatpush.bf16.msra.mxu0 %v3858
    %5337 = vmatpush.bf16.msra.mxu0 %v3854
    %5338 = vmatmul.bf16.gmra.mxu0 %v881
    %v5339 = vpop.f32.mrf.mxu0
    %v5340 = vadd.f32 %v5327, %v5339
    %v5341 = vpop.f32.mrf.mxu0
    %5342 = vdwg.mxu0
    %5343 = vmatpush.bf16.msra.mxu0 %v3914
    %5344 = vmatpush.bf16.msra.mxu0 %v3910
    %5345 = vmatpush.bf16.msra.mxu0 %v3906
    %5346 = vmatpush.bf16.msra.mxu0 %v3902
    %5347 = vmatpush.bf16.msra.mxu0 %v3898
    %5348 = vmatpush.bf16.msra.mxu0 %v3894
    %5349 = vmatpush.bf16.msra.mxu0 %v3890
    %5350 = vmatpush.bf16.msra.mxu0 %v3886
    %5351 = vmatmul.bf16.gmra.mxu0 %v882
    %v5352 = vpop.f32.mrf.mxu0
    %v5353 = vadd.f32 %v5340, %v5352
    %v5354 = vpop.f32.mrf.mxu0
    %5355 = vdwg.mxu0
    %5356 = vmatpush.bf16.msra.mxu0 %v3946
    %5357 = vmatpush.bf16.msra.mxu0 %v3942
    %5358 = vmatpush.bf16.msra.mxu0 %v3938
    %5359 = vmatpush.bf16.msra.mxu0 %v3934
    %5360 = vmatpush.bf16.msra.mxu0 %v3930
    %5361 = vmatpush.bf16.msra.mxu0 %v3926
    %5362 = vmatpush.bf16.msra.mxu0 %v3922
    %5363 = vmatpush.bf16.msra.mxu0 %v3918
    %5364 = vmatmul.bf16.gmra.mxu0 %v883
    %v5365 = vpop.f32.mrf.mxu0
    %v5366 = vadd.f32 %v5353, %v5365
    %v5367 = vpop.f32.mrf.mxu0
    %5368 = vdwg.mxu0
    %5369 = vmatpush.bf16.msra.mxu0 %v3978
    %5370 = vmatpush.bf16.msra.mxu0 %v3974
    %5371 = vmatpush.bf16.msra.mxu0 %v3970
    %5372 = vmatpush.bf16.msra.mxu0 %v3966
    %5373 = vmatpush.bf16.msra.mxu0 %v3962
    %5374 = vmatpush.bf16.msra.mxu0 %v3958
    %5375 = vmatpush.bf16.msra.mxu0 %v3954
    %5376 = vmatpush.bf16.msra.mxu0 %v3950
    %5377 = vmatmul.bf16.gmra.mxu0 %v884
    %v5378 = vpop.f32.mrf.mxu0
    %v5379 = vadd.f32 %v5366, %v5378
    %v5380 = vpop.f32.mrf.mxu0
    %5381 = vdwg.mxu0
    %5382 = vmatpush.bf16.msra.mxu0 %v3243
    %5383 = vmatpush.bf16.msra.mxu0 %v3239
    %5384 = vmatpush.bf16.msra.mxu0 %v3235
    %5385 = vmatpush.bf16.msra.mxu0 %v3231
    %5386 = vmatpush.bf16.msra.mxu0 %v3227
    %5387 = vmatpush.bf16.msra.mxu0 %v3223
    %5388 = vmatpush.bf16.msra.mxu0 %v3219
    %5389 = vmatpush.bf16.msra.mxu0 %v3215
    %5390 = vmatmul.bf16.gmra.mxu0 %v857
    %v5391 = vpop.f32.mrf.mxu0
    %v5392 = vadd.f32 %v4752, %v5391
    %v5393 = vpop.f32.mrf.mxu0
    %5394 = vdwg.mxu0
    %5395 = vmatpush.bf16.msra.mxu0 %v3275
    %5396 = vmatpush.bf16.msra.mxu0 %v3271
    %5397 = vmatpush.bf16.msra.mxu0 %v3267
    %5398 = vmatpush.bf16.msra.mxu0 %v3263
    %5399 = vmatpush.bf16.msra.mxu0 %v3259
    %5400 = vmatpush.bf16.msra.mxu0 %v3255
    %5401 = vmatpush.bf16.msra.mxu0 %v3251
    %5402 = vmatpush.bf16.msra.mxu0 %v3247
    %5403 = vmatmul.bf16.gmra.mxu0 %v858
    %v5404 = vpop.f32.mrf.mxu0
    %v5405 = vadd.f32 %v5392, %v5404
    %v5406 = vpop.f32.mrf.mxu0
    %5407 = vdwg.mxu0
    %5408 = vmatpush.bf16.msra.mxu0 %v3307
    %5409 = vmatpush.bf16.msra.mxu0 %v3303
    %5410 = vmatpush.bf16.msra.mxu0 %v3299
    %5411 = vmatpush.bf16.msra.mxu0 %v3295
    %5412 = vmatpush.bf16.msra.mxu0 %v3291
    %5413 = vmatpush.bf16.msra.mxu0 %v3287
    %5414 = vmatpush.bf16.msra.mxu0 %v3283
    %5415 = vmatpush.bf16.msra.mxu0 %v3279
    %5416 = vmatmul.bf16.gmra.mxu0 %v859
    %v5417 = vpop.f32.mrf.mxu0
    %v5418 = vadd.f32 %v5405, %v5417
    %v5419 = vpop.f32.mrf.mxu0
    %5420 = vdwg.mxu0
    %5421 = vmatpush.bf16.msra.mxu0 %v3339
    %5422 = vmatpush.bf16.msra.mxu0 %v3335
    %5423 = vmatpush.bf16.msra.mxu0 %v3331
    %5424 = vmatpush.bf16.msra.mxu0 %v3327
    %5425 = vmatpush.bf16.msra.mxu0 %v3323
    %5426 = vmatpush.bf16.msra.mxu0 %v3319
    %5427 = vmatpush.bf16.msra.mxu0 %v3315
    %5428 = vmatpush.bf16.msra.mxu0 %v3311
    %5429 = vmatmul.bf16.gmra.mxu0 %v860
    %v5430 = vpop.f32.mrf.mxu0
    %v5431 = vadd.f32 %v5418, %v5430
    %v5432 = vpop.f32.mrf.mxu0
    %5433 = vdwg.mxu0
    %5434 = vmatpush.bf16.msra.mxu0 %v3371
    %5435 = vmatpush.bf16.msra.mxu0 %v3367
    %5436 = vmatpush.bf16.msra.mxu0 %v3363
    %5437 = vmatpush.bf16.msra.mxu0 %v3359
    %5438 = vmatpush.bf16.msra.mxu0 %v3355
    %5439 = vmatpush.bf16.msra.mxu0 %v3351
    %5440 = vmatpush.bf16.msra.mxu0 %v3347
    %5441 = vmatpush.bf16.msra.mxu0 %v3343
    %5442 = vmatmul.bf16.gmra.mxu0 %v861
    %v5443 = vpop.f32.mrf.mxu0
    %v5444 = vadd.f32 %v5431, %v5443
    %v5445 = vpop.f32.mrf.mxu0
    %5446 = vdwg.mxu0
    %5447 = vmatpush.bf16.msra.mxu0 %v3403
    %5448 = vmatpush.bf16.msra.mxu0 %v3399
    %5449 = vmatpush.bf16.msra.mxu0 %v3395
    %5450 = vmatpush.bf16.msra.mxu0 %v3391
    %5451 = vmatpush.bf16.msra.mxu0 %v3387
    %5452 = vmatpush.bf16.msra.mxu0 %v3383
    %5453 = vmatpush.bf16.msra.mxu0 %v3379
    %5454 = vmatpush.bf16.msra.mxu0 %v3375
    %5455 = vmatmul.bf16.gmra.mxu0 %v862
    %v5456 = vpop.f32.mrf.mxu0
    %v5457 = vadd.f32 %v5444, %v5456
    %v5458 = vpop.f32.mrf.mxu0
    %5459 = vdwg.mxu0
    %5460 = vmatpush.bf16.msra.mxu0 %v3435
    %5461 = vmatpush.bf16.msra.mxu0 %v3431
    %5462 = vmatpush.bf16.msra.mxu0 %v3427
    %5463 = vmatpush.bf16.msra.mxu0 %v3423
    %5464 = vmatpush.bf16.msra.mxu0 %v3419
    %5465 = vmatpush.bf16.msra.mxu0 %v3415
    %5466 = vmatpush.bf16.msra.mxu0 %v3411
    %5467 = vmatpush.bf16.msra.mxu0 %v3407
    %5468 = vmatmul.bf16.gmra.mxu0 %v863
    %v5469 = vpop.f32.mrf.mxu0
    %v5470 = vadd.f32 %v5457, %v5469
    %v5471 = vpop.f32.mrf.mxu0
    %5472 = vdwg.mxu0
    %5473 = vmatpush.bf16.msra.mxu0 %v3467
    %5474 = vmatpush.bf16.msra.mxu0 %v3463
    %5475 = vmatpush.bf16.msra.mxu0 %v3459
    %5476 = vmatpush.bf16.msra.mxu0 %v3455
    %5477 = vmatpush.bf16.msra.mxu0 %v3451
    %5478 = vmatpush.bf16.msra.mxu0 %v3447
    %5479 = vmatpush.bf16.msra.mxu0 %v3443
    %5480 = vmatpush.bf16.msra.mxu0 %v3439
    %5481 = vmatmul.bf16.gmra.mxu0 %v864
    %v5482 = vpop.f32.mrf.mxu0
    %v5483 = vadd.f32 %v5470, %v5482
    %v5484 = vpop.f32.mrf.mxu0
    %5485 = vdwg.mxu0
    %5486 = vmatpush.bf16.msra.mxu0 %v3499
    %5487 = vmatpush.bf16.msra.mxu0 %v3495
    %5488 = vmatpush.bf16.msra.mxu0 %v3491
    %5489 = vmatpush.bf16.msra.mxu0 %v3487
    %5490 = vmatpush.bf16.msra.mxu0 %v3483
    %5491 = vmatpush.bf16.msra.mxu0 %v3479
    %5492 = vmatpush.bf16.msra.mxu0 %v3475
    %5493 = vmatpush.bf16.msra.mxu0 %v3471
    %5494 = vmatmul.bf16.gmra.mxu0 %v867
    %v5495 = vpop.f32.mrf.mxu0
    %v5496 = vadd.f32 %v5483, %v5495
    %v5497 = vpop.f32.mrf.mxu0
    %5498 = vdwg.mxu0
    %5499 = vmatpush.bf16.msra.mxu0 %v3531
    %5500 = vmatpush.bf16.msra.mxu0 %v3527
    %5501 = vmatpush.bf16.msra.mxu0 %v3523
    %5502 = vmatpush.bf16.msra.mxu0 %v3519
    %5503 = vmatpush.bf16.msra.mxu0 %v3515
    %5504 = vmatpush.bf16.msra.mxu0 %v3511
    %5505 = vmatpush.bf16.msra.mxu0 %v3507
    %5506 = vmatpush.bf16.msra.mxu0 %v3503
    %5507 = vmatmul.bf16.gmra.mxu0 %v868
    %v5508 = vpop.f32.mrf.mxu0
    %v5509 = vadd.f32 %v5496, %v5508
    %v5510 = vpop.f32.mrf.mxu0
    %5511 = vdwg.mxu0
    %5512 = vmatpush.bf16.msra.mxu0 %v3563
    %5513 = vmatpush.bf16.msra.mxu0 %v3559
    %5514 = vmatpush.bf16.msra.mxu0 %v3555
    %5515 = vmatpush.bf16.msra.mxu0 %v3551
    %5516 = vmatpush.bf16.msra.mxu0 %v3547
    %5517 = vmatpush.bf16.msra.mxu0 %v3543
    %5518 = vmatpush.bf16.msra.mxu0 %v3539
    %5519 = vmatpush.bf16.msra.mxu0 %v3535
    %5520 = vmatmul.bf16.gmra.mxu0 %v869
    %v5521 = vpop.f32.mrf.mxu0
    %v5522 = vadd.f32 %v5509, %v5521
    %v5523 = vpop.f32.mrf.mxu0
    %5524 = vdwg.mxu0
    %5525 = vmatpush.bf16.msra.mxu0 %v3595
    %5526 = vmatpush.bf16.msra.mxu0 %v3591
    %5527 = vmatpush.bf16.msra.mxu0 %v3587
    %5528 = vmatpush.bf16.msra.mxu0 %v3583
    %5529 = vmatpush.bf16.msra.mxu0 %v3579
    %5530 = vmatpush.bf16.msra.mxu0 %v3575
    %5531 = vmatpush.bf16.msra.mxu0 %v3571
    %5532 = vmatpush.bf16.msra.mxu0 %v3567
    %5533 = vmatmul.bf16.gmra.mxu0 %v870
    %v5534 = vpop.f32.mrf.mxu0
    %v5535 = vadd.f32 %v5522, %v5534
    %v5536 = vpop.f32.mrf.mxu0
    %5537 = vdwg.mxu0
    %5538 = vmatpush.bf16.msra.mxu0 %v3627
    %5539 = vmatpush.bf16.msra.mxu0 %v3623
    %5540 = vmatpush.bf16.msra.mxu0 %v3619
    %5541 = vmatpush.bf16.msra.mxu0 %v3615
    %5542 = vmatpush.bf16.msra.mxu0 %v3611
    %5543 = vmatpush.bf16.msra.mxu0 %v3607
    %5544 = vmatpush.bf16.msra.mxu0 %v3603
    %5545 = vmatpush.bf16.msra.mxu0 %v3599
    %5546 = vmatmul.bf16.gmra.mxu0 %v871
    %v5547 = vpop.f32.mrf.mxu0
    %v5548 = vadd.f32 %v5535, %v5547
    %v5549 = vpop.f32.mrf.mxu0
    %5550 = vdwg.mxu0
    %5551 = vmatpush.bf16.msra.mxu0 %v3659
    %5552 = vmatpush.bf16.msra.mxu0 %v3655
    %5553 = vmatpush.bf16.msra.mxu0 %v3651
    %5554 = vmatpush.bf16.msra.mxu0 %v3647
    %5555 = vmatpush.bf16.msra.mxu0 %v3643
    %5556 = vmatpush.bf16.msra.mxu0 %v3639
    %5557 = vmatpush.bf16.msra.mxu0 %v3635
    %5558 = vmatpush.bf16.msra.mxu0 %v3631
    %5559 = vmatmul.bf16.gmra.mxu0 %v872
    %v5560 = vpop.f32.mrf.mxu0
    %v5561 = vadd.f32 %v5548, %v5560
    %v5562 = vpop.f32.mrf.mxu0
    %5563 = vdwg.mxu0
    %5564 = vmatpush.bf16.msra.mxu0 %v3691
    %5565 = vmatpush.bf16.msra.mxu0 %v3687
    %5566 = vmatpush.bf16.msra.mxu0 %v3683
    %5567 = vmatpush.bf16.msra.mxu0 %v3679
    %5568 = vmatpush.bf16.msra.mxu0 %v3675
    %5569 = vmatpush.bf16.msra.mxu0 %v3671
    %5570 = vmatpush.bf16.msra.mxu0 %v3667
    %5571 = vmatpush.bf16.msra.mxu0 %v3663
    %5572 = vmatmul.bf16.gmra.mxu0 %v873
    %v5573 = vpop.f32.mrf.mxu0
    %v5574 = vadd.f32 %v5561, %v5573
    %v5575 = vpop.f32.mrf.mxu0
    %5576 = vdwg.mxu0
    %5577 = vmatpush.bf16.msra.mxu0 %v3723
    %5578 = vmatpush.bf16.msra.mxu0 %v3719
    %5579 = vmatpush.bf16.msra.mxu0 %v3715
    %5580 = vmatpush.bf16.msra.mxu0 %v3711
    %5581 = vmatpush.bf16.msra.mxu0 %v3707
    %5582 = vmatpush.bf16.msra.mxu0 %v3703
    %5583 = vmatpush.bf16.msra.mxu0 %v3699
    %5584 = vmatpush.bf16.msra.mxu0 %v3695
    %5585 = vmatmul.bf16.gmra.mxu0 %v874
    %v5586 = vpop.f32.mrf.mxu0
    %v5587 = vadd.f32 %v5574, %v5586
    %v5588 = vpop.f32.mrf.mxu0
    %5589 = vdwg.mxu0
    %5590 = vmatpush.bf16.msra.mxu0 %v3755
    %5591 = vmatpush.bf16.msra.mxu0 %v3751
    %5592 = vmatpush.bf16.msra.mxu0 %v3747
    %5593 = vmatpush.bf16.msra.mxu0 %v3743
    %5594 = vmatpush.bf16.msra.mxu0 %v3739
    %5595 = vmatpush.bf16.msra.mxu0 %v3735
    %5596 = vmatpush.bf16.msra.mxu0 %v3731
    %5597 = vmatpush.bf16.msra.mxu0 %v3727
    %5598 = vmatmul.bf16.gmra.mxu0 %v877
    %v5599 = vpop.f32.mrf.mxu0
    %v5600 = vadd.f32 %v5587, %v5599
    %v5601 = vpop.f32.mrf.mxu0
    %5602 = vdwg.mxu0
    %5603 = vmatpush.bf16.msra.mxu0 %v3787
    %5604 = vmatpush.bf16.msra.mxu0 %v3783
    %5605 = vmatpush.bf16.msra.mxu0 %v3779
    %5606 = vmatpush.bf16.msra.mxu0 %v3775
    %5607 = vmatpush.bf16.msra.mxu0 %v3771
    %5608 = vmatpush.bf16.msra.mxu0 %v3767
    %5609 = vmatpush.bf16.msra.mxu0 %v3763
    %5610 = vmatpush.bf16.msra.mxu0 %v3759
    %5611 = vmatmul.bf16.gmra.mxu0 %v878
    %v5612 = vpop.f32.mrf.mxu0
    %v5613 = vadd.f32 %v5600, %v5612
    %v5614 = vpop.f32.mrf.mxu0
    %5615 = vdwg.mxu0
    %5616 = vmatpush.bf16.msra.mxu0 %v3819
    %5617 = vmatpush.bf16.msra.mxu0 %v3815
    %5618 = vmatpush.bf16.msra.mxu0 %v3811
    %5619 = vmatpush.bf16.msra.mxu0 %v3807
    %5620 = vmatpush.bf16.msra.mxu0 %v3803
    %5621 = vmatpush.bf16.msra.mxu0 %v3799
    %5622 = vmatpush.bf16.msra.mxu0 %v3795
    %5623 = vmatpush.bf16.msra.mxu0 %v3791
    %5624 = vmatmul.bf16.gmra.mxu0 %v879
    %v5625 = vpop.f32.mrf.mxu0
    %v5626 = vadd.f32 %v5613, %v5625
    %v5627 = vpop.f32.mrf.mxu0
    %5628 = vdwg.mxu0
    %5629 = vmatpush.bf16.msra.mxu0 %v3851
    %5630 = vmatpush.bf16.msra.mxu0 %v3847
    %5631 = vmatpush.bf16.msra.mxu0 %v3843
    %5632 = vmatpush.bf16.msra.mxu0 %v3839
    %5633 = vmatpush.bf16.msra.mxu0 %v3835
    %5634 = vmatpush.bf16.msra.mxu0 %v3831
    %5635 = vmatpush.bf16.msra.mxu0 %v3827
    %5636 = vmatpush.bf16.msra.mxu0 %v3823
    %5637 = vmatmul.bf16.gmra.mxu0 %v880
    %v5638 = vpop.f32.mrf.mxu0
    %v5639 = vadd.f32 %v5626, %v5638
    %v5640 = vpop.f32.mrf.mxu0
    %5641 = vdwg.mxu0
    %5642 = vmatpush.bf16.msra.mxu0 %v3883
    %5643 = vmatpush.bf16.msra.mxu0 %v3879
    %5644 = vmatpush.bf16.msra.mxu0 %v3875
    %5645 = vmatpush.bf16.msra.mxu0 %v3871
    %5646 = vmatpush.bf16.msra.mxu0 %v3867
    %5647 = vmatpush.bf16.msra.mxu0 %v3863
    %5648 = vmatpush.bf16.msra.mxu0 %v3859
    %5649 = vmatpush.bf16.msra.mxu0 %v3855
    %5650 = vmatmul.bf16.gmra.mxu0 %v881
    %v5651 = vpop.f32.mrf.mxu0
    %v5652 = vadd.f32 %v5639, %v5651
    %v5653 = vpop.f32.mrf.mxu0
    %5654 = vdwg.mxu0
    %5655 = vmatpush.bf16.msra.mxu0 %v3915
    %5656 = vmatpush.bf16.msra.mxu0 %v3911
    %5657 = vmatpush.bf16.msra.mxu0 %v3907
    %5658 = vmatpush.bf16.msra.mxu0 %v3903
    %5659 = vmatpush.bf16.msra.mxu0 %v3899
    %5660 = vmatpush.bf16.msra.mxu0 %v3895
    %5661 = vmatpush.bf16.msra.mxu0 %v3891
    %5662 = vmatpush.bf16.msra.mxu0 %v3887
    %5663 = vmatmul.bf16.gmra.mxu0 %v882
    %v5664 = vpop.f32.mrf.mxu0
    %v5665 = vadd.f32 %v5652, %v5664
    %v5666 = vpop.f32.mrf.mxu0
    %5667 = vdwg.mxu0
    %5668 = vmatpush.bf16.msra.mxu0 %v3947
    %5669 = vmatpush.bf16.msra.mxu0 %v3943
    %5670 = vmatpush.bf16.msra.mxu0 %v3939
    %5671 = vmatpush.bf16.msra.mxu0 %v3935
    %5672 = vmatpush.bf16.msra.mxu0 %v3931
    %5673 = vmatpush.bf16.msra.mxu0 %v3927
    %5674 = vmatpush.bf16.msra.mxu0 %v3923
    %5675 = vmatpush.bf16.msra.mxu0 %v3919
    %5676 = vmatmul.bf16.gmra.mxu0 %v883
    %v5677 = vpop.f32.mrf.mxu0
    %v5678 = vadd.f32 %v5665, %v5677
    %v5679 = vpop.f32.mrf.mxu0
    %5680 = vdwg.mxu0
    %5681 = vmatpush.bf16.msra.mxu0 %v3979
    %5682 = vmatpush.bf16.msra.mxu0 %v3975
    %5683 = vmatpush.bf16.msra.mxu0 %v3971
    %5684 = vmatpush.bf16.msra.mxu0 %v3967
    %5685 = vmatpush.bf16.msra.mxu0 %v3963
    %5686 = vmatpush.bf16.msra.mxu0 %v3959
    %5687 = vmatpush.bf16.msra.mxu0 %v3955
    %5688 = vmatpush.bf16.msra.mxu0 %v3951
    %5689 = vmatmul.bf16.gmra.mxu0 %v884
    %v5690 = vpop.f32.mrf.mxu0
    %v5691 = vadd.f32 %v5678, %v5690
    %v5692 = vpop.f32.mrf.mxu0
    %5693 = vdwg.mxu0
    %5694 = vmatpush.bf16.msra.mxu0 %v3244
    %5695 = vmatpush.bf16.msra.mxu0 %v3240
    %5696 = vmatpush.bf16.msra.mxu0 %v3236
    %5697 = vmatpush.bf16.msra.mxu0 %v3232
    %5698 = vmatpush.bf16.msra.mxu0 %v3228
    %5699 = vmatpush.bf16.msra.mxu0 %v3224
    %5700 = vmatpush.bf16.msra.mxu0 %v3220
    %5701 = vmatpush.bf16.msra.mxu0 %v3216
    %5702 = vmatmul.bf16.gmra.mxu0 %v857
    %v5703 = vpop.f32.mrf.mxu0
    %v5704 = vadd.f32 %v4753, %v5703
    %v5705 = vpop.f32.mrf.mxu0
    %5706 = vdwg.mxu0
    %5707 = vmatpush.bf16.msra.mxu0 %v3276
    %5708 = vmatpush.bf16.msra.mxu0 %v3272
    %5709 = vmatpush.bf16.msra.mxu0 %v3268
    %5710 = vmatpush.bf16.msra.mxu0 %v3264
    %5711 = vmatpush.bf16.msra.mxu0 %v3260
    %5712 = vmatpush.bf16.msra.mxu0 %v3256
    %5713 = vmatpush.bf16.msra.mxu0 %v3252
    %5714 = vmatpush.bf16.msra.mxu0 %v3248
    %5715 = vmatmul.bf16.gmra.mxu0 %v858
    %v5716 = vpop.f32.mrf.mxu0
    %v5717 = vadd.f32 %v5704, %v5716
    %v5718 = vpop.f32.mrf.mxu0
    %5719 = vdwg.mxu0
    %5720 = vmatpush.bf16.msra.mxu0 %v3308
    %5721 = vmatpush.bf16.msra.mxu0 %v3304
    %5722 = vmatpush.bf16.msra.mxu0 %v3300
    %5723 = vmatpush.bf16.msra.mxu0 %v3296
    %5724 = vmatpush.bf16.msra.mxu0 %v3292
    %5725 = vmatpush.bf16.msra.mxu0 %v3288
    %5726 = vmatpush.bf16.msra.mxu0 %v3284
    %5727 = vmatpush.bf16.msra.mxu0 %v3280
    %5728 = vmatmul.bf16.gmra.mxu0 %v859
    %v5729 = vpop.f32.mrf.mxu0
    %v5730 = vadd.f32 %v5717, %v5729
    %v5731 = vpop.f32.mrf.mxu0
    %5732 = vdwg.mxu0
    %5733 = vmatpush.bf16.msra.mxu0 %v3340
    %5734 = vmatpush.bf16.msra.mxu0 %v3336
    %5735 = vmatpush.bf16.msra.mxu0 %v3332
    %5736 = vmatpush.bf16.msra.mxu0 %v3328
    %5737 = vmatpush.bf16.msra.mxu0 %v3324
    %5738 = vmatpush.bf16.msra.mxu0 %v3320
    %5739 = vmatpush.bf16.msra.mxu0 %v3316
    %5740 = vmatpush.bf16.msra.mxu0 %v3312
    %5741 = vmatmul.bf16.gmra.mxu0 %v860
    %v5742 = vpop.f32.mrf.mxu0
    %v5743 = vadd.f32 %v5730, %v5742
    %v5744 = vpop.f32.mrf.mxu0
    %5745 = vdwg.mxu0
    %5746 = vmatpush.bf16.msra.mxu0 %v3372
    %5747 = vmatpush.bf16.msra.mxu0 %v3368
    %5748 = vmatpush.bf16.msra.mxu0 %v3364
    %5749 = vmatpush.bf16.msra.mxu0 %v3360
    %5750 = vmatpush.bf16.msra.mxu0 %v3356
    %5751 = vmatpush.bf16.msra.mxu0 %v3352
    %5752 = vmatpush.bf16.msra.mxu0 %v3348
    %5753 = vmatpush.bf16.msra.mxu0 %v3344
    %5754 = vmatmul.bf16.gmra.mxu0 %v861
    %v5755 = vpop.f32.mrf.mxu0
    %v5756 = vadd.f32 %v5743, %v5755
    %v5757 = vpop.f32.mrf.mxu0
    %5758 = vdwg.mxu0
    %5759 = vmatpush.bf16.msra.mxu0 %v3404
    %5760 = vmatpush.bf16.msra.mxu0 %v3400
    %5761 = vmatpush.bf16.msra.mxu0 %v3396
    %5762 = vmatpush.bf16.msra.mxu0 %v3392
    %5763 = vmatpush.bf16.msra.mxu0 %v3388
    %5764 = vmatpush.bf16.msra.mxu0 %v3384
    %5765 = vmatpush.bf16.msra.mxu0 %v3380
    %5766 = vmatpush.bf16.msra.mxu0 %v3376
    %5767 = vmatmul.bf16.gmra.mxu0 %v862
    %v5768 = vpop.f32.mrf.mxu0
    %v5769 = vadd.f32 %v5756, %v5768
    %v5770 = vpop.f32.mrf.mxu0
    %5771 = vdwg.mxu0
    %5772 = vmatpush.bf16.msra.mxu0 %v3436
    %5773 = vmatpush.bf16.msra.mxu0 %v3432
    %5774 = vmatpush.bf16.msra.mxu0 %v3428
    %5775 = vmatpush.bf16.msra.mxu0 %v3424
    %5776 = vmatpush.bf16.msra.mxu0 %v3420
    %5777 = vmatpush.bf16.msra.mxu0 %v3416
    %5778 = vmatpush.bf16.msra.mxu0 %v3412
    %5779 = vmatpush.bf16.msra.mxu0 %v3408
    %5780 = vmatmul.bf16.gmra.mxu0 %v863
    %v5781 = vpop.f32.mrf.mxu0
    %v5782 = vadd.f32 %v5769, %v5781
    %v5783 = vpop.f32.mrf.mxu0
    %5784 = vdwg.mxu0
    %5785 = vmatpush.bf16.msra.mxu0 %v3468
    %5786 = vmatpush.bf16.msra.mxu0 %v3464
    %5787 = vmatpush.bf16.msra.mxu0 %v3460
    %5788 = vmatpush.bf16.msra.mxu0 %v3456
    %5789 = vmatpush.bf16.msra.mxu0 %v3452
    %5790 = vmatpush.bf16.msra.mxu0 %v3448
    %5791 = vmatpush.bf16.msra.mxu0 %v3444
    %5792 = vmatpush.bf16.msra.mxu0 %v3440
    %5793 = vmatmul.bf16.gmra.mxu0 %v864
    %v5794 = vpop.f32.mrf.mxu0
    %v5795 = vadd.f32 %v5782, %v5794
    %v5796 = vpop.f32.mrf.mxu0
    %5797 = vdwg.mxu0
    %5798 = vmatpush.bf16.msra.mxu0 %v3500
    %5799 = vmatpush.bf16.msra.mxu0 %v3496
    %5800 = vmatpush.bf16.msra.mxu0 %v3492
    %5801 = vmatpush.bf16.msra.mxu0 %v3488
    %5802 = vmatpush.bf16.msra.mxu0 %v3484
    %5803 = vmatpush.bf16.msra.mxu0 %v3480
    %5804 = vmatpush.bf16.msra.mxu0 %v3476
    %5805 = vmatpush.bf16.msra.mxu0 %v3472
    %5806 = vmatmul.bf16.gmra.mxu0 %v867
    %v5807 = vpop.f32.mrf.mxu0
    %v5808 = vadd.f32 %v5795, %v5807
    %v5809 = vpop.f32.mrf.mxu0
    %5810 = vdwg.mxu0
    %5811 = vmatpush.bf16.msra.mxu0 %v3532
    %5812 = vmatpush.bf16.msra.mxu0 %v3528
    %5813 = vmatpush.bf16.msra.mxu0 %v3524
    %5814 = vmatpush.bf16.msra.mxu0 %v3520
    %5815 = vmatpush.bf16.msra.mxu0 %v3516
    %5816 = vmatpush.bf16.msra.mxu0 %v3512
    %5817 = vmatpush.bf16.msra.mxu0 %v3508
    %5818 = vmatpush.bf16.msra.mxu0 %v3504
    %5819 = vmatmul.bf16.gmra.mxu0 %v868
    %v5820 = vpop.f32.mrf.mxu0
    %v5821 = vadd.f32 %v5808, %v5820
    %v5822 = vpop.f32.mrf.mxu0
    %5823 = vdwg.mxu0
    %5824 = vmatpush.bf16.msra.mxu0 %v3564
    %5825 = vmatpush.bf16.msra.mxu0 %v3560
    %5826 = vmatpush.bf16.msra.mxu0 %v3556
    %5827 = vmatpush.bf16.msra.mxu0 %v3552
    %5828 = vmatpush.bf16.msra.mxu0 %v3548
    %5829 = vmatpush.bf16.msra.mxu0 %v3544
    %5830 = vmatpush.bf16.msra.mxu0 %v3540
    %5831 = vmatpush.bf16.msra.mxu0 %v3536
    %5832 = vmatmul.bf16.gmra.mxu0 %v869
    %v5833 = vpop.f32.mrf.mxu0
    %v5834 = vadd.f32 %v5821, %v5833
    %v5835 = vpop.f32.mrf.mxu0
    %5836 = vdwg.mxu0
    %5837 = vmatpush.bf16.msra.mxu0 %v3596
    %5838 = vmatpush.bf16.msra.mxu0 %v3592
    %5839 = vmatpush.bf16.msra.mxu0 %v3588
    %5840 = vmatpush.bf16.msra.mxu0 %v3584
    %5841 = vmatpush.bf16.msra.mxu0 %v3580
    %5842 = vmatpush.bf16.msra.mxu0 %v3576
    %5843 = vmatpush.bf16.msra.mxu0 %v3572
    %5844 = vmatpush.bf16.msra.mxu0 %v3568
    %5845 = vmatmul.bf16.gmra.mxu0 %v870
    %v5846 = vpop.f32.mrf.mxu0
    %v5847 = vadd.f32 %v5834, %v5846
    %v5848 = vpop.f32.mrf.mxu0
    %5849 = vdwg.mxu0
    %5850 = vmatpush.bf16.msra.mxu0 %v3628
    %5851 = vmatpush.bf16.msra.mxu0 %v3624
    %5852 = vmatpush.bf16.msra.mxu0 %v3620
    %5853 = vmatpush.bf16.msra.mxu0 %v3616
    %5854 = vmatpush.bf16.msra.mxu0 %v3612
    %5855 = vmatpush.bf16.msra.mxu0 %v3608
    %5856 = vmatpush.bf16.msra.mxu0 %v3604
    %5857 = vmatpush.bf16.msra.mxu0 %v3600
    %5858 = vmatmul.bf16.gmra.mxu0 %v871
    %v5859 = vpop.f32.mrf.mxu0
    %v5860 = vadd.f32 %v5847, %v5859
    %v5861 = vpop.f32.mrf.mxu0
    %5862 = vdwg.mxu0
    %5863 = vmatpush.bf16.msra.mxu0 %v3660
    %5864 = vmatpush.bf16.msra.mxu0 %v3656
    %5865 = vmatpush.bf16.msra.mxu0 %v3652
    %5866 = vmatpush.bf16.msra.mxu0 %v3648
    %5867 = vmatpush.bf16.msra.mxu0 %v3644
    %5868 = vmatpush.bf16.msra.mxu0 %v3640
    %5869 = vmatpush.bf16.msra.mxu0 %v3636
    %5870 = vmatpush.bf16.msra.mxu0 %v3632
    %5871 = vmatmul.bf16.gmra.mxu0 %v872
    %v5872 = vpop.f32.mrf.mxu0
    %v5873 = vadd.f32 %v5860, %v5872
    %v5874 = vpop.f32.mrf.mxu0
    %5875 = vdwg.mxu0
    %5876 = vmatpush.bf16.msra.mxu0 %v3692
    %5877 = vmatpush.bf16.msra.mxu0 %v3688
    %5878 = vmatpush.bf16.msra.mxu0 %v3684
    %5879 = vmatpush.bf16.msra.mxu0 %v3680
    %5880 = vmatpush.bf16.msra.mxu0 %v3676
    %5881 = vmatpush.bf16.msra.mxu0 %v3672
    %5882 = vmatpush.bf16.msra.mxu0 %v3668
    %5883 = vmatpush.bf16.msra.mxu0 %v3664
    %5884 = vmatmul.bf16.gmra.mxu0 %v873
    %v5885 = vpop.f32.mrf.mxu0
    %v5886 = vadd.f32 %v5873, %v5885
    %v5887 = vpop.f32.mrf.mxu0
    %5888 = vdwg.mxu0
    %5889 = vmatpush.bf16.msra.mxu0 %v3724
    %5890 = vmatpush.bf16.msra.mxu0 %v3720
    %5891 = vmatpush.bf16.msra.mxu0 %v3716
    %5892 = vmatpush.bf16.msra.mxu0 %v3712
    %5893 = vmatpush.bf16.msra.mxu0 %v3708
    %5894 = vmatpush.bf16.msra.mxu0 %v3704
    %5895 = vmatpush.bf16.msra.mxu0 %v3700
    %5896 = vmatpush.bf16.msra.mxu0 %v3696
    %5897 = vmatmul.bf16.gmra.mxu0 %v874
    %v5898 = vpop.f32.mrf.mxu0
    %v5899 = vadd.f32 %v5886, %v5898
    %v5900 = vpop.f32.mrf.mxu0
    %5901 = vdwg.mxu0
    %5902 = vmatpush.bf16.msra.mxu0 %v3756
    %5903 = vmatpush.bf16.msra.mxu0 %v3752
    %5904 = vmatpush.bf16.msra.mxu0 %v3748
    %5905 = vmatpush.bf16.msra.mxu0 %v3744
    %5906 = vmatpush.bf16.msra.mxu0 %v3740
    %5907 = vmatpush.bf16.msra.mxu0 %v3736
    %5908 = vmatpush.bf16.msra.mxu0 %v3732
    %5909 = vmatpush.bf16.msra.mxu0 %v3728
    %5910 = vmatmul.bf16.gmra.mxu0 %v877
    %v5911 = vpop.f32.mrf.mxu0
    %v5912 = vadd.f32 %v5899, %v5911
    %v5913 = vpop.f32.mrf.mxu0
    %5914 = vdwg.mxu0
    %5915 = vmatpush.bf16.msra.mxu0 %v3788
    %5916 = vmatpush.bf16.msra.mxu0 %v3784
    %5917 = vmatpush.bf16.msra.mxu0 %v3780
    %5918 = vmatpush.bf16.msra.mxu0 %v3776
    %5919 = vmatpush.bf16.msra.mxu0 %v3772
    %5920 = vmatpush.bf16.msra.mxu0 %v3768
    %5921 = vmatpush.bf16.msra.mxu0 %v3764
    %5922 = vmatpush.bf16.msra.mxu0 %v3760
    %5923 = vmatmul.bf16.gmra.mxu0 %v878
    %v5924 = vpop.f32.mrf.mxu0
    %v5925 = vadd.f32 %v5912, %v5924
    %v5926 = vpop.f32.mrf.mxu0
    %5927 = vdwg.mxu0
    %5928 = vmatpush.bf16.msra.mxu0 %v3820
    %5929 = vmatpush.bf16.msra.mxu0 %v3816
    %5930 = vmatpush.bf16.msra.mxu0 %v3812
    %5931 = vmatpush.bf16.msra.mxu0 %v3808
    %5932 = vmatpush.bf16.msra.mxu0 %v3804
    %5933 = vmatpush.bf16.msra.mxu0 %v3800
    %5934 = vmatpush.bf16.msra.mxu0 %v3796
    %5935 = vmatpush.bf16.msra.mxu0 %v3792
    %5936 = vmatmul.bf16.gmra.mxu0 %v879
    %v5937 = vpop.f32.mrf.mxu0
    %v5938 = vadd.f32 %v5925, %v5937
    %v5939 = vpop.f32.mrf.mxu0
    %5940 = vdwg.mxu0
    %5941 = vmatpush.bf16.msra.mxu0 %v3852
    %5942 = vmatpush.bf16.msra.mxu0 %v3848
    %5943 = vmatpush.bf16.msra.mxu0 %v3844
    %5944 = vmatpush.bf16.msra.mxu0 %v3840
    %5945 = vmatpush.bf16.msra.mxu0 %v3836
    %5946 = vmatpush.bf16.msra.mxu0 %v3832
    %5947 = vmatpush.bf16.msra.mxu0 %v3828
    %5948 = vmatpush.bf16.msra.mxu0 %v3824
    %5949 = vmatmul.bf16.gmra.mxu0 %v880
    %v5950 = vpop.f32.mrf.mxu0
    %v5951 = vadd.f32 %v5938, %v5950
    %v5952 = vpop.f32.mrf.mxu0
    %5953 = vdwg.mxu0
    %5954 = vmatpush.bf16.msra.mxu0 %v3884
    %5955 = vmatpush.bf16.msra.mxu0 %v3880
    %5956 = vmatpush.bf16.msra.mxu0 %v3876
    %5957 = vmatpush.bf16.msra.mxu0 %v3872
    %5958 = vmatpush.bf16.msra.mxu0 %v3868
    %5959 = vmatpush.bf16.msra.mxu0 %v3864
    %5960 = vmatpush.bf16.msra.mxu0 %v3860
    %5961 = vmatpush.bf16.msra.mxu0 %v3856
    %5962 = vmatmul.bf16.gmra.mxu0 %v881
    %v5963 = vpop.f32.mrf.mxu0
    %v5964 = vadd.f32 %v5951, %v5963
    %v5965 = vpop.f32.mrf.mxu0
    %5966 = vdwg.mxu0
    %5967 = vmatpush.bf16.msra.mxu0 %v3916
    %5968 = vmatpush.bf16.msra.mxu0 %v3912
    %5969 = vmatpush.bf16.msra.mxu0 %v3908
    %5970 = vmatpush.bf16.msra.mxu0 %v3904
    %5971 = vmatpush.bf16.msra.mxu0 %v3900
    %5972 = vmatpush.bf16.msra.mxu0 %v3896
    %5973 = vmatpush.bf16.msra.mxu0 %v3892
    %5974 = vmatpush.bf16.msra.mxu0 %v3888
    %5975 = vmatmul.bf16.gmra.mxu0 %v882
    %v5976 = vpop.f32.mrf.mxu0
    %v5977 = vadd.f32 %v5964, %v5976
    %v5978 = vpop.f32.mrf.mxu0
    %5979 = vdwg.mxu0
    %5980 = vmatpush.bf16.msra.mxu0 %v3948
    %5981 = vmatpush.bf16.msra.mxu0 %v3944
    %5982 = vmatpush.bf16.msra.mxu0 %v3940
    %5983 = vmatpush.bf16.msra.mxu0 %v3936
    %5984 = vmatpush.bf16.msra.mxu0 %v3932
    %5985 = vmatpush.bf16.msra.mxu0 %v3928
    %5986 = vmatpush.bf16.msra.mxu0 %v3924
    %5987 = vmatpush.bf16.msra.mxu0 %v3920
    %5988 = vmatmul.bf16.gmra.mxu0 %v883
    %v5989 = vpop.f32.mrf.mxu0
    %v5990 = vadd.f32 %v5977, %v5989
    %v5991 = vpop.f32.mrf.mxu0
    %5992 = vdwg.mxu0
    %5993 = vmatpush.bf16.msra.mxu0 %v3980
    %5994 = vmatpush.bf16.msra.mxu0 %v3976
    %5995 = vmatpush.bf16.msra.mxu0 %v3972
    %5996 = vmatpush.bf16.msra.mxu0 %v3968
    %5997 = vmatpush.bf16.msra.mxu0 %v3964
    %5998 = vmatpush.bf16.msra.mxu0 %v3960
    %5999 = vmatpush.bf16.msra.mxu0 %v3956
    %6000 = vmatpush.bf16.msra.mxu0 %v3952
    %6001 = vmatmul.bf16.gmra.mxu0 %v884
    %v6002 = vpop.f32.mrf.mxu0
    %v6003 = vadd.f32 %v5990, %v6002
    %v6004 = vpop.f32.mrf.mxu0
    %6005 = vdwg.mxu0
    %v6006 = vld [vmem:[%s1] sm:$0xff]
    %v6007 = vld [vmem:[%s1 + $0x8] sm:$0xff]
    %6010 = vst [vmem:[#allocation1] ss:$4 sm:$0xff] %v6006
    %s6011 = scalar_lea.vmem [#allocation1], 32
    %6012 = vst [vmem:[%s6011] ss:$4 sm:$0xff] %v6007
    %v6013 = vld.sshfl [vmem:[#allocation1] sm:$0xff pattern:$0x73625140]
    %v6014 = vld.sshfl [vmem:[#allocation1 + $0x8] sm:$0xff pattern:$0x73625140]
    %v6015 = vld.sshfl [vmem:[#allocation1 + $0x10] sm:$0xff pattern:$0x73625140]
    %v6016 = vld.sshfl [vmem:[#allocation1 + $0x18] sm:$0xff pattern:$0x73625140]
    %v6017 = vld.sshfl [vmem:[#allocation1 + $0x20] sm:$0xff pattern:$0x73625140]
    %v6018 = vld.sshfl [vmem:[#allocation1 + $0x28] sm:$0xff pattern:$0x73625140]
    %v6019 = vld.sshfl [vmem:[#allocation1 + $0x30] sm:$0xff pattern:$0x73625140]
    %v6020 = vld.sshfl [vmem:[#allocation1 + $0x38] sm:$0xff pattern:$0x73625140]
    %v6029 = vpack.c.bf16 %v6013, %v6013
    %v6030 = vpack.c.bf16 %v6014, %v6014
    %v6031 = vpack.c.bf16 %v6015, %v6015
    %v6032 = vpack.c.bf16 %v6016, %v6016
    %v6033 = vpack.c.bf16 %v6017, %v6017
    %v6034 = vpack.c.bf16 %v6018, %v6018
    %v6035 = vpack.c.bf16 %v6019, %v6019
    %v6036 = vpack.c.bf16 %v6020, %v6020
    %v6037 = vld [vmem:[#allocation7] sm:$0xff]
    %v6038 = vld [vmem:[#allocation7 + $0x8] sm:$0xff]
    %v6039 = vld [vmem:[#allocation7 + $0x10] sm:$0xff]
    %v6040 = vld [vmem:[#allocation7 + $0x18] sm:$0xff]
    %v6041 = vld [vmem:[#allocation7 + $0x20] sm:$0xff]
    %v6042 = vld [vmem:[#allocation7 + $0x28] sm:$0xff]
    %v6043 = vld [vmem:[#allocation7 + $0x30] sm:$0xff]
    %v6044 = vld [vmem:[#allocation7 + $0x38] sm:$0xff]
    %v6045 = vld [vmem:[#allocation7 + $0x40] sm:$0xff]
    %v6046 = vld [vmem:[#allocation7 + $0x48] sm:$0xff]
    %v6047 = vld [vmem:[#allocation7 + $0x50] sm:$0xff]
    %v6048 = vld [vmem:[#allocation7 + $0x58] sm:$0xff]
    %v6049 = vld [vmem:[#allocation7 + $0x60] sm:$0xff]
    %v6050 = vld [vmem:[#allocation7 + $0x68] sm:$0xff]
    %v6051 = vld [vmem:[#allocation7 + $0x70] sm:$0xff]
    %v6052 = vld [vmem:[#allocation7 + $0x78] sm:$0xff]
    %v6053 = vld [vmem:[#allocation7 + $0x80] sm:$0xff]
    %v6054 = vld [vmem:[#allocation7 + $0x88] sm:$0xff]
    %v6055 = vld [vmem:[#allocation7 + $0x90] sm:$0xff]
    %v6056 = vld [vmem:[#allocation7 + $0x98] sm:$0xff]
    %v6057 = vld [vmem:[#allocation7 + $0xa0] sm:$0xff]
    %v6058 = vld [vmem:[#allocation7 + $0xa8] sm:$0xff]
    %v6059 = vld [vmem:[#allocation7 + $0xb0] sm:$0xff]
    %v6060 = vld [vmem:[#allocation7 + $0xb8] sm:$0xff]
    %v6061 = vld [vmem:[#allocation7 + $0xc0] sm:$0xff]
    %v6062 = vld [vmem:[#allocation7 + $0xc8] sm:$0xff]
    %v6063 = vld [vmem:[#allocation7 + $0xd0] sm:$0xff]
    %v6064 = vld [vmem:[#allocation7 + $0xd8] sm:$0xff]
    %v6065 = vld [vmem:[#allocation7 + $0xe0] sm:$0xff]
    %v6066 = vld [vmem:[#allocation7 + $0xe8] sm:$0xff]
    %v6067 = vld [vmem:[#allocation7 + $0xf0] sm:$0xff]
    %v6068 = vld [vmem:[#allocation7 + $0xf8] sm:$0xff]
    %v6069 = vld [vmem:[#allocation7 + $0x100] sm:$0xff]
    %v6070 = vld [vmem:[#allocation7 + $0x108] sm:$0xff]
    %v6071 = vld [vmem:[#allocation7 + $0x110] sm:$0xff]
    %v6072 = vld [vmem:[#allocation7 + $0x118] sm:$0xff]
    %v6073 = vld [vmem:[#allocation7 + $0x120] sm:$0xff]
    %v6074 = vld [vmem:[#allocation7 + $0x128] sm:$0xff]
    %v6075 = vld [vmem:[#allocation7 + $0x130] sm:$0xff]
    %v6076 = vld [vmem:[#allocation7 + $0x138] sm:$0xff]
    %v6077 = vld [vmem:[#allocation7 + $0x140] sm:$0xff]
    %v6078 = vld [vmem:[#allocation7 + $0x148] sm:$0xff]
    %v6079 = vld [vmem:[#allocation7 + $0x150] sm:$0xff]
    %v6080 = vld [vmem:[#allocation7 + $0x158] sm:$0xff]
    %v6081 = vld [vmem:[#allocation7 + $0x160] sm:$0xff]
    %v6082 = vld [vmem:[#allocation7 + $0x168] sm:$0xff]
    %v6083 = vld [vmem:[#allocation7 + $0x170] sm:$0xff]
    %v6084 = vld [vmem:[#allocation7 + $0x178] sm:$0xff]
    %v6085 = vld [vmem:[#allocation7 + $0x180] sm:$0xff]
    %v6086 = vld [vmem:[#allocation7 + $0x188] sm:$0xff]
    %v6087 = vld [vmem:[#allocation7 + $0x190] sm:$0xff]
    %v6088 = vld [vmem:[#allocation7 + $0x198] sm:$0xff]
    %v6089 = vld [vmem:[#allocation7 + $0x1a0] sm:$0xff]
    %v6090 = vld [vmem:[#allocation7 + $0x1a8] sm:$0xff]
    %v6091 = vld [vmem:[#allocation7 + $0x1b0] sm:$0xff]
    %v6092 = vld [vmem:[#allocation7 + $0x1b8] sm:$0xff]
    %v6093 = vld [vmem:[#allocation7 + $0x1c0] sm:$0xff]
    %v6094 = vld [vmem:[#allocation7 + $0x1c8] sm:$0xff]
    %v6095 = vld [vmem:[#allocation7 + $0x1d0] sm:$0xff]
    %v6096 = vld [vmem:[#allocation7 + $0x1d8] sm:$0xff]
    %v6097 = vld [vmem:[#allocation7 + $0x1e0] sm:$0xff]
    %v6098 = vld [vmem:[#allocation7 + $0x1e8] sm:$0xff]
    %v6099 = vld [vmem:[#allocation7 + $0x1f0] sm:$0xff]
    %v6100 = vld [vmem:[#allocation7 + $0x1f8] sm:$0xff]
    %v6101 = vld [vmem:[#allocation7 + $0x200] sm:$0xff]
    %v6102 = vld [vmem:[#allocation7 + $0x208] sm:$0xff]
    %v6103 = vld [vmem:[#allocation7 + $0x210] sm:$0xff]
    %v6104 = vld [vmem:[#allocation7 + $0x218] sm:$0xff]
    %v6105 = vld [vmem:[#allocation7 + $0x220] sm:$0xff]
    %v6106 = vld [vmem:[#allocation7 + $0x228] sm:$0xff]
    %v6107 = vld [vmem:[#allocation7 + $0x230] sm:$0xff]
    %v6108 = vld [vmem:[#allocation7 + $0x238] sm:$0xff]
    %v6109 = vld [vmem:[#allocation7 + $0x240] sm:$0xff]
    %v6110 = vld [vmem:[#allocation7 + $0x248] sm:$0xff]
    %v6111 = vld [vmem:[#allocation7 + $0x250] sm:$0xff]
    %v6112 = vld [vmem:[#allocation7 + $0x258] sm:$0xff]
    %v6113 = vld [vmem:[#allocation7 + $0x260] sm:$0xff]
    %v6114 = vld [vmem:[#allocation7 + $0x268] sm:$0xff]
    %v6115 = vld [vmem:[#allocation7 + $0x270] sm:$0xff]
    %v6116 = vld [vmem:[#allocation7 + $0x278] sm:$0xff]
    %v6117 = vld [vmem:[#allocation7 + $0x280] sm:$0xff]
    %v6118 = vld [vmem:[#allocation7 + $0x288] sm:$0xff]
    %v6119 = vld [vmem:[#allocation7 + $0x290] sm:$0xff]
    %v6120 = vld [vmem:[#allocation7 + $0x298] sm:$0xff]
    %v6121 = vld [vmem:[#allocation7 + $0x2a0] sm:$0xff]
    %v6122 = vld [vmem:[#allocation7 + $0x2a8] sm:$0xff]
    %v6123 = vld [vmem:[#allocation7 + $0x2b0] sm:$0xff]
    %v6124 = vld [vmem:[#allocation7 + $0x2b8] sm:$0xff]
    %v6125 = vld [vmem:[#allocation7 + $0x2c0] sm:$0xff]
    %v6126 = vld [vmem:[#allocation7 + $0x2c8] sm:$0xff]
    %v6127 = vld [vmem:[#allocation7 + $0x2d0] sm:$0xff]
    %v6128 = vld [vmem:[#allocation7 + $0x2d8] sm:$0xff]
    %v6129 = vld [vmem:[#allocation7 + $0x2e0] sm:$0xff]
    %v6130 = vld [vmem:[#allocation7 + $0x2e8] sm:$0xff]
    %v6131 = vld [vmem:[#allocation7 + $0x2f0] sm:$0xff]
    %v6132 = vld [vmem:[#allocation7 + $0x2f8] sm:$0xff]
    %v6133 = vld [vmem:[#allocation7 + $0x300] sm:$0xff]
    %v6134 = vld [vmem:[#allocation7 + $0x308] sm:$0xff]
    %v6135 = vld [vmem:[#allocation7 + $0x310] sm:$0xff]
    %v6136 = vld [vmem:[#allocation7 + $0x318] sm:$0xff]
    %v6137 = vld [vmem:[#allocation7 + $0x320] sm:$0xff]
    %v6138 = vld [vmem:[#allocation7 + $0x328] sm:$0xff]
    %v6139 = vld [vmem:[#allocation7 + $0x330] sm:$0xff]
    %v6140 = vld [vmem:[#allocation7 + $0x338] sm:$0xff]
    %v6141 = vld [vmem:[#allocation7 + $0x340] sm:$0xff]
    %v6142 = vld [vmem:[#allocation7 + $0x348] sm:$0xff]
    %v6143 = vld [vmem:[#allocation7 + $0x350] sm:$0xff]
    %v6144 = vld [vmem:[#allocation7 + $0x358] sm:$0xff]
    %v6145 = vld [vmem:[#allocation7 + $0x360] sm:$0xff]
    %v6146 = vld [vmem:[#allocation7 + $0x368] sm:$0xff]
    %v6147 = vld [vmem:[#allocation7 + $0x370] sm:$0xff]
    %v6148 = vld [vmem:[#allocation7 + $0x378] sm:$0xff]
    %v6149 = vld [vmem:[#allocation7 + $0x380] sm:$0xff]
    %v6150 = vld [vmem:[#allocation7 + $0x388] sm:$0xff]
    %v6151 = vld [vmem:[#allocation7 + $0x390] sm:$0xff]
    %v6152 = vld [vmem:[#allocation7 + $0x398] sm:$0xff]
    %v6153 = vld [vmem:[#allocation7 + $0x3a0] sm:$0xff]
    %v6154 = vld [vmem:[#allocation7 + $0x3a8] sm:$0xff]
    %v6155 = vld [vmem:[#allocation7 + $0x3b0] sm:$0xff]
    %v6156 = vld [vmem:[#allocation7 + $0x3b8] sm:$0xff]
    %v6157 = vld [vmem:[#allocation7 + $0x3c0] sm:$0xff]
    %v6158 = vld [vmem:[#allocation7 + $0x3c8] sm:$0xff]
    %v6159 = vld [vmem:[#allocation7 + $0x3d0] sm:$0xff]
    %v6160 = vld [vmem:[#allocation7 + $0x3d8] sm:$0xff]
    %v6161 = vld [vmem:[#allocation7 + $0x3e0] sm:$0xff]
    %v6162 = vld [vmem:[#allocation7 + $0x3e8] sm:$0xff]
    %v6163 = vld [vmem:[#allocation7 + $0x3f0] sm:$0xff]
    %v6164 = vld [vmem:[#allocation7 + $0x3f8] sm:$0xff]
    %v6165 = vld [vmem:[#allocation7 + $0x400] sm:$0xff]
    %v6166 = vld [vmem:[#allocation7 + $0x408] sm:$0xff]
    %v6167 = vld [vmem:[#allocation7 + $0x410] sm:$0xff]
    %v6168 = vld [vmem:[#allocation7 + $0x418] sm:$0xff]
    %v6169 = vld [vmem:[#allocation7 + $0x420] sm:$0xff]
    %v6170 = vld [vmem:[#allocation7 + $0x428] sm:$0xff]
    %v6171 = vld [vmem:[#allocation7 + $0x430] sm:$0xff]
    %v6172 = vld [vmem:[#allocation7 + $0x438] sm:$0xff]
    %v6173 = vld [vmem:[#allocation7 + $0x440] sm:$0xff]
    %v6174 = vld [vmem:[#allocation7 + $0x448] sm:$0xff]
    %v6175 = vld [vmem:[#allocation7 + $0x450] sm:$0xff]
    %v6176 = vld [vmem:[#allocation7 + $0x458] sm:$0xff]
    %v6177 = vld [vmem:[#allocation7 + $0x460] sm:$0xff]
    %v6178 = vld [vmem:[#allocation7 + $0x468] sm:$0xff]
    %v6179 = vld [vmem:[#allocation7 + $0x470] sm:$0xff]
    %v6180 = vld [vmem:[#allocation7 + $0x478] sm:$0xff]
    %v6181 = vld [vmem:[#allocation7 + $0x480] sm:$0xff]
    %v6182 = vld [vmem:[#allocation7 + $0x488] sm:$0xff]
    %v6183 = vld [vmem:[#allocation7 + $0x490] sm:$0xff]
    %v6184 = vld [vmem:[#allocation7 + $0x498] sm:$0xff]
    %v6185 = vld [vmem:[#allocation7 + $0x4a0] sm:$0xff]
    %v6186 = vld [vmem:[#allocation7 + $0x4a8] sm:$0xff]
    %v6187 = vld [vmem:[#allocation7 + $0x4b0] sm:$0xff]
    %v6188 = vld [vmem:[#allocation7 + $0x4b8] sm:$0xff]
    %v6189 = vld [vmem:[#allocation7 + $0x4c0] sm:$0xff]
    %v6190 = vld [vmem:[#allocation7 + $0x4c8] sm:$0xff]
    %v6191 = vld [vmem:[#allocation7 + $0x4d0] sm:$0xff]
    %v6192 = vld [vmem:[#allocation7 + $0x4d8] sm:$0xff]
    %v6193 = vld [vmem:[#allocation7 + $0x4e0] sm:$0xff]
    %v6194 = vld [vmem:[#allocation7 + $0x4e8] sm:$0xff]
    %v6195 = vld [vmem:[#allocation7 + $0x4f0] sm:$0xff]
    %v6196 = vld [vmem:[#allocation7 + $0x4f8] sm:$0xff]
    %v6197 = vld [vmem:[#allocation7 + $0x500] sm:$0xff]
    %v6198 = vld [vmem:[#allocation7 + $0x508] sm:$0xff]
    %v6199 = vld [vmem:[#allocation7 + $0x510] sm:$0xff]
    %v6200 = vld [vmem:[#allocation7 + $0x518] sm:$0xff]
    %v6201 = vld [vmem:[#allocation7 + $0x520] sm:$0xff]
    %v6202 = vld [vmem:[#allocation7 + $0x528] sm:$0xff]
    %v6203 = vld [vmem:[#allocation7 + $0x530] sm:$0xff]
    %v6204 = vld [vmem:[#allocation7 + $0x538] sm:$0xff]
    %v6205 = vld [vmem:[#allocation7 + $0x540] sm:$0xff]
    %v6206 = vld [vmem:[#allocation7 + $0x548] sm:$0xff]
    %v6207 = vld [vmem:[#allocation7 + $0x550] sm:$0xff]
    %v6208 = vld [vmem:[#allocation7 + $0x558] sm:$0xff]
    %v6209 = vld [vmem:[#allocation7 + $0x560] sm:$0xff]
    %v6210 = vld [vmem:[#allocation7 + $0x568] sm:$0xff]
    %v6211 = vld [vmem:[#allocation7 + $0x570] sm:$0xff]
    %v6212 = vld [vmem:[#allocation7 + $0x578] sm:$0xff]
    %v6213 = vld [vmem:[#allocation7 + $0x580] sm:$0xff]
    %v6214 = vld [vmem:[#allocation7 + $0x588] sm:$0xff]
    %v6215 = vld [vmem:[#allocation7 + $0x590] sm:$0xff]
    %v6216 = vld [vmem:[#allocation7 + $0x598] sm:$0xff]
    %v6217 = vld [vmem:[#allocation7 + $0x5a0] sm:$0xff]
    %v6218 = vld [vmem:[#allocation7 + $0x5a8] sm:$0xff]
    %v6219 = vld [vmem:[#allocation7 + $0x5b0] sm:$0xff]
    %v6220 = vld [vmem:[#allocation7 + $0x5b8] sm:$0xff]
    %v6221 = vld [vmem:[#allocation7 + $0x5c0] sm:$0xff]
    %v6222 = vld [vmem:[#allocation7 + $0x5c8] sm:$0xff]
    %v6223 = vld [vmem:[#allocation7 + $0x5d0] sm:$0xff]
    %v6224 = vld [vmem:[#allocation7 + $0x5d8] sm:$0xff]
    %v6225 = vld [vmem:[#allocation7 + $0x5e0] sm:$0xff]
    %v6226 = vld [vmem:[#allocation7 + $0x5e8] sm:$0xff]
    %v6227 = vld [vmem:[#allocation7 + $0x5f0] sm:$0xff]
    %v6228 = vld [vmem:[#allocation7 + $0x5f8] sm:$0xff]
    %v6229 = vld [vmem:[#allocation7 + $0x600] sm:$0xff]
    %v6230 = vld [vmem:[#allocation7 + $0x608] sm:$0xff]
    %v6231 = vld [vmem:[#allocation7 + $0x610] sm:$0xff]
    %v6232 = vld [vmem:[#allocation7 + $0x618] sm:$0xff]
    %v6233 = vld [vmem:[#allocation7 + $0x620] sm:$0xff]
    %v6234 = vld [vmem:[#allocation7 + $0x628] sm:$0xff]
    %v6235 = vld [vmem:[#allocation7 + $0x630] sm:$0xff]
    %v6236 = vld [vmem:[#allocation7 + $0x638] sm:$0xff]
    %v6237 = vld [vmem:[#allocation7 + $0x640] sm:$0xff]
    %v6238 = vld [vmem:[#allocation7 + $0x648] sm:$0xff]
    %v6239 = vld [vmem:[#allocation7 + $0x650] sm:$0xff]
    %v6240 = vld [vmem:[#allocation7 + $0x658] sm:$0xff]
    %v6241 = vld [vmem:[#allocation7 + $0x660] sm:$0xff]
    %v6242 = vld [vmem:[#allocation7 + $0x668] sm:$0xff]
    %v6243 = vld [vmem:[#allocation7 + $0x670] sm:$0xff]
    %v6244 = vld [vmem:[#allocation7 + $0x678] sm:$0xff]
    %v6245 = vld [vmem:[#allocation7 + $0x680] sm:$0xff]
    %v6246 = vld [vmem:[#allocation7 + $0x688] sm:$0xff]
    %v6247 = vld [vmem:[#allocation7 + $0x690] sm:$0xff]
    %v6248 = vld [vmem:[#allocation7 + $0x698] sm:$0xff]
    %v6249 = vld [vmem:[#allocation7 + $0x6a0] sm:$0xff]
    %v6250 = vld [vmem:[#allocation7 + $0x6a8] sm:$0xff]
    %v6251 = vld [vmem:[#allocation7 + $0x6b0] sm:$0xff]
    %v6252 = vld [vmem:[#allocation7 + $0x6b8] sm:$0xff]
    %v6253 = vld [vmem:[#allocation7 + $0x6c0] sm:$0xff]
    %v6254 = vld [vmem:[#allocation7 + $0x6c8] sm:$0xff]
    %v6255 = vld [vmem:[#allocation7 + $0x6d0] sm:$0xff]
    %v6256 = vld [vmem:[#allocation7 + $0x6d8] sm:$0xff]
    %v6257 = vld [vmem:[#allocation7 + $0x6e0] sm:$0xff]
    %v6258 = vld [vmem:[#allocation7 + $0x6e8] sm:$0xff]
    %v6259 = vld [vmem:[#allocation7 + $0x6f0] sm:$0xff]
    %v6260 = vld [vmem:[#allocation7 + $0x6f8] sm:$0xff]
    %v6261 = vld [vmem:[#allocation7 + $0x700] sm:$0xff]
    %v6262 = vld [vmem:[#allocation7 + $0x708] sm:$0xff]
    %v6263 = vld [vmem:[#allocation7 + $0x710] sm:$0xff]
    %v6264 = vld [vmem:[#allocation7 + $0x718] sm:$0xff]
    %v6265 = vld [vmem:[#allocation7 + $0x720] sm:$0xff]
    %v6266 = vld [vmem:[#allocation7 + $0x728] sm:$0xff]
    %v6267 = vld [vmem:[#allocation7 + $0x730] sm:$0xff]
    %v6268 = vld [vmem:[#allocation7 + $0x738] sm:$0xff]
    %v6269 = vld [vmem:[#allocation7 + $0x740] sm:$0xff]
    %v6270 = vld [vmem:[#allocation7 + $0x748] sm:$0xff]
    %v6271 = vld [vmem:[#allocation7 + $0x750] sm:$0xff]
    %v6272 = vld [vmem:[#allocation7 + $0x758] sm:$0xff]
    %v6273 = vld [vmem:[#allocation7 + $0x760] sm:$0xff]
    %v6274 = vld [vmem:[#allocation7 + $0x768] sm:$0xff]
    %v6275 = vld [vmem:[#allocation7 + $0x770] sm:$0xff]
    %v6276 = vld [vmem:[#allocation7 + $0x778] sm:$0xff]
    %v6277 = vld [vmem:[#allocation7 + $0x780] sm:$0xff]
    %v6278 = vld [vmem:[#allocation7 + $0x788] sm:$0xff]
    %v6279 = vld [vmem:[#allocation7 + $0x790] sm:$0xff]
    %v6280 = vld [vmem:[#allocation7 + $0x798] sm:$0xff]
    %v6281 = vld [vmem:[#allocation7 + $0x7a0] sm:$0xff]
    %v6282 = vld [vmem:[#allocation7 + $0x7a8] sm:$0xff]
    %v6283 = vld [vmem:[#allocation7 + $0x7b0] sm:$0xff]
    %v6284 = vld [vmem:[#allocation7 + $0x7b8] sm:$0xff]
    %v6285 = vld [vmem:[#allocation7 + $0x7c0] sm:$0xff]
    %v6286 = vld [vmem:[#allocation7 + $0x7c8] sm:$0xff]
    %v6287 = vld [vmem:[#allocation7 + $0x7d0] sm:$0xff]
    %v6288 = vld [vmem:[#allocation7 + $0x7d8] sm:$0xff]
    %v6289 = vld [vmem:[#allocation7 + $0x7e0] sm:$0xff]
    %v6290 = vld [vmem:[#allocation7 + $0x7e8] sm:$0xff]
    %v6291 = vld [vmem:[#allocation7 + $0x7f0] sm:$0xff]
    %v6292 = vld [vmem:[#allocation7 + $0x7f8] sm:$0xff]
    %v6293 = vld [vmem:[#allocation8] sm:$0xf]
    %v6295 = vperm.slane %v6293, 0
    %v6296 = vperm.slane %v6293, 1
    %v6297 = vperm.slane %v6293, 2
    %v6298 = vperm.slane %v6293, 3
    %v6559 = vunpack.c.l.b16 %v6037
    %v6560 = vunpack.c.h.b16 %v6037
    %v6561 = vunpack.c.l.b16 %v6038
    %v6562 = vunpack.c.h.b16 %v6038
    %v6563 = vunpack.c.l.b16 %v6039
    %v6564 = vunpack.c.h.b16 %v6039
    %v6565 = vunpack.c.l.b16 %v6040
    %v6566 = vunpack.c.h.b16 %v6040
    %v6567 = vunpack.c.l.b16 %v6041
    %v6568 = vunpack.c.h.b16 %v6041
    %v6569 = vunpack.c.l.b16 %v6042
    %v6570 = vunpack.c.h.b16 %v6042
    %v6571 = vunpack.c.l.b16 %v6043
    %v6572 = vunpack.c.h.b16 %v6043
    %v6573 = vunpack.c.l.b16 %v6044
    %v6574 = vunpack.c.h.b16 %v6044
    %v6575 = vunpack.c.l.b16 %v6045
    %v6576 = vunpack.c.h.b16 %v6045
    %v6577 = vunpack.c.l.b16 %v6046
    %v6578 = vunpack.c.h.b16 %v6046
    %v6579 = vunpack.c.l.b16 %v6047
    %v6580 = vunpack.c.h.b16 %v6047
    %v6581 = vunpack.c.l.b16 %v6048
    %v6582 = vunpack.c.h.b16 %v6048
    %v6583 = vunpack.c.l.b16 %v6049
    %v6584 = vunpack.c.h.b16 %v6049
    %v6585 = vunpack.c.l.b16 %v6050
    %v6586 = vunpack.c.h.b16 %v6050
    %v6587 = vunpack.c.l.b16 %v6051
    %v6588 = vunpack.c.h.b16 %v6051
    %v6589 = vunpack.c.l.b16 %v6052
    %v6590 = vunpack.c.h.b16 %v6052
    %v6591 = vunpack.c.l.b16 %v6053
    %v6592 = vunpack.c.h.b16 %v6053
    %v6593 = vunpack.c.l.b16 %v6054
    %v6594 = vunpack.c.h.b16 %v6054
    %v6595 = vunpack.c.l.b16 %v6055
    %v6596 = vunpack.c.h.b16 %v6055
    %v6597 = vunpack.c.l.b16 %v6056
    %v6598 = vunpack.c.h.b16 %v6056
    %v6599 = vunpack.c.l.b16 %v6057
    %v6600 = vunpack.c.h.b16 %v6057
    %v6601 = vunpack.c.l.b16 %v6058
    %v6602 = vunpack.c.h.b16 %v6058
    %v6603 = vunpack.c.l.b16 %v6059
    %v6604 = vunpack.c.h.b16 %v6059
    %v6605 = vunpack.c.l.b16 %v6060
    %v6606 = vunpack.c.h.b16 %v6060
    %v6607 = vunpack.c.l.b16 %v6061
    %v6608 = vunpack.c.h.b16 %v6061
    %v6609 = vunpack.c.l.b16 %v6062
    %v6610 = vunpack.c.h.b16 %v6062
    %v6611 = vunpack.c.l.b16 %v6063
    %v6612 = vunpack.c.h.b16 %v6063
    %v6613 = vunpack.c.l.b16 %v6064
    %v6614 = vunpack.c.h.b16 %v6064
    %v6615 = vunpack.c.l.b16 %v6065
    %v6616 = vunpack.c.h.b16 %v6065
    %v6617 = vunpack.c.l.b16 %v6066
    %v6618 = vunpack.c.h.b16 %v6066
    %v6619 = vunpack.c.l.b16 %v6067
    %v6620 = vunpack.c.h.b16 %v6067
    %v6621 = vunpack.c.l.b16 %v6068
    %v6622 = vunpack.c.h.b16 %v6068
    %v6623 = vunpack.c.l.b16 %v6069
    %v6624 = vunpack.c.h.b16 %v6069
    %v6625 = vunpack.c.l.b16 %v6070
    %v6626 = vunpack.c.h.b16 %v6070
    %v6627 = vunpack.c.l.b16 %v6071
    %v6628 = vunpack.c.h.b16 %v6071
    %v6629 = vunpack.c.l.b16 %v6072
    %v6630 = vunpack.c.h.b16 %v6072
    %v6631 = vunpack.c.l.b16 %v6073
    %v6632 = vunpack.c.h.b16 %v6073
    %v6633 = vunpack.c.l.b16 %v6074
    %v6634 = vunpack.c.h.b16 %v6074
    %v6635 = vunpack.c.l.b16 %v6075
    %v6636 = vunpack.c.h.b16 %v6075
    %v6637 = vunpack.c.l.b16 %v6076
    %v6638 = vunpack.c.h.b16 %v6076
    %v6639 = vunpack.c.l.b16 %v6077
    %v6640 = vunpack.c.h.b16 %v6077
    %v6641 = vunpack.c.l.b16 %v6078
    %v6642 = vunpack.c.h.b16 %v6078
    %v6643 = vunpack.c.l.b16 %v6079
    %v6644 = vunpack.c.h.b16 %v6079
    %v6645 = vunpack.c.l.b16 %v6080
    %v6646 = vunpack.c.h.b16 %v6080
    %v6647 = vunpack.c.l.b16 %v6081
    %v6648 = vunpack.c.h.b16 %v6081
    %v6649 = vunpack.c.l.b16 %v6082
    %v6650 = vunpack.c.h.b16 %v6082
    %v6651 = vunpack.c.l.b16 %v6083
    %v6652 = vunpack.c.h.b16 %v6083
    %v6653 = vunpack.c.l.b16 %v6084
    %v6654 = vunpack.c.h.b16 %v6084
    %v6655 = vunpack.c.l.b16 %v6085
    %v6656 = vunpack.c.h.b16 %v6085
    %v6657 = vunpack.c.l.b16 %v6086
    %v6658 = vunpack.c.h.b16 %v6086
    %v6659 = vunpack.c.l.b16 %v6087
    %v6660 = vunpack.c.h.b16 %v6087
    %v6661 = vunpack.c.l.b16 %v6088
    %v6662 = vunpack.c.h.b16 %v6088
    %v6663 = vunpack.c.l.b16 %v6089
    %v6664 = vunpack.c.h.b16 %v6089
    %v6665 = vunpack.c.l.b16 %v6090
    %v6666 = vunpack.c.h.b16 %v6090
    %v6667 = vunpack.c.l.b16 %v6091
    %v6668 = vunpack.c.h.b16 %v6091
    %v6669 = vunpack.c.l.b16 %v6092
    %v6670 = vunpack.c.h.b16 %v6092
    %v6671 = vunpack.c.l.b16 %v6093
    %v6672 = vunpack.c.h.b16 %v6093
    %v6673 = vunpack.c.l.b16 %v6094
    %v6674 = vunpack.c.h.b16 %v6094
    %v6675 = vunpack.c.l.b16 %v6095
    %v6676 = vunpack.c.h.b16 %v6095
    %v6677 = vunpack.c.l.b16 %v6096
    %v6678 = vunpack.c.h.b16 %v6096
    %v6679 = vunpack.c.l.b16 %v6097
    %v6680 = vunpack.c.h.b16 %v6097
    %v6681 = vunpack.c.l.b16 %v6098
    %v6682 = vunpack.c.h.b16 %v6098
    %v6683 = vunpack.c.l.b16 %v6099
    %v6684 = vunpack.c.h.b16 %v6099
    %v6685 = vunpack.c.l.b16 %v6100
    %v6686 = vunpack.c.h.b16 %v6100
    %v6687 = vunpack.c.l.b16 %v6101
    %v6688 = vunpack.c.h.b16 %v6101
    %v6689 = vunpack.c.l.b16 %v6102
    %v6690 = vunpack.c.h.b16 %v6102
    %v6691 = vunpack.c.l.b16 %v6103
    %v6692 = vunpack.c.h.b16 %v6103
    %v6693 = vunpack.c.l.b16 %v6104
    %v6694 = vunpack.c.h.b16 %v6104
    %v6695 = vunpack.c.l.b16 %v6105
    %v6696 = vunpack.c.h.b16 %v6105
    %v6697 = vunpack.c.l.b16 %v6106
    %v6698 = vunpack.c.h.b16 %v6106
    %v6699 = vunpack.c.l.b16 %v6107
    %v6700 = vunpack.c.h.b16 %v6107
    %v6701 = vunpack.c.l.b16 %v6108
    %v6702 = vunpack.c.h.b16 %v6108
    %v6703 = vunpack.c.l.b16 %v6109
    %v6704 = vunpack.c.h.b16 %v6109
    %v6705 = vunpack.c.l.b16 %v6110
    %v6706 = vunpack.c.h.b16 %v6110
    %v6707 = vunpack.c.l.b16 %v6111
    %v6708 = vunpack.c.h.b16 %v6111
    %v6709 = vunpack.c.l.b16 %v6112
    %v6710 = vunpack.c.h.b16 %v6112
    %v6711 = vunpack.c.l.b16 %v6113
    %v6712 = vunpack.c.h.b16 %v6113
    %v6713 = vunpack.c.l.b16 %v6114
    %v6714 = vunpack.c.h.b16 %v6114
    %v6715 = vunpack.c.l.b16 %v6115
    %v6716 = vunpack.c.h.b16 %v6115
    %v6717 = vunpack.c.l.b16 %v6116
    %v6718 = vunpack.c.h.b16 %v6116
    %v6719 = vunpack.c.l.b16 %v6117
    %v6720 = vunpack.c.h.b16 %v6117
    %v6721 = vunpack.c.l.b16 %v6118
    %v6722 = vunpack.c.h.b16 %v6118
    %v6723 = vunpack.c.l.b16 %v6119
    %v6724 = vunpack.c.h.b16 %v6119
    %v6725 = vunpack.c.l.b16 %v6120
    %v6726 = vunpack.c.h.b16 %v6120
    %v6727 = vunpack.c.l.b16 %v6121
    %v6728 = vunpack.c.h.b16 %v6121
    %v6729 = vunpack.c.l.b16 %v6122
    %v6730 = vunpack.c.h.b16 %v6122
    %v6731 = vunpack.c.l.b16 %v6123
    %v6732 = vunpack.c.h.b16 %v6123
    %v6733 = vunpack.c.l.b16 %v6124
    %v6734 = vunpack.c.h.b16 %v6124
    %v6735 = vunpack.c.l.b16 %v6125
    %v6736 = vunpack.c.h.b16 %v6125
    %v6737 = vunpack.c.l.b16 %v6126
    %v6738 = vunpack.c.h.b16 %v6126
    %v6739 = vunpack.c.l.b16 %v6127
    %v6740 = vunpack.c.h.b16 %v6127
    %v6741 = vunpack.c.l.b16 %v6128
    %v6742 = vunpack.c.h.b16 %v6128
    %v6743 = vunpack.c.l.b16 %v6129
    %v6744 = vunpack.c.h.b16 %v6129
    %v6745 = vunpack.c.l.b16 %v6130
    %v6746 = vunpack.c.h.b16 %v6130
    %v6747 = vunpack.c.l.b16 %v6131
    %v6748 = vunpack.c.h.b16 %v6131
    %v6749 = vunpack.c.l.b16 %v6132
    %v6750 = vunpack.c.h.b16 %v6132
    %v6751 = vunpack.c.l.b16 %v6133
    %v6752 = vunpack.c.h.b16 %v6133
    %v6753 = vunpack.c.l.b16 %v6134
    %v6754 = vunpack.c.h.b16 %v6134
    %v6755 = vunpack.c.l.b16 %v6135
    %v6756 = vunpack.c.h.b16 %v6135
    %v6757 = vunpack.c.l.b16 %v6136
    %v6758 = vunpack.c.h.b16 %v6136
    %v6759 = vunpack.c.l.b16 %v6137
    %v6760 = vunpack.c.h.b16 %v6137
    %v6761 = vunpack.c.l.b16 %v6138
    %v6762 = vunpack.c.h.b16 %v6138
    %v6763 = vunpack.c.l.b16 %v6139
    %v6764 = vunpack.c.h.b16 %v6139
    %v6765 = vunpack.c.l.b16 %v6140
    %v6766 = vunpack.c.h.b16 %v6140
    %v6767 = vunpack.c.l.b16 %v6141
    %v6768 = vunpack.c.h.b16 %v6141
    %v6769 = vunpack.c.l.b16 %v6142
    %v6770 = vunpack.c.h.b16 %v6142
    %v6771 = vunpack.c.l.b16 %v6143
    %v6772 = vunpack.c.h.b16 %v6143
    %v6773 = vunpack.c.l.b16 %v6144
    %v6774 = vunpack.c.h.b16 %v6144
    %v6775 = vunpack.c.l.b16 %v6145
    %v6776 = vunpack.c.h.b16 %v6145
    %v6777 = vunpack.c.l.b16 %v6146
    %v6778 = vunpack.c.h.b16 %v6146
    %v6779 = vunpack.c.l.b16 %v6147
    %v6780 = vunpack.c.h.b16 %v6147
    %v6781 = vunpack.c.l.b16 %v6148
    %v6782 = vunpack.c.h.b16 %v6148
    %v6783 = vunpack.c.l.b16 %v6149
    %v6784 = vunpack.c.h.b16 %v6149
    %v6785 = vunpack.c.l.b16 %v6150
    %v6786 = vunpack.c.h.b16 %v6150
    %v6787 = vunpack.c.l.b16 %v6151
    %v6788 = vunpack.c.h.b16 %v6151
    %v6789 = vunpack.c.l.b16 %v6152
    %v6790 = vunpack.c.h.b16 %v6152
    %v6791 = vunpack.c.l.b16 %v6153
    %v6792 = vunpack.c.h.b16 %v6153
    %v6793 = vunpack.c.l.b16 %v6154
    %v6794 = vunpack.c.h.b16 %v6154
    %v6795 = vunpack.c.l.b16 %v6155
    %v6796 = vunpack.c.h.b16 %v6155
    %v6797 = vunpack.c.l.b16 %v6156
    %v6798 = vunpack.c.h.b16 %v6156
    %v6799 = vunpack.c.l.b16 %v6157
    %v6800 = vunpack.c.h.b16 %v6157
    %v6801 = vunpack.c.l.b16 %v6158
    %v6802 = vunpack.c.h.b16 %v6158
    %v6803 = vunpack.c.l.b16 %v6159
    %v6804 = vunpack.c.h.b16 %v6159
    %v6805 = vunpack.c.l.b16 %v6160
    %v6806 = vunpack.c.h.b16 %v6160
    %v6807 = vunpack.c.l.b16 %v6161
    %v6808 = vunpack.c.h.b16 %v6161
    %v6809 = vunpack.c.l.b16 %v6162
    %v6810 = vunpack.c.h.b16 %v6162
    %v6811 = vunpack.c.l.b16 %v6163
    %v6812 = vunpack.c.h.b16 %v6163
    %v6813 = vunpack.c.l.b16 %v6164
    %v6814 = vunpack.c.h.b16 %v6164
    %v6815 = vunpack.c.l.b16 %v6165
    %v6816 = vunpack.c.h.b16 %v6165
    %v6817 = vunpack.c.l.b16 %v6166
    %v6818 = vunpack.c.h.b16 %v6166
    %v6819 = vunpack.c.l.b16 %v6167
    %v6820 = vunpack.c.h.b16 %v6167
    %v6821 = vunpack.c.l.b16 %v6168
    %v6822 = vunpack.c.h.b16 %v6168
    %v6823 = vunpack.c.l.b16 %v6169
    %v6824 = vunpack.c.h.b16 %v6169
    %v6825 = vunpack.c.l.b16 %v6170
    %v6826 = vunpack.c.h.b16 %v6170
    %v6827 = vunpack.c.l.b16 %v6171
    %v6828 = vunpack.c.h.b16 %v6171
    %v6829 = vunpack.c.l.b16 %v6172
    %v6830 = vunpack.c.h.b16 %v6172
    %v6831 = vunpack.c.l.b16 %v6173
    %v6832 = vunpack.c.h.b16 %v6173
    %v6833 = vunpack.c.l.b16 %v6174
    %v6834 = vunpack.c.h.b16 %v6174
    %v6835 = vunpack.c.l.b16 %v6175
    %v6836 = vunpack.c.h.b16 %v6175
    %v6837 = vunpack.c.l.b16 %v6176
    %v6838 = vunpack.c.h.b16 %v6176
    %v6839 = vunpack.c.l.b16 %v6177
    %v6840 = vunpack.c.h.b16 %v6177
    %v6841 = vunpack.c.l.b16 %v6178
    %v6842 = vunpack.c.h.b16 %v6178
    %v6843 = vunpack.c.l.b16 %v6179
    %v6844 = vunpack.c.h.b16 %v6179
    %v6845 = vunpack.c.l.b16 %v6180
    %v6846 = vunpack.c.h.b16 %v6180
    %v6847 = vunpack.c.l.b16 %v6181
    %v6848 = vunpack.c.h.b16 %v6181
    %v6849 = vunpack.c.l.b16 %v6182
    %v6850 = vunpack.c.h.b16 %v6182
    %v6851 = vunpack.c.l.b16 %v6183
    %v6852 = vunpack.c.h.b16 %v6183
    %v6853 = vunpack.c.l.b16 %v6184
    %v6854 = vunpack.c.h.b16 %v6184
    %v6855 = vunpack.c.l.b16 %v6185
    %v6856 = vunpack.c.h.b16 %v6185
    %v6857 = vunpack.c.l.b16 %v6186
    %v6858 = vunpack.c.h.b16 %v6186
    %v6859 = vunpack.c.l.b16 %v6187
    %v6860 = vunpack.c.h.b16 %v6187
    %v6861 = vunpack.c.l.b16 %v6188
    %v6862 = vunpack.c.h.b16 %v6188
    %v6863 = vunpack.c.l.b16 %v6189
    %v6864 = vunpack.c.h.b16 %v6189
    %v6865 = vunpack.c.l.b16 %v6190
    %v6866 = vunpack.c.h.b16 %v6190
    %v6867 = vunpack.c.l.b16 %v6191
    %v6868 = vunpack.c.h.b16 %v6191
    %v6869 = vunpack.c.l.b16 %v6192
    %v6870 = vunpack.c.h.b16 %v6192
    %v6871 = vunpack.c.l.b16 %v6193
    %v6872 = vunpack.c.h.b16 %v6193
    %v6873 = vunpack.c.l.b16 %v6194
    %v6874 = vunpack.c.h.b16 %v6194
    %v6875 = vunpack.c.l.b16 %v6195
    %v6876 = vunpack.c.h.b16 %v6195
    %v6877 = vunpack.c.l.b16 %v6196
    %v6878 = vunpack.c.h.b16 %v6196
    %v6879 = vunpack.c.l.b16 %v6197
    %v6880 = vunpack.c.h.b16 %v6197
    %v6881 = vunpack.c.l.b16 %v6198
    %v6882 = vunpack.c.h.b16 %v6198
    %v6883 = vunpack.c.l.b16 %v6199
    %v6884 = vunpack.c.h.b16 %v6199
    %v6885 = vunpack.c.l.b16 %v6200
    %v6886 = vunpack.c.h.b16 %v6200
    %v6887 = vunpack.c.l.b16 %v6201
    %v6888 = vunpack.c.h.b16 %v6201
    %v6889 = vunpack.c.l.b16 %v6202
    %v6890 = vunpack.c.h.b16 %v6202
    %v6891 = vunpack.c.l.b16 %v6203
    %v6892 = vunpack.c.h.b16 %v6203
    %v6893 = vunpack.c.l.b16 %v6204
    %v6894 = vunpack.c.h.b16 %v6204
    %v6895 = vunpack.c.l.b16 %v6205
    %v6896 = vunpack.c.h.b16 %v6205
    %v6897 = vunpack.c.l.b16 %v6206
    %v6898 = vunpack.c.h.b16 %v6206
    %v6899 = vunpack.c.l.b16 %v6207
    %v6900 = vunpack.c.h.b16 %v6207
    %v6901 = vunpack.c.l.b16 %v6208
    %v6902 = vunpack.c.h.b16 %v6208
    %v6903 = vunpack.c.l.b16 %v6209
    %v6904 = vunpack.c.h.b16 %v6209
    %v6905 = vunpack.c.l.b16 %v6210
    %v6906 = vunpack.c.h.b16 %v6210
    %v6907 = vunpack.c.l.b16 %v6211
    %v6908 = vunpack.c.h.b16 %v6211
    %v6909 = vunpack.c.l.b16 %v6212
    %v6910 = vunpack.c.h.b16 %v6212
    %v6911 = vunpack.c.l.b16 %v6213
    %v6912 = vunpack.c.h.b16 %v6213
    %v6913 = vunpack.c.l.b16 %v6214
    %v6914 = vunpack.c.h.b16 %v6214
    %v6915 = vunpack.c.l.b16 %v6215
    %v6916 = vunpack.c.h.b16 %v6215
    %v6917 = vunpack.c.l.b16 %v6216
    %v6918 = vunpack.c.h.b16 %v6216
    %v6919 = vunpack.c.l.b16 %v6217
    %v6920 = vunpack.c.h.b16 %v6217
    %v6921 = vunpack.c.l.b16 %v6218
    %v6922 = vunpack.c.h.b16 %v6218
    %v6923 = vunpack.c.l.b16 %v6219
    %v6924 = vunpack.c.h.b16 %v6219
    %v6925 = vunpack.c.l.b16 %v6220
    %v6926 = vunpack.c.h.b16 %v6220
    %v6927 = vunpack.c.l.b16 %v6221
    %v6928 = vunpack.c.h.b16 %v6221
    %v6929 = vunpack.c.l.b16 %v6222
    %v6930 = vunpack.c.h.b16 %v6222
    %v6931 = vunpack.c.l.b16 %v6223
    %v6932 = vunpack.c.h.b16 %v6223
    %v6933 = vunpack.c.l.b16 %v6224
    %v6934 = vunpack.c.h.b16 %v6224
    %v6935 = vunpack.c.l.b16 %v6225
    %v6936 = vunpack.c.h.b16 %v6225
    %v6937 = vunpack.c.l.b16 %v6226
    %v6938 = vunpack.c.h.b16 %v6226
    %v6939 = vunpack.c.l.b16 %v6227
    %v6940 = vunpack.c.h.b16 %v6227
    %v6941 = vunpack.c.l.b16 %v6228
    %v6942 = vunpack.c.h.b16 %v6228
    %v6943 = vunpack.c.l.b16 %v6229
    %v6944 = vunpack.c.h.b16 %v6229
    %v6945 = vunpack.c.l.b16 %v6230
    %v6946 = vunpack.c.h.b16 %v6230
    %v6947 = vunpack.c.l.b16 %v6231
    %v6948 = vunpack.c.h.b16 %v6231
    %v6949 = vunpack.c.l.b16 %v6232
    %v6950 = vunpack.c.h.b16 %v6232
    %v6951 = vunpack.c.l.b16 %v6233
    %v6952 = vunpack.c.h.b16 %v6233
    %v6953 = vunpack.c.l.b16 %v6234
    %v6954 = vunpack.c.h.b16 %v6234
    %v6955 = vunpack.c.l.b16 %v6235
    %v6956 = vunpack.c.h.b16 %v6235
    %v6957 = vunpack.c.l.b16 %v6236
    %v6958 = vunpack.c.h.b16 %v6236
    %v6959 = vunpack.c.l.b16 %v6237
    %v6960 = vunpack.c.h.b16 %v6237
    %v6961 = vunpack.c.l.b16 %v6238
    %v6962 = vunpack.c.h.b16 %v6238
    %v6963 = vunpack.c.l.b16 %v6239
    %v6964 = vunpack.c.h.b16 %v6239
    %v6965 = vunpack.c.l.b16 %v6240
    %v6966 = vunpack.c.h.b16 %v6240
    %v6967 = vunpack.c.l.b16 %v6241
    %v6968 = vunpack.c.h.b16 %v6241
    %v6969 = vunpack.c.l.b16 %v6242
    %v6970 = vunpack.c.h.b16 %v6242
    %v6971 = vunpack.c.l.b16 %v6243
    %v6972 = vunpack.c.h.b16 %v6243
    %v6973 = vunpack.c.l.b16 %v6244
    %v6974 = vunpack.c.h.b16 %v6244
    %v6975 = vunpack.c.l.b16 %v6245
    %v6976 = vunpack.c.h.b16 %v6245
    %v6977 = vunpack.c.l.b16 %v6246
    %v6978 = vunpack.c.h.b16 %v6246
    %v6979 = vunpack.c.l.b16 %v6247
    %v6980 = vunpack.c.h.b16 %v6247
    %v6981 = vunpack.c.l.b16 %v6248
    %v6982 = vunpack.c.h.b16 %v6248
    %v6983 = vunpack.c.l.b16 %v6249
    %v6984 = vunpack.c.h.b16 %v6249
    %v6985 = vunpack.c.l.b16 %v6250
    %v6986 = vunpack.c.h.b16 %v6250
    %v6987 = vunpack.c.l.b16 %v6251
    %v6988 = vunpack.c.h.b16 %v6251
    %v6989 = vunpack.c.l.b16 %v6252
    %v6990 = vunpack.c.h.b16 %v6252
    %v6991 = vunpack.c.l.b16 %v6253
    %v6992 = vunpack.c.h.b16 %v6253
    %v6993 = vunpack.c.l.b16 %v6254
    %v6994 = vunpack.c.h.b16 %v6254
    %v6995 = vunpack.c.l.b16 %v6255
    %v6996 = vunpack.c.h.b16 %v6255
    %v6997 = vunpack.c.l.b16 %v6256
    %v6998 = vunpack.c.h.b16 %v6256
    %v6999 = vunpack.c.l.b16 %v6257
    %v7000 = vunpack.c.h.b16 %v6257
    %v7001 = vunpack.c.l.b16 %v6258
    %v7002 = vunpack.c.h.b16 %v6258
    %v7003 = vunpack.c.l.b16 %v6259
    %v7004 = vunpack.c.h.b16 %v6259
    %v7005 = vunpack.c.l.b16 %v6260
    %v7006 = vunpack.c.h.b16 %v6260
    %v7007 = vunpack.c.l.b16 %v6261
    %v7008 = vunpack.c.h.b16 %v6261
    %v7009 = vunpack.c.l.b16 %v6262
    %v7010 = vunpack.c.h.b16 %v6262
    %v7011 = vunpack.c.l.b16 %v6263
    %v7012 = vunpack.c.h.b16 %v6263
    %v7013 = vunpack.c.l.b16 %v6264
    %v7014 = vunpack.c.h.b16 %v6264
    %v7015 = vunpack.c.l.b16 %v6265
    %v7016 = vunpack.c.h.b16 %v6265
    %v7017 = vunpack.c.l.b16 %v6266
    %v7018 = vunpack.c.h.b16 %v6266
    %v7019 = vunpack.c.l.b16 %v6267
    %v7020 = vunpack.c.h.b16 %v6267
    %v7021 = vunpack.c.l.b16 %v6268
    %v7022 = vunpack.c.h.b16 %v6268
    %v7023 = vunpack.c.l.b16 %v6269
    %v7024 = vunpack.c.h.b16 %v6269
    %v7025 = vunpack.c.l.b16 %v6270
    %v7026 = vunpack.c.h.b16 %v6270
    %v7027 = vunpack.c.l.b16 %v6271
    %v7028 = vunpack.c.h.b16 %v6271
    %v7029 = vunpack.c.l.b16 %v6272
    %v7030 = vunpack.c.h.b16 %v6272
    %v7031 = vunpack.c.l.b16 %v6273
    %v7032 = vunpack.c.h.b16 %v6273
    %v7033 = vunpack.c.l.b16 %v6274
    %v7034 = vunpack.c.h.b16 %v6274
    %v7035 = vunpack.c.l.b16 %v6275
    %v7036 = vunpack.c.h.b16 %v6275
    %v7037 = vunpack.c.l.b16 %v6276
    %v7038 = vunpack.c.h.b16 %v6276
    %v7039 = vunpack.c.l.b16 %v6277
    %v7040 = vunpack.c.h.b16 %v6277
    %v7041 = vunpack.c.l.b16 %v6278
    %v7042 = vunpack.c.h.b16 %v6278
    %v7043 = vunpack.c.l.b16 %v6279
    %v7044 = vunpack.c.h.b16 %v6279
    %v7045 = vunpack.c.l.b16 %v6280
    %v7046 = vunpack.c.h.b16 %v6280
    %v7047 = vunpack.c.l.b16 %v6281
    %v7048 = vunpack.c.h.b16 %v6281
    %v7049 = vunpack.c.l.b16 %v6282
    %v7050 = vunpack.c.h.b16 %v6282
    %v7051 = vunpack.c.l.b16 %v6283
    %v7052 = vunpack.c.h.b16 %v6283
    %v7053 = vunpack.c.l.b16 %v6284
    %v7054 = vunpack.c.h.b16 %v6284
    %v7055 = vunpack.c.l.b16 %v6285
    %v7056 = vunpack.c.h.b16 %v6285
    %v7057 = vunpack.c.l.b16 %v6286
    %v7058 = vunpack.c.h.b16 %v6286
    %v7059 = vunpack.c.l.b16 %v6287
    %v7060 = vunpack.c.h.b16 %v6287
    %v7061 = vunpack.c.l.b16 %v6288
    %v7062 = vunpack.c.h.b16 %v6288
    %v7063 = vunpack.c.l.b16 %v6289
    %v7064 = vunpack.c.h.b16 %v6289
    %v7065 = vunpack.c.l.b16 %v6290
    %v7066 = vunpack.c.h.b16 %v6290
    %v7067 = vunpack.c.l.b16 %v6291
    %v7068 = vunpack.c.h.b16 %v6291
    %v7069 = vunpack.c.l.b16 %v6292
    %v7070 = vunpack.c.h.b16 %v6292
    %v7071 = vpack.c.b16 %v6563, %v6559
    %v7072 = vpack.c.b16 %v6564, %v6560
    %v7073 = vpack.c.b16 %v6565, %v6561
    %v7074 = vpack.c.b16 %v6566, %v6562
    %v7075 = vpack.c.b16 %v6571, %v6567
    %v7076 = vpack.c.b16 %v6572, %v6568
    %v7077 = vpack.c.b16 %v6573, %v6569
    %v7078 = vpack.c.b16 %v6574, %v6570
    %v7079 = vpack.c.b16 %v6579, %v6575
    %v7080 = vpack.c.b16 %v6580, %v6576
    %v7081 = vpack.c.b16 %v6581, %v6577
    %v7082 = vpack.c.b16 %v6582, %v6578
    %v7083 = vpack.c.b16 %v6587, %v6583
    %v7084 = vpack.c.b16 %v6588, %v6584
    %v7085 = vpack.c.b16 %v6589, %v6585
    %v7086 = vpack.c.b16 %v6590, %v6586
    %v7087 = vpack.c.b16 %v6595, %v6591
    %v7088 = vpack.c.b16 %v6596, %v6592
    %v7089 = vpack.c.b16 %v6597, %v6593
    %v7090 = vpack.c.b16 %v6598, %v6594
    %v7091 = vpack.c.b16 %v6603, %v6599
    %v7092 = vpack.c.b16 %v6604, %v6600
    %v7093 = vpack.c.b16 %v6605, %v6601
    %v7094 = vpack.c.b16 %v6606, %v6602
    %v7095 = vpack.c.b16 %v6611, %v6607
    %v7096 = vpack.c.b16 %v6612, %v6608
    %v7097 = vpack.c.b16 %v6613, %v6609
    %v7098 = vpack.c.b16 %v6614, %v6610
    %v7099 = vpack.c.b16 %v6619, %v6615
    %v7100 = vpack.c.b16 %v6620, %v6616
    %v7101 = vpack.c.b16 %v6621, %v6617
    %v7102 = vpack.c.b16 %v6622, %v6618
    %v7103 = vpack.c.b16 %v6627, %v6623
    %v7104 = vpack.c.b16 %v6628, %v6624
    %v7105 = vpack.c.b16 %v6629, %v6625
    %v7106 = vpack.c.b16 %v6630, %v6626
    %v7107 = vpack.c.b16 %v6635, %v6631
    %v7108 = vpack.c.b16 %v6636, %v6632
    %v7109 = vpack.c.b16 %v6637, %v6633
    %v7110 = vpack.c.b16 %v6638, %v6634
    %v7111 = vpack.c.b16 %v6643, %v6639
    %v7112 = vpack.c.b16 %v6644, %v6640
    %v7113 = vpack.c.b16 %v6645, %v6641
    %v7114 = vpack.c.b16 %v6646, %v6642
    %v7115 = vpack.c.b16 %v6651, %v6647
    %v7116 = vpack.c.b16 %v6652, %v6648
    %v7117 = vpack.c.b16 %v6653, %v6649
    %v7118 = vpack.c.b16 %v6654, %v6650
    %v7119 = vpack.c.b16 %v6659, %v6655
    %v7120 = vpack.c.b16 %v6660, %v6656
    %v7121 = vpack.c.b16 %v6661, %v6657
    %v7122 = vpack.c.b16 %v6662, %v6658
    %v7123 = vpack.c.b16 %v6667, %v6663
    %v7124 = vpack.c.b16 %v6668, %v6664
    %v7125 = vpack.c.b16 %v6669, %v6665
    %v7126 = vpack.c.b16 %v6670, %v6666
    %v7127 = vpack.c.b16 %v6675, %v6671
    %v7128 = vpack.c.b16 %v6676, %v6672
    %v7129 = vpack.c.b16 %v6677, %v6673
    %v7130 = vpack.c.b16 %v6678, %v6674
    %v7131 = vpack.c.b16 %v6683, %v6679
    %v7132 = vpack.c.b16 %v6684, %v6680
    %v7133 = vpack.c.b16 %v6685, %v6681
    %v7134 = vpack.c.b16 %v6686, %v6682
    %v7135 = vpack.c.b16 %v6691, %v6687
    %v7136 = vpack.c.b16 %v6692, %v6688
    %v7137 = vpack.c.b16 %v6693, %v6689
    %v7138 = vpack.c.b16 %v6694, %v6690
    %v7139 = vpack.c.b16 %v6699, %v6695
    %v7140 = vpack.c.b16 %v6700, %v6696
    %v7141 = vpack.c.b16 %v6701, %v6697
    %v7142 = vpack.c.b16 %v6702, %v6698
    %v7143 = vpack.c.b16 %v6707, %v6703
    %v7144 = vpack.c.b16 %v6708, %v6704
    %v7145 = vpack.c.b16 %v6709, %v6705
    %v7146 = vpack.c.b16 %v6710, %v6706
    %v7147 = vpack.c.b16 %v6715, %v6711
    %v7148 = vpack.c.b16 %v6716, %v6712
    %v7149 = vpack.c.b16 %v6717, %v6713
    %v7150 = vpack.c.b16 %v6718, %v6714
    %v7151 = vpack.c.b16 %v6723, %v6719
    %v7152 = vpack.c.b16 %v6724, %v6720
    %v7153 = vpack.c.b16 %v6725, %v6721
    %v7154 = vpack.c.b16 %v6726, %v6722
    %v7155 = vpack.c.b16 %v6731, %v6727
    %v7156 = vpack.c.b16 %v6732, %v6728
    %v7157 = vpack.c.b16 %v6733, %v6729
    %v7158 = vpack.c.b16 %v6734, %v6730
    %v7159 = vpack.c.b16 %v6739, %v6735
    %v7160 = vpack.c.b16 %v6740, %v6736
    %v7161 = vpack.c.b16 %v6741, %v6737
    %v7162 = vpack.c.b16 %v6742, %v6738
    %v7163 = vpack.c.b16 %v6747, %v6743
    %v7164 = vpack.c.b16 %v6748, %v6744
    %v7165 = vpack.c.b16 %v6749, %v6745
    %v7166 = vpack.c.b16 %v6750, %v6746
    %v7167 = vpack.c.b16 %v6755, %v6751
    %v7168 = vpack.c.b16 %v6756, %v6752
    %v7169 = vpack.c.b16 %v6757, %v6753
    %v7170 = vpack.c.b16 %v6758, %v6754
    %v7171 = vpack.c.b16 %v6763, %v6759
    %v7172 = vpack.c.b16 %v6764, %v6760
    %v7173 = vpack.c.b16 %v6765, %v6761
    %v7174 = vpack.c.b16 %v6766, %v6762
    %v7175 = vpack.c.b16 %v6771, %v6767
    %v7176 = vpack.c.b16 %v6772, %v6768
    %v7177 = vpack.c.b16 %v6773, %v6769
    %v7178 = vpack.c.b16 %v6774, %v6770
    %v7179 = vpack.c.b16 %v6779, %v6775
    %v7180 = vpack.c.b16 %v6780, %v6776
    %v7181 = vpack.c.b16 %v6781, %v6777
    %v7182 = vpack.c.b16 %v6782, %v6778
    %v7183 = vpack.c.b16 %v6787, %v6783
    %v7184 = vpack.c.b16 %v6788, %v6784
    %v7185 = vpack.c.b16 %v6789, %v6785
    %v7186 = vpack.c.b16 %v6790, %v6786
    %v7187 = vpack.c.b16 %v6795, %v6791
    %v7188 = vpack.c.b16 %v6796, %v6792
    %v7189 = vpack.c.b16 %v6797, %v6793
    %v7190 = vpack.c.b16 %v6798, %v6794
    %v7191 = vpack.c.b16 %v6803, %v6799
    %v7192 = vpack.c.b16 %v6804, %v6800
    %v7193 = vpack.c.b16 %v6805, %v6801
    %v7194 = vpack.c.b16 %v6806, %v6802
    %v7195 = vpack.c.b16 %v6811, %v6807
    %v7196 = vpack.c.b16 %v6812, %v6808
    %v7197 = vpack.c.b16 %v6813, %v6809
    %v7198 = vpack.c.b16 %v6814, %v6810
    %v7199 = vpack.c.b16 %v6819, %v6815
    %v7200 = vpack.c.b16 %v6820, %v6816
    %v7201 = vpack.c.b16 %v6821, %v6817
    %v7202 = vpack.c.b16 %v6822, %v6818
    %v7203 = vpack.c.b16 %v6827, %v6823
    %v7204 = vpack.c.b16 %v6828, %v6824
    %v7205 = vpack.c.b16 %v6829, %v6825
    %v7206 = vpack.c.b16 %v6830, %v6826
    %v7207 = vpack.c.b16 %v6835, %v6831
    %v7208 = vpack.c.b16 %v6836, %v6832
    %v7209 = vpack.c.b16 %v6837, %v6833
    %v7210 = vpack.c.b16 %v6838, %v6834
    %v7211 = vpack.c.b16 %v6843, %v6839
    %v7212 = vpack.c.b16 %v6844, %v6840
    %v7213 = vpack.c.b16 %v6845, %v6841
    %v7214 = vpack.c.b16 %v6846, %v6842
    %v7215 = vpack.c.b16 %v6851, %v6847
    %v7216 = vpack.c.b16 %v6852, %v6848
    %v7217 = vpack.c.b16 %v6853, %v6849
    %v7218 = vpack.c.b16 %v6854, %v6850
    %v7219 = vpack.c.b16 %v6859, %v6855
    %v7220 = vpack.c.b16 %v6860, %v6856
    %v7221 = vpack.c.b16 %v6861, %v6857
    %v7222 = vpack.c.b16 %v6862, %v6858
    %v7223 = vpack.c.b16 %v6867, %v6863
    %v7224 = vpack.c.b16 %v6868, %v6864
    %v7225 = vpack.c.b16 %v6869, %v6865
    %v7226 = vpack.c.b16 %v6870, %v6866
    %v7227 = vpack.c.b16 %v6875, %v6871
    %v7228 = vpack.c.b16 %v6876, %v6872
    %v7229 = vpack.c.b16 %v6877, %v6873
    %v7230 = vpack.c.b16 %v6878, %v6874
    %v7231 = vpack.c.b16 %v6883, %v6879
    %v7232 = vpack.c.b16 %v6884, %v6880
    %v7233 = vpack.c.b16 %v6885, %v6881
    %v7234 = vpack.c.b16 %v6886, %v6882
    %v7235 = vpack.c.b16 %v6891, %v6887
    %v7236 = vpack.c.b16 %v6892, %v6888
    %v7237 = vpack.c.b16 %v6893, %v6889
    %v7238 = vpack.c.b16 %v6894, %v6890
    %v7239 = vpack.c.b16 %v6899, %v6895
    %v7240 = vpack.c.b16 %v6900, %v6896
    %v7241 = vpack.c.b16 %v6901, %v6897
    %v7242 = vpack.c.b16 %v6902, %v6898
    %v7243 = vpack.c.b16 %v6907, %v6903
    %v7244 = vpack.c.b16 %v6908, %v6904
    %v7245 = vpack.c.b16 %v6909, %v6905
    %v7246 = vpack.c.b16 %v6910, %v6906
    %v7247 = vpack.c.b16 %v6915, %v6911
    %v7248 = vpack.c.b16 %v6916, %v6912
    %v7249 = vpack.c.b16 %v6917, %v6913
    %v7250 = vpack.c.b16 %v6918, %v6914
    %v7251 = vpack.c.b16 %v6923, %v6919
    %v7252 = vpack.c.b16 %v6924, %v6920
    %v7253 = vpack.c.b16 %v6925, %v6921
    %v7254 = vpack.c.b16 %v6926, %v6922
    %v7255 = vpack.c.b16 %v6931, %v6927
    %v7256 = vpack.c.b16 %v6932, %v6928
    %v7257 = vpack.c.b16 %v6933, %v6929
    %v7258 = vpack.c.b16 %v6934, %v6930
    %v7259 = vpack.c.b16 %v6939, %v6935
    %v7260 = vpack.c.b16 %v6940, %v6936
    %v7261 = vpack.c.b16 %v6941, %v6937
    %v7262 = vpack.c.b16 %v6942, %v6938
    %v7263 = vpack.c.b16 %v6947, %v6943
    %v7264 = vpack.c.b16 %v6948, %v6944
    %v7265 = vpack.c.b16 %v6949, %v6945
    %v7266 = vpack.c.b16 %v6950, %v6946
    %v7267 = vpack.c.b16 %v6955, %v6951
    %v7268 = vpack.c.b16 %v6956, %v6952
    %v7269 = vpack.c.b16 %v6957, %v6953
    %v7270 = vpack.c.b16 %v6958, %v6954
    %v7271 = vpack.c.b16 %v6963, %v6959
    %v7272 = vpack.c.b16 %v6964, %v6960
    %v7273 = vpack.c.b16 %v6965, %v6961
    %v7274 = vpack.c.b16 %v6966, %v6962
    %v7275 = vpack.c.b16 %v6971, %v6967
    %v7276 = vpack.c.b16 %v6972, %v6968
    %v7277 = vpack.c.b16 %v6973, %v6969
    %v7278 = vpack.c.b16 %v6974, %v6970
    %v7279 = vpack.c.b16 %v6979, %v6975
    %v7280 = vpack.c.b16 %v6980, %v6976
    %v7281 = vpack.c.b16 %v6981, %v6977
    %v7282 = vpack.c.b16 %v6982, %v6978
    %v7283 = vpack.c.b16 %v6987, %v6983
    %v7284 = vpack.c.b16 %v6988, %v6984
    %v7285 = vpack.c.b16 %v6989, %v6985
    %v7286 = vpack.c.b16 %v6990, %v6986
    %v7287 = vpack.c.b16 %v6995, %v6991
    %v7288 = vpack.c.b16 %v6996, %v6992
    %v7289 = vpack.c.b16 %v6997, %v6993
    %v7290 = vpack.c.b16 %v6998, %v6994
    %v7291 = vpack.c.b16 %v7003, %v6999
    %v7292 = vpack.c.b16 %v7004, %v7000
    %v7293 = vpack.c.b16 %v7005, %v7001
    %v7294 = vpack.c.b16 %v7006, %v7002
    %v7295 = vpack.c.b16 %v7011, %v7007
    %v7296 = vpack.c.b16 %v7012, %v7008
    %v7297 = vpack.c.b16 %v7013, %v7009
    %v7298 = vpack.c.b16 %v7014, %v7010
    %v7299 = vpack.c.b16 %v7019, %v7015
    %v7300 = vpack.c.b16 %v7020, %v7016
    %v7301 = vpack.c.b16 %v7021, %v7017
    %v7302 = vpack.c.b16 %v7022, %v7018
    %v7303 = vpack.c.b16 %v7027, %v7023
    %v7304 = vpack.c.b16 %v7028, %v7024
    %v7305 = vpack.c.b16 %v7029, %v7025
    %v7306 = vpack.c.b16 %v7030, %v7026
    %v7307 = vpack.c.b16 %v7035, %v7031
    %v7308 = vpack.c.b16 %v7036, %v7032
    %v7309 = vpack.c.b16 %v7037, %v7033
    %v7310 = vpack.c.b16 %v7038, %v7034
    %v7311 = vpack.c.b16 %v7043, %v7039
    %v7312 = vpack.c.b16 %v7044, %v7040
    %v7313 = vpack.c.b16 %v7045, %v7041
    %v7314 = vpack.c.b16 %v7046, %v7042
    %v7315 = vpack.c.b16 %v7051, %v7047
    %v7316 = vpack.c.b16 %v7052, %v7048
    %v7317 = vpack.c.b16 %v7053, %v7049
    %v7318 = vpack.c.b16 %v7054, %v7050
    %v7319 = vpack.c.b16 %v7059, %v7055
    %v7320 = vpack.c.b16 %v7060, %v7056
    %v7321 = vpack.c.b16 %v7061, %v7057
    %v7322 = vpack.c.b16 %v7062, %v7058
    %v7323 = vpack.c.b16 %v7067, %v7063
    %v7324 = vpack.c.b16 %v7068, %v7064
    %v7325 = vpack.c.b16 %v7069, %v7065
    %v7326 = vpack.c.b16 %v7070, %v7066
    %7583 = vmatpush.bf16.msra.mxu0 %v7099
    %7584 = vmatpush.bf16.msra.mxu0 %v7095
    %7585 = vmatpush.bf16.msra.mxu0 %v7091
    %7586 = vmatpush.bf16.msra.mxu0 %v7087
    %7587 = vmatpush.bf16.msra.mxu0 %v7083
    %7588 = vmatpush.bf16.msra.mxu0 %v7079
    %7589 = vmatpush.bf16.msra.mxu0 %v7075
    %7590 = vmatpush.bf16.msra.mxu0 %v7071
    %7591 = vmatmul.bf16.gmra.mxu0 %v6029
    %v7592 = vpop.f32.mrf.mxu0
    %v7593 = vadd.f32 %v6295, %v7592
    %v7594 = vpop.f32.mrf.mxu0
    %7595 = vdwg.mxu0
    %7596 = vmatpush.bf16.msra.mxu0 %v7131
    %7597 = vmatpush.bf16.msra.mxu0 %v7127
    %7598 = vmatpush.bf16.msra.mxu0 %v7123
    %7599 = vmatpush.bf16.msra.mxu0 %v7119
    %7600 = vmatpush.bf16.msra.mxu0 %v7115
    %7601 = vmatpush.bf16.msra.mxu0 %v7111
    %7602 = vmatpush.bf16.msra.mxu0 %v7107
    %7603 = vmatpush.bf16.msra.mxu0 %v7103
    %7604 = vmatmul.bf16.gmra.mxu0 %v6030
    %v7605 = vpop.f32.mrf.mxu0
    %v7606 = vadd.f32 %v7593, %v7605
    %v7607 = vpop.f32.mrf.mxu0
    %7608 = vdwg.mxu0
    %7609 = vmatpush.bf16.msra.mxu0 %v7163
    %7610 = vmatpush.bf16.msra.mxu0 %v7159
    %7611 = vmatpush.bf16.msra.mxu0 %v7155
    %7612 = vmatpush.bf16.msra.mxu0 %v7151
    %7613 = vmatpush.bf16.msra.mxu0 %v7147
    %7614 = vmatpush.bf16.msra.mxu0 %v7143
    %7615 = vmatpush.bf16.msra.mxu0 %v7139
    %7616 = vmatpush.bf16.msra.mxu0 %v7135
    %7617 = vmatmul.bf16.gmra.mxu0 %v6031
    %v7618 = vpop.f32.mrf.mxu0
    %v7619 = vadd.f32 %v7606, %v7618
    %v7620 = vpop.f32.mrf.mxu0
    %7621 = vdwg.mxu0
    %7622 = vmatpush.bf16.msra.mxu0 %v7195
    %7623 = vmatpush.bf16.msra.mxu0 %v7191
    %7624 = vmatpush.bf16.msra.mxu0 %v7187
    %7625 = vmatpush.bf16.msra.mxu0 %v7183
    %7626 = vmatpush.bf16.msra.mxu0 %v7179
    %7627 = vmatpush.bf16.msra.mxu0 %v7175
    %7628 = vmatpush.bf16.msra.mxu0 %v7171
    %7629 = vmatpush.bf16.msra.mxu0 %v7167
    %7630 = vmatmul.bf16.gmra.mxu0 %v6032
    %v7631 = vpop.f32.mrf.mxu0
    %v7632 = vadd.f32 %v7619, %v7631
    %v7633 = vpop.f32.mrf.mxu0
    %7634 = vdwg.mxu0
    %7635 = vmatpush.bf16.msra.mxu0 %v7227
    %7636 = vmatpush.bf16.msra.mxu0 %v7223
    %7637 = vmatpush.bf16.msra.mxu0 %v7219
    %7638 = vmatpush.bf16.msra.mxu0 %v7215
    %7639 = vmatpush.bf16.msra.mxu0 %v7211
    %7640 = vmatpush.bf16.msra.mxu0 %v7207
    %7641 = vmatpush.bf16.msra.mxu0 %v7203
    %7642 = vmatpush.bf16.msra.mxu0 %v7199
    %7643 = vmatmul.bf16.gmra.mxu0 %v6033
    %v7644 = vpop.f32.mrf.mxu0
    %v7645 = vadd.f32 %v7632, %v7644
    %v7646 = vpop.f32.mrf.mxu0
    %7647 = vdwg.mxu0
    %7648 = vmatpush.bf16.msra.mxu0 %v7259
    %7649 = vmatpush.bf16.msra.mxu0 %v7255
    %7650 = vmatpush.bf16.msra.mxu0 %v7251
    %7651 = vmatpush.bf16.msra.mxu0 %v7247
    %7652 = vmatpush.bf16.msra.mxu0 %v7243
    %7653 = vmatpush.bf16.msra.mxu0 %v7239
    %7654 = vmatpush.bf16.msra.mxu0 %v7235
    %7655 = vmatpush.bf16.msra.mxu0 %v7231
    %7656 = vmatmul.bf16.gmra.mxu0 %v6034
    %v7657 = vpop.f32.mrf.mxu0
    %v7658 = vadd.f32 %v7645, %v7657
    %v7659 = vpop.f32.mrf.mxu0
    %7660 = vdwg.mxu0
    %7661 = vmatpush.bf16.msra.mxu0 %v7291
    %7662 = vmatpush.bf16.msra.mxu0 %v7287
    %7663 = vmatpush.bf16.msra.mxu0 %v7283
    %7664 = vmatpush.bf16.msra.mxu0 %v7279
    %7665 = vmatpush.bf16.msra.mxu0 %v7275
    %7666 = vmatpush.bf16.msra.mxu0 %v7271
    %7667 = vmatpush.bf16.msra.mxu0 %v7267
    %7668 = vmatpush.bf16.msra.mxu0 %v7263
    %7669 = vmatmul.bf16.gmra.mxu0 %v6035
    %v7670 = vpop.f32.mrf.mxu0
    %v7671 = vadd.f32 %v7658, %v7670
    %v7672 = vpop.f32.mrf.mxu0
    %7673 = vdwg.mxu0
    %7674 = vmatpush.bf16.msra.mxu0 %v7323
    %7675 = vmatpush.bf16.msra.mxu0 %v7319
    %7676 = vmatpush.bf16.msra.mxu0 %v7315
    %7677 = vmatpush.bf16.msra.mxu0 %v7311
    %7678 = vmatpush.bf16.msra.mxu0 %v7307
    %7679 = vmatpush.bf16.msra.mxu0 %v7303
    %7680 = vmatpush.bf16.msra.mxu0 %v7299
    %7681 = vmatpush.bf16.msra.mxu0 %v7295
    %7682 = vmatmul.bf16.gmra.mxu0 %v6036
    %v7683 = vpop.f32.mrf.mxu0
    %v7684 = vadd.f32 %v7671, %v7683
    %v7685 = vpop.f32.mrf.mxu0
    %7686 = vdwg.mxu0
    %7687 = vmatpush.bf16.msra.mxu0 %v7100
    %7688 = vmatpush.bf16.msra.mxu0 %v7096
    %7689 = vmatpush.bf16.msra.mxu0 %v7092
    %7690 = vmatpush.bf16.msra.mxu0 %v7088
    %7691 = vmatpush.bf16.msra.mxu0 %v7084
    %7692 = vmatpush.bf16.msra.mxu0 %v7080
    %7693 = vmatpush.bf16.msra.mxu0 %v7076
    %7694 = vmatpush.bf16.msra.mxu0 %v7072
    %7695 = vmatmul.bf16.gmra.mxu0 %v6029
    %v7696 = vpop.f32.mrf.mxu0
    %v7697 = vadd.f32 %v6296, %v7696
    %v7698 = vpop.f32.mrf.mxu0
    %7699 = vdwg.mxu0
    %7700 = vmatpush.bf16.msra.mxu0 %v7132
    %7701 = vmatpush.bf16.msra.mxu0 %v7128
    %7702 = vmatpush.bf16.msra.mxu0 %v7124
    %7703 = vmatpush.bf16.msra.mxu0 %v7120
    %7704 = vmatpush.bf16.msra.mxu0 %v7116
    %7705 = vmatpush.bf16.msra.mxu0 %v7112
    %7706 = vmatpush.bf16.msra.mxu0 %v7108
    %7707 = vmatpush.bf16.msra.mxu0 %v7104
    %7708 = vmatmul.bf16.gmra.mxu0 %v6030
    %v7709 = vpop.f32.mrf.mxu0
    %v7710 = vadd.f32 %v7697, %v7709
    %v7711 = vpop.f32.mrf.mxu0
    %7712 = vdwg.mxu0
    %7713 = vmatpush.bf16.msra.mxu0 %v7164
    %7714 = vmatpush.bf16.msra.mxu0 %v7160
    %7715 = vmatpush.bf16.msra.mxu0 %v7156
    %7716 = vmatpush.bf16.msra.mxu0 %v7152
    %7717 = vmatpush.bf16.msra.mxu0 %v7148
    %7718 = vmatpush.bf16.msra.mxu0 %v7144
    %7719 = vmatpush.bf16.msra.mxu0 %v7140
    %7720 = vmatpush.bf16.msra.mxu0 %v7136
    %7721 = vmatmul.bf16.gmra.mxu0 %v6031
    %v7722 = vpop.f32.mrf.mxu0
    %v7723 = vadd.f32 %v7710, %v7722
    %v7724 = vpop.f32.mrf.mxu0
    %7725 = vdwg.mxu0
    %7726 = vmatpush.bf16.msra.mxu0 %v7196
    %7727 = vmatpush.bf16.msra.mxu0 %v7192
    %7728 = vmatpush.bf16.msra.mxu0 %v7188
    %7729 = vmatpush.bf16.msra.mxu0 %v7184
    %7730 = vmatpush.bf16.msra.mxu0 %v7180
    %7731 = vmatpush.bf16.msra.mxu0 %v7176
    %7732 = vmatpush.bf16.msra.mxu0 %v7172
    %7733 = vmatpush.bf16.msra.mxu0 %v7168
    %7734 = vmatmul.bf16.gmra.mxu0 %v6032
    %v7735 = vpop.f32.mrf.mxu0
    %v7736 = vadd.f32 %v7723, %v7735
    %v7737 = vpop.f32.mrf.mxu0
    %7738 = vdwg.mxu0
    %7739 = vmatpush.bf16.msra.mxu0 %v7228
    %7740 = vmatpush.bf16.msra.mxu0 %v7224
    %7741 = vmatpush.bf16.msra.mxu0 %v7220
    %7742 = vmatpush.bf16.msra.mxu0 %v7216
    %7743 = vmatpush.bf16.msra.mxu0 %v7212
    %7744 = vmatpush.bf16.msra.mxu0 %v7208
    %7745 = vmatpush.bf16.msra.mxu0 %v7204
    %7746 = vmatpush.bf16.msra.mxu0 %v7200
    %7747 = vmatmul.bf16.gmra.mxu0 %v6033
    %v7748 = vpop.f32.mrf.mxu0
    %v7749 = vadd.f32 %v7736, %v7748
    %v7750 = vpop.f32.mrf.mxu0
    %7751 = vdwg.mxu0
    %7752 = vmatpush.bf16.msra.mxu0 %v7260
    %7753 = vmatpush.bf16.msra.mxu0 %v7256
    %7754 = vmatpush.bf16.msra.mxu0 %v7252
    %7755 = vmatpush.bf16.msra.mxu0 %v7248
    %7756 = vmatpush.bf16.msra.mxu0 %v7244
    %7757 = vmatpush.bf16.msra.mxu0 %v7240
    %7758 = vmatpush.bf16.msra.mxu0 %v7236
    %7759 = vmatpush.bf16.msra.mxu0 %v7232
    %7760 = vmatmul.bf16.gmra.mxu0 %v6034
    %v7761 = vpop.f32.mrf.mxu0
    %v7762 = vadd.f32 %v7749, %v7761
    %v7763 = vpop.f32.mrf.mxu0
    %7764 = vdwg.mxu0
    %7765 = vmatpush.bf16.msra.mxu0 %v7292
    %7766 = vmatpush.bf16.msra.mxu0 %v7288
    %7767 = vmatpush.bf16.msra.mxu0 %v7284
    %7768 = vmatpush.bf16.msra.mxu0 %v7280
    %7769 = vmatpush.bf16.msra.mxu0 %v7276
    %7770 = vmatpush.bf16.msra.mxu0 %v7272
    %7771 = vmatpush.bf16.msra.mxu0 %v7268
    %7772 = vmatpush.bf16.msra.mxu0 %v7264
    %7773 = vmatmul.bf16.gmra.mxu0 %v6035
    %v7774 = vpop.f32.mrf.mxu0
    %v7775 = vadd.f32 %v7762, %v7774
    %v7776 = vpop.f32.mrf.mxu0
    %7777 = vdwg.mxu0
    %7778 = vmatpush.bf16.msra.mxu0 %v7324
    %7779 = vmatpush.bf16.msra.mxu0 %v7320
    %7780 = vmatpush.bf16.msra.mxu0 %v7316
    %7781 = vmatpush.bf16.msra.mxu0 %v7312
    %7782 = vmatpush.bf16.msra.mxu0 %v7308
    %7783 = vmatpush.bf16.msra.mxu0 %v7304
    %7784 = vmatpush.bf16.msra.mxu0 %v7300
    %7785 = vmatpush.bf16.msra.mxu0 %v7296
    %7786 = vmatmul.bf16.gmra.mxu0 %v6036
    %v7787 = vpop.f32.mrf.mxu0
    %v7788 = vadd.f32 %v7775, %v7787
    %v7789 = vpop.f32.mrf.mxu0
    %7790 = vdwg.mxu0
    %7791 = vmatpush.bf16.msra.mxu0 %v7101
    %7792 = vmatpush.bf16.msra.mxu0 %v7097
    %7793 = vmatpush.bf16.msra.mxu0 %v7093
    %7794 = vmatpush.bf16.msra.mxu0 %v7089
    %7795 = vmatpush.bf16.msra.mxu0 %v7085
    %7796 = vmatpush.bf16.msra.mxu0 %v7081
    %7797 = vmatpush.bf16.msra.mxu0 %v7077
    %7798 = vmatpush.bf16.msra.mxu0 %v7073
    %7799 = vmatmul.bf16.gmra.mxu0 %v6029
    %v7800 = vpop.f32.mrf.mxu0
    %v7801 = vadd.f32 %v6297, %v7800
    %v7802 = vpop.f32.mrf.mxu0
    %7803 = vdwg.mxu0
    %7804 = vmatpush.bf16.msra.mxu0 %v7133
    %7805 = vmatpush.bf16.msra.mxu0 %v7129
    %7806 = vmatpush.bf16.msra.mxu0 %v7125
    %7807 = vmatpush.bf16.msra.mxu0 %v7121
    %7808 = vmatpush.bf16.msra.mxu0 %v7117
    %7809 = vmatpush.bf16.msra.mxu0 %v7113
    %7810 = vmatpush.bf16.msra.mxu0 %v7109
    %7811 = vmatpush.bf16.msra.mxu0 %v7105
    %7812 = vmatmul.bf16.gmra.mxu0 %v6030
    %v7813 = vpop.f32.mrf.mxu0
    %v7814 = vadd.f32 %v7801, %v7813
    %v7815 = vpop.f32.mrf.mxu0
    %7816 = vdwg.mxu0
    %7817 = vmatpush.bf16.msra.mxu0 %v7165
    %7818 = vmatpush.bf16.msra.mxu0 %v7161
    %7819 = vmatpush.bf16.msra.mxu0 %v7157
    %7820 = vmatpush.bf16.msra.mxu0 %v7153
    %7821 = vmatpush.bf16.msra.mxu0 %v7149
    %7822 = vmatpush.bf16.msra.mxu0 %v7145
    %7823 = vmatpush.bf16.msra.mxu0 %v7141
    %7824 = vmatpush.bf16.msra.mxu0 %v7137
    %7825 = vmatmul.bf16.gmra.mxu0 %v6031
    %v7826 = vpop.f32.mrf.mxu0
    %v7827 = vadd.f32 %v7814, %v7826
    %v7828 = vpop.f32.mrf.mxu0
    %7829 = vdwg.mxu0
    %7830 = vmatpush.bf16.msra.mxu0 %v7197
    %7831 = vmatpush.bf16.msra.mxu0 %v7193
    %7832 = vmatpush.bf16.msra.mxu0 %v7189
    %7833 = vmatpush.bf16.msra.mxu0 %v7185
    %7834 = vmatpush.bf16.msra.mxu0 %v7181
    %7835 = vmatpush.bf16.msra.mxu0 %v7177
    %7836 = vmatpush.bf16.msra.mxu0 %v7173
    %7837 = vmatpush.bf16.msra.mxu0 %v7169
    %7838 = vmatmul.bf16.gmra.mxu0 %v6032
    %v7839 = vpop.f32.mrf.mxu0
    %v7840 = vadd.f32 %v7827, %v7839
    %v7841 = vpop.f32.mrf.mxu0
    %7842 = vdwg.mxu0
    %7843 = vmatpush.bf16.msra.mxu0 %v7229
    %7844 = vmatpush.bf16.msra.mxu0 %v7225
    %7845 = vmatpush.bf16.msra.mxu0 %v7221
    %7846 = vmatpush.bf16.msra.mxu0 %v7217
    %7847 = vmatpush.bf16.msra.mxu0 %v7213
    %7848 = vmatpush.bf16.msra.mxu0 %v7209
    %7849 = vmatpush.bf16.msra.mxu0 %v7205
    %7850 = vmatpush.bf16.msra.mxu0 %v7201
    %7851 = vmatmul.bf16.gmra.mxu0 %v6033
    %v7852 = vpop.f32.mrf.mxu0
    %v7853 = vadd.f32 %v7840, %v7852
    %v7854 = vpop.f32.mrf.mxu0
    %7855 = vdwg.mxu0
    %7856 = vmatpush.bf16.msra.mxu0 %v7261
    %7857 = vmatpush.bf16.msra.mxu0 %v7257
    %7858 = vmatpush.bf16.msra.mxu0 %v7253
    %7859 = vmatpush.bf16.msra.mxu0 %v7249
    %7860 = vmatpush.bf16.msra.mxu0 %v7245
    %7861 = vmatpush.bf16.msra.mxu0 %v7241
    %7862 = vmatpush.bf16.msra.mxu0 %v7237
    %7863 = vmatpush.bf16.msra.mxu0 %v7233
    %7864 = vmatmul.bf16.gmra.mxu0 %v6034
    %v7865 = vpop.f32.mrf.mxu0
    %v7866 = vadd.f32 %v7853, %v7865
    %v7867 = vpop.f32.mrf.mxu0
    %7868 = vdwg.mxu0
    %7869 = vmatpush.bf16.msra.mxu0 %v7293
    %7870 = vmatpush.bf16.msra.mxu0 %v7289
    %7871 = vmatpush.bf16.msra.mxu0 %v7285
    %7872 = vmatpush.bf16.msra.mxu0 %v7281
    %7873 = vmatpush.bf16.msra.mxu0 %v7277
    %7874 = vmatpush.bf16.msra.mxu0 %v7273
    %7875 = vmatpush.bf16.msra.mxu0 %v7269
    %7876 = vmatpush.bf16.msra.mxu0 %v7265
    %7877 = vmatmul.bf16.gmra.mxu0 %v6035
    %v7878 = vpop.f32.mrf.mxu0
    %v7879 = vadd.f32 %v7866, %v7878
    %v7880 = vpop.f32.mrf.mxu0
    %7881 = vdwg.mxu0
    %7882 = vmatpush.bf16.msra.mxu0 %v7325
    %7883 = vmatpush.bf16.msra.mxu0 %v7321
    %7884 = vmatpush.bf16.msra.mxu0 %v7317
    %7885 = vmatpush.bf16.msra.mxu0 %v7313
    %7886 = vmatpush.bf16.msra.mxu0 %v7309
    %7887 = vmatpush.bf16.msra.mxu0 %v7305
    %7888 = vmatpush.bf16.msra.mxu0 %v7301
    %7889 = vmatpush.bf16.msra.mxu0 %v7297
    %7890 = vmatmul.bf16.gmra.mxu0 %v6036
    %v7891 = vpop.f32.mrf.mxu0
    %v7892 = vadd.f32 %v7879, %v7891
    %v7893 = vpop.f32.mrf.mxu0
    %7894 = vdwg.mxu0
    %7895 = vmatpush.bf16.msra.mxu0 %v7102
    %7896 = vmatpush.bf16.msra.mxu0 %v7098
    %7897 = vmatpush.bf16.msra.mxu0 %v7094
    %7898 = vmatpush.bf16.msra.mxu0 %v7090
    %7899 = vmatpush.bf16.msra.mxu0 %v7086
    %7900 = vmatpush.bf16.msra.mxu0 %v7082
    %7901 = vmatpush.bf16.msra.mxu0 %v7078
    %7902 = vmatpush.bf16.msra.mxu0 %v7074
    %7903 = vmatmul.bf16.gmra.mxu0 %v6029
    %v7904 = vpop.f32.mrf.mxu0
    %v7905 = vadd.f32 %v6298, %v7904
    %v7906 = vpop.f32.mrf.mxu0
    %7907 = vdwg.mxu0
    %7908 = vmatpush.bf16.msra.mxu0 %v7134
    %7909 = vmatpush.bf16.msra.mxu0 %v7130
    %7910 = vmatpush.bf16.msra.mxu0 %v7126
    %7911 = vmatpush.bf16.msra.mxu0 %v7122
    %7912 = vmatpush.bf16.msra.mxu0 %v7118
    %7913 = vmatpush.bf16.msra.mxu0 %v7114
    %7914 = vmatpush.bf16.msra.mxu0 %v7110
    %7915 = vmatpush.bf16.msra.mxu0 %v7106
    %7916 = vmatmul.bf16.gmra.mxu0 %v6030
    %v7917 = vpop.f32.mrf.mxu0
    %v7918 = vadd.f32 %v7905, %v7917
    %v7919 = vpop.f32.mrf.mxu0
    %7920 = vdwg.mxu0
    %7921 = vmatpush.bf16.msra.mxu0 %v7166
    %7922 = vmatpush.bf16.msra.mxu0 %v7162
    %7923 = vmatpush.bf16.msra.mxu0 %v7158
    %7924 = vmatpush.bf16.msra.mxu0 %v7154
    %7925 = vmatpush.bf16.msra.mxu0 %v7150
    %7926 = vmatpush.bf16.msra.mxu0 %v7146
    %7927 = vmatpush.bf16.msra.mxu0 %v7142
    %7928 = vmatpush.bf16.msra.mxu0 %v7138
    %7929 = vmatmul.bf16.gmra.mxu0 %v6031
    %v7930 = vpop.f32.mrf.mxu0
    %v7931 = vadd.f32 %v7918, %v7930
    %v7932 = vpop.f32.mrf.mxu0
    %7933 = vdwg.mxu0
    %7934 = vmatpush.bf16.msra.mxu0 %v7198
    %7935 = vmatpush.bf16.msra.mxu0 %v7194
    %7936 = vmatpush.bf16.msra.mxu0 %v7190
    %7937 = vmatpush.bf16.msra.mxu0 %v7186
    %7938 = vmatpush.bf16.msra.mxu0 %v7182
    %7939 = vmatpush.bf16.msra.mxu0 %v7178
    %7940 = vmatpush.bf16.msra.mxu0 %v7174
    %7941 = vmatpush.bf16.msra.mxu0 %v7170
    %7942 = vmatmul.bf16.gmra.mxu0 %v6032
    %v7943 = vpop.f32.mrf.mxu0
    %v7944 = vadd.f32 %v7931, %v7943
    %v7945 = vpop.f32.mrf.mxu0
    %7946 = vdwg.mxu0
    %7947 = vmatpush.bf16.msra.mxu0 %v7230
    %7948 = vmatpush.bf16.msra.mxu0 %v7226
    %7949 = vmatpush.bf16.msra.mxu0 %v7222
    %7950 = vmatpush.bf16.msra.mxu0 %v7218
    %7951 = vmatpush.bf16.msra.mxu0 %v7214
    %7952 = vmatpush.bf16.msra.mxu0 %v7210
    %7953 = vmatpush.bf16.msra.mxu0 %v7206
    %7954 = vmatpush.bf16.msra.mxu0 %v7202
    %7955 = vmatmul.bf16.gmra.mxu0 %v6033
    %v7956 = vpop.f32.mrf.mxu0
    %v7957 = vadd.f32 %v7944, %v7956
    %v7958 = vpop.f32.mrf.mxu0
    %7959 = vdwg.mxu0
    %7960 = vmatpush.bf16.msra.mxu0 %v7262
    %7961 = vmatpush.bf16.msra.mxu0 %v7258
    %7962 = vmatpush.bf16.msra.mxu0 %v7254
    %7963 = vmatpush.bf16.msra.mxu0 %v7250
    %7964 = vmatpush.bf16.msra.mxu0 %v7246
    %7965 = vmatpush.bf16.msra.mxu0 %v7242
    %7966 = vmatpush.bf16.msra.mxu0 %v7238
    %7967 = vmatpush.bf16.msra.mxu0 %v7234
    %7968 = vmatmul.bf16.gmra.mxu0 %v6034
    %v7969 = vpop.f32.mrf.mxu0
    %v7970 = vadd.f32 %v7957, %v7969
    %v7971 = vpop.f32.mrf.mxu0
    %7972 = vdwg.mxu0
    %7973 = vmatpush.bf16.msra.mxu0 %v7294
    %7974 = vmatpush.bf16.msra.mxu0 %v7290
    %7975 = vmatpush.bf16.msra.mxu0 %v7286
    %7976 = vmatpush.bf16.msra.mxu0 %v7282
    %7977 = vmatpush.bf16.msra.mxu0 %v7278
    %7978 = vmatpush.bf16.msra.mxu0 %v7274
    %7979 = vmatpush.bf16.msra.mxu0 %v7270
    %7980 = vmatpush.bf16.msra.mxu0 %v7266
    %7981 = vmatmul.bf16.gmra.mxu0 %v6035
    %v7982 = vpop.f32.mrf.mxu0
    %v7983 = vadd.f32 %v7970, %v7982
    %v7984 = vpop.f32.mrf.mxu0
    %7985 = vdwg.mxu0
    %7986 = vmatpush.bf16.msra.mxu0 %v7326
    %7987 = vmatpush.bf16.msra.mxu0 %v7322
    %7988 = vmatpush.bf16.msra.mxu0 %v7318
    %7989 = vmatpush.bf16.msra.mxu0 %v7314
    %7990 = vmatpush.bf16.msra.mxu0 %v7310
    %7991 = vmatpush.bf16.msra.mxu0 %v7306
    %7992 = vmatpush.bf16.msra.mxu0 %v7302
    %7993 = vmatpush.bf16.msra.mxu0 %v7298
    %7994 = vmatmul.bf16.gmra.mxu0 %v6036
    %v7995 = vpop.f32.mrf.mxu0
    %v7996 = vadd.f32 %v7983, %v7995
    %v7997 = vpop.f32.mrf.mxu0
    %7998 = vdwg.mxu0
    %v7999 = vmul.f32 %v5067, %v5067
    %v8000 = vmul.f32 %v5379, %v5379
    %v8001 = vmul.f32 %v5691, %v5691
    %v8002 = vmul.f32 %v6003, %v6003
    %vm8003 = vcmask 1040384
    %v8004 = vsel %vm8003, %v7999, 0.0
    %v8005 = vsel %vm8003, %v8000, 0.0
    %v8006 = vadd.f32 %v8004, %v8005
    %v8007 = vsel %vm8003, %v8001, 0.0
    %v8008 = vadd.f32 %v8006, %v8007
    %v8009 = vsel %vm8003, %v8002, 0.0
    %v8010 = vadd.f32 %v8008, %v8009
    %8011 = vadd.xlane.f32.xlu0 %v8010
    %v8012 = vpop.xlane.xlu0 %8011
    %v8013 = vadd.f32 %v8012, 1e-12
    %v8014 = vrsqrt.pop %v8013
    %v8015 = vmul.f32 %v8014, %v8013
    %v8016 = vmul.f32 %v8015, %v8014
    %v8017 = vmul.f32 0.5, %v8016
    %v8018 = vsub.f32 1.5, %v8017
    %v8019 = vmul.f32 %v8014, %v8018
    %vm8020 = vweird.f32 %v8013
    %vm8021 = vweird.f32 %v8014
    %vm8022 = vmor %vm8020, %vm8021
    %v8023 = vsel %vm8022, %v8014, %v8019
    %v8024 = vmul.f32 %v5067, %v8023
    %v8025 = vmul.f32 %v5379, %v8023
    %v8026 = vmul.f32 %v5691, %v8023
    %v8027 = vmul.f32 %v6003, %v8023
    %v8028 = vmul.f32 %v7684, %v7684
    %v8029 = vmul.f32 %v7788, %v7788
    %v8030 = vmul.f32 %v7892, %v7892
    %v8031 = vmul.f32 %v7996, %v7996
    %vm8032 = vcmask 1041408
    %v8033 = vsel %vm8032, %v8028, 0.0
    %v8034 = vsel %vm8032, %v8029, 0.0
    %v8035 = vadd.f32 %v8033, %v8034
    %v8036 = vsel %vm8032, %v8030, 0.0
    %v8037 = vadd.f32 %v8035, %v8036
    %v8038 = vsel %vm8032, %v8031, 0.0
    %v8039 = vadd.f32 %v8037, %v8038
    %8040 = vadd.xlane.f32.xlu0 %v8039
    %v8041 = vpop.xlane.xlu0 %8040
    %v8042 = vadd.f32 %v8041, 1e-12
    %v8043 = vrsqrt.pop %v8042
    %v8044 = vmul.f32 %v8043, %v8042
    %v8045 = vmul.f32 %v8044, %v8043
    %v8046 = vmul.f32 0.5, %v8045
    %v8047 = vsub.f32 1.5, %v8046
    %v8048 = vmul.f32 %v8043, %v8047
    %vm8049 = vweird.f32 %v8042
    %vm8050 = vweird.f32 %v8043
    %vm8051 = vmor %vm8049, %vm8050
    %v8052 = vsel %vm8051, %v8043, %v8048
    %v8053 = vmul.f32 %v7684, %v8052
    %v8054 = vmul.f32 %v7788, %v8052
    %v8055 = vmul.f32 %v7892, %v8052
    %v8056 = vmul.f32 %v7996, %v8052
    %8057 = vmatpush.xpose.msra.mxu0 0.0
    %8058 = vmatpush.xpose.msra.mxu0 0.0
    %8059 = vmatpush.xpose.msra.mxu0 0.0
    %8060 = vmatpush.xpose.msra.mxu0 0.0
    %8061 = vmatpush.xpose.msra.mxu0 0.0
    %8062 = vmatpush.xpose.msra.mxu0 0.0
    %8063 = vmatpush.xpose.msra.mxu0 0.0
    %8064 = vmatpush.xpose.msra.mxu0 0.0
    %8065 = vmatpush.xpose.msra.mxu0 0.0
    %8066 = vmatpush.xpose.msra.mxu0 0.0
    %8067 = vmatpush.xpose.msra.mxu0 0.0
    %8068 = vmatpush.xpose.msra.mxu0 0.0
    %8069 = vmatpush.xpose.msra.mxu0 0.0
    %8070 = vmatpush.xpose.msra.mxu0 0.0
    %8071 = vmatpush.xpose.msra.mxu0 0.0
    %8072 = vmatpush.xpose.msra.mxu0 %v8053
    %8073 = vmatmul.f32.gmra.mxu0 %v8024
    %v8074 = vpop.f32.mrf.mxu0
    %v8075 = vadd.f32 0.0, %v8074
    %8076 = vdwg.mxu0
    %8077 = vmatpush.xpose.msra.mxu0 0.0
    %8078 = vmatpush.xpose.msra.mxu0 0.0
    %8079 = vmatpush.xpose.msra.mxu0 0.0
    %8080 = vmatpush.xpose.msra.mxu0 0.0
    %8081 = vmatpush.xpose.msra.mxu0 0.0
    %8082 = vmatpush.xpose.msra.mxu0 0.0
    %8083 = vmatpush.xpose.msra.mxu0 0.0
    %8084 = vmatpush.xpose.msra.mxu0 0.0
    %8085 = vmatpush.xpose.msra.mxu0 0.0
    %8086 = vmatpush.xpose.msra.mxu0 0.0
    %8087 = vmatpush.xpose.msra.mxu0 0.0
    %8088 = vmatpush.xpose.msra.mxu0 0.0
    %8089 = vmatpush.xpose.msra.mxu0 0.0
    %8090 = vmatpush.xpose.msra.mxu0 0.0
    %8091 = vmatpush.xpose.msra.mxu0 0.0
    %8092 = vmatpush.xpose.msra.mxu0 %v8054
    %8093 = vmatmul.f32.gmra.mxu0 %v8025
    %v8094 = vpop.f32.mrf.mxu0
    %v8095 = vadd.f32 %v8075, %v8094
    %8096 = vdwg.mxu0
    %8097 = vmatpush.xpose.msra.mxu0 0.0
    %8098 = vmatpush.xpose.msra.mxu0 0.0
    %8099 = vmatpush.xpose.msra.mxu0 0.0
    %8100 = vmatpush.xpose.msra.mxu0 0.0
    %8101 = vmatpush.xpose.msra.mxu0 0.0
    %8102 = vmatpush.xpose.msra.mxu0 0.0
    %8103 = vmatpush.xpose.msra.mxu0 0.0
    %8104 = vmatpush.xpose.msra.mxu0 0.0
    %8105 = vmatpush.xpose.msra.mxu0 0.0
    %8106 = vmatpush.xpose.msra.mxu0 0.0
    %8107 = vmatpush.xpose.msra.mxu0 0.0
    %8108 = vmatpush.xpose.msra.mxu0 0.0
    %8109 = vmatpush.xpose.msra.mxu0 0.0
    %8110 = vmatpush.xpose.msra.mxu0 0.0
    %8111 = vmatpush.xpose.msra.mxu0 0.0
    %8112 = vmatpush.xpose.msra.mxu0 %v8055
    %8113 = vmatmul.f32.gmra.mxu0 %v8026
    %v8114 = vpop.f32.mrf.mxu0
    %v8115 = vadd.f32 %v8095, %v8114
    %8116 = vdwg.mxu0
    %8117 = vmatpush.xpose.msra.mxu0 0.0
    %8118 = vmatpush.xpose.msra.mxu0 0.0
    %8119 = vmatpush.xpose.msra.mxu0 0.0
    %8120 = vmatpush.xpose.msra.mxu0 0.0
    %8121 = vmatpush.xpose.msra.mxu0 0.0
    %8122 = vmatpush.xpose.msra.mxu0 0.0
    %8123 = vmatpush.xpose.msra.mxu0 0.0
    %8124 = vmatpush.xpose.msra.mxu0 0.0
    %8125 = vmatpush.xpose.msra.mxu0 0.0
    %8126 = vmatpush.xpose.msra.mxu0 0.0
    %8127 = vmatpush.xpose.msra.mxu0 0.0
    %8128 = vmatpush.xpose.msra.mxu0 0.0
    %8129 = vmatpush.xpose.msra.mxu0 0.0
    %8130 = vmatpush.xpose.msra.mxu0 0.0
    %8131 = vmatpush.xpose.msra.mxu0 0.0
    %8132 = vmatpush.xpose.msra.mxu0 %v8056
    %8133 = vmatmul.f32.gmra.mxu0 %v8027
    %v8134 = vpop.f32.mrf.mxu0
    %v8135 = vadd.f32 %v8115, %v8134
    %8136 = vdwg.mxu0
    %v8137 = vmul.f32 %v8135, 1.0725082
    %v8138 = vsub.f32 1.0, %v8137
    %vm8139 = vcmask 8192
    %8140 = vst.msk [vmem:[#allocation10] sm:$0x1] %vm8139, %v8138
    // Predicated region
    $region42: #{soundclip_loss.3} parent=1 // pred_check
      _
    $region43: #{soundclip_loss.3} parent=1 // pred_check_branch
      %8142 = sbr.rel (0) target = $region45
    $region44: #{soundclip_loss.3} parent=1 // pred_region
      %8144 = vsyncadd [#allocation4], 0
      %s8146 = sshll.u32 [#allocation10], 4
      %s8147 = int_to_ptr.vmem [resolvable:$true] %s8146
      %s8148 = sshll.u32 %s6, 4
      %s8149 = int_to_ptr.hbm [resolvable:$true] %s8148
      %8151 = dma.vmem_to_hbm [thread:$0]  %s8147, 16, %s8149, [#allocation4]
    $region45: #{soundclip_loss.3} parent=1 // pred_fallthru
      _
    // Predicated region
    $region46: #{soundclip_loss.3} parent=1 // pred_check
      _
    $region47: #{soundclip_loss.3} parent=1 // pred_check_branch
      %8153 = sbr.rel (0) target = $region49
    $region48: #{soundclip_loss.3} parent=1 // pred_region
      %8155 = dma.done [#allocation4], 16
    $region49: #{soundclip_loss.3} parent=1 // pred_fallthru
      _
    %8156 = vsyncpa [#allocation3], 1
    %8157 = vsyncpa [#allocation6], 1
    %8158 = vsyncpa [#allocation9], 1
    %8159 = vsyncpa [#allocation4], 1

</llo_original>
